<compile_context>
chip_gen: v5e
topology: v5e:2x2
jax: 0.10.0
libtpu: 0.0.40
codegen_flags: <defaults>
</compile_context>

<pallas_src>
import functools

import jax
import jax.numpy as jnp
from jax.experimental import pallas as pl
from jax.experimental.pallas import tpu as pltpu

BN_EPS = 1e-5  # PyTorch BatchNorm3d default


def _cparams(*sem):
    return pltpu.CompilerParams(
        dimension_semantics=sem,
        vmem_limit_bytes=32 * 1024 * 1024,
    )


# ==========================================================================
# Pallas kernels
# ==========================================================================
def _stem_kernel(x_ref, band_ref, s_ref, b_ref, o_ref, acc_ref, *, tap_plan):
    """Fused k^3 conv (one banded matmul per depth tap) + BN + ReLU.

    x_ref    : (Din, Hin*Win*Cin)        bf16
    band_ref : (k, Hin*Win*Cin, Ho*Wo*Cout)  bf16 (H/W taps + padding folded)
    acc_ref  : (Do, Ho*Wo*Cout)          f32 VMEM accumulator
    """
    acc_ref[...] = jnp.zeros_like(acc_ref)
    for kd, d_out, rows in tap_plan:            # static unroll over depth taps
        n = len(rows)
        lhs = x_ref[pl.ds(rows[0], n), :]       # stride-1 taps are contiguous
        acc_ref[pl.ds(d_out, n), :] += jnp.dot(
            lhs, band_ref[kd], preferred_element_type=jnp.float32)
    y = acc_ref[...] * s_ref[...] + b_ref[...]
    o_ref[...] = jnp.maximum(y, 0.0).astype(o_ref.dtype)


def _block_kernel(x_ref, w1_ref, s1_ref, b1_ref, band_ref, s2_ref, b2_ref,
                  w3_ref, s3_ref, b3_ref, *rest,
                  tap_plan, stride, Ds, has_shortcut):
    """Whole bottleneck ResidualBlock3D fused in one kernel.

    conv1(1x1)+BN+ReLU -> conv2(k^3 dilated, strided)+BN+ReLU ->
    conv3(1x1)+BN  (+ shortcut(1x1,stride)+BN or identity) -> add -> ReLU.
    All intermediates live in VMEM; padding / H-W taps / output stride are
    folded into the precomputed block-diagonal / banded weights.
    """
    if has_shortcut:
        ws_ref, ss_ref, bs_ref, o_ref, y1_ref, acc_ref = rest
    else:
        o_ref, y1_ref, acc_ref = rest

    # ---- conv1 (1x1), block-diagonal over H*W (lane-folded), BN, ReLU ----
    y1 = jnp.dot(x_ref[...], w1_ref[...], preferred_element_type=jnp.float32)
    y1 = jnp.maximum(y1 * s1_ref[...] + b1_ref[...], 0.0)
    y1_ref[...] = y1.astype(y1_ref.dtype)

    def _rows(ref, rows):
        if stride == 1:                          # contiguous depth rows
            return ref[pl.ds(rows[0], len(rows)), :]
        if len(rows) == 1:
            return ref[pl.ds(rows[0], 1), :]
        return jnp.concatenate([ref[pl.ds(r, 1), :] for r in rows], axis=0)

    # ---- conv2 (k^3 dilated, strided): one banded matmul per depth tap ----
    acc_ref[...] = jnp.zeros_like(acc_ref)
    for kd, d_out, rows in tap_plan:             # static unroll
        acc_ref[pl.ds(d_out, len(rows)), :] += jnp.dot(
            _rows(y1_ref, rows), band_ref[kd],
            preferred_element_type=jnp.float32)
    y2 = jnp.maximum(acc_ref[...] * s2_ref[...] + b2_ref[...], 0.0)

    # ---- conv3 (1x1), block-diagonal, BN (no ReLU before residual add) ----
    y3 = jnp.dot(y2.astype(jnp.bfloat16), w3_ref[...],
                 preferred_element_type=jnp.float32)
    y3 = y3 * s3_ref[...] + b3_ref[...]

    # ---- residual branch, add, final ReLU ----
    if has_shortcut:
        if stride == 1:
            xs = x_ref[...]
        else:
            xs = jnp.concatenate(
                [x_ref[pl.ds(d * stride, 1), :] for d in range(Ds)], axis=0)
        res = jnp.dot(xs, ws_ref[...], preferred_element_type=jnp.float32)
        res = res * ss_ref[...] + bs_ref[...]
    else:
        res = x_ref[...].astype(jnp.float32)
    o_ref[...] = jnp.maximum(y3 + res, 0.0).astype(o_ref.dtype)


def _head_kernel(x_ref, p_ref, w1_ref, b1_ref, w2_ref, b2_ref, w3_ref, b3_ref,
                 o_ref):
    """Fused global average pool (as a matmul) + Linear/ReLU x2 + Linear.

    x_ref: (Ds, Hs*Ws*C) bf16 (one batch element);  p_ref: (Hs*Ws*C, C) f32
    pooling matrix with the 1/(D*H*W) factor folded in.  Dropout = identity.
    """
    xs = jnp.sum(x_ref[...].astype(jnp.float32), axis=0, keepdims=True)
    pooled = jnp.dot(xs, p_ref[...], preferred_element_type=jnp.float32)
    h = jnp.dot(pooled, w1_ref[...], preferred_element_type=jnp.float32) + b1_ref[...]
    h = jnp.maximum(h, 0.0)
    h = jnp.dot(h, w2_ref[...], preferred_element_type=jnp.float32) + b2_ref[...]
    h = jnp.maximum(h, 0.0)
    o_ref[...] = jnp.dot(h, w3_ref[...],
                         preferred_element_type=jnp.float32) + b3_ref[...]


# ==========================================================================
# pallas_call wrappers (all static shapes come from the precomputed arch)
# ==========================================================================
def _stem_call(x, p, m):
    N = x.shape[0]
    Din, L_in, Ds, L_out, k = m['Din'], m['L_in'], m['Ds'], m['L_out'], m['k']
    return pl.pallas_call(
        functools.partial(_stem_kernel, tap_plan=m['tap_plan']),
        out_shape=jax.ShapeDtypeStruct((N, Ds, L_out), jnp.bfloat16),
        grid=(N,),
        in_specs=[
            pl.BlockSpec((None, Din, L_in), lambda n: (n, 0, 0)),
            pl.BlockSpec((k, L_in, L_out), lambda n: (0, 0, 0)),
            pl.BlockSpec((1, L_out), lambda n: (0, 0)),
            pl.BlockSpec((1, L_out), lambda n: (0, 0)),
        ],
        out_specs=pl.BlockSpec((None, Ds, L_out), lambda n: (n, 0, 0)),
        scratch_shapes=[pltpu.VMEM((Ds, L_out), jnp.float32)],
        compiler_params=_cparams("parallel"),
    )(x, p['band'], p['scale'], p['shift'])


def _block_call(x, p, m):
    N = x.shape[0]
    Din, L_in = m['Din'], m['L_in']
    Ds, L1, L2, L_out = m['Ds'], m['L1'], m['L2'], m['L_out']
    k, stride, has_sc = m['k'], m['stride'], m['has_shortcut']

    kernel = functools.partial(_block_kernel, tap_plan=m['tap_plan'],
                               stride=stride, Ds=Ds, has_shortcut=has_sc)
    in_specs = [
        pl.BlockSpec((None, Din, L_in), lambda n: (n, 0, 0)),
        pl.BlockSpec((L_in, L1), lambda n: (0, 0)),
        pl.BlockSpec((1, L1), lambda n: (0, 0)),
        pl.BlockSpec((1, L1), lambda n: (0, 0)),
        pl.BlockSpec((k, L1, L2), lambda n: (0, 0, 0)),
        pl.BlockSpec((1, L2), lambda n: (0, 0)),
        pl.BlockSpec((1, L2), lambda n: (0, 0)),
        pl.BlockSpec((L2, L_out), lambda n: (0, 0)),
        pl.BlockSpec((1, L_out), lambda n: (0, 0)),
        pl.BlockSpec((1, L_out), lambda n: (0, 0)),
    ]
    args = [x, p['w1'], p['s1'], p['b1'], p['band'], p['s2'], p['b2'],
            p['w3'], p['s3'], p['b3']]
    if has_sc:
        in_specs += [
            pl.BlockSpec((L_in, L_out), lambda n: (0, 0)),
            pl.BlockSpec((1, L_out), lambda n: (0, 0)),
            pl.BlockSpec((1, L_out), lambda n: (0, 0)),
        ]
        args += [p['ws'], p['ss'], p['bs']]

    return pl.pallas_call(
        kernel,
        out_shape=jax.ShapeDtypeStruct((N, Ds, L_out), jnp.bfloat16),
        grid=(N,),
        in_specs=in_specs,
        out_specs=pl.BlockSpec((None, Ds, L_out), lambda n: (n, 0, 0)),
        scratch_shapes=[pltpu.VMEM((Din, L1), jnp.bfloat16),
                        pltpu.VMEM((Ds, L2), jnp.float32)],
        compiler_params=_cparams("parallel"),
    )(*args)


def _head_call(x, p, m):
    N = x.shape[0]
    Ds, L_in, C = m['Ds'], m['L_in'], m['C']
    h1, h2, h3 = m['h1'], m['h2'], m['h3']
    out = pl.pallas_call(
        _head_kernel,
        out_shape=jax.ShapeDtypeStruct((N, 1, h3), jnp.float32),
        grid=(N,),
        in_specs=[
            pl.BlockSpec((None, Ds, L_in), lambda n: (n, 0, 0)),
            pl.BlockSpec((L_in, C), lambda n: (0, 0)),
            pl.BlockSpec((C, h1), lambda n: (0, 0)),
            pl.BlockSpec((1, h1), lambda n: (0, 0)),
            pl.BlockSpec((h1, h2), lambda n: (0, 0)),
            pl.BlockSpec((1, h2), lambda n: (0, 0)),
            pl.BlockSpec((h2, h3), lambda n: (0, 0)),
            pl.BlockSpec((1, h3), lambda n: (0, 0)),
        ],
        out_specs=pl.BlockSpec((None, 1, h3), lambda n: (n, 0, 0)),
        compiler_params=_cparams("parallel"),
    )(x, p['pool'], p['w1'], p['b1'], p['w2'], p['b2'], p['w3'], p['b3'])
    return out.reshape(N, h3)


# ==========================================================================
# One-time weight preprocessing (runs OUTSIDE the jitted forward)
# ==========================================================================
def _fold_bn(bias, bn):
    gamma, beta, mean, var = bn
    scale = gamma / jnp.sqrt(var + BN_EPS)
    shift = (bias - mean) * scale + beta
    return scale, shift


def _tile_affine(bias, bn, reps):
    scale, shift = _fold_bn(bias, bn)
    return (jnp.tile(scale, reps)[None, :].astype(jnp.float32),
            jnp.tile(shift, reps)[None, :].astype(jnp.float32))


def _out_size(n, k, dil, pad, stride):
    return (n + 2 * pad - dil * (k - 1) - 1) // stride + 1


def _depth_tap_plan(Din, k, dil, pad, stride):
    """Static per-depth-tap plan: (kd, first_output_row, input_row_indices)."""
    Ds = _out_size(Din, k, dil, pad, stride)
    plan = []
    for kd in range(k):
        off = kd * dil - pad
        ds_lo = max(0, -(off // stride))
        ds_hi = min(Ds - 1, (Din - 1 - off) // stride)
        if ds_hi < ds_lo:
            continue                              # tap lands fully in padding
        rows = tuple(ds * stride + off for ds in range(ds_lo, ds_hi + 1))
        plan.append((kd, ds_lo, rows))
    return Ds, tuple(plan)


def _conv_band(w, Hin, Win, dil, pad, stride):
    """k^3 conv weight -> per-depth-tap banded matmul weight.

    band[kd, (h, w, ci), (hs, ws, co)] = w[co, ci, kd, kh, kw]
      iff h == hs*stride + kh*dil - pad and w == ws*stride + kw*dil - pad.
    H/W taps, zero padding and the output stride are all folded in.
    """
    Cout, Cin, k = w.shape[0], w.shape[1], w.shape[2]
    Hs = _out_size(Hin, k, dil, pad, stride)
    Ws = _out_size(Win, k, dil, pad, stride)
    kk = jnp.arange(k)[:, None, None]
    selH = (jnp.arange(Hin)[None, :, None] ==
            (jnp.arange(Hs)[None, None, :] * stride + kk * dil - pad)
            ).astype(jnp.float32)                                   # (k,Hin,Hs)
    selW = (jnp.arange(Win)[None, :, None] ==
            (jnp.arange(Ws)[None, None, :] * stride + kk * dil - pad)
            ).astype(jnp.float32)                                   # (k,Win,Ws)
    wt = jnp.transpose(w, (2, 3, 4, 1, 0)).astype(jnp.float32)      # kd,kh,kw,ci,co
    band = jnp.einsum('ahb,cwd,eacio->ehwibdo', selH, selW, wt)
    band = band.reshape(k, Hin * Win * Cin, Hs * Ws * Cout)
    return band.astype(jnp.bfloat16), Hs, Ws


def _pointwise_blockdiag(w, P):
    """1x1 conv -> block-diagonal (P*Cin, P*Cout) weight (P spatial sites)."""
    Cout, Cin = w.shape[0], w.shape[1]
    mat = w.reshape(Cout, Cin).T.astype(jnp.float32)
    eye = jnp.eye(P, dtype=jnp.float32)
    bd = jnp.einsum('pq,io->piqo', eye, mat).reshape(P * Cin, P * Cout)
    return bd.astype(jnp.bfloat16)


def _pointwise_strided(w, Hin, Win, stride):
    """1x1 stride-s conv -> (Hin*Win*Cin, Hs*Ws*Cout) selection-diag weight."""
    Cout, Cin = w.shape[0], w.shape[1]
    mat = w.reshape(Cout, Cin).T.astype(jnp.float32)
    Hs = _out_size(Hin, 1, 1, 0, stride)
    Ws = _out_size(Win, 1, 1, 0, stride)
    selH = (jnp.arange(Hin)[:, None] ==
            jnp.arange(Hs)[None, :] * stride).astype(jnp.float32)
    selW = (jnp.arange(Win)[:, None] ==
            jnp.arange(Ws)[None, :] * stride).astype(jnp.float32)
    bd = jnp.einsum('hb,wd,io->hwibdo', selH, selW, mat)
    return bd.reshape(Hin * Win * Cin, Hs * Ws * Cout).astype(jnp.bfloat16)


def prepare_plan(params, config, spatial):
    """Builds all Pallas-ready weight arrays (plan) and static shape info (arch)."""
    D, H, W = spatial
    plan = {'blocks': []}

    # ---- stem: Conv3d(k=7, s=1, p=3) + BN + ReLU ----
    st = params['stem']
    Cout, Cin, k = st['w'].shape[0], st['w'].shape[1], st['w'].shape[2]
    pad = (k - 1) // 2
    band, Hs, Ws = _conv_band(st['w'], H, W, dil=1, pad=pad, stride=1)
    Ds, tap_plan = _depth_tap_plan(D, k, 1, pad, 1)
    scale, shift = _tile_affine(st['b'], st['bn'], Hs * Ws)
    plan['stem'] = {'band': band, 'scale': scale, 'shift': shift}
    stem_meta = dict(Din=D, L_in=H * W * Cin, Ds=Ds, L_out=Hs * Ws * Cout,
                     k=k, tap_plan=tap_plan)
    D, H, W, ch = Ds, Hs, Ws, Cout

    # ---- bottleneck residual blocks ----
    block_metas = []
    for bp, (blk_in, out_ch, stride, dil, has_sc) in zip(params['blocks'], config):
        bc = bp['conv2']['w'].shape[0]
        pad = dil * (3 - 1) // 2
        p = {}
        p['w1'] = _pointwise_blockdiag(bp['conv1']['w'], H * W)
        p['s1'], p['b1'] = _tile_affine(bp['conv1']['b'], bp['conv1']['bn'], H * W)
        band, Hs, Ws = _conv_band(bp['conv2']['w'], H, W, dil, pad, stride)
        Ds, tap_plan = _depth_tap_plan(D, 3, dil, pad, stride)
        p['band'] = band
        p['s2'], p['b2'] = _tile_affine(bp['conv2']['b'], bp['conv2']['bn'], Hs * Ws)
        p['w3'] = _pointwise_blockdiag(bp['conv3']['w'], Hs * Ws)
        p['s3'], p['b3'] = _tile_affine(bp['conv3']['b'], bp['conv3']['bn'], Hs * Ws)
        if has_sc:
            p['ws'] = _pointwise_strided(bp['shortcut']['w'], H, W, stride)
            p['ss'], p['bs'] = _tile_affine(bp['shortcut']['b'],
                                            bp['shortcut']['bn'], Hs * Ws)
        plan['blocks'].append(p)
        block_metas.append(dict(
            Din=D, L_in=H * W * blk_in, Ds=Ds,
            L1=H * W * bc, L2=Hs * Ws * bc, L_out=Hs * Ws * out_ch,
            k=3, stride=stride, has_shortcut=has_sc, tap_plan=tap_plan))
        D, H, W, ch = Ds, Hs, Ws, out_ch

    # ---- head: global average pool (matmul) + 3-layer MLP (dropout = eval) ----
    C = ch
    pool = jnp.tile(jnp.eye(C, dtype=jnp.float32), (H * W, 1)) / float(D * H * W)
    w1, b1 = params['fc1']
    w2, b2 = params['fc2']
    w3, b3 = params['fc3']
    plan['head'] = {
        'pool': pool,
        'w1': w1.astype(jnp.float32), 'b1': b1.reshape(1, -1).astype(jnp.float32),
        'w2': w2.astype(jnp.float32), 'b2': b2.reshape(1, -1).astype(jnp.float32),
        'w3': w3.astype(jnp.float32), 'b3': b3.reshape(1, -1).astype(jnp.float32),
    }
    head_meta = dict(Ds=D, L_in=H * W * C, C=C,
                     h1=w1.shape[1], h2=w2.shape[1], h3=w3.shape[1])
    return plan, (stem_meta, tuple(block_metas), head_meta)


# ==========================================================================
# Model init (synthetic parameters, PyTorch layout) + forward
# ==========================================================================
def _conv_params(key, cin, cout, k):
    k1, k2 = jax.random.split(key)
    fan_in = cin * k ** 3
    w = jax.random.normal(k1, (cout, cin, k, k, k), jnp.float32) / jnp.sqrt(fan_in)
    b = 0.01 * jax.random.normal(k2, (cout,), jnp.float32)
    return w, b


def _bn_params(key, c):
    k1, k2, k3, k4 = jax.random.split(key, 4)
    gamma = 1.0 + 0.1 * jax.random.normal(k1, (c,), jnp.float32)
    beta = 0.1 * jax.random.normal(k2, (c,), jnp.float32)
    mean = 0.1 * jax.random.normal(k3, (c,), jnp.float32)
    var = jax.random.uniform(k4, (c,), jnp.float32, minval=0.5, maxval=1.5)
    return (gamma, beta, mean, var)


def _linear_params(key, din, dout):
    k1, k2 = jax.random.split(key)
    w = jax.random.normal(k1, (din, dout), jnp.float32) / jnp.sqrt(din)
    b = 0.01 * jax.random.normal(k2, (dout,), jnp.float32)
    return (w, b)


def init_model(key, input_channels=4, init_features=8,
               block_config=(1, 1, 1, 1), dilations=(1, 2, 4, 8)):
    keys = iter(jax.random.split(key, 256))
    params = {'blocks': []}
    config = []

    w, b = _conv_params(next(keys), input_channels, init_features, 7)
    params['stem'] = {'w': w, 'b': b, 'bn': _bn_params(next(keys), init_features)}

    in_ch = init_features
    for i, (num_blocks, dil) in enumerate(zip(block_config, dilations)):
        out_ch = in_ch * 2 if i > 0 else in_ch
        stage_stride = 2 if i < 2 else 1
        for j in range(num_blocks):
            blk_in = in_ch if j == 0 else out_ch
            blk_stride = stage_stride if j == 0 else 1
            bc = out_ch // 4  # bottleneck_factor = 4
            p = {}
            w, b = _conv_params(next(keys), blk_in, bc, 1)
            p['conv1'] = {'w': w, 'b': b, 'bn': _bn_params(next(keys), bc)}
            w, b = _conv_params(next(keys), bc, bc, 3)
            p['conv2'] = {'w': w, 'b': b, 'bn': _bn_params(next(keys), bc)}
            w, b = _conv_params(next(keys), bc, out_ch, 1)
            p['conv3'] = {'w': w, 'b': b, 'bn': _bn_params(next(keys), out_ch)}
            has_sc = (blk_in != out_ch) or (blk_stride != 1)
            if has_sc:
                w, b = _conv_params(next(keys), blk_in, out_ch, 1)
                p['shortcut'] = {'w': w, 'b': b,
                                 'bn': _bn_params(next(keys), out_ch)}
            params['blocks'].append(p)
            config.append((blk_in, out_ch, blk_stride, dil, has_sc))
        in_ch = out_ch

    params['fc1'] = _linear_params(next(keys), in_ch, 256)
    params['fc2'] = _linear_params(next(keys), 256, 128)
    params['fc3'] = _linear_params(next(keys), 128, 1)
    return params, tuple(config)


def make_forward(arch):
    stem_meta, block_metas, head_meta = arch

    def forward(plan, x_ncdhw):
        N, C, D, H, W = x_ncdhw.shape
        # Single layout change per forward: NCDHW -> (N, D, H*W*C), C minor.
        x = jnp.transpose(x_ncdhw, (0, 2, 3, 4, 1)).reshape(N, D, H * W * C)
        x = x.astype(jnp.bfloat16)
        x = _stem_call(x, plan['stem'], stem_meta)
        for p, m in zip(plan['blocks'], block_metas):
            x = _block_call(x, p, m)
        return _head_call(x, plan['head'], head_meta)

    return forward


# ==========================================================================
if __name__ == "__main__":
    key = jax.random.PRNGKey(0)
    pkey, xkey = jax.random.split(key)

    # 4 input channels, 8 init features, one bottleneck block per stage,
    # dilations [1, 2, 4, 8], 8^3 spatial grid, batch 2.
    params, config = init_model(pkey, input_channels=4, init_features=8,
                                block_config=(1, 1, 1, 1),
                                dilations=(1, 2, 4, 8))

    # One-time weight preprocessing (band/block-diag weights, BN folding,
    # scale/shift tiling, bf16 casts) -- hoisted out of the jitted forward.
    plan, arch = prepare_plan(params, config, spatial=(8, 8, 8))
    plan = jax.tree_util.tree_map(lambda a: a.block_until_ready(), plan)

    fwd = jax.jit(make_forward(arch))
    x = jax.random.normal(xkey, (2, 4, 8, 8, 8), jnp.float32)  # NCDHW
    out = jax.block_until_ready(fwd(plan, x))

    assert out.shape == (2, 1), out.shape
    assert bool(jnp.all(jnp.isfinite(out)))
    print("KERNEL_OK")
</pallas_src>

<mosaic_0001>
module attributes {stable_mosaic.version = 11 : i64} {
  func.func @_stem_kernel(%arg0: i32, %arg1: memref<1x8x256xbf16, #tpu.memory_space<vmem>>, %arg2: memref<7x256x512xbf16, #tpu.memory_space<vmem>>, %arg3: memref<1x512xf32, #tpu.memory_space<vmem>>, %arg4: memref<1x512xf32, #tpu.memory_space<vmem>>, %arg5: memref<1x8x512xbf16, #tpu.memory_space<vmem>>, %arg6: memref<8x512xf32, #tpu.memory_space<vmem>>) attributes {dimension_semantics = [#tpu.dimension_semantics<parallel>], iteration_bounds = array<i64: 2>, scalar_prefetch = 0 : i64, scratch_operands = 1 : i64, tpu.core_type = #tpu.core_type<tc>, window_params = [{transform_indices = @transform_0, window_bounds = array<i64: 1, 8, 256>}, {pipeline_mode = #tpu.pipeline_mode<synchronous>, transform_indices = @transform_1, window_bounds = array<i64: 7, 256, 512>}, {pipeline_mode = #tpu.pipeline_mode<synchronous>, transform_indices = @transform_2, window_bounds = array<i64: 1, 512>}, {pipeline_mode = #tpu.pipeline_mode<synchronous>, transform_indices = @transform_3, window_bounds = array<i64: 1, 512>}, {transform_indices = @transform_4, window_bounds = array<i64: 1, 8, 512>}]} {
    %cst = arith.constant 0.000000e+00 : f32
    %0 = vector.broadcast %cst : f32 to vector<8x512xf32>
    %c0 = arith.constant 0 : index
    %c0_0 = arith.constant 0 : index
    %1 = vector.load %arg6[%c0, %c0_0] : memref<8x512xf32, #tpu.memory_space<vmem>>, vector<8x512xf32>
    tpu.vector_store %arg6[%c0, %c0_0], %0 {strides = array<i32>} : memref<8x512xf32, #tpu.memory_space<vmem>>, vector<8x512xf32>,
    %c0_1 = arith.constant 0 : index
    %c0_2 = arith.constant 0 : index
    %c0_3 = arith.constant 0 : index
    %2 = vector.load %arg1[%c0_1, %c0_2, %c0_3] : memref<1x8x256xbf16, #tpu.memory_space<vmem>>, vector<1x5x256xbf16>
    %3 = vector.shape_cast %2 : vector<1x5x256xbf16> to vector<5x256xbf16>
    %c3 = arith.constant 3 : index
    %c0_4 = arith.constant 0 : index
    %4 = vector.load %arg6[%c3, %c0_4] : memref<8x512xf32, #tpu.memory_space<vmem>>, vector<5x512xf32>
    %c0_5 = arith.constant 0 : index
    %c0_6 = arith.constant 0 : index
    %c0_7 = arith.constant 0 : index
    %5 = vector.load %arg2[%c0_5, %c0_6, %c0_7] : memref<7x256x512xbf16, #tpu.memory_space<vmem>>, vector<1x256x512xbf16>
    %6 = vector.shape_cast %5 : vector<1x256x512xbf16> to vector<256x512xbf16>
    %cst_8 = arith.constant dense<0.000000e+00> : vector<5x512xf32>
    %7 = tpu.matmul %3, %6, %cst_8 {dimension_numbers = #tpu.dot_dimension_numbers<[1], [0], [0], [1], [0, 0, 1, 1], [], []>} : vector<5x256xbf16>, vector<256x512xbf16>, vector<5x512xf32> -> vector<5x512xf32>
    %8 = arith.addf %4, %7 : vector<5x512xf32>
    %c3_9 = arith.constant 3 : index
    %c0_10 = arith.constant 0 : index
    %9 = vector.load %arg6[%c3_9, %c0_10] : memref<8x512xf32, #tpu.memory_space<vmem>>, vector<5x512xf32>
    tpu.vector_store %arg6[%c3_9, %c0_10], %8 {strides = array<i32>} : memref<8x512xf32, #tpu.memory_space<vmem>>, vector<5x512xf32>,
    %c0_11 = arith.constant 0 : index
    %c0_12 = arith.constant 0 : index
    %c0_13 = arith.constant 0 : index
    %10 = vector.load %arg1[%c0_11, %c0_12, %c0_13] : memref<1x8x256xbf16, #tpu.memory_space<vmem>>, vector<1x6x256xbf16>
    %11 = vector.shape_cast %10 : vector<1x6x256xbf16> to vector<6x256xbf16>
    %c2 = arith.constant 2 : index
    %c0_14 = arith.constant 0 : index
    %12 = vector.load %arg6[%c2, %c0_14] : memref<8x512xf32, #tpu.memory_space<vmem>>, vector<6x512xf32>
    %c1 = arith.constant 1 : index
    %c0_15 = arith.constant 0 : index
    %c0_16 = arith.constant 0 : index
    %13 = vector.load %arg2[%c1, %c0_15, %c0_16] : memref<7x256x512xbf16, #tpu.memory_space<vmem>>, vector<1x256x512xbf16>
    %14 = vector.shape_cast %13 : vector<1x256x512xbf16> to vector<256x512xbf16>
    %cst_17 = arith.constant dense<0.000000e+00> : vector<6x512xf32>
    %15 = tpu.matmul %11, %14, %cst_17 {dimension_numbers = #tpu.dot_dimension_numbers<[1], [0], [0], [1], [0, 0, 1, 1], [], []>} : vector<6x256xbf16>, vector<256x512xbf16>, vector<6x512xf32> -> vector<6x512xf32>
    %16 = arith.addf %12, %15 : vector<6x512xf32>
    %c2_18 = arith.constant 2 : index
    %c0_19 = arith.constant 0 : index
    %17 = vector.load %arg6[%c2_18, %c0_19] : memref<8x512xf32, #tpu.memory_space<vmem>>, vector<6x512xf32>
    tpu.vector_store %arg6[%c2_18, %c0_19], %16 {strides = array<i32>} : memref<8x512xf32, #tpu.memory_space<vmem>>, vector<6x512xf32>,
    %c0_20 = arith.constant 0 : index
    %c0_21 = arith.constant 0 : index
    %c0_22 = arith.constant 0 : index
    %18 = vector.load %arg1[%c0_20, %c0_21, %c0_22] : memref<1x8x256xbf16, #tpu.memory_space<vmem>>, vector<1x7x256xbf16>
    %19 = vector.shape_cast %18 : vector<1x7x256xbf16> to vector<7x256xbf16>
    %c1_23 = arith.constant 1 : index
    %c0_24 = arith.constant 0 : index
    %20 = vector.load %arg6[%c1_23, %c0_24] : memref<8x512xf32, #tpu.memory_space<vmem>>, vector<7x512xf32>
    %c2_25 = arith.constant 2 : index
    %c0_26 = arith.constant 0 : index
    %c0_27 = arith.constant 0 : index
    %21 = vector.load %arg2[%c2_25, %c0_26, %c0_27] : memref<7x256x512xbf16, #tpu.memory_space<vmem>>, vector<1x256x512xbf16>
    %22 = vector.shape_cast %21 : vector<1x256x512xbf16> to vector<256x512xbf16>
    %cst_28 = arith.constant dense<0.000000e+00> : vector<7x512xf32>
    %23 = tpu.matmul %19, %22, %cst_28 {dimension_numbers = #tpu.dot_dimension_numbers<[1], [0], [0], [1], [0, 0, 1, 1], [], []>} : vector<7x256xbf16>, vector<256x512xbf16>, vector<7x512xf32> -> vector<7x512xf32>
    %24 = arith.addf %20, %23 : vector<7x512xf32>
    %c1_29 = arith.constant 1 : index
    %c0_30 = arith.constant 0 : index
    %25 = vector.load %arg6[%c1_29, %c0_30] : memref<8x512xf32, #tpu.memory_space<vmem>>, vector<7x512xf32>
    tpu.vector_store %arg6[%c1_29, %c0_30], %24 {strides = array<i32>} : memref<8x512xf32, #tpu.memory_space<vmem>>, vector<7x512xf32>,
    %c0_31 = arith.constant 0 : index
    %c0_32 = arith.constant 0 : index
    %c0_33 = arith.constant 0 : index
    %26 = vector.load %arg1[%c0_31, %c0_32, %c0_33] : memref<1x8x256xbf16, #tpu.memory_space<vmem>>, vector<1x8x256xbf16>
    %27 = vector.shape_cast %26 : vector<1x8x256xbf16> to vector<8x256xbf16>
    %c0_34 = arith.constant 0 : index
    %c0_35 = arith.constant 0 : index
    %28 = vector.load %arg6[%c0_34, %c0_35] : memref<8x512xf32, #tpu.memory_space<vmem>>, vector<8x512xf32>
    %c3_36 = arith.constant 3 : index
    %c0_37 = arith.constant 0 : index
    %c0_38 = arith.constant 0 : index
    %29 = vector.load %arg2[%c3_36, %c0_37, %c0_38] : memref<7x256x512xbf16, #tpu.memory_space<vmem>>, vector<1x256x512xbf16>
    %30 = vector.shape_cast %29 : vector<1x256x512xbf16> to vector<256x512xbf16>
    %cst_39 = arith.constant dense<0.000000e+00> : vector<8x512xf32>
    %31 = tpu.matmul %27, %30, %cst_39 {dimension_numbers = #tpu.dot_dimension_numbers<[1], [0], [0], [1], [0, 0, 1, 1], [], []>} : vector<8x256xbf16>, vector<256x512xbf16>, vector<8x512xf32> -> vector<8x512xf32>
    %32 = arith.addf %28, %31 : vector<8x512xf32>
    %c0_40 = arith.constant 0 : index
    %c0_41 = arith.constant 0 : index
    %33 = vector.load %arg6[%c0_40, %c0_41] : memref<8x512xf32, #tpu.memory_space<vmem>>, vector<8x512xf32>
    tpu.vector_store %arg6[%c0_40, %c0_41], %32 {strides = array<i32>} : memref<8x512xf32, #tpu.memory_space<vmem>>, vector<8x512xf32>,
    %c0_42 = arith.constant 0 : index
    %c1_43 = arith.constant 1 : index
    %c0_44 = arith.constant 0 : index
    %34 = vector.load %arg1[%c0_42, %c1_43, %c0_44] : memref<1x8x256xbf16, #tpu.memory_space<vmem>>, vector<1x7x256xbf16>
    %35 = vector.shape_cast %34 : vector<1x7x256xbf16> to vector<7x256xbf16>
    %c0_45 = arith.constant 0 : index
    %c0_46 = arith.constant 0 : index
    %36 = vector.load %arg6[%c0_45, %c0_46] : memref<8x512xf32, #tpu.memory_space<vmem>>, vector<7x512xf32>
    %c4 = arith.constant 4 : index
    %c0_47 = arith.constant 0 : index
    %c0_48 = arith.constant 0 : index
    %37 = vector.load %arg2[%c4, %c0_47, %c0_48] : memref<7x256x512xbf16, #tpu.memory_space<vmem>>, vector<1x256x512xbf16>
    %38 = vector.shape_cast %37 : vector<1x256x512xbf16> to vector<256x512xbf16>
    %cst_49 = arith.constant dense<0.000000e+00> : vector<7x512xf32>
    %39 = tpu.matmul %35, %38, %cst_49 {dimension_numbers = #tpu.dot_dimension_numbers<[1], [0], [0], [1], [0, 0, 1, 1], [], []>} : vector<7x256xbf16>, vector<256x512xbf16>, vector<7x512xf32> -> vector<7x512xf32>
    %40 = arith.addf %36, %39 : vector<7x512xf32>
    %c0_50 = arith.constant 0 : index
    %c0_51 = arith.constant 0 : index
    %41 = vector.load %arg6[%c0_50, %c0_51] : memref<8x512xf32, #tpu.memory_space<vmem>>, vector<7x512xf32>
    tpu.vector_store %arg6[%c0_50, %c0_51], %40 {strides = array<i32>} : memref<8x512xf32, #tpu.memory_space<vmem>>, vector<7x512xf32>,
    %c0_52 = arith.constant 0 : index
    %c2_53 = arith.constant 2 : index
    %c0_54 = arith.constant 0 : index
    %42 = vector.load %arg1[%c0_52, %c2_53, %c0_54] : memref<1x8x256xbf16, #tpu.memory_space<vmem>>, vector<1x6x256xbf16>
    %43 = vector.shape_cast %42 : vector<1x6x256xbf16> to vector<6x256xbf16>
    %c0_55 = arith.constant 0 : index
    %c0_56 = arith.constant 0 : index
    %44 = vector.load %arg6[%c0_55, %c0_56] : memref<8x512xf32, #tpu.memory_space<vmem>>, vector<6x512xf32>
    %c5 = arith.constant 5 : index
    %c0_57 = arith.constant 0 : index
    %c0_58 = arith.constant 0 : index
    %45 = vector.load %arg2[%c5, %c0_57, %c0_58] : memref<7x256x512xbf16, #tpu.memory_space<vmem>>, vector<1x256x512xbf16>
    %46 = vector.shape_cast %45 : vector<1x256x512xbf16> to vector<256x512xbf16>
    %cst_59 = arith.constant dense<0.000000e+00> : vector<6x512xf32>
    %47 = tpu.matmul %43, %46, %cst_59 {dimension_numbers = #tpu.dot_dimension_numbers<[1], [0], [0], [1], [0, 0, 1, 1], [], []>} : vector<6x256xbf16>, vector<256x512xbf16>, vector<6x512xf32> -> vector<6x512xf32>
    %48 = arith.addf %44, %47 : vector<6x512xf32>
    %c0_60 = arith.constant 0 : index
    %c0_61 = arith.constant 0 : index
    %49 = vector.load %arg6[%c0_60, %c0_61] : memref<8x512xf32, #tpu.memory_space<vmem>>, vector<6x512xf32>
    tpu.vector_store %arg6[%c0_60, %c0_61], %48 {strides = array<i32>} : memref<8x512xf32, #tpu.memory_space<vmem>>, vector<6x512xf32>,
    %c0_62 = arith.constant 0 : index
    %c3_63 = arith.constant 3 : index
    %c0_64 = arith.constant 0 : index
    %50 = vector.load %arg1[%c0_62, %c3_63, %c0_64] : memref<1x8x256xbf16, #tpu.memory_space<vmem>>, vector<1x5x256xbf16>
    %51 = vector.shape_cast %50 : vector<1x5x256xbf16> to vector<5x256xbf16>
    %c0_65 = arith.constant 0 : index
    %c0_66 = arith.constant 0 : index
    %52 = vector.load %arg6[%c0_65, %c0_66] : memref<8x512xf32, #tpu.memory_space<vmem>>, vector<5x512xf32>
    %c6 = arith.constant 6 : index
    %c0_67 = arith.constant 0 : index
    %c0_68 = arith.constant 0 : index
    %53 = vector.load %arg2[%c6, %c0_67, %c0_68] : memref<7x256x512xbf16, #tpu.memory_space<vmem>>, vector<1x256x512xbf16>
    %54 = vector.shape_cast %53 : vector<1x256x512xbf16> to vector<256x512xbf16>
    %cst_69 = arith.constant dense<0.000000e+00> : vector<5x512xf32>
    %55 = tpu.matmul %51, %54, %cst_69 {dimension_numbers = #tpu.dot_dimension_numbers<[1], [0], [0], [1], [0, 0, 1, 1], [], []>} : vector<5x256xbf16>, vector<256x512xbf16>, vector<5x512xf32> -> vector<5x512xf32>
    %56 = arith.addf %52, %55 : vector<5x512xf32>
    %c0_70 = arith.constant 0 : index
    %c0_71 = arith.constant 0 : index
    %57 = vector.load %arg6[%c0_70, %c0_71] : memref<8x512xf32, #tpu.memory_space<vmem>>, vector<5x512xf32>
    tpu.vector_store %arg6[%c0_70, %c0_71], %56 {strides = array<i32>} : memref<8x512xf32, #tpu.memory_space<vmem>>, vector<5x512xf32>,
    %c0_72 = arith.constant 0 : index
    %c0_73 = arith.constant 0 : index
    %58 = vector.load %arg6[%c0_72, %c0_73] : memref<8x512xf32, #tpu.memory_space<vmem>>, vector<8x512xf32>
    %c0_74 = arith.constant 0 : index
    %c0_75 = arith.constant 0 : index
    %59 = vector.load %arg3[%c0_74, %c0_75] : memref<1x512xf32, #tpu.memory_space<vmem>>, vector<1x512xf32>
    %60 = vector.broadcast %59 : vector<1x512xf32> to vector<8x512xf32>
    %61 = arith.mulf %58, %60 : vector<8x512xf32>
    %c0_76 = arith.constant 0 : index
    %c0_77 = arith.constant 0 : index
    %62 = vector.load %arg4[%c0_76, %c0_77] : memref<1x512xf32, #tpu.memory_space<vmem>>, vector<1x512xf32>
    %63 = vector.broadcast %62 : vector<1x512xf32> to vector<8x512xf32>
    %64 = arith.addf %61, %63 : vector<8x512xf32>
    %cst_78 = arith.constant 0.000000e+00 : f32
    %65 = vector.broadcast %cst_78 : f32 to vector<8x512xf32>
    %66 = arith.maximumf %64, %65 : vector<8x512xf32>
    %67 = arith.truncf %66 : vector<8x512xf32> to vector<8x512xbf16>
    %c0_79 = arith.constant 0 : index
    %c0_80 = arith.constant 0 : index
    %c0_81 = arith.constant 0 : index
    %68 = vector.load %arg5[%c0_79, %c0_80, %c0_81] : memref<1x8x512xbf16, #tpu.memory_space<vmem>>, vector<1x8x512xbf16>
    %69 = vector.shape_cast %68 : vector<1x8x512xbf16> to vector<8x512xbf16>
    %70 = vector.shape_cast %67 : vector<8x512xbf16> to vector<1x8x512xbf16>
    tpu.vector_store %arg5[%c0_79, %c0_80, %c0_81], %70 {strides = array<i32>} : memref<1x8x512xbf16, #tpu.memory_space<vmem>>, vector<1x8x512xbf16>,
    return
  }
  func.func @transform_0(%arg0: i32) -> (i32, i32, i32) {
    %c0_i32 = arith.constant 0 : i32
    %c0_i32_0 = arith.constant 0 : i32
    %c0_i32_1 = arith.constant 0 : i32
    return %arg0, %c0_i32, %c0_i32_0 : i32, i32, i32
  }
  func.func @transform_1(%arg0: i32) -> (i32, i32, i32) {
    %c0_i32 = arith.constant 0 : i32
    %c0_i32_0 = arith.constant 0 : i32
    %c0_i32_1 = arith.constant 0 : i32
    %c0_i32_2 = arith.constant 0 : i32
    return %c0_i32, %c0_i32_0, %c0_i32_1 : i32, i32, i32
  }
  func.func @transform_2(%arg0: i32) -> (i32, i32) {
    %c0_i32 = arith.constant 0 : i32
    %c0_i32_0 = arith.constant 0 : i32
    %c0_i32_1 = arith.constant 0 : i32
    return %c0_i32, %c0_i32_0 : i32, i32
  }
  func.func @transform_3(%arg0: i32) -> (i32, i32) {
    %c0_i32 = arith.constant 0 : i32
    %c0_i32_0 = arith.constant 0 : i32
    %c0_i32_1 = arith.constant 0 : i32
    return %c0_i32, %c0_i32_0 : i32, i32
  }
  func.func @transform_4(%arg0: i32) -> (i32, i32, i32) {
    %c0_i32 = arith.constant 0 : i32
    %c0_i32_0 = arith.constant 0 : i32
    %c0_i32_1 = arith.constant 0 : i32
    return %arg0, %c0_i32, %c0_i32_0 : i32, i32, i32
  }
}

module attributes {stable_mosaic.version = 11 : i64} {
  func.func @_block_kernel(%arg0: i32, %arg1: memref<1x4x128xbf16, #tpu.memory_space<vmem>>, %arg2: memref<128x64xbf16, #tpu.memory_space<vmem>>, %arg3: memref<1x64xf32, #tpu.memory_space<vmem>>, %arg4: memref<1x64xf32, #tpu.memory_space<vmem>>, %arg5: memref<3x64x16xbf16, #tpu.memory_space<vmem>>, %arg6: memref<1x16xf32, #tpu.memory_space<vmem>>, %arg7: memref<1x16xf32, #tpu.memory_space<vmem>>, %arg8: memref<16x64xbf16, #tpu.memory_space<vmem>>, %arg9: memref<1x64xf32, #tpu.memory_space<vmem>>, %arg10: memref<1x64xf32, #tpu.memory_space<vmem>>, %arg11: memref<128x64xbf16, #tpu.memory_space<vmem>>, %arg12: memref<1x64xf32, #tpu.memory_space<vmem>>, %arg13: memref<1x64xf32, #tpu.memory_space<vmem>>, %arg14: memref<1x2x64xbf16, #tpu.memory_space<vmem>>, %arg15: memref<4x64xbf16, #tpu.memory_space<vmem>>, %arg16: memref<2x16xf32, #tpu.memory_space<vmem>>) attributes {dimension_semantics = [#tpu.dimension_semantics<parallel>], iteration_bounds = array<i64: 2>, scalar_prefetch = 0 : i64, scratch_operands = 2 : i64, tpu.core_type = #tpu.core_type<tc>, window_params = [{transform_indices = @transform_0, window_bounds = array<i64: 1, 4, 128>}, {pipeline_mode = #tpu.pipeline_mode<synchronous>, transform_indices = @transform_1, window_bounds = array<i64: 128, 64>}, {pipeline_mode = #tpu.pipeline_mode<synchronous>, transform_indices = @transform_2, window_bounds = array<i64: 1, 64>}, {pipeline_mode = #tpu.pipeline_mode<synchronous>, transform_indices = @transform_3, window_bounds = array<i64: 1, 64>}, {pipeline_mode = #tpu.pipeline_mode<synchronous>, transform_indices = @transform_4, window_bounds = array<i64: 3, 64, 16>}, {pipeline_mode = #tpu.pipeline_mode<synchronous>, transform_indices = @transform_5, window_bounds = array<i64: 1, 16>}, {pipeline_mode = #tpu.pipeline_mode<synchronous>, transform_indices = @transform_6, window_bounds = array<i64: 1, 16>}, {pipeline_mode = #tpu.pipeline_mode<synchronous>, transform_indices = @transform_7, window_bounds = array<i64: 16, 64>}, {pipeline_mode = #tpu.pipeline_mode<synchronous>, transform_indices = @transform_8, window_bounds = array<i64: 1, 64>}, {pipeline_mode = #tpu.pipeline_mode<synchronous>, transform_indices = @transform_9, window_bounds = array<i64: 1, 64>}, {pipeline_mode = #tpu.pipeline_mode<synchronous>, transform_indices = @transform_10, window_bounds = array<i64: 128, 64>}, {pipeline_mode = #tpu.pipeline_mode<synchronous>, transform_indices = @transform_11, window_bounds = array<i64: 1, 64>}, {pipeline_mode = #tpu.pipeline_mode<synchronous>, transform_indices = @transform_12, window_bounds = array<i64: 1, 64>}, {transform_indices = @transform_13, window_bounds = array<i64: 1, 2, 64>}]} {
    %c0 = arith.constant 0 : index
    %c0_0 = arith.constant 0 : index
    %c0_1 = arith.constant 0 : index
    %0 = vector.load %arg1[%c0, %c0_0, %c0_1] : memref<1x4x128xbf16, #tpu.memory_space<vmem>>, vector<1x4x128xbf16>
    %1 = vector.shape_cast %0 : vector<1x4x128xbf16> to vector<4x128xbf16>
    %c0_2 = arith.constant 0 : index
    %c0_3 = arith.constant 0 : index
    %2 = vector.load %arg2[%c0_2, %c0_3] : memref<128x64xbf16, #tpu.memory_space<vmem>>, vector<128x64xbf16>
    %cst = arith.constant dense<0.000000e+00> : vector<4x64xf32>
    %3 = tpu.matmul %1, %2, %cst {dimension_numbers = #tpu.dot_dimension_numbers<[1], [0], [0], [1], [0, 0, 1, 1], [], []>} : vector<4x128xbf16>, vector<128x64xbf16>, vector<4x64xf32> -> vector<4x64xf32>
    %c0_4 = arith.constant 0 : index
    %c0_5 = arith.constant 0 : index
    %4 = vector.load %arg3[%c0_4, %c0_5] : memref<1x64xf32, #tpu.memory_space<vmem>>, vector<1x64xf32>
    %5 = vector.broadcast %4 : vector<1x64xf32> to vector<4x64xf32>
    %6 = arith.mulf %3, %5 : vector<4x64xf32>
    %c0_6 = arith.constant 0 : index
    %c0_7 = arith.constant 0 : index
    %7 = vector.load %arg4[%c0_6, %c0_7] : memref<1x64xf32, #tpu.memory_space<vmem>>, vector<1x64xf32>
    %8 = vector.broadcast %7 : vector<1x64xf32> to vector<4x64xf32>
    %9 = arith.addf %6, %8 : vector<4x64xf32>
    %cst_8 = arith.constant 0.000000e+00 : f32
    %10 = vector.broadcast %cst_8 : f32 to vector<4x64xf32>
    %11 = arith.maximumf %9, %10 : vector<4x64xf32>
    %12 = arith.truncf %11 : vector<4x64xf32> to vector<4x64xbf16>
    %c0_9 = arith.constant 0 : index
    %c0_10 = arith.constant 0 : index
    %13 = vector.load %arg15[%c0_9, %c0_10] : memref<4x64xbf16, #tpu.memory_space<vmem>>, vector<4x64xbf16>
    tpu.vector_store %arg15[%c0_9, %c0_10], %12 {strides = array<i32>} : memref<4x64xbf16, #tpu.memory_space<vmem>>, vector<4x64xbf16>,
    %cst_11 = arith.constant 0.000000e+00 : f32
    %14 = vector.broadcast %cst_11 : f32 to vector<2x16xf32>
    %c0_12 = arith.constant 0 : index
    %c0_13 = arith.constant 0 : index
    %15 = vector.load %arg16[%c0_12, %c0_13] : memref<2x16xf32, #tpu.memory_space<vmem>>, vector<2x16xf32>
    tpu.vector_store %arg16[%c0_12, %c0_13], %14 {strides = array<i32>} : memref<2x16xf32, #tpu.memory_space<vmem>>, vector<2x16xf32>,
    %c1 = arith.constant 1 : index
    %c0_14 = arith.constant 0 : index
    %16 = vector.load %arg16[%c1, %c0_14] : memref<2x16xf32, #tpu.memory_space<vmem>>, vector<1x16xf32>
    %c0_15 = arith.constant 0 : index
    %c0_16 = arith.constant 0 : index
    %17 = vector.load %arg15[%c0_15, %c0_16] : memref<4x64xbf16, #tpu.memory_space<vmem>>, vector<1x64xbf16>
    %c0_17 = arith.constant 0 : index
    %c0_18 = arith.constant 0 : index
    %c0_19 = arith.constant 0 : index
    %18 = vector.load %arg5[%c0_17, %c0_18, %c0_19] : memref<3x64x16xbf16, #tpu.memory_space<vmem>>, vector<1x64x16xbf16>
    %19 = vector.shape_cast %18 : vector<1x64x16xbf16> to vector<64x16xbf16>
    %cst_20 = arith.constant dense<0.000000e+00> : vector<1x16xf32>
    %20 = tpu.matmul %17, %19, %cst_20 {dimension_numbers = #tpu.dot_dimension_numbers<[1], [0], [0], [1], [0, 0, 1, 1], [], []>} : vector<1x64xbf16>, vector<64x16xbf16>, vector<1x16xf32> -> vector<1x16xf32>
    %21 = arith.addf %16, %20 : vector<1x16xf32>
    %c1_21 = arith.constant 1 : index
    %c0_22 = arith.constant 0 : index
    %22 = vector.load %arg16[%c1_21, %c0_22] : memref<2x16xf32, #tpu.memory_space<vmem>>, vector<1x16xf32>
    tpu.vector_store %arg16[%c1_21, %c0_22], %21 {strides = array<i32>} : memref<2x16xf32, #tpu.memory_space<vmem>>, vector<1x16xf32>,
    %c0_23 = arith.constant 0 : index
    %c0_24 = arith.constant 0 : index
    %23 = vector.load %arg16[%c0_23, %c0_24] : memref<2x16xf32, #tpu.memory_space<vmem>>, vector<2x16xf32>
    %c0_25 = arith.constant 0 : index
    %c0_26 = arith.constant 0 : index
    %24 = vector.load %arg15[%c0_25, %c0_26] : memref<4x64xbf16, #tpu.memory_space<vmem>>, vector<1x64xbf16>
    %c2 = arith.constant 2 : index
    %c0_27 = arith.constant 0 : index
    %25 = vector.load %arg15[%c2, %c0_27] : memref<4x64xbf16, #tpu.memory_space<vmem>>, vector<1x64xbf16>
    %26 = tpu.concatenate %24, %25 in 0 : vector<1x64xbf16>, vector<1x64xbf16> -> vector<2x64xbf16>
    %c1_28 = arith.constant 1 : index
    %c0_29 = arith.constant 0 : index
    %c0_30 = arith.constant 0 : index
    %27 = vector.load %arg5[%c1_28, %c0_29, %c0_30] : memref<3x64x16xbf16, #tpu.memory_space<vmem>>, vector<1x64x16xbf16>
    %28 = vector.shape_cast %27 : vector<1x64x16xbf16> to vector<64x16xbf16>
    %cst_31 = arith.constant dense<0.000000e+00> : vector<2x16xf32>
    %29 = tpu.matmul %26, %28, %cst_31 {dimension_numbers = #tpu.dot_dimension_numbers<[1], [0], [0], [1], [0, 0, 1, 1], [], []>} : vector<2x64xbf16>, vector<64x16xbf16>, vector<2x16xf32> -> vector<2x16xf32>
    %30 = arith.addf %23, %29 : vector<2x16xf32>
    %c0_32 = arith.constant 0 : index
    %c0_33 = arith.constant 0 : index
    %31 = vector.load %arg16[%c0_32, %c0_33] : memref<2x16xf32, #tpu.memory_space<vmem>>, vector<2x16xf32>
    tpu.vector_store %arg16[%c0_32, %c0_33], %30 {strides = array<i32>} : memref<2x16xf32, #tpu.memory_space<vmem>>, vector<2x16xf32>,
    %c0_34 = arith.constant 0 : index
    %c0_35 = arith.constant 0 : index
    %32 = vector.load %arg16[%c0_34, %c0_35] : memref<2x16xf32, #tpu.memory_space<vmem>>, vector<1x16xf32>
    %c2_36 = arith.constant 2 : index
    %c0_37 = arith.constant 0 : index
    %33 = vector.load %arg15[%c2_36, %c0_37] : memref<4x64xbf16, #tpu.memory_space<vmem>>, vector<1x64xbf16>
    %c2_38 = arith.constant 2 : index
    %c0_39 = arith.constant 0 : index
    %c0_40 = arith.constant 0 : index
    %34 = vector.load %arg5[%c2_38, %c0_39, %c0_40] : memref<3x64x16xbf16, #tpu.memory_space<vmem>>, vector<1x64x16xbf16>
    %35 = vector.shape_cast %34 : vector<1x64x16xbf16> to vector<64x16xbf16>
    %cst_41 = arith.constant dense<0.000000e+00> : vector<1x16xf32>
    %36 = tpu.matmul %33, %35, %cst_41 {dimension_numbers = #tpu.dot_dimension_numbers<[1], [0], [0], [1], [0, 0, 1, 1], [], []>} : vector<1x64xbf16>, vector<64x16xbf16>, vector<1x16xf32> -> vector<1x16xf32>
    %37 = arith.addf %32, %36 : vector<1x16xf32>
    %c0_42 = arith.constant 0 : index
    %c0_43 = arith.constant 0 : index
    %38 = vector.load %arg16[%c0_42, %c0_43] : memref<2x16xf32, #tpu.memory_space<vmem>>, vector<1x16xf32>
    tpu.vector_store %arg16[%c0_42, %c0_43], %37 {strides = array<i32>} : memref<2x16xf32, #tpu.memory_space<vmem>>, vector<1x16xf32>,
    %c0_44 = arith.constant 0 : index
    %c0_45 = arith.constant 0 : index
    %39 = vector.load %arg16[%c0_44, %c0_45] : memref<2x16xf32, #tpu.memory_space<vmem>>, vector<2x16xf32>
    %c0_46 = arith.constant 0 : index
    %c0_47 = arith.constant 0 : index
    %40 = vector.load %arg6[%c0_46, %c0_47] : memref<1x16xf32, #tpu.memory_space<vmem>>, vector<1x16xf32>
    %41 = vector.broadcast %40 : vector<1x16xf32> to vector<2x16xf32>
    %42 = arith.mulf %39, %41 : vector<2x16xf32>
    %c0_48 = arith.constant 0 : index
    %c0_49 = arith.constant 0 : index
    %43 = vector.load %arg7[%c0_48, %c0_49] : memref<1x16xf32, #tpu.memory_space<vmem>>, vector<1x16xf32>
    %44 = vector.broadcast %43 : vector<1x16xf32> to vector<2x16xf32>
    %45 = arith.addf %42, %44 : vector<2x16xf32>
    %cst_50 = arith.constant 0.000000e+00 : f32
    %46 = vector.broadcast %cst_50 : f32 to vector<2x16xf32>
    %47 = arith.maximumf %45, %46 : vector<2x16xf32>
    %48 = arith.truncf %47 : vector<2x16xf32> to vector<2x16xbf16>
    %c0_51 = arith.constant 0 : index
    %c0_52 = arith.constant 0 : index
    %49 = vector.load %arg8[%c0_51, %c0_52] : memref<16x64xbf16, #tpu.memory_space<vmem>>, vector<16x64xbf16>
    %cst_53 = arith.constant dense<0.000000e+00> : vector<2x64xf32>
    %50 = tpu.matmul %48, %49, %cst_53 {dimension_numbers = #tpu.dot_dimension_numbers<[1], [0], [0], [1], [0, 0, 1, 1], [], []>} : vector<2x16xbf16>, vector<16x64xbf16>, vector<2x64xf32> -> vector<2x64xf32>
    %c0_54 = arith.constant 0 : index
    %c0_55 = arith.constant 0 : index
    %51 = vector.load %arg9[%c0_54, %c0_55] : memref<1x64xf32, #tpu.memory_space<vmem>>, vector<1x64xf32>
    %52 = vector.broadcast %51 : vector<1x64xf32> to vector<2x64xf32>
    %53 = arith.mulf %50, %52 : vector<2x64xf32>
    %c0_56 = arith.constant 0 : index
    %c0_57 = arith.constant 0 : index
    %54 = vector.load %arg10[%c0_56, %c0_57] : memref<1x64xf32, #tpu.memory_space<vmem>>, vector<1x64xf32>
    %55 = vector.broadcast %54 : vector<1x64xf32> to vector<2x64xf32>
    %56 = arith.addf %53, %55 : vector<2x64xf32>
    %c0_58 = arith.constant 0 : index
    %c0_59 = arith.constant 0 : index
    %c0_60 = arith.constant 0 : index
    %57 = vector.load %arg1[%c0_58, %c0_59, %c0_60] : memref<1x4x128xbf16, #tpu.memory_space<vmem>>, vector<1x1x128xbf16>
    %58 = vector.shape_cast %57 : vector<1x1x128xbf16> to vector<1x128xbf16>
    %c0_61 = arith.constant 0 : index
    %c2_62 = arith.constant 2 : index
    %c0_63 = arith.constant 0 : index
    %59 = vector.load %arg1[%c0_61, %c2_62, %c0_63] : memref<1x4x128xbf16, #tpu.memory_space<vmem>>, vector<1x1x128xbf16>
    %60 = vector.shape_cast %59 : vector<1x1x128xbf16> to vector<1x128xbf16>
    %61 = tpu.concatenate %58, %60 in 0 : vector<1x128xbf16>, vector<1x128xbf16> -> vector<2x128xbf16>
    %c0_64 = arith.constant 0 : index
    %c0_65 = arith.constant 0 : index
    %62 = vector.load %arg11[%c0_64, %c0_65] : memref<128x64xbf16, #tpu.memory_space<vmem>>, vector<128x64xbf16>
    %cst_66 = arith.constant dense<0.000000e+00> : vector<2x64xf32>
    %63 = tpu.matmul %61, %62, %cst_66 {dimension_numbers = #tpu.dot_dimension_numbers<[1], [0], [0], [1], [0, 0, 1, 1], [], []>} : vector<2x128xbf16>, vector<128x64xbf16>, vector<2x64xf32> -> vector<2x64xf32>
    %c0_67 = arith.constant 0 : index
    %c0_68 = arith.constant 0 : index
    %64 = vector.load %arg12[%c0_67, %c0_68] : memref<1x64xf32, #tpu.memory_space<vmem>>, vector<1x64xf32>
    %65 = vector.broadcast %64 : vector<1x64xf32> to vector<2x64xf32>
    %66 = arith.mulf %63, %65 : vector<2x64xf32>
    %c0_69 = arith.constant 0 : index
    %c0_70 = arith.constant 0 : index
    %67 = vector.load %arg13[%c0_69, %c0_70] : memref<1x64xf32, #tpu.memory_space<vmem>>, vector<1x64xf32>
    %68 = vector.broadcast %67 : vector<1x64xf32> to vector<2x64xf32>
    %69 = arith.addf %66, %68 : vector<2x64xf32>
    %70 = arith.addf %56, %69 : vector<2x64xf32>
    %cst_71 = arith.constant 0.000000e+00 : f32
    %71 = vector.broadcast %cst_71 : f32 to vector<2x64xf32>
    %72 = arith.maximumf %70, %71 : vector<2x64xf32>
    %73 = arith.truncf %72 : vector<2x64xf32> to vector<2x64xbf16>
    %c0_72 = arith.constant 0 : index
    %c0_73 = arith.constant 0 : index
    %c0_74 = arith.constant 0 : index
    %74 = vector.load %arg14[%c0_72, %c0_73, %c0_74] : memref<1x2x64xbf16, #tpu.memory_space<vmem>>, vector<1x2x64xbf16>
    %75 = vector.shape_cast %74 : vector<1x2x64xbf16> to vector<2x64xbf16>
    %76 = vector.shape_cast %73 : vector<2x64xbf16> to vector<1x2x64xbf16>
    tpu.vector_store %arg14[%c0_72, %c0_73, %c0_74], %76 {strides = array<i32>} : memref<1x2x64xbf16, #tpu.memory_space<vmem>>, vector<1x2x64xbf16>,
    return
  }
  func.func @transform_0(%arg0: i32) -> (i32, i32, i32) {
    %c0_i32 = arith.constant 0 : i32
    %c0_i32_0 = arith.constant 0 : i32
    %c0_i32_1 = arith.constant 0 : i32
    return %arg0, %c0_i32, %c0_i32_0 : i32, i32, i32
  }
  func.func @transform_1(%arg0: i32) -> (i32, i32) {
    %c0_i32 = arith.constant 0 : i32
    %c0_i32_0 = arith.constant 0 : i32
    %c0_i32_1 = arith.constant 0 : i32
    return %c0_i32, %c0_i32_0 : i32, i32
  }
  func.func @transform_2(%arg0: i32) -> (i32, i32) {
    %c0_i32 = arith.constant 0 : i32
    %c0_i32_0 = arith.constant 0 : i32
    %c0_i32_1 = arith.constant 0 : i32
    return %c0_i32, %c0_i32_0 : i32, i32
  }
  func.func @transform_3(%arg0: i32) -> (i32, i32) {
    %c0_i32 = arith.constant 0 : i32
    %c0_i32_0 = arith.constant 0 : i32
    %c0_i32_1 = arith.constant 0 : i32
    return %c0_i32, %c0_i32_0 : i32, i32
  }
  func.func @transform_4(%arg0: i32) -> (i32, i32, i32) {
    %c0_i32 = arith.constant 0 : i32
    %c0_i32_0 = arith.constant 0 : i32
    %c0_i32_1 = arith.constant 0 : i32
    %c0_i32_2 = arith.constant 0 : i32
    return %c0_i32, %c0_i32_0, %c0_i32_1 : i32, i32, i32
  }
  func.func @transform_5(%arg0: i32) -> (i32, i32) {
    %c0_i32 = arith.constant 0 : i32
    %c0_i32_0 = arith.constant 0 : i32
    %c0_i32_1 = arith.constant 0 : i32
    return %c0_i32, %c0_i32_0 : i32, i32
  }
  func.func @transform_6(%arg0: i32) -> (i32, i32) {
    %c0_i32 = arith.constant 0 : i32
    %c0_i32_0 = arith.constant 0 : i32
    %c0_i32_1 = arith.constant 0 : i32
    return %c0_i32, %c0_i32_0 : i32, i32
  }
  func.func @transform_7(%arg0: i32) -> (i32, i32) {
    %c0_i32 = arith.constant 0 : i32
    %c0_i32_0 = arith.constant 0 : i32
    %c0_i32_1 = arith.constant 0 : i32
    return %c0_i32, %c0_i32_0 : i32, i32
  }
  func.func @transform_8(%arg0: i32) -> (i32, i32) {
    %c0_i32 = arith.constant 0 : i32
    %c0_i32_0 = arith.constant 0 : i32
    %c0_i32_1 = arith.constant 0 : i32
    return %c0_i32, %c0_i32_0 : i32, i32
  }
  func.func @transform_9(%arg0: i32) -> (i32, i32) {
    %c0_i32 = arith.constant 0 : i32
    %c0_i32_0 = arith.constant 0 : i32
    %c0_i32_1 = arith.constant 0 : i32
    return %c0_i32, %c0_i32_0 : i32, i32
  }
  func.func @transform_10(%arg0: i32) -> (i32, i32) {
    %c0_i32 = arith.constant 0 : i32
    %c0_i32_0 = arith.constant 0 : i32
    %c0_i32_1 = arith.constant 0 : i32
    return %c0_i32, %c0_i32_0 : i32, i32
  }
  func.func @transform_11(%arg0: i32) -> (i32, i32) {
    %c0_i32 = arith.constant 0 : i32
    %c0_i32_0 = arith.constant 0 : i32
    %c0_i32_1 = arith.constant 0 : i32
    return %c0_i32, %c0_i32_0 : i32, i32
  }
  func.func @transform_12(%arg0: i32) -> (i32, i32) {
    %c0_i32 = arith.constant 0 : i32
    %c0_i32_0 = arith.constant 0 : i32
    %c0_i32_1 = arith.constant 0 : i32
    return %c0_i32, %c0_i32_0 : i32, i32
  }
  func.func @transform_13(%arg0: i32) -> (i32, i32, i32) {
    %c0_i32 = arith.constant 0 : i32
    %c0_i32_0 = arith.constant 0 : i32
    %c0_i32_1 = arith.constant 0 : i32
    return %arg0, %c0_i32, %c0_i32_0 : i32, i32, i32
  }
}

module attributes {stable_mosaic.version = 11 : i64} {
  func.func @_block_kernel(%arg0: i32, %arg1: memref<1x8x512xbf16, #tpu.memory_space<vmem>>, %arg2: memref<512x128xbf16, #tpu.memory_space<vmem>>, %arg3: memref<1x128xf32, #tpu.memory_space<vmem>>, %arg4: memref<1x128xf32, #tpu.memory_space<vmem>>, %arg5: memref<3x128x32xbf16, #tpu.memory_space<vmem>>, %arg6: memref<1x32xf32, #tpu.memory_space<vmem>>, %arg7: memref<1x32xf32, #tpu.memory_space<vmem>>, %arg8: memref<32x128xbf16, #tpu.memory_space<vmem>>, %arg9: memref<1x128xf32, #tpu.memory_space<vmem>>, %arg10: memref<1x128xf32, #tpu.memory_space<vmem>>, %arg11: memref<512x128xbf16, #tpu.memory_space<vmem>>, %arg12: memref<1x128xf32, #tpu.memory_space<vmem>>, %arg13: memref<1x128xf32, #tpu.memory_space<vmem>>, %arg14: memref<1x4x128xbf16, #tpu.memory_space<vmem>>, %arg15: memref<8x128xbf16, #tpu.memory_space<vmem>>, %arg16: memref<4x32xf32, #tpu.memory_space<vmem>>) attributes {dimension_semantics = [#tpu.dimension_semantics<parallel>], iteration_bounds = array<i64: 2>, scalar_prefetch = 0 : i64, scratch_operands = 2 : i64, tpu.core_type = #tpu.core_type<tc>, window_params = [{transform_indices = @transform_0, window_bounds = array<i64: 1, 8, 512>}, {pipeline_mode = #tpu.pipeline_mode<synchronous>, transform_indices = @transform_1, window_bounds = array<i64: 512, 128>}, {pipeline_mode = #tpu.pipeline_mode<synchronous>, transform_indices = @transform_2, window_bounds = array<i64: 1, 128>}, {pipeline_mode = #tpu.pipeline_mode<synchronous>, transform_indices = @transform_3, window_bounds = array<i64: 1, 128>}, {pipeline_mode = #tpu.pipeline_mode<synchronous>, transform_indices = @transform_4, window_bounds = array<i64: 3, 128, 32>}, {pipeline_mode = #tpu.pipeline_mode<synchronous>, transform_indices = @transform_5, window_bounds = array<i64: 1, 32>}, {pipeline_mode = #tpu.pipeline_mode<synchronous>, transform_indices = @transform_6, window_bounds = array<i64: 1, 32>}, {pipeline_mode = #tpu.pipeline_mode<synchronous>, transform_indices = @transform_7, window_bounds = array<i64: 32, 128>}, {pipeline_mode = #tpu.pipeline_mode<synchronous>, transform_indices = @transform_8, window_bounds = array<i64: 1, 128>}, {pipeline_mode = #tpu.pipeline_mode<synchronous>, transform_indices = @transform_9, window_bounds = array<i64: 1, 128>}, {pipeline_mode = #tpu.pipeline_mode<synchronous>, transform_indices = @transform_10, window_bounds = array<i64: 512, 128>}, {pipeline_mode = #tpu.pipeline_mode<synchronous>, transform_indices = @transform_11, window_bounds = array<i64: 1, 128>}, {pipeline_mode = #tpu.pipeline_mode<synchronous>, transform_indices = @transform_12, window_bounds = array<i64: 1, 128>}, {transform_indices = @transform_13, window_bounds = array<i64: 1, 4, 128>}]} {
    %c0 = arith.constant 0 : index
    %c0_0 = arith.constant 0 : index
    %c0_1 = arith.constant 0 : index
    %0 = vector.load %arg1[%c0, %c0_0, %c0_1] : memref<1x8x512xbf16, #tpu.memory_space<vmem>>, vector<1x8x512xbf16>
    %1 = vector.shape_cast %0 : vector<1x8x512xbf16> to vector<8x512xbf16>
    %c0_2 = arith.constant 0 : index
    %c0_3 = arith.constant 0 : index
    %2 = vector.load %arg2[%c0_2, %c0_3] : memref<512x128xbf16, #tpu.memory_space<vmem>>, vector<512x128xbf16>
    %cst = arith.constant dense<0.000000e+00> : vector<8x128xf32>
    %3 = tpu.matmul %1, %2, %cst {dimension_numbers = #tpu.dot_dimension_numbers<[1], [0], [0], [1], [0, 0, 1, 1], [], []>} : vector<8x512xbf16>, vector<512x128xbf16>, vector<8x128xf32> -> vector<8x128xf32>
    %c0_4 = arith.constant 0 : index
    %c0_5 = arith.constant 0 : index
    %4 = vector.load %arg3[%c0_4, %c0_5] : memref<1x128xf32, #tpu.memory_space<vmem>>, vector<1x128xf32>
    %5 = vector.broadcast %4 : vector<1x128xf32> to vector<8x128xf32>
    %6 = arith.mulf %3, %5 : vector<8x128xf32>
    %c0_6 = arith.constant 0 : index
    %c0_7 = arith.constant 0 : index
    %7 = vector.load %arg4[%c0_6, %c0_7] : memref<1x128xf32, #tpu.memory_space<vmem>>, vector<1x128xf32>
    %8 = vector.broadcast %7 : vector<1x128xf32> to vector<8x128xf32>
    %9 = arith.addf %6, %8 : vector<8x128xf32>
    %cst_8 = arith.constant 0.000000e+00 : f32
    %10 = vector.broadcast %cst_8 : f32 to vector<8x128xf32>
    %11 = arith.maximumf %9, %10 : vector<8x128xf32>
    %12 = arith.truncf %11 : vector<8x128xf32> to vector<8x128xbf16>
    %c0_9 = arith.constant 0 : index
    %c0_10 = arith.constant 0 : index
    %13 = vector.load %arg15[%c0_9, %c0_10] : memref<8x128xbf16, #tpu.memory_space<vmem>>, vector<8x128xbf16>
    tpu.vector_store %arg15[%c0_9, %c0_10], %12 {strides = array<i32>} : memref<8x128xbf16, #tpu.memory_space<vmem>>, vector<8x128xbf16>,
    %cst_11 = arith.constant 0.000000e+00 : f32
    %14 = vector.broadcast %cst_11 : f32 to vector<4x32xf32>
    %c0_12 = arith.constant 0 : index
    %c0_13 = arith.constant 0 : index
    %15 = vector.load %arg16[%c0_12, %c0_13] : memref<4x32xf32, #tpu.memory_space<vmem>>, vector<4x32xf32>
    tpu.vector_store %arg16[%c0_12, %c0_13], %14 {strides = array<i32>} : memref<4x32xf32, #tpu.memory_space<vmem>>, vector<4x32xf32>,
    %c1 = arith.constant 1 : index
    %c0_14 = arith.constant 0 : index
    %16 = vector.load %arg16[%c1, %c0_14] : memref<4x32xf32, #tpu.memory_space<vmem>>, vector<3x32xf32>
    %c1_15 = arith.constant 1 : index
    %c0_16 = arith.constant 0 : index
    %17 = vector.load %arg15[%c1_15, %c0_16] : memref<8x128xbf16, #tpu.memory_space<vmem>>, vector<1x128xbf16>
    %c3 = arith.constant 3 : index
    %c0_17 = arith.constant 0 : index
    %18 = vector.load %arg15[%c3, %c0_17] : memref<8x128xbf16, #tpu.memory_space<vmem>>, vector<1x128xbf16>
    %c5 = arith.constant 5 : index
    %c0_18 = arith.constant 0 : index
    %19 = vector.load %arg15[%c5, %c0_18] : memref<8x128xbf16, #tpu.memory_space<vmem>>, vector<1x128xbf16>
    %20 = tpu.concatenate %17, %18, %19 in 0 : vector<1x128xbf16>, vector<1x128xbf16>, vector<1x128xbf16> -> vector<3x128xbf16>
    %c0_19 = arith.constant 0 : index
    %c0_20 = arith.constant 0 : index
    %c0_21 = arith.constant 0 : index
    %21 = vector.load %arg5[%c0_19, %c0_20, %c0_21] : memref<3x128x32xbf16, #tpu.memory_space<vmem>>, vector<1x128x32xbf16>
    %22 = vector.shape_cast %21 : vector<1x128x32xbf16> to vector<128x32xbf16>
    %cst_22 = arith.constant dense<0.000000e+00> : vector<3x32xf32>
    %23 = tpu.matmul %20, %22, %cst_22 {dimension_numbers = #tpu.dot_dimension_numbers<[1], [0], [0], [1], [0, 0, 1, 1], [], []>} : vector<3x128xbf16>, vector<128x32xbf16>, vector<3x32xf32> -> vector<3x32xf32>
    %24 = arith.addf %16, %23 : vector<3x32xf32>
    %c1_23 = arith.constant 1 : index
    %c0_24 = arith.constant 0 : index
    %25 = vector.load %arg16[%c1_23, %c0_24] : memref<4x32xf32, #tpu.memory_space<vmem>>, vector<3x32xf32>
    tpu.vector_store %arg16[%c1_23, %c0_24], %24 {strides = array<i32>} : memref<4x32xf32, #tpu.memory_space<vmem>>, vector<3x32xf32>,
    %c0_25 = arith.constant 0 : index
    %c0_26 = arith.constant 0 : index
    %26 = vector.load %arg16[%c0_25, %c0_26] : memref<4x32xf32, #tpu.memory_space<vmem>>, vector<4x32xf32>
    %c0_27 = arith.constant 0 : index
    %c0_28 = arith.constant 0 : index
    %27 = vector.load %arg15[%c0_27, %c0_28] : memref<8x128xbf16, #tpu.memory_space<vmem>>, vector<1x128xbf16>
    %c2 = arith.constant 2 : index
    %c0_29 = arith.constant 0 : index
    %28 = vector.load %arg15[%c2, %c0_29] : memref<8x128xbf16, #tpu.memory_space<vmem>>, vector<1x128xbf16>
    %c4 = arith.constant 4 : index
    %c0_30 = arith.constant 0 : index
    %29 = vector.load %arg15[%c4, %c0_30] : memref<8x128xbf16, #tpu.memory_space<vmem>>, vector<1x128xbf16>
    %c6 = arith.constant 6 : index
    %c0_31 = arith.constant 0 : index
    %30 = vector.load %arg15[%c6, %c0_31] : memref<8x128xbf16, #tpu.memory_space<vmem>>, vector<1x128xbf16>
    %31 = tpu.concatenate %27, %28, %29, %30 in 0 : vector<1x128xbf16>, vector<1x128xbf16>, vector<1x128xbf16>, vector<1x128xbf16> -> vector<4x128xbf16>
    %c1_32 = arith.constant 1 : index
    %c0_33 = arith.constant 0 : index
    %c0_34 = arith.constant 0 : index
    %32 = vector.load %arg5[%c1_32, %c0_33, %c0_34] : memref<3x128x32xbf16, #tpu.memory_space<vmem>>, vector<1x128x32xbf16>
    %33 = vector.shape_cast %32 : vector<1x128x32xbf16> to vector<128x32xbf16>
    %cst_35 = arith.constant dense<0.000000e+00> : vector<4x32xf32>
    %34 = tpu.matmul %31, %33, %cst_35 {dimension_numbers = #tpu.dot_dimension_numbers<[1], [0], [0], [1], [0, 0, 1, 1], [], []>} : vector<4x128xbf16>, vector<128x32xbf16>, vector<4x32xf32> -> vector<4x32xf32>
    %35 = arith.addf %26, %34 : vector<4x32xf32>
    %c0_36 = arith.constant 0 : index
    %c0_37 = arith.constant 0 : index
    %36 = vector.load %arg16[%c0_36, %c0_37] : memref<4x32xf32, #tpu.memory_space<vmem>>, vector<4x32xf32>
    tpu.vector_store %arg16[%c0_36, %c0_37], %35 {strides = array<i32>} : memref<4x32xf32, #tpu.memory_space<vmem>>, vector<4x32xf32>,
    %c0_38 = arith.constant 0 : index
    %c0_39 = arith.constant 0 : index
    %37 = vector.load %arg16[%c0_38, %c0_39] : memref<4x32xf32, #tpu.memory_space<vmem>>, vector<4x32xf32>
    %c1_40 = arith.constant 1 : index
    %c0_41 = arith.constant 0 : index
    %38 = vector.load %arg15[%c1_40, %c0_41] : memref<8x128xbf16, #tpu.memory_space<vmem>>, vector<1x128xbf16>
    %c3_42 = arith.constant 3 : index
    %c0_43 = arith.constant 0 : index
    %39 = vector.load %arg15[%c3_42, %c0_43] : memref<8x128xbf16, #tpu.memory_space<vmem>>, vector<1x128xbf16>
    %c5_44 = arith.constant 5 : index
    %c0_45 = arith.constant 0 : index
    %40 = vector.load %arg15[%c5_44, %c0_45] : memref<8x128xbf16, #tpu.memory_space<vmem>>, vector<1x128xbf16>
    %c7 = arith.constant 7 : index
    %c0_46 = arith.constant 0 : index
    %41 = vector.load %arg15[%c7, %c0_46] : memref<8x128xbf16, #tpu.memory_space<vmem>>, vector<1x128xbf16>
    %42 = tpu.concatenate %38, %39, %40, %41 in 0 : vector<1x128xbf16>, vector<1x128xbf16>, vector<1x128xbf16>, vector<1x128xbf16> -> vector<4x128xbf16>
    %c2_47 = arith.constant 2 : index
    %c0_48 = arith.constant 0 : index
    %c0_49 = arith.constant 0 : index
    %43 = vector.load %arg5[%c2_47, %c0_48, %c0_49] : memref<3x128x32xbf16, #tpu.memory_space<vmem>>, vector<1x128x32xbf16>
    %44 = vector.shape_cast %43 : vector<1x128x32xbf16> to vector<128x32xbf16>
    %cst_50 = arith.constant dense<0.000000e+00> : vector<4x32xf32>
    %45 = tpu.matmul %42, %44, %cst_50 {dimension_numbers = #tpu.dot_dimension_numbers<[1], [0], [0], [1], [0, 0, 1, 1], [], []>} : vector<4x128xbf16>, vector<128x32xbf16>, vector<4x32xf32> -> vector<4x32xf32>
    %46 = arith.addf %37, %45 : vector<4x32xf32>
    %c0_51 = arith.constant 0 : index
    %c0_52 = arith.constant 0 : index
    %47 = vector.load %arg16[%c0_51, %c0_52] : memref<4x32xf32, #tpu.memory_space<vmem>>, vector<4x32xf32>
    tpu.vector_store %arg16[%c0_51, %c0_52], %46 {strides = array<i32>} : memref<4x32xf32, #tpu.memory_space<vmem>>, vector<4x32xf32>,
    %c0_53 = arith.constant 0 : index
    %c0_54 = arith.constant 0 : index
    %48 = vector.load %arg16[%c0_53, %c0_54] : memref<4x32xf32, #tpu.memory_space<vmem>>, vector<4x32xf32>
    %c0_55 = arith.constant 0 : index
    %c0_56 = arith.constant 0 : index
    %49 = vector.load %arg6[%c0_55, %c0_56] : memref<1x32xf32, #tpu.memory_space<vmem>>, vector<1x32xf32>
    %50 = vector.broadcast %49 : vector<1x32xf32> to vector<4x32xf32>
    %51 = arith.mulf %48, %50 : vector<4x32xf32>
    %c0_57 = arith.constant 0 : index
    %c0_58 = arith.constant 0 : index
    %52 = vector.load %arg7[%c0_57, %c0_58] : memref<1x32xf32, #tpu.memory_space<vmem>>, vector<1x32xf32>
    %53 = vector.broadcast %52 : vector<1x32xf32> to vector<4x32xf32>
    %54 = arith.addf %51, %53 : vector<4x32xf32>
    %cst_59 = arith.constant 0.000000e+00 : f32
    %55 = vector.broadcast %cst_59 : f32 to vector<4x32xf32>
    %56 = arith.maximumf %54, %55 : vector<4x32xf32>
    %57 = arith.truncf %56 : vector<4x32xf32> to vector<4x32xbf16>
    %c0_60 = arith.constant 0 : index
    %c0_61 = arith.constant 0 : index
    %58 = vector.load %arg8[%c0_60, %c0_61] : memref<32x128xbf16, #tpu.memory_space<vmem>>, vector<32x128xbf16>
    %cst_62 = arith.constant dense<0.000000e+00> : vector<4x128xf32>
    %59 = tpu.matmul %57, %58, %cst_62 {dimension_numbers = #tpu.dot_dimension_numbers<[1], [0], [0], [1], [0, 0, 1, 1], [], []>} : vector<4x32xbf16>, vector<32x128xbf16>, vector<4x128xf32> -> vector<4x128xf32>
    %c0_63 = arith.constant 0 : index
    %c0_64 = arith.constant 0 : index
    %60 = vector.load %arg9[%c0_63, %c0_64] : memref<1x128xf32, #tpu.memory_space<vmem>>, vector<1x128xf32>
    %61 = vector.broadcast %60 : vector<1x128xf32> to vector<4x128xf32>
    %62 = arith.mulf %59, %61 : vector<4x128xf32>
    %c0_65 = arith.constant 0 : index
    %c0_66 = arith.constant 0 : index
    %63 = vector.load %arg10[%c0_65, %c0_66] : memref<1x128xf32, #tpu.memory_space<vmem>>, vector<1x128xf32>
    %64 = vector.broadcast %63 : vector<1x128xf32> to vector<4x128xf32>
    %65 = arith.addf %62, %64 : vector<4x128xf32>
    %c0_67 = arith.constant 0 : index
    %c0_68 = arith.constant 0 : index
    %c0_69 = arith.constant 0 : index
    %66 = vector.load %arg1[%c0_67, %c0_68, %c0_69] : memref<1x8x512xbf16, #tpu.memory_space<vmem>>, vector<1x1x512xbf16>
    %67 = vector.shape_cast %66 : vector<1x1x512xbf16> to vector<1x512xbf16>
    %c0_70 = arith.constant 0 : index
    %c2_71 = arith.constant 2 : index
    %c0_72 = arith.constant 0 : index
    %68 = vector.load %arg1[%c0_70, %c2_71, %c0_72] : memref<1x8x512xbf16, #tpu.memory_space<vmem>>, vector<1x1x512xbf16>
    %69 = vector.shape_cast %68 : vector<1x1x512xbf16> to vector<1x512xbf16>
    %c0_73 = arith.constant 0 : index
    %c4_74 = arith.constant 4 : index
    %c0_75 = arith.constant 0 : index
    %70 = vector.load %arg1[%c0_73, %c4_74, %c0_75] : memref<1x8x512xbf16, #tpu.memory_space<vmem>>, vector<1x1x512xbf16>
    %71 = vector.shape_cast %70 : vector<1x1x512xbf16> to vector<1x512xbf16>
    %c0_76 = arith.constant 0 : index
    %c6_77 = arith.constant 6 : index
    %c0_78 = arith.constant 0 : index
    %72 = vector.load %arg1[%c0_76, %c6_77, %c0_78] : memref<1x8x512xbf16, #tpu.memory_space<vmem>>, vector<1x1x512xbf16>
    %73 = vector.shape_cast %72 : vector<1x1x512xbf16> to vector<1x512xbf16>
    %74 = tpu.concatenate %67, %69, %71, %73 in 0 : vector<1x512xbf16>, vector<1x512xbf16>, vector<1x512xbf16>, vector<1x512xbf16> -> vector<4x512xbf16>
    %c0_79 = arith.constant 0 : index
    %c0_80 = arith.constant 0 : index
    %75 = vector.load %arg11[%c0_79, %c0_80] : memref<512x128xbf16, #tpu.memory_space<vmem>>, vector<512x128xbf16>
    %cst_81 = arith.constant dense<0.000000e+00> : vector<4x128xf32>
    %76 = tpu.matmul %74, %75, %cst_81 {dimension_numbers = #tpu.dot_dimension_numbers<[1], [0], [0], [1], [0, 0, 1, 1], [], []>} : vector<4x512xbf16>, vector<512x128xbf16>, vector<4x128xf32> -> vector<4x128xf32>
    %c0_82 = arith.constant 0 : index
    %c0_83 = arith.constant 0 : index
    %77 = vector.load %arg12[%c0_82, %c0_83] : memref<1x128xf32, #tpu.memory_space<vmem>>, vector<1x128xf32>
    %78 = vector.broadcast %77 : vector<1x128xf32> to vector<4x128xf32>
    %79 = arith.mulf %76, %78 : vector<4x128xf32>
    %c0_84 = arith.constant 0 : index
    %c0_85 = arith.constant 0 : index
    %80 = vector.load %arg13[%c0_84, %c0_85] : memref<1x128xf32, #tpu.memory_space<vmem>>, vector<1x128xf32>
    %81 = vector.broadcast %80 : vector<1x128xf32> to vector<4x128xf32>
    %82 = arith.addf %79, %81 : vector<4x128xf32>
    %83 = arith.addf %65, %82 : vector<4x128xf32>
    %cst_86 = arith.constant 0.000000e+00 : f32
    %84 = vector.broadcast %cst_86 : f32 to vector<4x128xf32>
    %85 = arith.maximumf %83, %84 : vector<4x128xf32>
    %86 = arith.truncf %85 : vector<4x128xf32> to vector<4x128xbf16>
    %c0_87 = arith.constant 0 : index
    %c0_88 = arith.constant 0 : index
    %c0_89 = arith.constant 0 : index
    %87 = vector.load %arg14[%c0_87, %c0_88, %c0_89] : memref<1x4x128xbf16, #tpu.memory_space<vmem>>, vector<1x4x128xbf16>
    %88 = vector.shape_cast %87 : vector<1x4x128xbf16> to vector<4x128xbf16>
    %89 = vector.shape_cast %86 : vector<4x128xbf16> to vector<1x4x128xbf16>
    tpu.vector_store %arg14[%c0_87, %c0_88, %c0_89], %89 {strides = array<i32>} : memref<1x4x128xbf16, #tpu.memory_space<vmem>>, vector<1x4x128xbf16>,
    return
  }
  func.func @transform_0(%arg0: i32) -> (i32, i32, i32) {
    %c0_i32 = arith.constant 0 : i32
    %c0_i32_0 = arith.constant 0 : i32
    %c0_i32_1 = arith.constant 0 : i32
    return %arg0, %c0_i32, %c0_i32_0 : i32, i32, i32
  }
  func.func @transform_1(%arg0: i32) -> (i32, i32) {
    %c0_i32 = arith.constant 0 : i32
    %c0_i32_0 = arith.constant 0 : i32
    %c0_i32_1 = arith.constant 0 : i32
    return %c0_i32, %c0_i32_0 : i32, i32
  }
  func.func @transform_2(%arg0: i32) -> (i32, i32) {
    %c0_i32 = arith.constant 0 : i32
    %c0_i32_0 = arith.constant 0 : i32
    %c0_i32_1 = arith.constant 0 : i32
    return %c0_i32, %c0_i32_0 : i32, i32
  }
  func.func @transform_3(%arg0: i32) -> (i32, i32) {
    %c0_i32 = arith.constant 0 : i32
    %c0_i32_0 = arith.constant 0 : i32
    %c0_i32_1 = arith.constant 0 : i32
    return %c0_i32, %c0_i32_0 : i32, i32
  }
  func.func @transform_4(%arg0: i32) -> (i32, i32, i32) {
    %c0_i32 = arith.constant 0 : i32
    %c0_i32_0 = arith.constant 0 : i32
    %c0_i32_1 = arith.constant 0 : i32
    %c0_i32_2 = arith.constant 0 : i32
    return %c0_i32, %c0_i32_0, %c0_i32_1 : i32, i32, i32
  }
  func.func @transform_5(%arg0: i32) -> (i32, i32) {
    %c0_i32 = arith.constant 0 : i32
    %c0_i32_0 = arith.constant 0 : i32
    %c0_i32_1 = arith.constant 0 : i32
    return %c0_i32, %c0_i32_0 : i32, i32
  }
  func.func @transform_6(%arg0: i32) -> (i32, i32) {
    %c0_i32 = arith.constant 0 : i32
    %c0_i32_0 = arith.constant 0 : i32
    %c0_i32_1 = arith.constant 0 : i32
    return %c0_i32, %c0_i32_0 : i32, i32
  }
  func.func @transform_7(%arg0: i32) -> (i32, i32) {
    %c0_i32 = arith.constant 0 : i32
    %c0_i32_0 = arith.constant 0 : i32
    %c0_i32_1 = arith.constant 0 : i32
    return %c0_i32, %c0_i32_0 : i32, i32
  }
  func.func @transform_8(%arg0: i32) -> (i32, i32) {
    %c0_i32 = arith.constant 0 : i32
    %c0_i32_0 = arith.constant 0 : i32
    %c0_i32_1 = arith.constant 0 : i32
    return %c0_i32, %c0_i32_0 : i32, i32
  }
  func.func @transform_9(%arg0: i32) -> (i32, i32) {
    %c0_i32 = arith.constant 0 : i32
    %c0_i32_0 = arith.constant 0 : i32
    %c0_i32_1 = arith.constant 0 : i32
    return %c0_i32, %c0_i32_0 : i32, i32
  }
  func.func @transform_10(%arg0: i32) -> (i32, i32) {
    %c0_i32 = arith.constant 0 : i32
    %c0_i32_0 = arith.constant 0 : i32
    %c0_i32_1 = arith.constant 0 : i32
    return %c0_i32, %c0_i32_0 : i32, i32
  }
  func.func @transform_11(%arg0: i32) -> (i32, i32) {
    %c0_i32 = arith.constant 0 : i32
    %c0_i32_0 = arith.constant 0 : i32
    %c0_i32_1 = arith.constant 0 : i32
    return %c0_i32, %c0_i32_0 : i32, i32
  }
  func.func @transform_12(%arg0: i32) -> (i32, i32) {
    %c0_i32 = arith.constant 0 : i32
    %c0_i32_0 = arith.constant 0 : i32
    %c0_i32_1 = arith.constant 0 : i32
    return %c0_i32, %c0_i32_0 : i32, i32
  }
  func.func @transform_13(%arg0: i32) -> (i32, i32, i32) {
    %c0_i32 = arith.constant 0 : i32
    %c0_i32_0 = arith.constant 0 : i32
    %c0_i32_1 = arith.constant 0 : i32
    return %arg0, %c0_i32, %c0_i32_0 : i32, i32, i32
  }
}

module attributes {stable_mosaic.version = 11 : i64} {
  func.func @_block_kernel(%arg0: i32, %arg1: memref<1x2x64xbf16, #tpu.memory_space<vmem>>, %arg2: memref<64x32xbf16, #tpu.memory_space<vmem>>, %arg3: memref<1x32xf32, #tpu.memory_space<vmem>>, %arg4: memref<1x32xf32, #tpu.memory_space<vmem>>, %arg5: memref<3x32x32xbf16, #tpu.memory_space<vmem>>, %arg6: memref<1x32xf32, #tpu.memory_space<vmem>>, %arg7: memref<1x32xf32, #tpu.memory_space<vmem>>, %arg8: memref<32x128xbf16, #tpu.memory_space<vmem>>, %arg9: memref<1x128xf32, #tpu.memory_space<vmem>>, %arg10: memref<1x128xf32, #tpu.memory_space<vmem>>, %arg11: memref<64x128xbf16, #tpu.memory_space<vmem>>, %arg12: memref<1x128xf32, #tpu.memory_space<vmem>>, %arg13: memref<1x128xf32, #tpu.memory_space<vmem>>, %arg14: memref<1x2x128xbf16, #tpu.memory_space<vmem>>, %arg15: memref<2x32xbf16, #tpu.memory_space<vmem>>, %arg16: memref<2x32xf32, #tpu.memory_space<vmem>>) attributes {dimension_semantics = [#tpu.dimension_semantics<parallel>], iteration_bounds = array<i64: 2>, scalar_prefetch = 0 : i64, scratch_operands = 2 : i64, tpu.core_type = #tpu.core_type<tc>, window_params = [{transform_indices = @transform_0, window_bounds = array<i64: 1, 2, 64>}, {pipeline_mode = #tpu.pipeline_mode<synchronous>, transform_indices = @transform_1, window_bounds = array<i64: 64, 32>}, {pipeline_mode = #tpu.pipeline_mode<synchronous>, transform_indices = @transform_2, window_bounds = array<i64: 1, 32>}, {pipeline_mode = #tpu.pipeline_mode<synchronous>, transform_indices = @transform_3, window_bounds = array<i64: 1, 32>}, {pipeline_mode = #tpu.pipeline_mode<synchronous>, transform_indices = @transform_4, window_bounds = array<i64: 3, 32, 32>}, {pipeline_mode = #tpu.pipeline_mode<synchronous>, transform_indices = @transform_5, window_bounds = array<i64: 1, 32>}, {pipeline_mode = #tpu.pipeline_mode<synchronous>, transform_indices = @transform_6, window_bounds = array<i64: 1, 32>}, {pipeline_mode = #tpu.pipeline_mode<synchronous>, transform_indices = @transform_7, window_bounds = array<i64: 32, 128>}, {pipeline_mode = #tpu.pipeline_mode<synchronous>, transform_indices = @transform_8, window_bounds = array<i64: 1, 128>}, {pipeline_mode = #tpu.pipeline_mode<synchronous>, transform_indices = @transform_9, window_bounds = array<i64: 1, 128>}, {pipeline_mode = #tpu.pipeline_mode<synchronous>, transform_indices = @transform_10, window_bounds = array<i64: 64, 128>}, {pipeline_mode = #tpu.pipeline_mode<synchronous>, transform_indices = @transform_11, window_bounds = array<i64: 1, 128>}, {pipeline_mode = #tpu.pipeline_mode<synchronous>, transform_indices = @transform_12, window_bounds = array<i64: 1, 128>}, {transform_indices = @transform_13, window_bounds = array<i64: 1, 2, 128>}]} {
    %c0 = arith.constant 0 : index
    %c0_0 = arith.constant 0 : index
    %c0_1 = arith.constant 0 : index
    %0 = vector.load %arg1[%c0, %c0_0, %c0_1] : memref<1x2x64xbf16, #tpu.memory_space<vmem>>, vector<1x2x64xbf16>
    %1 = vector.shape_cast %0 : vector<1x2x64xbf16> to vector<2x64xbf16>
    %c0_2 = arith.constant 0 : index
    %c0_3 = arith.constant 0 : index
    %2 = vector.load %arg2[%c0_2, %c0_3] : memref<64x32xbf16, #tpu.memory_space<vmem>>, vector<64x32xbf16>
    %cst = arith.constant dense<0.000000e+00> : vector<2x32xf32>
    %3 = tpu.matmul %1, %2, %cst {dimension_numbers = #tpu.dot_dimension_numbers<[1], [0], [0], [1], [0, 0, 1, 1], [], []>} : vector<2x64xbf16>, vector<64x32xbf16>, vector<2x32xf32> -> vector<2x32xf32>
    %c0_4 = arith.constant 0 : index
    %c0_5 = arith.constant 0 : index
    %4 = vector.load %arg3[%c0_4, %c0_5] : memref<1x32xf32, #tpu.memory_space<vmem>>, vector<1x32xf32>
    %5 = vector.broadcast %4 : vector<1x32xf32> to vector<2x32xf32>
    %6 = arith.mulf %3, %5 : vector<2x32xf32>
    %c0_6 = arith.constant 0 : index
    %c0_7 = arith.constant 0 : index
    %7 = vector.load %arg4[%c0_6, %c0_7] : memref<1x32xf32, #tpu.memory_space<vmem>>, vector<1x32xf32>
    %8 = vector.broadcast %7 : vector<1x32xf32> to vector<2x32xf32>
    %9 = arith.addf %6, %8 : vector<2x32xf32>
    %cst_8 = arith.constant 0.000000e+00 : f32
    %10 = vector.broadcast %cst_8 : f32 to vector<2x32xf32>
    %11 = arith.maximumf %9, %10 : vector<2x32xf32>
    %12 = arith.truncf %11 : vector<2x32xf32> to vector<2x32xbf16>
    %c0_9 = arith.constant 0 : index
    %c0_10 = arith.constant 0 : index
    %13 = vector.load %arg15[%c0_9, %c0_10] : memref<2x32xbf16, #tpu.memory_space<vmem>>, vector<2x32xbf16>
    tpu.vector_store %arg15[%c0_9, %c0_10], %12 {strides = array<i32>} : memref<2x32xbf16, #tpu.memory_space<vmem>>, vector<2x32xbf16>,
    %cst_11 = arith.constant 0.000000e+00 : f32
    %14 = vector.broadcast %cst_11 : f32 to vector<2x32xf32>
    %c0_12 = arith.constant 0 : index
    %c0_13 = arith.constant 0 : index
    %15 = vector.load %arg16[%c0_12, %c0_13] : memref<2x32xf32, #tpu.memory_space<vmem>>, vector<2x32xf32>
    tpu.vector_store %arg16[%c0_12, %c0_13], %14 {strides = array<i32>} : memref<2x32xf32, #tpu.memory_space<vmem>>, vector<2x32xf32>,
    %c0_14 = arith.constant 0 : index
    %c0_15 = arith.constant 0 : index
    %16 = vector.load %arg16[%c0_14, %c0_15] : memref<2x32xf32, #tpu.memory_space<vmem>>, vector<2x32xf32>
    %c0_16 = arith.constant 0 : index
    %c0_17 = arith.constant 0 : index
    %17 = vector.load %arg15[%c0_16, %c0_17] : memref<2x32xbf16, #tpu.memory_space<vmem>>, vector<2x32xbf16>
    %c1 = arith.constant 1 : index
    %c0_18 = arith.constant 0 : index
    %c0_19 = arith.constant 0 : index
    %18 = vector.load %arg5[%c1, %c0_18, %c0_19] : memref<3x32x32xbf16, #tpu.memory_space<vmem>>, vector<1x32x32xbf16>
    %19 = vector.shape_cast %18 : vector<1x32x32xbf16> to vector<32x32xbf16>
    %cst_20 = arith.constant dense<0.000000e+00> : vector<2x32xf32>
    %20 = tpu.matmul %17, %19, %cst_20 {dimension_numbers = #tpu.dot_dimension_numbers<[1], [0], [0], [1], [0, 0, 1, 1], [], []>} : vector<2x32xbf16>, vector<32x32xbf16>, vector<2x32xf32> -> vector<2x32xf32>
    %21 = arith.addf %16, %20 : vector<2x32xf32>
    %c0_21 = arith.constant 0 : index
    %c0_22 = arith.constant 0 : index
    %22 = vector.load %arg16[%c0_21, %c0_22] : memref<2x32xf32, #tpu.memory_space<vmem>>, vector<2x32xf32>
    tpu.vector_store %arg16[%c0_21, %c0_22], %21 {strides = array<i32>} : memref<2x32xf32, #tpu.memory_space<vmem>>, vector<2x32xf32>,
    %c0_23 = arith.constant 0 : index
    %c0_24 = arith.constant 0 : index
    %23 = vector.load %arg16[%c0_23, %c0_24] : memref<2x32xf32, #tpu.memory_space<vmem>>, vector<2x32xf32>
    %c0_25 = arith.constant 0 : index
    %c0_26 = arith.constant 0 : index
    %24 = vector.load %arg6[%c0_25, %c0_26] : memref<1x32xf32, #tpu.memory_space<vmem>>, vector<1x32xf32>
    %25 = vector.broadcast %24 : vector<1x32xf32> to vector<2x32xf32>
    %26 = arith.mulf %23, %25 : vector<2x32xf32>
    %c0_27 = arith.constant 0 : index
    %c0_28 = arith.constant 0 : index
    %27 = vector.load %arg7[%c0_27, %c0_28] : memref<1x32xf32, #tpu.memory_space<vmem>>, vector<1x32xf32>
    %28 = vector.broadcast %27 : vector<1x32xf32> to vector<2x32xf32>
    %29 = arith.addf %26, %28 : vector<2x32xf32>
    %cst_29 = arith.constant 0.000000e+00 : f32
    %30 = vector.broadcast %cst_29 : f32 to vector<2x32xf32>
    %31 = arith.maximumf %29, %30 : vector<2x32xf32>
    %32 = arith.truncf %31 : vector<2x32xf32> to vector<2x32xbf16>
    %c0_30 = arith.constant 0 : index
    %c0_31 = arith.constant 0 : index
    %33 = vector.load %arg8[%c0_30, %c0_31] : memref<32x128xbf16, #tpu.memory_space<vmem>>, vector<32x128xbf16>
    %cst_32 = arith.constant dense<0.000000e+00> : vector<2x128xf32>
    %34 = tpu.matmul %32, %33, %cst_32 {dimension_numbers = #tpu.dot_dimension_numbers<[1], [0], [0], [1], [0, 0, 1, 1], [], []>} : vector<2x32xbf16>, vector<32x128xbf16>, vector<2x128xf32> -> vector<2x128xf32>
    %c0_33 = arith.constant 0 : index
    %c0_34 = arith.constant 0 : index
    %35 = vector.load %arg9[%c0_33, %c0_34] : memref<1x128xf32, #tpu.memory_space<vmem>>, vector<1x128xf32>
    %36 = vector.broadcast %35 : vector<1x128xf32> to vector<2x128xf32>
    %37 = arith.mulf %34, %36 : vector<2x128xf32>
    %c0_35 = arith.constant 0 : index
    %c0_36 = arith.constant 0 : index
    %38 = vector.load %arg10[%c0_35, %c0_36] : memref<1x128xf32, #tpu.memory_space<vmem>>, vector<1x128xf32>
    %39 = vector.broadcast %38 : vector<1x128xf32> to vector<2x128xf32>
    %40 = arith.addf %37, %39 : vector<2x128xf32>
    %c0_37 = arith.constant 0 : index
    %c0_38 = arith.constant 0 : index
    %c0_39 = arith.constant 0 : index
    %41 = vector.load %arg1[%c0_37, %c0_38, %c0_39] : memref<1x2x64xbf16, #tpu.memory_space<vmem>>, vector<1x2x64xbf16>
    %42 = vector.shape_cast %41 : vector<1x2x64xbf16> to vector<2x64xbf16>
    %c0_40 = arith.constant 0 : index
    %c0_41 = arith.constant 0 : index
    %43 = vector.load %arg11[%c0_40, %c0_41] : memref<64x128xbf16, #tpu.memory_space<vmem>>, vector<64x128xbf16>
    %cst_42 = arith.constant dense<0.000000e+00> : vector<2x128xf32>
    %44 = tpu.matmul %42, %43, %cst_42 {dimension_numbers = #tpu.dot_dimension_numbers<[1], [0], [0], [1], [0, 0, 1, 1], [], []>} : vector<2x64xbf16>, vector<64x128xbf16>, vector<2x128xf32> -> vector<2x128xf32>
    %c0_43 = arith.constant 0 : index
    %c0_44 = arith.constant 0 : index
    %45 = vector.load %arg12[%c0_43, %c0_44] : memref<1x128xf32, #tpu.memory_space<vmem>>, vector<1x128xf32>
    %46 = vector.broadcast %45 : vector<1x128xf32> to vector<2x128xf32>
    %47 = arith.mulf %44, %46 : vector<2x128xf32>
    %c0_45 = arith.constant 0 : index
    %c0_46 = arith.constant 0 : index
    %48 = vector.load %arg13[%c0_45, %c0_46] : memref<1x128xf32, #tpu.memory_space<vmem>>, vector<1x128xf32>
    %49 = vector.broadcast %48 : vector<1x128xf32> to vector<2x128xf32>
    %50 = arith.addf %47, %49 : vector<2x128xf32>
    %51 = arith.addf %40, %50 : vector<2x128xf32>
    %cst_47 = arith.constant 0.000000e+00 : f32
    %52 = vector.broadcast %cst_47 : f32 to vector<2x128xf32>
    %53 = arith.maximumf %51, %52 : vector<2x128xf32>
    %54 = arith.truncf %53 : vector<2x128xf32> to vector<2x128xbf16>
    %c0_48 = arith.constant 0 : index
    %c0_49 = arith.constant 0 : index
    %c0_50 = arith.constant 0 : index
    %55 = vector.load %arg14[%c0_48, %c0_49, %c0_50] : memref<1x2x128xbf16, #tpu.memory_space<vmem>>, vector<1x2x128xbf16>
    %56 = vector.shape_cast %55 : vector<1x2x128xbf16> to vector<2x128xbf16>
    %57 = vector.shape_cast %54 : vector<2x128xbf16> to vector<1x2x128xbf16>
    tpu.vector_store %arg14[%c0_48, %c0_49, %c0_50], %57 {strides = array<i32>} : memref<1x2x128xbf16, #tpu.memory_space<vmem>>, vector<1x2x128xbf16>,
    return
  }
  func.func @transform_0(%arg0: i32) -> (i32, i32, i32) {
    %c0_i32 = arith.constant 0 : i32
    %c0_i32_0 = arith.constant 0 : i32
    %c0_i32_1 = arith.constant 0 : i32
    return %arg0, %c0_i32, %c0_i32_0 : i32, i32, i32
  }
  func.func @transform_1(%arg0: i32) -> (i32, i32) {
    %c0_i32 = arith.constant 0 : i32
    %c0_i32_0 = arith.constant 0 : i32
    %c0_i32_1 = arith.constant 0 : i32
    return %c0_i32, %c0_i32_0 : i32, i32
  }
  func.func @transform_2(%arg0: i32) -> (i32, i32) {
    %c0_i32 = arith.constant 0 : i32
    %c0_i32_0 = arith.constant 0 : i32
    %c0_i32_1 = arith.constant 0 : i32
    return %c0_i32, %c0_i32_0 : i32, i32
  }
  func.func @transform_3(%arg0: i32) -> (i32, i32) {
    %c0_i32 = arith.constant 0 : i32
    %c0_i32_0 = arith.constant 0 : i32
    %c0_i32_1 = arith.constant 0 : i32
    return %c0_i32, %c0_i32_0 : i32, i32
  }
  func.func @transform_4(%arg0: i32) -> (i32, i32, i32) {
    %c0_i32 = arith.constant 0 : i32
    %c0_i32_0 = arith.constant 0 : i32
    %c0_i32_1 = arith.constant 0 : i32
    %c0_i32_2 = arith.constant 0 : i32
    return %c0_i32, %c0_i32_0, %c0_i32_1 : i32, i32, i32
  }
  func.func @transform_5(%arg0: i32) -> (i32, i32) {
    %c0_i32 = arith.constant 0 : i32
    %c0_i32_0 = arith.constant 0 : i32
    %c0_i32_1 = arith.constant 0 : i32
    return %c0_i32, %c0_i32_0 : i32, i32
  }
  func.func @transform_6(%arg0: i32) -> (i32, i32) {
    %c0_i32 = arith.constant 0 : i32
    %c0_i32_0 = arith.constant 0 : i32
    %c0_i32_1 = arith.constant 0 : i32
    return %c0_i32, %c0_i32_0 : i32, i32
  }
  func.func @transform_7(%arg0: i32) -> (i32, i32) {
    %c0_i32 = arith.constant 0 : i32
    %c0_i32_0 = arith.constant 0 : i32
    %c0_i32_1 = arith.constant 0 : i32
    return %c0_i32, %c0_i32_0 : i32, i32
  }
  func.func @transform_8(%arg0: i32) -> (i32, i32) {
    %c0_i32 = arith.constant 0 : i32
    %c0_i32_0 = arith.constant 0 : i32
    %c0_i32_1 = arith.constant 0 : i32
    return %c0_i32, %c0_i32_0 : i32, i32
  }
  func.func @transform_9(%arg0: i32) -> (i32, i32) {
    %c0_i32 = arith.constant 0 : i32
    %c0_i32_0 = arith.constant 0 : i32
    %c0_i32_1 = arith.constant 0 : i32
    return %c0_i32, %c0_i32_0 : i32, i32
  }
  func.func @transform_10(%arg0: i32) -> (i32, i32) {
    %c0_i32 = arith.constant 0 : i32
    %c0_i32_0 = arith.constant 0 : i32
    %c0_i32_1 = arith.constant 0 : i32
    return %c0_i32, %c0_i32_0 : i32, i32
  }
  func.func @transform_11(%arg0: i32) -> (i32, i32) {
    %c0_i32 = arith.constant 0 : i32
    %c0_i32_0 = arith.constant 0 : i32
    %c0_i32_1 = arith.constant 0 : i32
    return %c0_i32, %c0_i32_0 : i32, i32
  }
  func.func @transform_12(%arg0: i32) -> (i32, i32) {
    %c0_i32 = arith.constant 0 : i32
    %c0_i32_0 = arith.constant 0 : i32
    %c0_i32_1 = arith.constant 0 : i32
    return %c0_i32, %c0_i32_0 : i32, i32
  }
  func.func @transform_13(%arg0: i32) -> (i32, i32, i32) {
    %c0_i32 = arith.constant 0 : i32
    %c0_i32_0 = arith.constant 0 : i32
    %c0_i32_1 = arith.constant 0 : i32
    return %arg0, %c0_i32, %c0_i32_0 : i32, i32, i32
  }
}

module attributes {stable_mosaic.version = 11 : i64} {
  func.func @_block_kernel(%arg0: i32, %arg1: memref<1x2x128xbf16, #tpu.memory_space<vmem>>, %arg2: memref<128x64xbf16, #tpu.memory_space<vmem>>, %arg3: memref<1x64xf32, #tpu.memory_space<vmem>>, %arg4: memref<1x64xf32, #tpu.memory_space<vmem>>, %arg5: memref<3x64x64xbf16, #tpu.memory_space<vmem>>, %arg6: memref<1x64xf32, #tpu.memory_space<vmem>>, %arg7: memref<1x64xf32, #tpu.memory_space<vmem>>, %arg8: memref<64x256xbf16, #tpu.memory_space<vmem>>, %arg9: memref<1x256xf32, #tpu.memory_space<vmem>>, %arg10: memref<1x256xf32, #tpu.memory_space<vmem>>, %arg11: memref<128x256xbf16, #tpu.memory_space<vmem>>, %arg12: memref<1x256xf32, #tpu.memory_space<vmem>>, %arg13: memref<1x256xf32, #tpu.memory_space<vmem>>, %arg14: memref<1x2x256xbf16, #tpu.memory_space<vmem>>, %arg15: memref<2x64xbf16, #tpu.memory_space<vmem>>, %arg16: memref<2x64xf32, #tpu.memory_space<vmem>>) attributes {dimension_semantics = [#tpu.dimension_semantics<parallel>], iteration_bounds = array<i64: 2>, scalar_prefetch = 0 : i64, scratch_operands = 2 : i64, tpu.core_type = #tpu.core_type<tc>, window_params = [{transform_indices = @transform_0, window_bounds = array<i64: 1, 2, 128>}, {pipeline_mode = #tpu.pipeline_mode<synchronous>, transform_indices = @transform_1, window_bounds = array<i64: 128, 64>}, {pipeline_mode = #tpu.pipeline_mode<synchronous>, transform_indices = @transform_2, window_bounds = array<i64: 1, 64>}, {pipeline_mode = #tpu.pipeline_mode<synchronous>, transform_indices = @transform_3, window_bounds = array<i64: 1, 64>}, {pipeline_mode = #tpu.pipeline_mode<synchronous>, transform_indices = @transform_4, window_bounds = array<i64: 3, 64, 64>}, {pipeline_mode = #tpu.pipeline_mode<synchronous>, transform_indices = @transform_5, window_bounds = array<i64: 1, 64>}, {pipeline_mode = #tpu.pipeline_mode<synchronous>, transform_indices = @transform_6, window_bounds = array<i64: 1, 64>}, {pipeline_mode = #tpu.pipeline_mode<synchronous>, transform_indices = @transform_7, window_bounds = array<i64: 64, 256>}, {pipeline_mode = #tpu.pipeline_mode<synchronous>, transform_indices = @transform_8, window_bounds = array<i64: 1, 256>}, {pipeline_mode = #tpu.pipeline_mode<synchronous>, transform_indices = @transform_9, window_bounds = array<i64: 1, 256>}, {pipeline_mode = #tpu.pipeline_mode<synchronous>, transform_indices = @transform_10, window_bounds = array<i64: 128, 256>}, {pipeline_mode = #tpu.pipeline_mode<synchronous>, transform_indices = @transform_11, window_bounds = array<i64: 1, 256>}, {pipeline_mode = #tpu.pipeline_mode<synchronous>, transform_indices = @transform_12, window_bounds = array<i64: 1, 256>}, {transform_indices = @transform_13, window_bounds = array<i64: 1, 2, 256>}]} {
    %c0 = arith.constant 0 : index
    %c0_0 = arith.constant 0 : index
    %c0_1 = arith.constant 0 : index
    %0 = vector.load %arg1[%c0, %c0_0, %c0_1] : memref<1x2x128xbf16, #tpu.memory_space<vmem>>, vector<1x2x128xbf16>
    %1 = vector.shape_cast %0 : vector<1x2x128xbf16> to vector<2x128xbf16>
    %c0_2 = arith.constant 0 : index
    %c0_3 = arith.constant 0 : index
    %2 = vector.load %arg2[%c0_2, %c0_3] : memref<128x64xbf16, #tpu.memory_space<vmem>>, vector<128x64xbf16>
    %cst = arith.constant dense<0.000000e+00> : vector<2x64xf32>
    %3 = tpu.matmul %1, %2, %cst {dimension_numbers = #tpu.dot_dimension_numbers<[1], [0], [0], [1], [0, 0, 1, 1], [], []>} : vector<2x128xbf16>, vector<128x64xbf16>, vector<2x64xf32> -> vector<2x64xf32>
    %c0_4 = arith.constant 0 : index
    %c0_5 = arith.constant 0 : index
    %4 = vector.load %arg3[%c0_4, %c0_5] : memref<1x64xf32, #tpu.memory_space<vmem>>, vector<1x64xf32>
    %5 = vector.broadcast %4 : vector<1x64xf32> to vector<2x64xf32>
    %6 = arith.mulf %3, %5 : vector<2x64xf32>
    %c0_6 = arith.constant 0 : index
    %c0_7 = arith.constant 0 : index
    %7 = vector.load %arg4[%c0_6, %c0_7] : memref<1x64xf32, #tpu.memory_space<vmem>>, vector<1x64xf32>
    %8 = vector.broadcast %7 : vector<1x64xf32> to vector<2x64xf32>
    %9 = arith.addf %6, %8 : vector<2x64xf32>
    %cst_8 = arith.constant 0.000000e+00 : f32
    %10 = vector.broadcast %cst_8 : f32 to vector<2x64xf32>
    %11 = arith.maximumf %9, %10 : vector<2x64xf32>
    %12 = arith.truncf %11 : vector<2x64xf32> to vector<2x64xbf16>
    %c0_9 = arith.constant 0 : index
    %c0_10 = arith.constant 0 : index
    %13 = vector.load %arg15[%c0_9, %c0_10] : memref<2x64xbf16, #tpu.memory_space<vmem>>, vector<2x64xbf16>
    tpu.vector_store %arg15[%c0_9, %c0_10], %12 {strides = array<i32>} : memref<2x64xbf16, #tpu.memory_space<vmem>>, vector<2x64xbf16>,
    %cst_11 = arith.constant 0.000000e+00 : f32
    %14 = vector.broadcast %cst_11 : f32 to vector<2x64xf32>
    %c0_12 = arith.constant 0 : index
    %c0_13 = arith.constant 0 : index
    %15 = vector.load %arg16[%c0_12, %c0_13] : memref<2x64xf32, #tpu.memory_space<vmem>>, vector<2x64xf32>
    tpu.vector_store %arg16[%c0_12, %c0_13], %14 {strides = array<i32>} : memref<2x64xf32, #tpu.memory_space<vmem>>, vector<2x64xf32>,
    %c0_14 = arith.constant 0 : index
    %c0_15 = arith.constant 0 : index
    %16 = vector.load %arg16[%c0_14, %c0_15] : memref<2x64xf32, #tpu.memory_space<vmem>>, vector<2x64xf32>
    %c0_16 = arith.constant 0 : index
    %c0_17 = arith.constant 0 : index
    %17 = vector.load %arg15[%c0_16, %c0_17] : memref<2x64xbf16, #tpu.memory_space<vmem>>, vector<2x64xbf16>
    %c1 = arith.constant 1 : index
    %c0_18 = arith.constant 0 : index
    %c0_19 = arith.constant 0 : index
    %18 = vector.load %arg5[%c1, %c0_18, %c0_19] : memref<3x64x64xbf16, #tpu.memory_space<vmem>>, vector<1x64x64xbf16>
    %19 = vector.shape_cast %18 : vector<1x64x64xbf16> to vector<64x64xbf16>
    %cst_20 = arith.constant dense<0.000000e+00> : vector<2x64xf32>
    %20 = tpu.matmul %17, %19, %cst_20 {dimension_numbers = #tpu.dot_dimension_numbers<[1], [0], [0], [1], [0, 0, 1, 1], [], []>} : vector<2x64xbf16>, vector<64x64xbf16>, vector<2x64xf32> -> vector<2x64xf32>
    %21 = arith.addf %16, %20 : vector<2x64xf32>
    %c0_21 = arith.constant 0 : index
    %c0_22 = arith.constant 0 : index
    %22 = vector.load %arg16[%c0_21, %c0_22] : memref<2x64xf32, #tpu.memory_space<vmem>>, vector<2x64xf32>
    tpu.vector_store %arg16[%c0_21, %c0_22], %21 {strides = array<i32>} : memref<2x64xf32, #tpu.memory_space<vmem>>, vector<2x64xf32>,
    %c0_23 = arith.constant 0 : index
    %c0_24 = arith.constant 0 : index
    %23 = vector.load %arg16[%c0_23, %c0_24] : memref<2x64xf32, #tpu.memory_space<vmem>>, vector<2x64xf32>
    %c0_25 = arith.constant 0 : index
    %c0_26 = arith.constant 0 : index
    %24 = vector.load %arg6[%c0_25, %c0_26] : memref<1x64xf32, #tpu.memory_space<vmem>>, vector<1x64xf32>
    %25 = vector.broadcast %24 : vector<1x64xf32> to vector<2x64xf32>
    %26 = arith.mulf %23, %25 : vector<2x64xf32>
    %c0_27 = arith.constant 0 : index
    %c0_28 = arith.constant 0 : index
    %27 = vector.load %arg7[%c0_27, %c0_28] : memref<1x64xf32, #tpu.memory_space<vmem>>, vector<1x64xf32>
    %28 = vector.broadcast %27 : vector<1x64xf32> to vector<2x64xf32>
    %29 = arith.addf %26, %28 : vector<2x64xf32>
    %cst_29 = arith.constant 0.000000e+00 : f32
    %30 = vector.broadcast %cst_29 : f32 to vector<2x64xf32>
    %31 = arith.maximumf %29, %30 : vector<2x64xf32>
    %32 = arith.truncf %31 : vector<2x64xf32> to vector<2x64xbf16>
    %c0_30 = arith.constant 0 : index
    %c0_31 = arith.constant 0 : index
    %33 = vector.load %arg8[%c0_30, %c0_31] : memref<64x256xbf16, #tpu.memory_space<vmem>>, vector<64x256xbf16>
    %cst_32 = arith.constant dense<0.000000e+00> : vector<2x256xf32>
    %34 = tpu.matmul %32, %33, %cst_32 {dimension_numbers = #tpu.dot_dimension_numbers<[1], [0], [0], [1], [0, 0, 1, 1], [], []>} : vector<2x64xbf16>, vector<64x256xbf16>, vector<2x256xf32> -> vector<2x256xf32>
    %c0_33 = arith.constant 0 : index
    %c0_34 = arith.constant 0 : index
    %35 = vector.load %arg9[%c0_33, %c0_34] : memref<1x256xf32, #tpu.memory_space<vmem>>, vector<1x256xf32>
    %36 = vector.broadcast %35 : vector<1x256xf32> to vector<2x256xf32>
    %37 = arith.mulf %34, %36 : vector<2x256xf32>
    %c0_35 = arith.constant 0 : index
    %c0_36 = arith.constant 0 : index
    %38 = vector.load %arg10[%c0_35, %c0_36] : memref<1x256xf32, #tpu.memory_space<vmem>>, vector<1x256xf32>
    %39 = vector.broadcast %38 : vector<1x256xf32> to vector<2x256xf32>
    %40 = arith.addf %37, %39 : vector<2x256xf32>
    %c0_37 = arith.constant 0 : index
    %c0_38 = arith.constant 0 : index
    %c0_39 = arith.constant 0 : index
    %41 = vector.load %arg1[%c0_37, %c0_38, %c0_39] : memref<1x2x128xbf16, #tpu.memory_space<vmem>>, vector<1x2x128xbf16>
    %42 = vector.shape_cast %41 : vector<1x2x128xbf16> to vector<2x128xbf16>
    %c0_40 = arith.constant 0 : index
    %c0_41 = arith.constant 0 : index
    %43 = vector.load %arg11[%c0_40, %c0_41] : memref<128x256xbf16, #tpu.memory_space<vmem>>, vector<128x256xbf16>
    %cst_42 = arith.constant dense<0.000000e+00> : vector<2x256xf32>
    %44 = tpu.matmul %42, %43, %cst_42 {dimension_numbers = #tpu.dot_dimension_numbers<[1], [0], [0], [1], [0, 0, 1, 1], [], []>} : vector<2x128xbf16>, vector<128x256xbf16>, vector<2x256xf32> -> vector<2x256xf32>
    %c0_43 = arith.constant 0 : index
    %c0_44 = arith.constant 0 : index
    %45 = vector.load %arg12[%c0_43, %c0_44] : memref<1x256xf32, #tpu.memory_space<vmem>>, vector<1x256xf32>
    %46 = vector.broadcast %45 : vector<1x256xf32> to vector<2x256xf32>
    %47 = arith.mulf %44, %46 : vector<2x256xf32>
    %c0_45 = arith.constant 0 : index
    %c0_46 = arith.constant 0 : index
    %48 = vector.load %arg13[%c0_45, %c0_46] : memref<1x256xf32, #tpu.memory_space<vmem>>, vector<1x256xf32>
    %49 = vector.broadcast %48 : vector<1x256xf32> to vector<2x256xf32>
    %50 = arith.addf %47, %49 : vector<2x256xf32>
    %51 = arith.addf %40, %50 : vector<2x256xf32>
    %cst_47 = arith.constant 0.000000e+00 : f32
    %52 = vector.broadcast %cst_47 : f32 to vector<2x256xf32>
    %53 = arith.maximumf %51, %52 : vector<2x256xf32>
    %54 = arith.truncf %53 : vector<2x256xf32> to vector<2x256xbf16>
    %c0_48 = arith.constant 0 : index
    %c0_49 = arith.constant 0 : index
    %c0_50 = arith.constant 0 : index
    %55 = vector.load %arg14[%c0_48, %c0_49, %c0_50] : memref<1x2x256xbf16, #tpu.memory_space<vmem>>, vector<1x2x256xbf16>
    %56 = vector.shape_cast %55 : vector<1x2x256xbf16> to vector<2x256xbf16>
    %57 = vector.shape_cast %54 : vector<2x256xbf16> to vector<1x2x256xbf16>
    tpu.vector_store %arg14[%c0_48, %c0_49, %c0_50], %57 {strides = array<i32>} : memref<1x2x256xbf16, #tpu.memory_space<vmem>>, vector<1x2x256xbf16>,
    return
  }
  func.func @transform_0(%arg0: i32) -> (i32, i32, i32) {
    %c0_i32 = arith.constant 0 : i32
    %c0_i32_0 = arith.constant 0 : i32
    %c0_i32_1 = arith.constant 0 : i32
    return %arg0, %c0_i32, %c0_i32_0 : i32, i32, i32
  }
  func.func @transform_1(%arg0: i32) -> (i32, i32) {
    %c0_i32 = arith.constant 0 : i32
    %c0_i32_0 = arith.constant 0 : i32
    %c0_i32_1 = arith.constant 0 : i32
    return %c0_i32, %c0_i32_0 : i32, i32
  }
  func.func @transform_2(%arg0: i32) -> (i32, i32) {
    %c0_i32 = arith.constant 0 : i32
    %c0_i32_0 = arith.constant 0 : i32
    %c0_i32_1 = arith.constant 0 : i32
    return %c0_i32, %c0_i32_0 : i32, i32
  }
  func.func @transform_3(%arg0: i32) -> (i32, i32) {
    %c0_i32 = arith.constant 0 : i32
    %c0_i32_0 = arith.constant 0 : i32
    %c0_i32_1 = arith.constant 0 : i32
    return %c0_i32, %c0_i32_0 : i32, i32
  }
  func.func @transform_4(%arg0: i32) -> (i32, i32, i32) {
    %c0_i32 = arith.constant 0 : i32
    %c0_i32_0 = arith.constant 0 : i32
    %c0_i32_1 = arith.constant 0 : i32
    %c0_i32_2 = arith.constant 0 : i32
    return %c0_i32, %c0_i32_0, %c0_i32_1 : i32, i32, i32
  }
  func.func @transform_5(%arg0: i32) -> (i32, i32) {
    %c0_i32 = arith.constant 0 : i32
    %c0_i32_0 = arith.constant 0 : i32
    %c0_i32_1 = arith.constant 0 : i32
    return %c0_i32, %c0_i32_0 : i32, i32
  }
  func.func @transform_6(%arg0: i32) -> (i32, i32) {
    %c0_i32 = arith.constant 0 : i32
    %c0_i32_0 = arith.constant 0 : i32
    %c0_i32_1 = arith.constant 0 : i32
    return %c0_i32, %c0_i32_0 : i32, i32
  }
  func.func @transform_7(%arg0: i32) -> (i32, i32) {
    %c0_i32 = arith.constant 0 : i32
    %c0_i32_0 = arith.constant 0 : i32
    %c0_i32_1 = arith.constant 0 : i32
    return %c0_i32, %c0_i32_0 : i32, i32
  }
  func.func @transform_8(%arg0: i32) -> (i32, i32) {
    %c0_i32 = arith.constant 0 : i32
    %c0_i32_0 = arith.constant 0 : i32
    %c0_i32_1 = arith.constant 0 : i32
    return %c0_i32, %c0_i32_0 : i32, i32
  }
  func.func @transform_9(%arg0: i32) -> (i32, i32) {
    %c0_i32 = arith.constant 0 : i32
    %c0_i32_0 = arith.constant 0 : i32
    %c0_i32_1 = arith.constant 0 : i32
    return %c0_i32, %c0_i32_0 : i32, i32
  }
  func.func @transform_10(%arg0: i32) -> (i32, i32) {
    %c0_i32 = arith.constant 0 : i32
    %c0_i32_0 = arith.constant 0 : i32
    %c0_i32_1 = arith.constant 0 : i32
    return %c0_i32, %c0_i32_0 : i32, i32
  }
  func.func @transform_11(%arg0: i32) -> (i32, i32) {
    %c0_i32 = arith.constant 0 : i32
    %c0_i32_0 = arith.constant 0 : i32
    %c0_i32_1 = arith.constant 0 : i32
    return %c0_i32, %c0_i32_0 : i32, i32
  }
  func.func @transform_12(%arg0: i32) -> (i32, i32) {
    %c0_i32 = arith.constant 0 : i32
    %c0_i32_0 = arith.constant 0 : i32
    %c0_i32_1 = arith.constant 0 : i32
    return %c0_i32, %c0_i32_0 : i32, i32
  }
  func.func @transform_13(%arg0: i32) -> (i32, i32, i32) {
    %c0_i32 = arith.constant 0 : i32
    %c0_i32_0 = arith.constant 0 : i32
    %c0_i32_1 = arith.constant 0 : i32
    return %arg0, %c0_i32, %c0_i32_0 : i32, i32, i32
  }
}

module attributes {stable_mosaic.version = 11 : i64} {
  func.func @_head_kernel(%arg0: i32, %arg1: memref<1x2x256xbf16, #tpu.memory_space<vmem>>, %arg2: memref<256x64xf32, #tpu.memory_space<vmem>>, %arg3: memref<64x256xf32, #tpu.memory_space<vmem>>, %arg4: memref<1x256xf32, #tpu.memory_space<vmem>>, %arg5: memref<256x128xf32, #tpu.memory_space<vmem>>, %arg6: memref<1x128xf32, #tpu.memory_space<vmem>>, %arg7: memref<128x1xf32, #tpu.memory_space<vmem>>, %arg8: memref<1x1xf32, #tpu.memory_space<vmem>>, %arg9: memref<1x1x1xf32, #tpu.memory_space<vmem>>) attributes {dimension_semantics = [#tpu.dimension_semantics<parallel>], iteration_bounds = array<i64: 2>, scalar_prefetch = 0 : i64, scratch_operands = 0 : i64, tpu.core_type = #tpu.core_type<tc>, window_params = [{transform_indices = @transform_0, window_bounds = array<i64: 1, 2, 256>}, {pipeline_mode = #tpu.pipeline_mode<synchronous>, transform_indices = @transform_1, window_bounds = array<i64: 256, 64>}, {pipeline_mode = #tpu.pipeline_mode<synchronous>, transform_indices = @transform_2, window_bounds = array<i64: 64, 256>}, {pipeline_mode = #tpu.pipeline_mode<synchronous>, transform_indices = @transform_3, window_bounds = array<i64: 1, 256>}, {pipeline_mode = #tpu.pipeline_mode<synchronous>, transform_indices = @transform_4, window_bounds = array<i64: 256, 128>}, {pipeline_mode = #tpu.pipeline_mode<synchronous>, transform_indices = @transform_5, window_bounds = array<i64: 1, 128>}, {pipeline_mode = #tpu.pipeline_mode<synchronous>, transform_indices = @transform_6, window_bounds = array<i64: 128, 1>}, {pipeline_mode = #tpu.pipeline_mode<synchronous>, transform_indices = @transform_7, window_bounds = array<i64: 1, 1>}, {transform_indices = @transform_8, window_bounds = array<i64: 1, 1, 1>}]} {
    %c0 = arith.constant 0 : index
    %c0_0 = arith.constant 0 : index
    %c0_1 = arith.constant 0 : index
    %0 = vector.load %arg1[%c0, %c0_0, %c0_1] : memref<1x2x256xbf16, #tpu.memory_space<vmem>>, vector<1x2x256xbf16>
    %1 = vector.shape_cast %0 : vector<1x2x256xbf16> to vector<2x256xbf16>
    %2 = arith.extf %1 : vector<2x256xbf16> to vector<2x256xf32>
    %cst = arith.constant dense<0.000000e+00> : vector<256xf32>
    %3 = vector.multi_reduction <add>, %2, %cst [0] : vector<2x256xf32> to vector<256xf32>
    %4 = vector.shape_cast %3 : vector<256xf32> to vector<1x256xf32>
    %c0_2 = arith.constant 0 : index
    %c0_3 = arith.constant 0 : index
    %5 = vector.load %arg2[%c0_2, %c0_3] : memref<256x64xf32, #tpu.memory_space<vmem>>, vector<256x64xf32>
    %cst_4 = arith.constant dense<0.000000e+00> : vector<1x64xf32>
    %6 = tpu.matmul %4, %5, %cst_4 {dimension_numbers = #tpu.dot_dimension_numbers<[1], [0], [0], [1], [0, 0, 1, 1], [], []>} : vector<1x256xf32>, vector<256x64xf32>, vector<1x64xf32> -> vector<1x64xf32>
    %c0_5 = arith.constant 0 : index
    %c0_6 = arith.constant 0 : index
    %7 = vector.load %arg3[%c0_5, %c0_6] : memref<64x256xf32, #tpu.memory_space<vmem>>, vector<64x256xf32>
    %cst_7 = arith.constant dense<0.000000e+00> : vector<1x256xf32>
    %8 = tpu.matmul %6, %7, %cst_7 {dimension_numbers = #tpu.dot_dimension_numbers<[1], [0], [0], [1], [0, 0, 1, 1], [], []>} : vector<1x64xf32>, vector<64x256xf32>, vector<1x256xf32> -> vector<1x256xf32>
    %c0_8 = arith.constant 0 : index
    %c0_9 = arith.constant 0 : index
    %9 = vector.load %arg4[%c0_8, %c0_9] : memref<1x256xf32, #tpu.memory_space<vmem>>, vector<1x256xf32>
    %10 = arith.addf %8, %9 : vector<1x256xf32>
    %cst_10 = arith.constant 0.000000e+00 : f32
    %11 = vector.broadcast %cst_10 : f32 to vector<1x256xf32>
    %12 = arith.maximumf %10, %11 : vector<1x256xf32>
    %c0_11 = arith.constant 0 : index
    %c0_12 = arith.constant 0 : index
    %13 = vector.load %arg5[%c0_11, %c0_12] : memref<256x128xf32, #tpu.memory_space<vmem>>, vector<256x128xf32>
    %cst_13 = arith.constant dense<0.000000e+00> : vector<1x128xf32>
    %14 = tpu.matmul %12, %13, %cst_13 {dimension_numbers = #tpu.dot_dimension_numbers<[1], [0], [0], [1], [0, 0, 1, 1], [], []>} : vector<1x256xf32>, vector<256x128xf32>, vector<1x128xf32> -> vector<1x128xf32>
    %c0_14 = arith.constant 0 : index
    %c0_15 = arith.constant 0 : index
    %15 = vector.load %arg6[%c0_14, %c0_15] : memref<1x128xf32, #tpu.memory_space<vmem>>, vector<1x128xf32>
    %16 = arith.addf %14, %15 : vector<1x128xf32>
    %cst_16 = arith.constant 0.000000e+00 : f32
    %17 = vector.broadcast %cst_16 : f32 to vector<1x128xf32>
    %18 = arith.maximumf %16, %17 : vector<1x128xf32>
    %c0_17 = arith.constant 0 : index
    %c0_18 = arith.constant 0 : index
    %19 = vector.load %arg7[%c0_17, %c0_18] : memref<128x1xf32, #tpu.memory_space<vmem>>, vector<128x1xf32>
    %cst_19 = arith.constant dense<0.000000e+00> : vector<1x1xf32>
    %20 = tpu.matmul %18, %19, %cst_19 {dimension_numbers = #tpu.dot_dimension_numbers<[1], [0], [0], [1], [0, 0, 1, 1], [], []>} : vector<1x128xf32>, vector<128x1xf32>, vector<1x1xf32> -> vector<1x1xf32>
    %c0_20 = arith.constant 0 : index
    %c0_21 = arith.constant 0 : index
    %21 = vector.load %arg8[%c0_20, %c0_21] : memref<1x1xf32, #tpu.memory_space<vmem>>, vector<1x1xf32>
    %22 = arith.addf %20, %21 : vector<1x1xf32>
    %c0_22 = arith.constant 0 : index
    %c0_23 = arith.constant 0 : index
    %c0_24 = arith.constant 0 : index
    %23 = vector.load %arg9[%c0_22, %c0_23, %c0_24] : memref<1x1x1xf32, #tpu.memory_space<vmem>>, vector<1x1x1xf32>
    %24 = vector.shape_cast %23 : vector<1x1x1xf32> to vector<1x1xf32>
    %25 = vector.shape_cast %22 : vector<1x1xf32> to vector<1x1x1xf32>
    tpu.vector_store %arg9[%c0_22, %c0_23, %c0_24], %25 {strides = array<i32>} : memref<1x1x1xf32, #tpu.memory_space<vmem>>, vector<1x1x1xf32>,
    return
  }
  func.func @transform_0(%arg0: i32) -> (i32, i32, i32) {
    %c0_i32 = arith.constant 0 : i32
    %c0_i32_0 = arith.constant 0 : i32
    %c0_i32_1 = arith.constant 0 : i32
    return %arg0, %c0_i32, %c0_i32_0 : i32, i32, i32
  }
  func.func @transform_1(%arg0: i32) -> (i32, i32) {
    %c0_i32 = arith.constant 0 : i32
    %c0_i32_0 = arith.constant 0 : i32
    %c0_i32_1 = arith.constant 0 : i32
    return %c0_i32, %c0_i32_0 : i32, i32
  }
  func.func @transform_2(%arg0: i32) -> (i32, i32) {
    %c0_i32 = arith.constant 0 : i32
    %c0_i32_0 = arith.constant 0 : i32
    %c0_i32_1 = arith.constant 0 : i32
    return %c0_i32, %c0_i32_0 : i32, i32
  }
  func.func @transform_3(%arg0: i32) -> (i32, i32) {
    %c0_i32 = arith.constant 0 : i32
    %c0_i32_0 = arith.constant 0 : i32
    %c0_i32_1 = arith.constant 0 : i32
    return %c0_i32, %c0_i32_0 : i32, i32
  }
  func.func @transform_4(%arg0: i32) -> (i32, i32) {
    %c0_i32 = arith.constant 0 : i32
    %c0_i32_0 = arith.constant 0 : i32
    %c0_i32_1 = arith.constant 0 : i32
    return %c0_i32, %c0_i32_0 : i32, i32
  }
  func.func @transform_5(%arg0: i32) -> (i32, i32) {
    %c0_i32 = arith.constant 0 : i32
    %c0_i32_0 = arith.constant 0 : i32
    %c0_i32_1 = arith.constant 0 : i32
    return %c0_i32, %c0_i32_0 : i32, i32
  }
  func.func @transform_6(%arg0: i32) -> (i32, i32) {
    %c0_i32 = arith.constant 0 : i32
    %c0_i32_0 = arith.constant 0 : i32
    %c0_i32_1 = arith.constant 0 : i32
    return %c0_i32, %c0_i32_0 : i32, i32
  }
  func.func @transform_7(%arg0: i32) -> (i32, i32) {
    %c0_i32 = arith.constant 0 : i32
    %c0_i32_0 = arith.constant 0 : i32
    %c0_i32_1 = arith.constant 0 : i32
    return %c0_i32, %c0_i32_0 : i32, i32
  }
  func.func @transform_8(%arg0: i32) -> (i32, i32, i32) {
    %c0_i32 = arith.constant 0 : i32
    %c0_i32_0 = arith.constant 0 : i32
    %c0_i32_1 = arith.constant 0 : i32
    return %arg0, %c0_i32, %c0_i32_0 : i32, i32, i32
  }
}

</mosaic_0001>

<llo_original>
// kernel: forward.8
$region0: #{forward.8}
  #allocation0 [shape = 'u32[]', space=smem, size = 0x4, offset = 0x4, fixed_abs, tag = 'smem constant byte address 0x4 - core index']
  #allocation1 [shape = 'u32[72,128]{1,0:T(1,128)}', space=vmem, size = 0x9000, scoped, tag = 'internal scratch']
  #allocation2 [shape = 'bf16[4,64]{1,0:T(4,128)(2,1)}', space=vmem, size = 0x400, scoped, tag = 'scratch operand']
  #allocation3 [shape = 'f32[2,16]{1,0:T(2,128)}', space=vmem, size = 0x400, scoped, tag = 'scratch operand']
  %s0 = inlined_call_operand.vmem [shape: bf16[2,4,128], index: 0, kind: input, shape index: {}]
  %s1 = inlined_call_operand.vmem [shape: bf16[128,64], index: 1, kind: input, shape index: {}]
  %s2 = inlined_call_operand.hbm [shape: f32[1,64], index: 2, kind: input, shape index: {}]
  %s3 = inlined_call_operand.hbm [shape: f32[1,64], index: 3, kind: input, shape index: {}]
  %s4 = inlined_call_operand.vmem [shape: bf16[3,64,16], index: 4, kind: input, shape index: {}]
  %s5 = inlined_call_operand.hbm [shape: f32[1,16], index: 5, kind: input, shape index: {}]
  %s6 = inlined_call_operand.hbm [shape: f32[1,16], index: 6, kind: input, shape index: {}]
  %s7 = inlined_call_operand.hbm [shape: bf16[16,64], index: 7, kind: input, shape index: {}]
  %s8 = inlined_call_operand.hbm [shape: f32[1,64], index: 8, kind: input, shape index: {}]
  %s9 = inlined_call_operand.hbm [shape: f32[1,64], index: 9, kind: input, shape index: {}]
  %s10 = inlined_call_operand.vmem [shape: bf16[128,64], index: 10, kind: input, shape index: {}]
  %s11 = inlined_call_operand.hbm [shape: f32[1,64], index: 11, kind: input, shape index: {}]
  %s12 = inlined_call_operand.hbm [shape: f32[1,64], index: 12, kind: input, shape index: {}]
  %s13 = inlined_call_operand.vmem [shape: bf16[2,2,64], index: 13, kind: output, shape index: {}]
  %s14 = sld [smem:[#allocation0]]
  $region121: #{forward.8} parent=0
    _
  %s16 = ssub.s32 1, %s14
  %s17 = scalar_select 0, %s16, %s14
  $region1: #{forward.8} parent=0
    #allocation4 [shape = 'u8[512]{0}', space=vmem, size = 0x400, scoped, tag = 'input window, operand 2, single buffered']
    #allocation5 [shape = 's32[2]{0}', space=sflag, size = 0x8, scoped, tag = 'scoped memory for forward.8']
    #allocation6 [shape = 'u8[512]{0}', space=vmem, size = 0x400, scoped, tag = 'input window, operand 3, single buffered']
    #allocation7 [shape = 's32[1]{0}', space=sflag, size = 0x4, scoped, tag = 'scoped memory for forward.8']
    #allocation8 [shape = 'u8[512]{0}', space=vmem, size = 0x400, scoped, tag = 'input window, operand 5, single buffered']
    #allocation9 [shape = 'u8[512]{0}', space=vmem, size = 0x400, scoped, tag = 'input window, operand 6, single buffered']
    #allocation10 [shape = 's32[1]{0}', space=sflag, size = 0x4, scoped, tag = 'scoped memory for forward.8']
    #allocation11 [shape = 'u8[4096]{0}', space=vmem, size = 0x1000, scoped, tag = 'input window, operand 7, single buffered']
    #allocation12 [shape = 'u8[512]{0}', space=vmem, size = 0x400, scoped, tag = 'input window, operand 8, single buffered']
    #allocation13 [shape = 's32[1]{0}', space=sflag, size = 0x4, scoped, tag = 'scoped memory for forward.8']
    #allocation14 [shape = 'u8[512]{0}', space=vmem, size = 0x400, scoped, tag = 'input window, operand 9, single buffered']
    #allocation15 [shape = 'u8[512]{0}', space=vmem, size = 0x400, scoped, tag = 'input window, operand 11, single buffered']
    #allocation16 [shape = 's32[1]{0}', space=sflag, size = 0x4, scoped, tag = 'scoped memory for forward.8']
    #allocation17 [shape = 'u8[512]{0}', space=vmem, size = 0x400, scoped, tag = 'input window, operand 12, single buffered']
    %18 = vsyncpa [#allocation5], 0
    %19 = vsyncpa [#allocation7], 0
    %20 = vsyncpa [#allocation10], 0
    %21 = vsyncpa [#allocation13], 0
    %22 = vsyncpa [#allocation16], 0
    loop: start=0, step=1, limit=4
    $region2: #{forward.8} parent=1 // loop_pre_header
      _
    $region3: #{forward.8} parent=1 // loop_header
      %s24 = sphi 0, %s28
      %p25 = scmp.ge.s32.totalorder %s24, 4
      %s34 = sphi 0, %s36
      %s37 = sphi 0, %s34
      %s38 = sphi 0, %s37
      %s54 = sphi 0, %s38
      %s58 = sphi 0, %s58
      %s60 = sphi 0, %s58
      %s61 = sphi 0, %s60
      %s75 = sphi 0, %s61
      %s79 = sphi 0, %s79
      %s81 = sphi 0, %s79
      %s82 = sphi 0, %s81
      %s96 = sphi 0, %s82
      %s100 = sphi 0, %s100
      %s102 = sphi 0, %s100
      %s103 = sphi 0, %s102
      %s117 = sphi 0, %s103
      %s121 = sphi 0, %s121
      %s123 = sphi 0, %s121
      %s124 = sphi 0, %s123
      %s138 = sphi 0, %s124
      %s142 = sphi 0, %s142
      %s144 = sphi 0, %s142
      %s145 = sphi 0, %s144
      %s159 = sphi 0, %s145
      %s163 = sphi 0, %s163
      %s165 = sphi 0, %s163
      %s166 = sphi 0, %s165
      %s180 = sphi 0, %s166
      %s184 = sphi 0, %s184
      %s186 = sphi 0, %s184
      %s187 = sphi 0, %s186
      %s201 = sphi 0, %s187
      %s205 = sphi 0, %s205
      %s207 = sphi 0, %s205
      %s208 = sphi 0, %s207
      %s222 = sphi 0, %s208
      %s226 = sphi 0, %s226
      %s228 = sphi 0, %s226
      %s229 = sphi 0, %s228
      %s243 = sphi 0, %s229
      %s247 = sphi 0, %s247
      %s249 = sphi 0, %s247
      %s250 = sphi 0, %s249
      %s264 = sphi 0, %s250
      %s268 = sphi 0, %s268
      %s270 = sphi 0, %s268
      %s271 = sphi 0, %s270
      %s285 = sphi 0, %s271
      %s289 = sphi 0, %s289
      %s291 = sphi 0, %s289
      %s292 = sphi 0, %s291
      %s306 = sphi 0, %s292
      %s312 = sphi 0, %s314
      %s315 = sphi 0, %s312
      %s316 = sphi 0, %s315
      %s332 = sphi 0, %s316
    $region4: #{forward.8} parent=1 // loop_header_branch
      %27 = sbr.rel (%p25) target = $region8
    $region5: #{forward.8} parent=1 // loop_body
      %s29 = ssub.s32 %s24, 1
      %s30 = ssub.s32 %s24, 2
      %s31 = sadd.s32 %s24, 1
      %s32 = ssub.s32 %s24, %s31
      %p33 = scmp.eq.s32.totalorder %s32, 0
      %s35 = sadd.s32 %s34, 1
      %s36 = scalar_select %p33, %s34, %s35
      %p39 = pneg %p33
      %p40 = scmp.eq.s32.totalorder %s24, 1
      %p41 = por %p39, %p40
      %p42 = scmp.ne.s32.totalorder %s34, %s37
      %p43 = scmp.eq.s32.totalorder %s24, 0
      %p44 = por %p42, %p43
      %p45 = scmp.ne.s32.totalorder %s34, %s37
      %p46 = scmp.eq.s32.totalorder %s29, 1
      %p47 = por %p45, %p46
      %p48 = scmp.ne.s32.totalorder %s37, %s38
      %p49 = scmp.eq.s32.totalorder %s29, 0
      %p50 = por %p48, %p49
      %p51 = scmp.ne.s32.totalorder %s37, %s38
      %p52 = scmp.eq.s32.totalorder %s30, 1
      %p53 = por %p51, %p52
      %p55 = scmp.ne.s32.totalorder %s38, %s54
      %p56 = scmp.eq.s32.totalorder %s30, 0
      %p57 = por %p55, %p56
      %s59 = sadd.s32 %s58, 1
      %p62 = scmp.eq.s32.totalorder %s24, 1
      %p63 = scmp.ne.s32.totalorder %s58, %s60
      %p64 = scmp.eq.s32.totalorder %s24, 0
      %p65 = por %p63, %p64
      %p66 = scmp.ne.s32.totalorder %s58, %s60
      %p67 = scmp.eq.s32.totalorder %s29, 1
      %p68 = por %p66, %p67
      %p69 = scmp.ne.s32.totalorder %s60, %s61
      %p70 = scmp.eq.s32.totalorder %s29, 0
      %p71 = por %p69, %p70
      %p72 = scmp.ne.s32.totalorder %s60, %s61
      %p73 = scmp.eq.s32.totalorder %s30, 1
      %p74 = por %p72, %p73
      %p76 = scmp.ne.s32.totalorder %s61, %s75
      %p77 = scmp.eq.s32.totalorder %s30, 0
      %p78 = por %p76, %p77
      %s80 = sadd.s32 %s79, 1
      %p83 = scmp.eq.s32.totalorder %s24, 1
      %p84 = scmp.ne.s32.totalorder %s79, %s81
      %p85 = scmp.eq.s32.totalorder %s24, 0
      %p86 = por %p84, %p85
      %p87 = scmp.ne.s32.totalorder %s79, %s81
      %p88 = scmp.eq.s32.totalorder %s29, 1
      %p89 = por %p87, %p88
      %p90 = scmp.ne.s32.totalorder %s81, %s82
      %p91 = scmp.eq.s32.totalorder %s29, 0
      %p92 = por %p90, %p91
      %p93 = scmp.ne.s32.totalorder %s81, %s82
      %p94 = scmp.eq.s32.totalorder %s30, 1
      %p95 = por %p93, %p94
      %p97 = scmp.ne.s32.totalorder %s82, %s96
      %p98 = scmp.eq.s32.totalorder %s30, 0
      %p99 = por %p97, %p98
      %s101 = sadd.s32 %s100, 1
      %p104 = scmp.eq.s32.totalorder %s24, 1
      %p105 = scmp.ne.s32.totalorder %s100, %s102
      %p106 = scmp.eq.s32.totalorder %s24, 0
      %p107 = por %p105, %p106
      %p108 = scmp.ne.s32.totalorder %s100, %s102
      %p109 = scmp.eq.s32.totalorder %s29, 1
      %p110 = por %p108, %p109
      %p111 = scmp.ne.s32.totalorder %s102, %s103
      %p112 = scmp.eq.s32.totalorder %s29, 0
      %p113 = por %p111, %p112
      %p114 = scmp.ne.s32.totalorder %s102, %s103
      %p115 = scmp.eq.s32.totalorder %s30, 1
      %p116 = por %p114, %p115
      %p118 = scmp.ne.s32.totalorder %s103, %s117
      %p119 = scmp.eq.s32.totalorder %s30, 0
      %p120 = por %p118, %p119
      %s122 = sadd.s32 %s121, 1
      %p125 = scmp.eq.s32.totalorder %s24, 1
      %p126 = scmp.ne.s32.totalorder %s121, %s123
      %p127 = scmp.eq.s32.totalorder %s24, 0
      %p128 = por %p126, %p127
      %p129 = scmp.ne.s32.totalorder %s121, %s123
      %p130 = scmp.eq.s32.totalorder %s29, 1
      %p131 = por %p129, %p130
      %p132 = scmp.ne.s32.totalorder %s123, %s124
      %p133 = scmp.eq.s32.totalorder %s29, 0
      %p134 = por %p132, %p133
      %p135 = scmp.ne.s32.totalorder %s123, %s124
      %p136 = scmp.eq.s32.totalorder %s30, 1
      %p137 = por %p135, %p136
      %p139 = scmp.ne.s32.totalorder %s124, %s138
      %p140 = scmp.eq.s32.totalorder %s30, 0
      %p141 = por %p139, %p140
      %s143 = sadd.s32 %s142, 1
      %p146 = scmp.eq.s32.totalorder %s24, 1
      %p147 = scmp.ne.s32.totalorder %s142, %s144
      %p148 = scmp.eq.s32.totalorder %s24, 0
      %p149 = por %p147, %p148
      %p150 = scmp.ne.s32.totalorder %s142, %s144
      %p151 = scmp.eq.s32.totalorder %s29, 1
      %p152 = por %p150, %p151
      %p153 = scmp.ne.s32.totalorder %s144, %s145
      %p154 = scmp.eq.s32.totalorder %s29, 0
      %p155 = por %p153, %p154
      %p156 = scmp.ne.s32.totalorder %s144, %s145
      %p157 = scmp.eq.s32.totalorder %s30, 1
      %p158 = por %p156, %p157
      %p160 = scmp.ne.s32.totalorder %s145, %s159
      %p161 = scmp.eq.s32.totalorder %s30, 0
      %p162 = por %p160, %p161
      %s164 = sadd.s32 %s163, 1
      %p167 = scmp.eq.s32.totalorder %s24, 1
      %p168 = scmp.ne.s32.totalorder %s163, %s165
      %p169 = scmp.eq.s32.totalorder %s24, 0
      %p170 = por %p168, %p169
      %p171 = scmp.ne.s32.totalorder %s163, %s165
      %p172 = scmp.eq.s32.totalorder %s29, 1
      %p173 = por %p171, %p172
      %p174 = scmp.ne.s32.totalorder %s165, %s166
      %p175 = scmp.eq.s32.totalorder %s29, 0
      %p176 = por %p174, %p175
      %p177 = scmp.ne.s32.totalorder %s165, %s166
      %p178 = scmp.eq.s32.totalorder %s30, 1
      %p179 = por %p177, %p178
      %p181 = scmp.ne.s32.totalorder %s166, %s180
      %p182 = scmp.eq.s32.totalorder %s30, 0
      %p183 = por %p181, %p182
      %s185 = sadd.s32 %s184, 1
      %p188 = scmp.eq.s32.totalorder %s24, 1
      %p189 = scmp.ne.s32.totalorder %s184, %s186
      %p190 = scmp.eq.s32.totalorder %s24, 0
      %p191 = por %p189, %p190
      %p192 = scmp.ne.s32.totalorder %s184, %s186
      %p193 = scmp.eq.s32.totalorder %s29, 1
      %p194 = por %p192, %p193
      %p195 = scmp.ne.s32.totalorder %s186, %s187
      %p196 = scmp.eq.s32.totalorder %s29, 0
      %p197 = por %p195, %p196
      %p198 = scmp.ne.s32.totalorder %s186, %s187
      %p199 = scmp.eq.s32.totalorder %s30, 1
      %p200 = por %p198, %p199
      %p202 = scmp.ne.s32.totalorder %s187, %s201
      %p203 = scmp.eq.s32.totalorder %s30, 0
      %p204 = por %p202, %p203
      %s206 = sadd.s32 %s205, 1
      %p209 = scmp.eq.s32.totalorder %s24, 1
      %p210 = scmp.ne.s32.totalorder %s205, %s207
      %p211 = scmp.eq.s32.totalorder %s24, 0
      %p212 = por %p210, %p211
      %p213 = scmp.ne.s32.totalorder %s205, %s207
      %p214 = scmp.eq.s32.totalorder %s29, 1
      %p215 = por %p213, %p214
      %p216 = scmp.ne.s32.totalorder %s207, %s208
      %p217 = scmp.eq.s32.totalorder %s29, 0
      %p218 = por %p216, %p217
      %p219 = scmp.ne.s32.totalorder %s207, %s208
      %p220 = scmp.eq.s32.totalorder %s30, 1
      %p221 = por %p219, %p220
      %p223 = scmp.ne.s32.totalorder %s208, %s222
      %p224 = scmp.eq.s32.totalorder %s30, 0
      %p225 = por %p223, %p224
      %s227 = sadd.s32 %s226, 1
      %p230 = scmp.eq.s32.totalorder %s24, 1
      %p231 = scmp.ne.s32.totalorder %s226, %s228
      %p232 = scmp.eq.s32.totalorder %s24, 0
      %p233 = por %p231, %p232
      %p234 = scmp.ne.s32.totalorder %s226, %s228
      %p235 = scmp.eq.s32.totalorder %s29, 1
      %p236 = por %p234, %p235
      %p237 = scmp.ne.s32.totalorder %s228, %s229
      %p238 = scmp.eq.s32.totalorder %s29, 0
      %p239 = por %p237, %p238
      %p240 = scmp.ne.s32.totalorder %s228, %s229
      %p241 = scmp.eq.s32.totalorder %s30, 1
      %p242 = por %p240, %p241
      %p244 = scmp.ne.s32.totalorder %s229, %s243
      %p245 = scmp.eq.s32.totalorder %s30, 0
      %p246 = por %p244, %p245
      %s248 = sadd.s32 %s247, 1
      %p251 = scmp.eq.s32.totalorder %s24, 1
      %p252 = scmp.ne.s32.totalorder %s247, %s249
      %p253 = scmp.eq.s32.totalorder %s24, 0
      %p254 = por %p252, %p253
      %p255 = scmp.ne.s32.totalorder %s247, %s249
      %p256 = scmp.eq.s32.totalorder %s29, 1
      %p257 = por %p255, %p256
      %p258 = scmp.ne.s32.totalorder %s249, %s250
      %p259 = scmp.eq.s32.totalorder %s29, 0
      %p260 = por %p258, %p259
      %p261 = scmp.ne.s32.totalorder %s249, %s250
      %p262 = scmp.eq.s32.totalorder %s30, 1
      %p263 = por %p261, %p262
      %p265 = scmp.ne.s32.totalorder %s250, %s264
      %p266 = scmp.eq.s32.totalorder %s30, 0
      %p267 = por %p265, %p266
      %s269 = sadd.s32 %s268, 1
      %p272 = scmp.eq.s32.totalorder %s24, 1
      %p273 = scmp.ne.s32.totalorder %s268, %s270
      %p274 = scmp.eq.s32.totalorder %s24, 0
      %p275 = por %p273, %p274
      %p276 = scmp.ne.s32.totalorder %s268, %s270
      %p277 = scmp.eq.s32.totalorder %s29, 1
      %p278 = por %p276, %p277
      %p279 = scmp.ne.s32.totalorder %s270, %s271
      %p280 = scmp.eq.s32.totalorder %s29, 0
      %p281 = por %p279, %p280
      %p282 = scmp.ne.s32.totalorder %s270, %s271
      %p283 = scmp.eq.s32.totalorder %s30, 1
      %p284 = por %p282, %p283
      %p286 = scmp.ne.s32.totalorder %s271, %s285
      %p287 = scmp.eq.s32.totalorder %s30, 0
      %p288 = por %p286, %p287
      %s290 = sadd.s32 %s289, 1
      %p293 = scmp.eq.s32.totalorder %s24, 1
      %p294 = scmp.ne.s32.totalorder %s289, %s291
      %p295 = scmp.eq.s32.totalorder %s24, 0
      %p296 = por %p294, %p295
      %p297 = scmp.ne.s32.totalorder %s289, %s291
      %p298 = scmp.eq.s32.totalorder %s29, 1
      %p299 = por %p297, %p298
      %p300 = scmp.ne.s32.totalorder %s291, %s292
      %p301 = scmp.eq.s32.totalorder %s29, 0
      %p302 = por %p300, %p301
      %p303 = scmp.ne.s32.totalorder %s291, %s292
      %p304 = scmp.eq.s32.totalorder %s30, 1
      %p305 = por %p303, %p304
      %p307 = scmp.ne.s32.totalorder %s292, %s306
      %p308 = scmp.eq.s32.totalorder %s30, 0
      %p309 = por %p307, %p308
      %s310 = ssub.s32 %s24, %s31
      %p311 = scmp.eq.s32.totalorder %s310, 0
      %s313 = sadd.s32 %s312, 1
      %s314 = scalar_select %p311, %s312, %s313
      %p317 = pneg %p311
      %p318 = scmp.eq.s32.totalorder %s24, 1
      %p319 = por %p317, %p318
      %p320 = scmp.ne.s32.totalorder %s312, %s315
      %p321 = scmp.eq.s32.totalorder %s24, 0
      %p322 = por %p320, %p321
      %p323 = scmp.ne.s32.totalorder %s312, %s315
      %p324 = scmp.eq.s32.totalorder %s29, 1
      %p325 = por %p323, %p324
      %p326 = scmp.ne.s32.totalorder %s315, %s316
      %p327 = scmp.eq.s32.totalorder %s29, 0
      %p328 = por %p326, %p327
      %p329 = scmp.ne.s32.totalorder %s315, %s316
      %p330 = scmp.eq.s32.totalorder %s30, 1
      %p331 = por %p329, %p330
      %p333 = scmp.ne.s32.totalorder %s316, %s332
      %p334 = scmp.eq.s32.totalorder %s30, 0
      %p335 = por %p333, %p334
      %p336 = scmp.le.s32.totalorder 1, %s24
      %p337 = scmp.lt.s32.totalorder %s24, 3
      %p338 = pnand %p336, %p337
      %p339 = pneg %p338
      // Predicated region
      $region9: #{forward.8} parent=5 // pred_check
        _
      $region10: #{forward.8} parent=5 // pred_check_branch
        %341 = sbr.rel (%p338) target = $region12
      $region11: #{forward.8} parent=5 // pred_region
        %s342 = ssub.s32 %s24, 1
        // Predicated region
        $region13: #{forward.8} parent=11 // pred_check
          %p343 = pneg %p71
        $region14: #{forward.8} parent=11 // pred_check_branch
          %345 = sbr.rel (%p343) target = $region16
        $region15: #{forward.8} parent=11 // pred_region
          _
        $region16: #{forward.8} parent=11 // pred_fallthru
          _
        // Predicated region
        $region17: #{forward.8} parent=11 // pred_check
          %p346 = pneg %p92
        $region18: #{forward.8} parent=11 // pred_check_branch
          %348 = sbr.rel (%p346) target = $region20
        $region19: #{forward.8} parent=11 // pred_region
          %350 = vsyncadd [#allocation5], 0
          %s352 = sshll.u32 %s2, 4
          %s353 = int_to_ptr.hbm [resolvable:$true] %s352
          %s354 = sshll.u32 [#allocation4], 4
          %s355 = int_to_ptr.vmem [resolvable:$true] %s354
          %357 = dma.hbm_to_vmem [thread:$0]  %s353, 16, %s355, [#allocation5]
        $region20: #{forward.8} parent=11 // pred_fallthru
          _
        // Predicated region
        $region21: #{forward.8} parent=11 // pred_check
          %p358 = pneg %p113
        $region22: #{forward.8} parent=11 // pred_check_branch
          %360 = sbr.rel (%p358) target = $region24
        $region23: #{forward.8} parent=11 // pred_region
          %362 = vsyncadd [#allocation7], 0
          %s364 = sshll.u32 %s3, 4
          %s365 = int_to_ptr.hbm [resolvable:$true] %s364
          %s366 = sshll.u32 [#allocation6], 4
          %s367 = int_to_ptr.vmem [resolvable:$true] %s366
          %369 = dma.hbm_to_vmem [thread:$0]  %s365, 16, %s367, [#allocation7]
        $region24: #{forward.8} parent=11 // pred_fallthru
          _
        // Predicated region
        $region25: #{forward.8} parent=11 // pred_check
          %p370 = pneg %p134
        $region26: #{forward.8} parent=11 // pred_check_branch
          %372 = sbr.rel (%p370) target = $region28
        $region27: #{forward.8} parent=11 // pred_region
          _
        $region28: #{forward.8} parent=11 // pred_fallthru
          _
        // Predicated region
        $region29: #{forward.8} parent=11 // pred_check
          %p373 = pneg %p155
        $region30: #{forward.8} parent=11 // pred_check_branch
          %375 = sbr.rel (%p373) target = $region32
        $region31: #{forward.8} parent=11 // pred_region
          %377 = vsyncadd [#allocation7], 0
          %s379 = sshll.u32 %s5, 4
          %s380 = int_to_ptr.hbm [resolvable:$true] %s379
          %s381 = sshll.u32 [#allocation8], 4
          %s382 = int_to_ptr.vmem [resolvable:$true] %s381
          %384 = dma.hbm_to_vmem [thread:$0]  %s380, 16, %s382, [#allocation7]
        $region32: #{forward.8} parent=11 // pred_fallthru
          _
        // Predicated region
        $region33: #{forward.8} parent=11 // pred_check
          %p385 = pneg %p176
        $region34: #{forward.8} parent=11 // pred_check_branch
          %387 = sbr.rel (%p385) target = $region36
        $region35: #{forward.8} parent=11 // pred_region
          %389 = vsyncadd [#allocation10], 0
          %s391 = sshll.u32 %s6, 4
          %s392 = int_to_ptr.hbm [resolvable:$true] %s391
          %s393 = sshll.u32 [#allocation9], 4
          %s394 = int_to_ptr.vmem [resolvable:$true] %s393
          %396 = dma.hbm_to_vmem [thread:$0]  %s392, 16, %s394, [#allocation10]
        $region36: #{forward.8} parent=11 // pred_fallthru
          _
        // Predicated region
        $region37: #{forward.8} parent=11 // pred_check
          %p397 = pneg %p197
        $region38: #{forward.8} parent=11 // pred_check_branch
          %399 = sbr.rel (%p397) target = $region40
        $region39: #{forward.8} parent=11 // pred_region
          %401 = vsyncadd [#allocation10], 0
          %s402 = sshll.u32 %s7, 4
          %s403 = int_to_ptr.hbm [resolvable:$true] %s402
          %s404 = sshll.u32 [#allocation11], 4
          %s405 = int_to_ptr.vmem [resolvable:$true] %s404
          %410 = dma.hbm_to_vmem [thread:$0]  %s403, 128, %s405, [#allocation10], 64, 64, 4
        $region40: #{forward.8} parent=11 // pred_fallthru
          _
        // Predicated region
        $region41: #{forward.8} parent=11 // pred_check
          %p411 = pneg %p218
        $region42: #{forward.8} parent=11 // pred_check_branch
          %413 = sbr.rel (%p411) target = $region44
        $region43: #{forward.8} parent=11 // pred_region
          %415 = vsyncadd [#allocation13], 0
          %s417 = sshll.u32 %s8, 4
          %s418 = int_to_ptr.hbm [resolvable:$true] %s417
          %s419 = sshll.u32 [#allocation12], 4
          %s420 = int_to_ptr.vmem [resolvable:$true] %s419
          %422 = dma.hbm_to_vmem [thread:$0]  %s418, 16, %s420, [#allocation13]
        $region44: #{forward.8} parent=11 // pred_fallthru
          _
        // Predicated region
        $region45: #{forward.8} parent=11 // pred_check
          %p423 = pneg %p239
        $region46: #{forward.8} parent=11 // pred_check_branch
          %425 = sbr.rel (%p423) target = $region48
        $region47: #{forward.8} parent=11 // pred_region
          %427 = vsyncadd [#allocation13], 0
          %s429 = sshll.u32 %s9, 4
          %s430 = int_to_ptr.hbm [resolvable:$true] %s429
          %s431 = sshll.u32 [#allocation14], 4
          %s432 = int_to_ptr.vmem [resolvable:$true] %s431
          %434 = dma.hbm_to_vmem [thread:$0]  %s430, 16, %s432, [#allocation13]
        $region48: #{forward.8} parent=11 // pred_fallthru
          _
        // Predicated region
        $region49: #{forward.8} parent=11 // pred_check
          %p435 = pneg %p260
        $region50: #{forward.8} parent=11 // pred_check_branch
          %437 = sbr.rel (%p435) target = $region52
        $region51: #{forward.8} parent=11 // pred_region
          _
        $region52: #{forward.8} parent=11 // pred_fallthru
          _
        // Predicated region
        $region53: #{forward.8} parent=11 // pred_check
          %p438 = pneg %p281
        $region54: #{forward.8} parent=11 // pred_check_branch
          %440 = sbr.rel (%p438) target = $region56
        $region55: #{forward.8} parent=11 // pred_region
          %442 = vsyncadd [#allocation16], 0
          %s444 = sshll.u32 %s11, 4
          %s445 = int_to_ptr.hbm [resolvable:$true] %s444
          %s446 = sshll.u32 [#allocation15], 4
          %s447 = int_to_ptr.vmem [resolvable:$true] %s446
          %449 = dma.hbm_to_vmem [thread:$0]  %s445, 16, %s447, [#allocation16]
        $region56: #{forward.8} parent=11 // pred_fallthru
          _
        // Predicated region
        $region57: #{forward.8} parent=11 // pred_check
          %p450 = pneg %p302
        $region58: #{forward.8} parent=11 // pred_check_branch
          %452 = sbr.rel (%p450) target = $region60
        $region59: #{forward.8} parent=11 // pred_region
          %454 = vsyncadd [#allocation16], 0
          %s456 = sshll.u32 %s12, 4
          %s457 = int_to_ptr.hbm [resolvable:$true] %s456
          %s458 = sshll.u32 [#allocation17], 4
          %s459 = int_to_ptr.vmem [resolvable:$true] %s458
          %461 = dma.hbm_to_vmem [thread:$0]  %s457, 16, %s459, [#allocation16]
        $region60: #{forward.8} parent=11 // pred_fallthru
          _
      $region12: #{forward.8} parent=5 // pred_fallthru
        _
      %p462 = scmp.lt.s32.totalorder %s24, 2
      // Predicated region
      $region61: #{forward.8} parent=5 // pred_check
        %p463 = pneg %p462
      $region62: #{forward.8} parent=5 // pred_check_branch
        %465 = sbr.rel (%p463) target = $region64
      $region63: #{forward.8} parent=5 // pred_region
        // Predicated region
        $region65: #{forward.8} parent=63 // pred_check
          %p466 = pneg %p44
        $region66: #{forward.8} parent=63 // pred_check_branch
          %468 = sbr.rel (%p466) target = $region68
        $region67: #{forward.8} parent=63 // pred_region
          %p469 = scmp.lt.s32.totalorder %s24, 1
          %s470 = scalar_select %p469, %s24, 1
          %s471 = smul.addr %s470, 2
          %s472 = scalar_lea.vmem %s0, %s471
        $region68: #{forward.8} parent=63 // pred_fallthru
          _
      $region64: #{forward.8} parent=5 // pred_fallthru
        _
      %p473 = scmp.le.s32.totalorder 1, %s24
      %p474 = scmp.lt.s32.totalorder %s24, 3
      %p475 = pnand %p473, %p474
      %p476 = pneg %p475
      // Predicated region
      $region69: #{forward.8} parent=5 // pred_check
        _
      $region70: #{forward.8} parent=5 // pred_check_branch
        %478 = sbr.rel (%p475) target = $region72
      $region71: #{forward.8} parent=5 // pred_region
        %s479 = ssub.s32 %s24, 1
        // Predicated region
        $region73: #{forward.8} parent=71 // pred_check
          %p480 = pneg %p92
        $region74: #{forward.8} parent=71 // pred_check_branch
          %482 = sbr.rel (%p480) target = $region76
        $region75: #{forward.8} parent=71 // pred_region
          %484 = dma.done [#allocation5], 16
        $region76: #{forward.8} parent=71 // pred_fallthru
          _
        // Predicated region
        $region77: #{forward.8} parent=71 // pred_check
          %p485 = pneg %p113
        $region78: #{forward.8} parent=71 // pred_check_branch
          %487 = sbr.rel (%p485) target = $region80
        $region79: #{forward.8} parent=71 // pred_region
          %489 = dma.done [#allocation7], 16
        $region80: #{forward.8} parent=71 // pred_fallthru
          _
        // Predicated region
        $region81: #{forward.8} parent=71 // pred_check
          %p490 = pneg %p155
        $region82: #{forward.8} parent=71 // pred_check_branch
          %492 = sbr.rel (%p490) target = $region84
        $region83: #{forward.8} parent=71 // pred_region
          %494 = dma.done [#allocation7], 16
        $region84: #{forward.8} parent=71 // pred_fallthru
          _
        // Predicated region
        $region85: #{forward.8} parent=71 // pred_check
          %p495 = pneg %p176
        $region86: #{forward.8} parent=71 // pred_check_branch
          %497 = sbr.rel (%p495) target = $region88
        $region87: #{forward.8} parent=71 // pred_region
          %499 = dma.done [#allocation10], 16
        $region88: #{forward.8} parent=71 // pred_fallthru
          _
        // Predicated region
        $region89: #{forward.8} parent=71 // pred_check
          %p500 = pneg %p197
        $region90: #{forward.8} parent=71 // pred_check_branch
          %502 = sbr.rel (%p500) target = $region92
        $region91: #{forward.8} parent=71 // pred_region
          %504 = dma.done [#allocation10], 128
        $region92: #{forward.8} parent=71 // pred_fallthru
          _
        // Predicated region
        $region93: #{forward.8} parent=71 // pred_check
          %p505 = pneg %p218
        $region94: #{forward.8} parent=71 // pred_check_branch
          %507 = sbr.rel (%p505) target = $region96
        $region95: #{forward.8} parent=71 // pred_region
          %509 = dma.done [#allocation13], 16
        $region96: #{forward.8} parent=71 // pred_fallthru
          _
        // Predicated region
        $region97: #{forward.8} parent=71 // pred_check
          %p510 = pneg %p239
        $region98: #{forward.8} parent=71 // pred_check_branch
          %512 = sbr.rel (%p510) target = $region100
        $region99: #{forward.8} parent=71 // pred_region
          %514 = dma.done [#allocation13], 16
        $region100: #{forward.8} parent=71 // pred_fallthru
          _
        // Predicated region
        $region101: #{forward.8} parent=71 // pred_check
          %p515 = pneg %p281
        $region102: #{forward.8} parent=71 // pred_check_branch
          %517 = sbr.rel (%p515) target = $region104
        $region103: #{forward.8} parent=71 // pred_region
          %519 = dma.done [#allocation16], 16
        $region104: #{forward.8} parent=71 // pred_fallthru
          _
        // Predicated region
        $region105: #{forward.8} parent=71 // pred_check
          %p520 = pneg %p302
        $region106: #{forward.8} parent=71 // pred_check_branch
          %522 = sbr.rel (%p520) target = $region108
        $region107: #{forward.8} parent=71 // pred_region
          %524 = dma.done [#allocation16], 16
        $region108: #{forward.8} parent=71 // pred_fallthru
          _
        %p525 = scmp.lt.s32.totalorder %s29, 1
        %s526 = scalar_select %p525, %s29, 1
        %s527 = smul.addr %s526, 2
        %s528 = scalar_lea.vmem %s0, %s527
        %p529 = pneg %p50
        %p530 = pneg %p47
        %p531 = pneg %p71
        %p532 = pneg %p68
        %p533 = pneg %p92
        %p534 = pneg %p89
        %p535 = pneg %p113
        %p536 = pneg %p110
        %p537 = pneg %p134
        %p538 = pneg %p131
        %p539 = pneg %p155
        %p540 = pneg %p152
        %p541 = pneg %p176
        %p542 = pneg %p173
        %p543 = pneg %p197
        %p544 = pneg %p194
        %p545 = pneg %p218
        %p546 = pneg %p215
        %p547 = pneg %p239
        %p548 = pneg %p236
        %p549 = pneg %p260
        %p550 = pneg %p257
        %p551 = pneg %p281
        %p552 = pneg %p278
        %p553 = pneg %p302
        %p554 = pneg %p299
        %p555 = pneg %p328
        %p556 = pneg %p325
        %p557 = scmp.lt.s32.totalorder %s29, 1
        %s558 = scalar_select %p557, %s29, 1
        %s559 = scalar_lea.vmem %s13, %s558
        %p560 = scmp.lt.s32.totalorder %s29, 1
        %s561 = scalar_select %p560, %s29, 1
        %s562 = smul.addr %s561, 2
        %s563 = scalar_lea.vmem %s0, %s562
        %p564 = scmp.lt.s32.totalorder %s29, 1
        %s565 = scalar_select %p564, %s29, 1
        %s566 = scalar_lea.vmem %s13, %s565
        %v568 = vld [vmem:[%s563] sm:$0x3]
        %v569 = vld [vmem:[%s1] sm:$0xf]
        %v570 = vld [vmem:[%s1 + $0x4] sm:$0xf]
        %v571 = vld [vmem:[%s1 + $0x8] sm:$0xf]
        %v572 = vld [vmem:[%s1 + $0xc] sm:$0xf]
        %v573 = vld [vmem:[%s1 + $0x10] sm:$0xf]
        %v574 = vld [vmem:[%s1 + $0x14] sm:$0xf]
        %v575 = vld [vmem:[%s1 + $0x18] sm:$0xf]
        %v576 = vld [vmem:[%s1 + $0x1c] sm:$0xf]
        %v577 = vld [vmem:[%s1 + $0x20] sm:$0xf]
        %v578 = vld [vmem:[%s1 + $0x24] sm:$0xf]
        %v579 = vld [vmem:[%s1 + $0x28] sm:$0xf]
        %v580 = vld [vmem:[%s1 + $0x2c] sm:$0xf]
        %v581 = vld [vmem:[%s1 + $0x30] sm:$0xf]
        %v582 = vld [vmem:[%s1 + $0x34] sm:$0xf]
        %v583 = vld [vmem:[%s1 + $0x38] sm:$0xf]
        %v584 = vld [vmem:[%s1 + $0x3c] sm:$0xf]
        %v601 = vunpack.c.l.b16 %v569
        %v602 = vunpack.c.l.b16 %v570
        %v603 = vunpack.c.l.b16 %v571
        %v604 = vunpack.c.l.b16 %v572
        %v605 = vunpack.c.l.b16 %v573
        %v606 = vunpack.c.l.b16 %v574
        %v607 = vunpack.c.l.b16 %v575
        %v608 = vunpack.c.l.b16 %v576
        %v609 = vunpack.c.l.b16 %v577
        %v610 = vunpack.c.l.b16 %v578
        %v611 = vunpack.c.l.b16 %v579
        %v612 = vunpack.c.l.b16 %v580
        %v613 = vunpack.c.l.b16 %v581
        %v614 = vunpack.c.l.b16 %v582
        %v615 = vunpack.c.l.b16 %v583
        %v616 = vunpack.c.l.b16 %v584
        %v617 = vpack.c.b16 %v602, %v601
        %v618 = vpack.c.b16 %v604, %v603
        %v619 = vpack.c.b16 %v606, %v605
        %v620 = vpack.c.b16 %v608, %v607
        %v621 = vpack.c.b16 %v610, %v609
        %v622 = vpack.c.b16 %v612, %v611
        %v623 = vpack.c.b16 %v614, %v613
        %v624 = vpack.c.b16 %v616, %v615
        %633 = vmatpush.bf16.msra.mxu0 %v624
        %634 = vmatpush.bf16.msra.mxu0 %v623
        %635 = vmatpush.bf16.msra.mxu0 %v622
        %636 = vmatpush.bf16.msra.mxu0 %v621
        %637 = vmatpush.bf16.msra.mxu0 %v620
        %638 = vmatpush.bf16.msra.mxu0 %v619
        %639 = vmatpush.bf16.msra.mxu0 %v618
        %640 = vmatpush.bf16.msra.mxu0 %v617
        %641 = vmatmul.bf16.gmra.mxu0 %v568
        %v642 = vpop.f32.mrf.mxu0
        %v643 = vadd.f32 0.0, %v642
        %v644 = vpop.f32.mrf.mxu0
        %645 = vdwg.mxu0
        %v646 = vld [vmem:[#allocation4] sm:$0x1]
        %v648 = vperm.slane %v646, 0
        %v650 = vmul.f32 %v643, %v648
        %v651 = vld [vmem:[#allocation6] sm:$0x1]
        %v653 = vperm.slane %v651, 0
        %v655 = vadd.f32 %v650, %v653
        %v656 = vmax.f32 %v655, 0.0
        %v657 = vpack.c.bf16 %v656, %v656
        %vm658 = vcmask 517120
        %659 = vst.msk [vmem:[#allocation2] sm:$0x3] %vm658, %v657
        %vm660 = vcmask 123904
        %661 = vst.msk [vmem:[#allocation3] sm:$0x3] %vm660, 0.0
        %v662 = vld [vmem:[#allocation3 + $0x1] sm:$0x1]
        %v663 = vld [vmem:[#allocation2] sm:$0x1]
        %v664 = vld [vmem:[%s4] sm:$0xf]
        %v665 = vld [vmem:[%s4 + $0x4] sm:$0xf]
        %v666 = vld [vmem:[%s4 + $0x8] sm:$0xf]
        %v667 = vld [vmem:[%s4 + $0xc] sm:$0xf]
        %v668 = vld [vmem:[%s4 + $0x10] sm:$0xf]
        %v669 = vld [vmem:[%s4 + $0x14] sm:$0xf]
        %v670 = vld [vmem:[%s4 + $0x18] sm:$0xf]
        %v671 = vld [vmem:[%s4 + $0x1c] sm:$0xf]
        %v680 = vunpack.c.l.b16 %v664
        %v681 = vunpack.c.l.b16 %v665
        %v682 = vunpack.c.l.b16 %v666
        %v683 = vunpack.c.l.b16 %v667
        %v684 = vunpack.c.l.b16 %v668
        %v685 = vunpack.c.l.b16 %v669
        %v686 = vunpack.c.l.b16 %v670
        %v687 = vunpack.c.l.b16 %v671
        %v688 = vpack.c.b16 %v681, %v680
        %v689 = vpack.c.b16 %v683, %v682
        %v690 = vpack.c.b16 %v685, %v684
        %v691 = vpack.c.b16 %v687, %v686
        %vm696 = vcmask 523264
        %v698 = vsel %vm696, %v663, 0
        %700 = vmatpush.bf16.msra.mxu0 0
        %701 = vmatpush.bf16.msra.mxu0 0
        %702 = vmatpush.bf16.msra.mxu0 0
        %703 = vmatpush.bf16.msra.mxu0 0
        %704 = vmatpush.bf16.msra.mxu0 %v691
        %705 = vmatpush.bf16.msra.mxu0 %v690
        %706 = vmatpush.bf16.msra.mxu0 %v689
        %707 = vmatpush.bf16.msra.mxu0 %v688
        %708 = vmatmul.bf16.gmra.mxu0 %v698
        %v709 = vpop.f32.mrf.mxu0
        %v710 = vadd.f32 0.0, %v709
        %v711 = vpop.f32.mrf.mxu0
        %712 = vdwg.mxu0
        %v713 = vadd.f32 %v662, %v710
        %vm714 = vcmask 122880
        %715 = vst.msk [vmem:[#allocation3 + $0x1] sm:$0x1] %vm714, %v713
        %v716 = vld [vmem:[#allocation3] sm:$0x3]
        %v717 = vld [vmem:[#allocation2] sm:$0x1]
        %v718 = vld [vmem:[#allocation2] sm:$0x2]
        %720 = vst [vmem:[#allocation1] ss:$4 sm:$0xff] %v718
        %v721 = vld.sshfl [vmem:[#allocation1] sm:$0xff pattern:$0x73625140]
        %v722 = vshll.u32 %v721, 16
        %v724 = vrot.slane %v722, 1
        %vm726 = vcmask 1040384
        %vm727 = vsmask.f32 256
        %vm728 = vmand %vm726, %vm727
        %v729 = vsel %vm728, %v717, %v724
        %s730 = scalar_lea.vmem %s4, 32
        %v731 = vld [vmem:[%s730] sm:$0xf]
        %v732 = vld [vmem:[%s730 + $0x4] sm:$0xf]
        %v733 = vld [vmem:[%s730 + $0x8] sm:$0xf]
        %v734 = vld [vmem:[%s730 + $0xc] sm:$0xf]
        %v735 = vld [vmem:[%s730 + $0x10] sm:$0xf]
        %v736 = vld [vmem:[%s730 + $0x14] sm:$0xf]
        %v737 = vld [vmem:[%s730 + $0x18] sm:$0xf]
        %v738 = vld [vmem:[%s730 + $0x1c] sm:$0xf]
        %v747 = vunpack.c.l.b16 %v731
        %v748 = vunpack.c.l.b16 %v732
        %v749 = vunpack.c.l.b16 %v733
        %v750 = vunpack.c.l.b16 %v734
        %v751 = vunpack.c.l.b16 %v735
        %v752 = vunpack.c.l.b16 %v736
        %v753 = vunpack.c.l.b16 %v737
        %v754 = vunpack.c.l.b16 %v738
        %v755 = vpack.c.b16 %v748, %v747
        %v756 = vpack.c.b16 %v750, %v749
        %v757 = vpack.c.b16 %v752, %v751
        %v758 = vpack.c.b16 %v754, %v753
        %v764 = vsel %vm696, %v729, 0
        %766 = vmatpush.bf16.msra.mxu0 0
        %767 = vmatpush.bf16.msra.mxu0 0
        %768 = vmatpush.bf16.msra.mxu0 0
        %769 = vmatpush.bf16.msra.mxu0 0
        %770 = vmatpush.bf16.msra.mxu0 %v758
        %771 = vmatpush.bf16.msra.mxu0 %v757
        %772 = vmatpush.bf16.msra.mxu0 %v756
        %773 = vmatpush.bf16.msra.mxu0 %v755
        %774 = vmatmul.bf16.gmra.mxu0 %v764
        %v775 = vpop.f32.mrf.mxu0
        %v776 = vadd.f32 0.0, %v775
        %v777 = vpop.f32.mrf.mxu0
        %778 = vdwg.mxu0
        %v779 = vadd.f32 %v716, %v776
        %780 = vst.msk [vmem:[#allocation3] sm:$0x3] %vm660, %v779
        %v781 = vld [vmem:[#allocation3] sm:$0x1]
        %v782 = vld [vmem:[#allocation2] sm:$0x2]
        %s783 = scalar_lea.vmem %s4, 64
        %v784 = vld [vmem:[%s783] sm:$0xf]
        %v785 = vld [vmem:[%s783 + $0x4] sm:$0xf]
        %v786 = vld [vmem:[%s783 + $0x8] sm:$0xf]
        %v787 = vld [vmem:[%s783 + $0xc] sm:$0xf]
        %v788 = vld [vmem:[%s783 + $0x10] sm:$0xf]
        %v789 = vld [vmem:[%s783 + $0x14] sm:$0xf]
        %v790 = vld [vmem:[%s783 + $0x18] sm:$0xf]
        %v791 = vld [vmem:[%s783 + $0x1c] sm:$0xf]
        %793 = vst [vmem:[#allocation1] ss:$4 sm:$0xff] %v782
        %v794 = vld.sshfl [vmem:[#allocation1] sm:$0xff pattern:$0x73625140]
        %v796 = vrot.slane %v794, 1
        %v805 = vunpack.c.l.b16 %v784
        %v806 = vunpack.c.l.b16 %v785
        %v807 = vunpack.c.l.b16 %v786
        %v808 = vunpack.c.l.b16 %v787
        %v809 = vunpack.c.l.b16 %v788
        %v810 = vunpack.c.l.b16 %v789
        %v811 = vunpack.c.l.b16 %v790
        %v812 = vunpack.c.l.b16 %v791
        %v813 = vpack.c.b16 %v806, %v805
        %v814 = vpack.c.b16 %v808, %v807
        %v815 = vpack.c.b16 %v810, %v809
        %v816 = vpack.c.b16 %v812, %v811
        %v822 = vsel %vm696, %v796, 0
        %824 = vmatpush.bf16.msra.mxu0 0
        %825 = vmatpush.bf16.msra.mxu0 0
        %826 = vmatpush.bf16.msra.mxu0 0
        %827 = vmatpush.bf16.msra.mxu0 0
        %828 = vmatpush.bf16.msra.mxu0 %v816
        %829 = vmatpush.bf16.msra.mxu0 %v815
        %830 = vmatpush.bf16.msra.mxu0 %v814
        %831 = vmatpush.bf16.msra.mxu0 %v813
        %832 = vmatmul.bf16.gmra.mxu0 %v822
        %v833 = vpop.f32.mrf.mxu0
        %v834 = vadd.f32 0.0, %v833
        %v835 = vpop.f32.mrf.mxu0
        %836 = vdwg.mxu0
        %v837 = vadd.f32 %v781, %v834
        %838 = vst.msk [vmem:[#allocation3] sm:$0x1] %vm714, %v837
        %v839 = vld [vmem:[#allocation3] sm:$0x3]
        %v840 = vld [vmem:[#allocation8] sm:$0x1]
        %v842 = vperm.slane %v840, 0
        %v844 = vmul.f32 %v839, %v842
        %v845 = vld [vmem:[#allocation9] sm:$0x1]
        %v847 = vperm.slane %v845, 0
        %v849 = vadd.f32 %v844, %v847
        %v850 = vmax.f32 %v849, 0.0
        %v851 = vpack.c.bf16 %v850, %v850
        %v852 = vld [vmem:[#allocation11] sm:$0xf]
        %v853 = vld [vmem:[#allocation11 + $0x4] sm:$0xf]
        %v856 = vunpack.c.l.b16 %v852
        %v857 = vunpack.c.l.b16 %v853
        %v858 = vpack.c.b16 %v857, %v856
        %vm860 = vcmask 130048
        %v862 = vsel %vm860, %v851, 0
        %864 = vmatpush.bf16.msra.mxu0 0
        %865 = vmatpush.bf16.msra.mxu0 0
        %866 = vmatpush.bf16.msra.mxu0 0
        %867 = vmatpush.bf16.msra.mxu0 0
        %868 = vmatpush.bf16.msra.mxu0 0
        %869 = vmatpush.bf16.msra.mxu0 0
        %870 = vmatpush.bf16.msra.mxu0 0
        %871 = vmatpush.bf16.msra.mxu0 %v858
        %872 = vmatmul.bf16.gmra.mxu0 %v862
        %v873 = vpop.f32.mrf.mxu0
        %v874 = vadd.f32 0.0, %v873
        %v875 = vpop.f32.mrf.mxu0
        %876 = vdwg.mxu0
        %v877 = vld [vmem:[#allocation12] sm:$0x1]
        %v879 = vperm.slane %v877, 0
        %v881 = vmul.f32 %v874, %v879
        %v882 = vld [vmem:[#allocation14] sm:$0x1]
        %v884 = vperm.slane %v882, 0
        %v886 = vadd.f32 %v881, %v884
        %v887 = vld [vmem:[%s563] sm:$0x1]
        %v888 = vld [vmem:[%s563] sm:$0x2]
        %890 = vst [vmem:[#allocation1] ss:$4 sm:$0xff] %v888
        %v891 = vld.sshfl [vmem:[#allocation1] sm:$0xff pattern:$0x73625140]
        %v892 = vshll.u32 %v891, 16
        %v894 = vrot.slane %v892, 1
        %v896 = vsel %vm728, %v887, %v894
        %v897 = vld [vmem:[%s10] sm:$0xf]
        %v898 = vld [vmem:[%s10 + $0x4] sm:$0xf]
        %v899 = vld [vmem:[%s10 + $0x8] sm:$0xf]
        %v900 = vld [vmem:[%s10 + $0xc] sm:$0xf]
        %v901 = vld [vmem:[%s10 + $0x10] sm:$0xf]
        %v902 = vld [vmem:[%s10 + $0x14] sm:$0xf]
        %v903 = vld [vmem:[%s10 + $0x18] sm:$0xf]
        %v904 = vld [vmem:[%s10 + $0x1c] sm:$0xf]
        %v905 = vld [vmem:[%s10 + $0x20] sm:$0xf]
        %v906 = vld [vmem:[%s10 + $0x24] sm:$0xf]
        %v907 = vld [vmem:[%s10 + $0x28] sm:$0xf]
        %v908 = vld [vmem:[%s10 + $0x2c] sm:$0xf]
        %v909 = vld [vmem:[%s10 + $0x30] sm:$0xf]
        %v910 = vld [vmem:[%s10 + $0x34] sm:$0xf]
        %v911 = vld [vmem:[%s10 + $0x38] sm:$0xf]
        %v912 = vld [vmem:[%s10 + $0x3c] sm:$0xf]
        %v929 = vunpack.c.l.b16 %v897
        %v930 = vunpack.c.l.b16 %v898
        %v931 = vunpack.c.l.b16 %v899
        %v932 = vunpack.c.l.b16 %v900
        %v933 = vunpack.c.l.b16 %v901
        %v934 = vunpack.c.l.b16 %v902
        %v935 = vunpack.c.l.b16 %v903
        %v936 = vunpack.c.l.b16 %v904
        %v937 = vunpack.c.l.b16 %v905
        %v938 = vunpack.c.l.b16 %v906
        %v939 = vunpack.c.l.b16 %v907
        %v940 = vunpack.c.l.b16 %v908
        %v941 = vunpack.c.l.b16 %v909
        %v942 = vunpack.c.l.b16 %v910
        %v943 = vunpack.c.l.b16 %v911
        %v944 = vunpack.c.l.b16 %v912
        %v945 = vpack.c.b16 %v930, %v929
        %v946 = vpack.c.b16 %v932, %v931
        %v947 = vpack.c.b16 %v934, %v933
        %v948 = vpack.c.b16 %v936, %v935
        %v949 = vpack.c.b16 %v938, %v937
        %v950 = vpack.c.b16 %v940, %v939
        %v951 = vpack.c.b16 %v942, %v941
        %v952 = vpack.c.b16 %v944, %v943
        %961 = vmatpush.bf16.msra.mxu0 %v952
        %962 = vmatpush.bf16.msra.mxu0 %v951
        %963 = vmatpush.bf16.msra.mxu0 %v950
        %964 = vmatpush.bf16.msra.mxu0 %v949
        %965 = vmatpush.bf16.msra.mxu0 %v948
        %966 = vmatpush.bf16.msra.mxu0 %v947
        %967 = vmatpush.bf16.msra.mxu0 %v946
        %968 = vmatpush.bf16.msra.mxu0 %v945
        %969 = vmatmul.bf16.gmra.mxu0 %v896
        %v970 = vpop.f32.mrf.mxu0
        %v971 = vadd.f32 0.0, %v970
        %v972 = vpop.f32.mrf.mxu0
        %973 = vdwg.mxu0
        %v974 = vld [vmem:[#allocation15] sm:$0x1]
        %v976 = vperm.slane %v974, 0
        %v978 = vmul.f32 %v971, %v976
        %v979 = vld [vmem:[#allocation17] sm:$0x1]
        %v981 = vperm.slane %v979, 0
        %v983 = vadd.f32 %v978, %v981
        %v984 = vadd.f32 %v886, %v983
        %v985 = vmax.f32 %v984, 0.0
        %v986 = vpack.c.bf16 %v985, %v985
        %vm987 = vcmask 516096
        %988 = vst.msk [vmem:[%s566] sm:$0x1] %vm987, %v986
        %p989 = scmp.lt.s32.totalorder %s29, 1
        %s990 = scalar_select %p989, %s29, 1
        %s991 = scalar_lea.vmem %s13, %s990
        // Predicated region
        $region109: #{forward.8} parent=71 // pred_check
          %p992 = pneg %p325
        $region110: #{forward.8} parent=71 // pred_check_branch
          %994 = sbr.rel (%p992) target = $region112
        $region111: #{forward.8} parent=71 // pred_region
          _
        $region112: #{forward.8} parent=71 // pred_fallthru
          _
      $region72: #{forward.8} parent=5 // pred_fallthru
        _
      %p995 = scmp.le.s32.totalorder 2, %s24
      // Predicated region
      $region113: #{forward.8} parent=5 // pred_check
        %p996 = pneg %p995
      $region114: #{forward.8} parent=5 // pred_check_branch
        %998 = sbr.rel (%p996) target = $region116
      $region115: #{forward.8} parent=5 // pred_region
        %s999 = ssub.s32 %s24, 2
        // Predicated region
        $region117: #{forward.8} parent=115 // pred_check
          %p1000 = pneg %p331
        $region118: #{forward.8} parent=115 // pred_check_branch
          %1002 = sbr.rel (%p1000) target = $region120
        $region119: #{forward.8} parent=115 // pred_region
          %p1003 = scmp.lt.s32.totalorder %s30, 1
          %s1004 = scalar_select %p1003, %s30, 1
          %s1005 = scalar_lea.vmem %s13, %s1004
        $region120: #{forward.8} parent=115 // pred_fallthru
          _
      $region116: #{forward.8} parent=5 // pred_fallthru
        _
    $region6: #{forward.8} parent=1 // loop_footer
      %s28 = sadd.s32 1, %s24
    $region7: #{forward.8} parent=1 // loop_footer_branch
      %23 = sbr.rel target = $region3
    $region8: #{forward.8} parent=1 // loop_exit
      _
    %1006 = vsyncpa [#allocation5], 1
    %s1007 = scalar_lea.sflag [#allocation5], 1
    %1008 = vsyncpa %s1007, 1
    %1009 = vsyncpa [#allocation7], 1
    %1010 = vsyncpa [#allocation10], 1
    %1011 = vsyncpa [#allocation13], 1
    %1012 = vsyncpa [#allocation16], 1

// kernel: forward.9
$region0: #{forward.9}
  #allocation0 [shape = 'u32[]', space=smem, size = 0x4, offset = 0x4, fixed_abs, tag = 'smem constant byte address 0x4 - core index']
  #allocation1 [shape = 'u32[72,128]{1,0:T(1,128)}', space=vmem, size = 0x9000, scoped, tag = 'internal scratch']
  #allocation2 [shape = 'bf16[2,32]{1,0:T(2,128)(2,1)}', space=vmem, size = 0x200, scoped, tag = 'scratch operand']
  #allocation3 [shape = 'f32[2,32]{1,0:T(2,128)}', space=vmem, size = 0x400, scoped, tag = 'scratch operand']
  %s0 = inlined_call_operand.vmem [shape: bf16[2,2,64], index: 0, kind: input, shape index: {}]
  %s1 = inlined_call_operand.vmem [shape: bf16[64,32], index: 1, kind: input, shape index: {}]
  %s2 = inlined_call_operand.hbm [shape: f32[1,32], index: 2, kind: input, shape index: {}]
  %s3 = inlined_call_operand.hbm [shape: f32[1,32], index: 3, kind: input, shape index: {}]
  %s4 = inlined_call_operand.hbm [shape: bf16[3,32,32], index: 4, kind: input, shape index: {}]
  %s5 = inlined_call_operand.hbm [shape: f32[1,32], index: 5, kind: input, shape index: {}]
  %s6 = inlined_call_operand.hbm [shape: f32[1,32], index: 6, kind: input, shape index: {}]
  %s7 = inlined_call_operand.hbm [shape: bf16[32,128], index: 7, kind: input, shape index: {}]
  %s8 = inlined_call_operand.hbm [shape: f32[1,128], index: 8, kind: input, shape index: {}]
  %s9 = inlined_call_operand.hbm [shape: f32[1,128], index: 9, kind: input, shape index: {}]
  %s10 = inlined_call_operand.hbm [shape: bf16[64,128], index: 10, kind: input, shape index: {}]
  %s11 = inlined_call_operand.hbm [shape: f32[1,128], index: 11, kind: input, shape index: {}]
  %s12 = inlined_call_operand.hbm [shape: f32[1,128], index: 12, kind: input, shape index: {}]
  %s13 = inlined_call_operand.vmem [shape: bf16[2,2,128], index: 13, kind: output, shape index: {}]
  %s14 = sld [smem:[#allocation0]]
  $region129: #{forward.9} parent=0
    _
  %s16 = ssub.s32 1, %s14
  %s17 = scalar_select 0, %s16, %s14
  $region1: #{forward.9} parent=0
    #allocation4 [shape = 'u8[512]{0}', space=vmem, size = 0x400, scoped, tag = 'input window, operand 2, single buffered']
    #allocation5 [shape = 's32[2]{0}', space=sflag, size = 0x8, scoped, tag = 'scoped memory for forward.9']
    #allocation6 [shape = 'u8[512]{0}', space=vmem, size = 0x400, scoped, tag = 'input window, operand 3, single buffered']
    #allocation7 [shape = 's32[1]{0}', space=sflag, size = 0x4, scoped, tag = 'scoped memory for forward.9']
    #allocation8 [shape = 'u8[24576]{0}', space=vmem, size = 0x6000, scoped, tag = 'input window, operand 4, single buffered']
    #allocation9 [shape = 'u8[512]{0}', space=vmem, size = 0x400, scoped, tag = 'input window, operand 5, single buffered']
    #allocation10 [shape = 's32[1]{0}', space=sflag, size = 0x4, scoped, tag = 'scoped memory for forward.9']
    #allocation11 [shape = 'u8[512]{0}', space=vmem, size = 0x400, scoped, tag = 'input window, operand 6, single buffered']
    #allocation12 [shape = 'u8[8192]{0}', space=vmem, size = 0x2000, scoped, tag = 'input window, operand 7, single buffered']
    #allocation13 [shape = 's32[1]{0}', space=sflag, size = 0x4, scoped, tag = 'scoped memory for forward.9']
    #allocation14 [shape = 'u8[512]{0}', space=vmem, size = 0x400, scoped, tag = 'input window, operand 8, single buffered']
    #allocation15 [shape = 'u8[512]{0}', space=vmem, size = 0x400, scoped, tag = 'input window, operand 9, single buffered']
    #allocation16 [shape = 's32[1]{0}', space=sflag, size = 0x4, scoped, tag = 'scoped memory for forward.9']
    #allocation17 [shape = 'u8[16384]{0}', space=vmem, size = 0x4000, scoped, tag = 'input window, operand 10, single buffered']
    #allocation18 [shape = 'u8[512]{0}', space=vmem, size = 0x400, scoped, tag = 'input window, operand 11, single buffered']
    #allocation19 [shape = 's32[1]{0}', space=sflag, size = 0x4, scoped, tag = 'scoped memory for forward.9']
    #allocation20 [shape = 'u8[512]{0}', space=vmem, size = 0x400, scoped, tag = 'input window, operand 12, single buffered']
    %18 = vsyncpa [#allocation5], 0
    %19 = vsyncpa [#allocation7], 0
    %20 = vsyncpa [#allocation10], 0
    %21 = vsyncpa [#allocation13], 0
    %22 = vsyncpa [#allocation16], 0
    %23 = vsyncpa [#allocation19], 0
    loop: start=0, step=1, limit=4
    $region2: #{forward.9} parent=1 // loop_pre_header
      _
    $region3: #{forward.9} parent=1 // loop_header
      %s25 = sphi 0, %s29
      %p26 = scmp.ge.s32.totalorder %s25, 4
      %s35 = sphi 0, %s37
      %s38 = sphi 0, %s35
      %s39 = sphi 0, %s38
      %s55 = sphi 0, %s39
      %s59 = sphi 0, %s59
      %s61 = sphi 0, %s59
      %s62 = sphi 0, %s61
      %s76 = sphi 0, %s62
      %s80 = sphi 0, %s80
      %s82 = sphi 0, %s80
      %s83 = sphi 0, %s82
      %s97 = sphi 0, %s83
      %s101 = sphi 0, %s101
      %s103 = sphi 0, %s101
      %s104 = sphi 0, %s103
      %s118 = sphi 0, %s104
      %s122 = sphi 0, %s122
      %s124 = sphi 0, %s122
      %s125 = sphi 0, %s124
      %s139 = sphi 0, %s125
      %s143 = sphi 0, %s143
      %s145 = sphi 0, %s143
      %s146 = sphi 0, %s145
      %s160 = sphi 0, %s146
      %s164 = sphi 0, %s164
      %s166 = sphi 0, %s164
      %s167 = sphi 0, %s166
      %s181 = sphi 0, %s167
      %s185 = sphi 0, %s185
      %s187 = sphi 0, %s185
      %s188 = sphi 0, %s187
      %s202 = sphi 0, %s188
      %s206 = sphi 0, %s206
      %s208 = sphi 0, %s206
      %s209 = sphi 0, %s208
      %s223 = sphi 0, %s209
      %s227 = sphi 0, %s227
      %s229 = sphi 0, %s227
      %s230 = sphi 0, %s229
      %s244 = sphi 0, %s230
      %s248 = sphi 0, %s248
      %s250 = sphi 0, %s248
      %s251 = sphi 0, %s250
      %s265 = sphi 0, %s251
      %s269 = sphi 0, %s269
      %s271 = sphi 0, %s269
      %s272 = sphi 0, %s271
      %s286 = sphi 0, %s272
      %s290 = sphi 0, %s290
      %s292 = sphi 0, %s290
      %s293 = sphi 0, %s292
      %s307 = sphi 0, %s293
      %s313 = sphi 0, %s315
      %s316 = sphi 0, %s313
      %s317 = sphi 0, %s316
      %s333 = sphi 0, %s317
    $region4: #{forward.9} parent=1 // loop_header_branch
      %28 = sbr.rel (%p26) target = $region8
    $region5: #{forward.9} parent=1 // loop_body
      %s30 = ssub.s32 %s25, 1
      %s31 = ssub.s32 %s25, 2
      %s32 = sadd.s32 %s25, 1
      %s33 = ssub.s32 %s25, %s32
      %p34 = scmp.eq.s32.totalorder %s33, 0
      %s36 = sadd.s32 %s35, 1
      %s37 = scalar_select %p34, %s35, %s36
      %p40 = pneg %p34
      %p41 = scmp.eq.s32.totalorder %s25, 1
      %p42 = por %p40, %p41
      %p43 = scmp.ne.s32.totalorder %s35, %s38
      %p44 = scmp.eq.s32.totalorder %s25, 0
      %p45 = por %p43, %p44
      %p46 = scmp.ne.s32.totalorder %s35, %s38
      %p47 = scmp.eq.s32.totalorder %s30, 1
      %p48 = por %p46, %p47
      %p49 = scmp.ne.s32.totalorder %s38, %s39
      %p50 = scmp.eq.s32.totalorder %s30, 0
      %p51 = por %p49, %p50
      %p52 = scmp.ne.s32.totalorder %s38, %s39
      %p53 = scmp.eq.s32.totalorder %s31, 1
      %p54 = por %p52, %p53
      %p56 = scmp.ne.s32.totalorder %s39, %s55
      %p57 = scmp.eq.s32.totalorder %s31, 0
      %p58 = por %p56, %p57
      %s60 = sadd.s32 %s59, 1
      %p63 = scmp.eq.s32.totalorder %s25, 1
      %p64 = scmp.ne.s32.totalorder %s59, %s61
      %p65 = scmp.eq.s32.totalorder %s25, 0
      %p66 = por %p64, %p65
      %p67 = scmp.ne.s32.totalorder %s59, %s61
      %p68 = scmp.eq.s32.totalorder %s30, 1
      %p69 = por %p67, %p68
      %p70 = scmp.ne.s32.totalorder %s61, %s62
      %p71 = scmp.eq.s32.totalorder %s30, 0
      %p72 = por %p70, %p71
      %p73 = scmp.ne.s32.totalorder %s61, %s62
      %p74 = scmp.eq.s32.totalorder %s31, 1
      %p75 = por %p73, %p74
      %p77 = scmp.ne.s32.totalorder %s62, %s76
      %p78 = scmp.eq.s32.totalorder %s31, 0
      %p79 = por %p77, %p78
      %s81 = sadd.s32 %s80, 1
      %p84 = scmp.eq.s32.totalorder %s25, 1
      %p85 = scmp.ne.s32.totalorder %s80, %s82
      %p86 = scmp.eq.s32.totalorder %s25, 0
      %p87 = por %p85, %p86
      %p88 = scmp.ne.s32.totalorder %s80, %s82
      %p89 = scmp.eq.s32.totalorder %s30, 1
      %p90 = por %p88, %p89
      %p91 = scmp.ne.s32.totalorder %s82, %s83
      %p92 = scmp.eq.s32.totalorder %s30, 0
      %p93 = por %p91, %p92
      %p94 = scmp.ne.s32.totalorder %s82, %s83
      %p95 = scmp.eq.s32.totalorder %s31, 1
      %p96 = por %p94, %p95
      %p98 = scmp.ne.s32.totalorder %s83, %s97
      %p99 = scmp.eq.s32.totalorder %s31, 0
      %p100 = por %p98, %p99
      %s102 = sadd.s32 %s101, 1
      %p105 = scmp.eq.s32.totalorder %s25, 1
      %p106 = scmp.ne.s32.totalorder %s101, %s103
      %p107 = scmp.eq.s32.totalorder %s25, 0
      %p108 = por %p106, %p107
      %p109 = scmp.ne.s32.totalorder %s101, %s103
      %p110 = scmp.eq.s32.totalorder %s30, 1
      %p111 = por %p109, %p110
      %p112 = scmp.ne.s32.totalorder %s103, %s104
      %p113 = scmp.eq.s32.totalorder %s30, 0
      %p114 = por %p112, %p113
      %p115 = scmp.ne.s32.totalorder %s103, %s104
      %p116 = scmp.eq.s32.totalorder %s31, 1
      %p117 = por %p115, %p116
      %p119 = scmp.ne.s32.totalorder %s104, %s118
      %p120 = scmp.eq.s32.totalorder %s31, 0
      %p121 = por %p119, %p120
      %s123 = sadd.s32 %s122, 1
      %p126 = scmp.eq.s32.totalorder %s25, 1
      %p127 = scmp.ne.s32.totalorder %s122, %s124
      %p128 = scmp.eq.s32.totalorder %s25, 0
      %p129 = por %p127, %p128
      %p130 = scmp.ne.s32.totalorder %s122, %s124
      %p131 = scmp.eq.s32.totalorder %s30, 1
      %p132 = por %p130, %p131
      %p133 = scmp.ne.s32.totalorder %s124, %s125
      %p134 = scmp.eq.s32.totalorder %s30, 0
      %p135 = por %p133, %p134
      %p136 = scmp.ne.s32.totalorder %s124, %s125
      %p137 = scmp.eq.s32.totalorder %s31, 1
      %p138 = por %p136, %p137
      %p140 = scmp.ne.s32.totalorder %s125, %s139
      %p141 = scmp.eq.s32.totalorder %s31, 0
      %p142 = por %p140, %p141
      %s144 = sadd.s32 %s143, 1
      %p147 = scmp.eq.s32.totalorder %s25, 1
      %p148 = scmp.ne.s32.totalorder %s143, %s145
      %p149 = scmp.eq.s32.totalorder %s25, 0
      %p150 = por %p148, %p149
      %p151 = scmp.ne.s32.totalorder %s143, %s145
      %p152 = scmp.eq.s32.totalorder %s30, 1
      %p153 = por %p151, %p152
      %p154 = scmp.ne.s32.totalorder %s145, %s146
      %p155 = scmp.eq.s32.totalorder %s30, 0
      %p156 = por %p154, %p155
      %p157 = scmp.ne.s32.totalorder %s145, %s146
      %p158 = scmp.eq.s32.totalorder %s31, 1
      %p159 = por %p157, %p158
      %p161 = scmp.ne.s32.totalorder %s146, %s160
      %p162 = scmp.eq.s32.totalorder %s31, 0
      %p163 = por %p161, %p162
      %s165 = sadd.s32 %s164, 1
      %p168 = scmp.eq.s32.totalorder %s25, 1
      %p169 = scmp.ne.s32.totalorder %s164, %s166
      %p170 = scmp.eq.s32.totalorder %s25, 0
      %p171 = por %p169, %p170
      %p172 = scmp.ne.s32.totalorder %s164, %s166
      %p173 = scmp.eq.s32.totalorder %s30, 1
      %p174 = por %p172, %p173
      %p175 = scmp.ne.s32.totalorder %s166, %s167
      %p176 = scmp.eq.s32.totalorder %s30, 0
      %p177 = por %p175, %p176
      %p178 = scmp.ne.s32.totalorder %s166, %s167
      %p179 = scmp.eq.s32.totalorder %s31, 1
      %p180 = por %p178, %p179
      %p182 = scmp.ne.s32.totalorder %s167, %s181
      %p183 = scmp.eq.s32.totalorder %s31, 0
      %p184 = por %p182, %p183
      %s186 = sadd.s32 %s185, 1
      %p189 = scmp.eq.s32.totalorder %s25, 1
      %p190 = scmp.ne.s32.totalorder %s185, %s187
      %p191 = scmp.eq.s32.totalorder %s25, 0
      %p192 = por %p190, %p191
      %p193 = scmp.ne.s32.totalorder %s185, %s187
      %p194 = scmp.eq.s32.totalorder %s30, 1
      %p195 = por %p193, %p194
      %p196 = scmp.ne.s32.totalorder %s187, %s188
      %p197 = scmp.eq.s32.totalorder %s30, 0
      %p198 = por %p196, %p197
      %p199 = scmp.ne.s32.totalorder %s187, %s188
      %p200 = scmp.eq.s32.totalorder %s31, 1
      %p201 = por %p199, %p200
      %p203 = scmp.ne.s32.totalorder %s188, %s202
      %p204 = scmp.eq.s32.totalorder %s31, 0
      %p205 = por %p203, %p204
      %s207 = sadd.s32 %s206, 1
      %p210 = scmp.eq.s32.totalorder %s25, 1
      %p211 = scmp.ne.s32.totalorder %s206, %s208
      %p212 = scmp.eq.s32.totalorder %s25, 0
      %p213 = por %p211, %p212
      %p214 = scmp.ne.s32.totalorder %s206, %s208
      %p215 = scmp.eq.s32.totalorder %s30, 1
      %p216 = por %p214, %p215
      %p217 = scmp.ne.s32.totalorder %s208, %s209
      %p218 = scmp.eq.s32.totalorder %s30, 0
      %p219 = por %p217, %p218
      %p220 = scmp.ne.s32.totalorder %s208, %s209
      %p221 = scmp.eq.s32.totalorder %s31, 1
      %p222 = por %p220, %p221
      %p224 = scmp.ne.s32.totalorder %s209, %s223
      %p225 = scmp.eq.s32.totalorder %s31, 0
      %p226 = por %p224, %p225
      %s228 = sadd.s32 %s227, 1
      %p231 = scmp.eq.s32.totalorder %s25, 1
      %p232 = scmp.ne.s32.totalorder %s227, %s229
      %p233 = scmp.eq.s32.totalorder %s25, 0
      %p234 = por %p232, %p233
      %p235 = scmp.ne.s32.totalorder %s227, %s229
      %p236 = scmp.eq.s32.totalorder %s30, 1
      %p237 = por %p235, %p236
      %p238 = scmp.ne.s32.totalorder %s229, %s230
      %p239 = scmp.eq.s32.totalorder %s30, 0
      %p240 = por %p238, %p239
      %p241 = scmp.ne.s32.totalorder %s229, %s230
      %p242 = scmp.eq.s32.totalorder %s31, 1
      %p243 = por %p241, %p242
      %p245 = scmp.ne.s32.totalorder %s230, %s244
      %p246 = scmp.eq.s32.totalorder %s31, 0
      %p247 = por %p245, %p246
      %s249 = sadd.s32 %s248, 1
      %p252 = scmp.eq.s32.totalorder %s25, 1
      %p253 = scmp.ne.s32.totalorder %s248, %s250
      %p254 = scmp.eq.s32.totalorder %s25, 0
      %p255 = por %p253, %p254
      %p256 = scmp.ne.s32.totalorder %s248, %s250
      %p257 = scmp.eq.s32.totalorder %s30, 1
      %p258 = por %p256, %p257
      %p259 = scmp.ne.s32.totalorder %s250, %s251
      %p260 = scmp.eq.s32.totalorder %s30, 0
      %p261 = por %p259, %p260
      %p262 = scmp.ne.s32.totalorder %s250, %s251
      %p263 = scmp.eq.s32.totalorder %s31, 1
      %p264 = por %p262, %p263
      %p266 = scmp.ne.s32.totalorder %s251, %s265
      %p267 = scmp.eq.s32.totalorder %s31, 0
      %p268 = por %p266, %p267
      %s270 = sadd.s32 %s269, 1
      %p273 = scmp.eq.s32.totalorder %s25, 1
      %p274 = scmp.ne.s32.totalorder %s269, %s271
      %p275 = scmp.eq.s32.totalorder %s25, 0
      %p276 = por %p274, %p275
      %p277 = scmp.ne.s32.totalorder %s269, %s271
      %p278 = scmp.eq.s32.totalorder %s30, 1
      %p279 = por %p277, %p278
      %p280 = scmp.ne.s32.totalorder %s271, %s272
      %p281 = scmp.eq.s32.totalorder %s30, 0
      %p282 = por %p280, %p281
      %p283 = scmp.ne.s32.totalorder %s271, %s272
      %p284 = scmp.eq.s32.totalorder %s31, 1
      %p285 = por %p283, %p284
      %p287 = scmp.ne.s32.totalorder %s272, %s286
      %p288 = scmp.eq.s32.totalorder %s31, 0
      %p289 = por %p287, %p288
      %s291 = sadd.s32 %s290, 1
      %p294 = scmp.eq.s32.totalorder %s25, 1
      %p295 = scmp.ne.s32.totalorder %s290, %s292
      %p296 = scmp.eq.s32.totalorder %s25, 0
      %p297 = por %p295, %p296
      %p298 = scmp.ne.s32.totalorder %s290, %s292
      %p299 = scmp.eq.s32.totalorder %s30, 1
      %p300 = por %p298, %p299
      %p301 = scmp.ne.s32.totalorder %s292, %s293
      %p302 = scmp.eq.s32.totalorder %s30, 0
      %p303 = por %p301, %p302
      %p304 = scmp.ne.s32.totalorder %s292, %s293
      %p305 = scmp.eq.s32.totalorder %s31, 1
      %p306 = por %p304, %p305
      %p308 = scmp.ne.s32.totalorder %s293, %s307
      %p309 = scmp.eq.s32.totalorder %s31, 0
      %p310 = por %p308, %p309
      %s311 = ssub.s32 %s25, %s32
      %p312 = scmp.eq.s32.totalorder %s311, 0
      %s314 = sadd.s32 %s313, 1
      %s315 = scalar_select %p312, %s313, %s314
      %p318 = pneg %p312
      %p319 = scmp.eq.s32.totalorder %s25, 1
      %p320 = por %p318, %p319
      %p321 = scmp.ne.s32.totalorder %s313, %s316
      %p322 = scmp.eq.s32.totalorder %s25, 0
      %p323 = por %p321, %p322
      %p324 = scmp.ne.s32.totalorder %s313, %s316
      %p325 = scmp.eq.s32.totalorder %s30, 1
      %p326 = por %p324, %p325
      %p327 = scmp.ne.s32.totalorder %s316, %s317
      %p328 = scmp.eq.s32.totalorder %s30, 0
      %p329 = por %p327, %p328
      %p330 = scmp.ne.s32.totalorder %s316, %s317
      %p331 = scmp.eq.s32.totalorder %s31, 1
      %p332 = por %p330, %p331
      %p334 = scmp.ne.s32.totalorder %s317, %s333
      %p335 = scmp.eq.s32.totalorder %s31, 0
      %p336 = por %p334, %p335
      %p337 = scmp.le.s32.totalorder 1, %s25
      %p338 = scmp.lt.s32.totalorder %s25, 3
      %p339 = pnand %p337, %p338
      %p340 = pneg %p339
      // Predicated region
      $region9: #{forward.9} parent=5 // pred_check
        _
      $region10: #{forward.9} parent=5 // pred_check_branch
        %342 = sbr.rel (%p339) target = $region12
      $region11: #{forward.9} parent=5 // pred_region
        %s343 = ssub.s32 %s25, 1
        // Predicated region
        $region13: #{forward.9} parent=11 // pred_check
          %p344 = pneg %p72
        $region14: #{forward.9} parent=11 // pred_check_branch
          %346 = sbr.rel (%p344) target = $region16
        $region15: #{forward.9} parent=11 // pred_region
          _
        $region16: #{forward.9} parent=11 // pred_fallthru
          _
        // Predicated region
        $region17: #{forward.9} parent=11 // pred_check
          %p347 = pneg %p93
        $region18: #{forward.9} parent=11 // pred_check_branch
          %349 = sbr.rel (%p347) target = $region20
        $region19: #{forward.9} parent=11 // pred_region
          %351 = vsyncadd [#allocation5], 0
          %s353 = sshll.u32 %s2, 4
          %s354 = int_to_ptr.hbm [resolvable:$true] %s353
          %s355 = sshll.u32 [#allocation4], 4
          %s356 = int_to_ptr.vmem [resolvable:$true] %s355
          %358 = dma.hbm_to_vmem [thread:$0]  %s354, 16, %s356, [#allocation5]
        $region20: #{forward.9} parent=11 // pred_fallthru
          _
        // Predicated region
        $region21: #{forward.9} parent=11 // pred_check
          %p359 = pneg %p114
        $region22: #{forward.9} parent=11 // pred_check_branch
          %361 = sbr.rel (%p359) target = $region24
        $region23: #{forward.9} parent=11 // pred_region
          %363 = vsyncadd [#allocation7], 0
          %s365 = sshll.u32 %s3, 4
          %s366 = int_to_ptr.hbm [resolvable:$true] %s365
          %s367 = sshll.u32 [#allocation6], 4
          %s368 = int_to_ptr.vmem [resolvable:$true] %s367
          %370 = dma.hbm_to_vmem [thread:$0]  %s366, 16, %s368, [#allocation7]
        $region24: #{forward.9} parent=11 // pred_fallthru
          _
        // Predicated region
        $region25: #{forward.9} parent=11 // pred_check
          %p371 = pneg %p135
        $region26: #{forward.9} parent=11 // pred_check_branch
          %373 = sbr.rel (%p371) target = $region28
        $region27: #{forward.9} parent=11 // pred_region
          %375 = vsyncadd [#allocation7], 0
          %s376 = sshll.u32 %s4, 4
          %s377 = int_to_ptr.hbm [resolvable:$true] %s376
          %s378 = sshll.u32 [#allocation8], 4
          %s379 = int_to_ptr.vmem [resolvable:$true] %s378
          %384 = dma.hbm_to_vmem [thread:$0]  %s377, 768, %s379, [#allocation7], 64, 64, 4
        $region28: #{forward.9} parent=11 // pred_fallthru
          _
        // Predicated region
        $region29: #{forward.9} parent=11 // pred_check
          %p385 = pneg %p156
        $region30: #{forward.9} parent=11 // pred_check_branch
          %387 = sbr.rel (%p385) target = $region32
        $region31: #{forward.9} parent=11 // pred_region
          %389 = vsyncadd [#allocation10], 0
          %s391 = sshll.u32 %s5, 4
          %s392 = int_to_ptr.hbm [resolvable:$true] %s391
          %s393 = sshll.u32 [#allocation9], 4
          %s394 = int_to_ptr.vmem [resolvable:$true] %s393
          %396 = dma.hbm_to_vmem [thread:$0]  %s392, 16, %s394, [#allocation10]
        $region32: #{forward.9} parent=11 // pred_fallthru
          _
        // Predicated region
        $region33: #{forward.9} parent=11 // pred_check
          %p397 = pneg %p177
        $region34: #{forward.9} parent=11 // pred_check_branch
          %399 = sbr.rel (%p397) target = $region36
        $region35: #{forward.9} parent=11 // pred_region
          %401 = vsyncadd [#allocation10], 0
          %s403 = sshll.u32 %s6, 4
          %s404 = int_to_ptr.hbm [resolvable:$true] %s403
          %s405 = sshll.u32 [#allocation11], 4
          %s406 = int_to_ptr.vmem [resolvable:$true] %s405
          %408 = dma.hbm_to_vmem [thread:$0]  %s404, 16, %s406, [#allocation10]
        $region36: #{forward.9} parent=11 // pred_fallthru
          _
        // Predicated region
        $region37: #{forward.9} parent=11 // pred_check
          %p409 = pneg %p198
        $region38: #{forward.9} parent=11 // pred_check_branch
          %411 = sbr.rel (%p409) target = $region40
        $region39: #{forward.9} parent=11 // pred_region
          %413 = vsyncadd [#allocation13], 0
          %s414 = sshll.u32 %s7, 4
          %s415 = int_to_ptr.hbm [resolvable:$true] %s414
          %s416 = sshll.u32 [#allocation12], 4
          %s417 = int_to_ptr.vmem [resolvable:$true] %s416
          %422 = dma.hbm_to_vmem [thread:$0]  %s415, 256, %s417, [#allocation13], 64, 64, 4
        $region40: #{forward.9} parent=11 // pred_fallthru
          _
        // Predicated region
        $region41: #{forward.9} parent=11 // pred_check
          %p423 = pneg %p219
        $region42: #{forward.9} parent=11 // pred_check_branch
          %425 = sbr.rel (%p423) target = $region44
        $region43: #{forward.9} parent=11 // pred_region
          %427 = vsyncadd [#allocation13], 0
          %s429 = sshll.u32 %s8, 4
          %s430 = int_to_ptr.hbm [resolvable:$true] %s429
          %s431 = sshll.u32 [#allocation14], 4
          %s432 = int_to_ptr.vmem [resolvable:$true] %s431
          %434 = dma.hbm_to_vmem [thread:$0]  %s430, 16, %s432, [#allocation13]
        $region44: #{forward.9} parent=11 // pred_fallthru
          _
        // Predicated region
        $region45: #{forward.9} parent=11 // pred_check
          %p435 = pneg %p240
        $region46: #{forward.9} parent=11 // pred_check_branch
          %437 = sbr.rel (%p435) target = $region48
        $region47: #{forward.9} parent=11 // pred_region
          %439 = vsyncadd [#allocation16], 0
          %s441 = sshll.u32 %s9, 4
          %s442 = int_to_ptr.hbm [resolvable:$true] %s441
          %s443 = sshll.u32 [#allocation15], 4
          %s444 = int_to_ptr.vmem [resolvable:$true] %s443
          %446 = dma.hbm_to_vmem [thread:$0]  %s442, 16, %s444, [#allocation16]
        $region48: #{forward.9} parent=11 // pred_fallthru
          _
        // Predicated region
        $region49: #{forward.9} parent=11 // pred_check
          %p447 = pneg %p261
        $region50: #{forward.9} parent=11 // pred_check_branch
          %449 = sbr.rel (%p447) target = $region52
        $region51: #{forward.9} parent=11 // pred_region
          %451 = vsyncadd [#allocation16], 0
          %s452 = sshll.u32 %s10, 4
          %s453 = int_to_ptr.hbm [resolvable:$true] %s452
          %s454 = sshll.u32 [#allocation17], 4
          %s455 = int_to_ptr.vmem [resolvable:$true] %s454
          %460 = dma.hbm_to_vmem [thread:$0]  %s453, 512, %s455, [#allocation16], 64, 64, 4
        $region52: #{forward.9} parent=11 // pred_fallthru
          _
        // Predicated region
        $region53: #{forward.9} parent=11 // pred_check
          %p461 = pneg %p282
        $region54: #{forward.9} parent=11 // pred_check_branch
          %463 = sbr.rel (%p461) target = $region56
        $region55: #{forward.9} parent=11 // pred_region
          %465 = vsyncadd [#allocation19], 0
          %s467 = sshll.u32 %s11, 4
          %s468 = int_to_ptr.hbm [resolvable:$true] %s467
          %s469 = sshll.u32 [#allocation18], 4
          %s470 = int_to_ptr.vmem [resolvable:$true] %s469
          %472 = dma.hbm_to_vmem [thread:$0]  %s468, 16, %s470, [#allocation19]
        $region56: #{forward.9} parent=11 // pred_fallthru
          _
        // Predicated region
        $region57: #{forward.9} parent=11 // pred_check
          %p473 = pneg %p303
        $region58: #{forward.9} parent=11 // pred_check_branch
          %475 = sbr.rel (%p473) target = $region60
        $region59: #{forward.9} parent=11 // pred_region
          %477 = vsyncadd [#allocation19], 0
          %s479 = sshll.u32 %s12, 4
          %s480 = int_to_ptr.hbm [resolvable:$true] %s479
          %s481 = sshll.u32 [#allocation20], 4
          %s482 = int_to_ptr.vmem [resolvable:$true] %s481
          %484 = dma.hbm_to_vmem [thread:$0]  %s480, 16, %s482, [#allocation19]
        $region60: #{forward.9} parent=11 // pred_fallthru
          _
      $region12: #{forward.9} parent=5 // pred_fallthru
        _
      %p485 = scmp.lt.s32.totalorder %s25, 2
      // Predicated region
      $region61: #{forward.9} parent=5 // pred_check
        %p486 = pneg %p485
      $region62: #{forward.9} parent=5 // pred_check_branch
        %488 = sbr.rel (%p486) target = $region64
      $region63: #{forward.9} parent=5 // pred_region
        // Predicated region
        $region65: #{forward.9} parent=63 // pred_check
          %p489 = pneg %p45
        $region66: #{forward.9} parent=63 // pred_check_branch
          %491 = sbr.rel (%p489) target = $region68
        $region67: #{forward.9} parent=63 // pred_region
          %p492 = scmp.lt.s32.totalorder %s25, 1
          %s493 = scalar_select %p492, %s25, 1
          %s494 = scalar_lea.vmem %s0, %s493
        $region68: #{forward.9} parent=63 // pred_fallthru
          _
      $region64: #{forward.9} parent=5 // pred_fallthru
        _
      %p495 = scmp.le.s32.totalorder 1, %s25
      %p496 = scmp.lt.s32.totalorder %s25, 3
      %p497 = pnand %p495, %p496
      %p498 = pneg %p497
      // Predicated region
      $region69: #{forward.9} parent=5 // pred_check
        _
      $region70: #{forward.9} parent=5 // pred_check_branch
        %500 = sbr.rel (%p497) target = $region72
      $region71: #{forward.9} parent=5 // pred_region
        %s501 = ssub.s32 %s25, 1
        // Predicated region
        $region73: #{forward.9} parent=71 // pred_check
          %p502 = pneg %p93
        $region74: #{forward.9} parent=71 // pred_check_branch
          %504 = sbr.rel (%p502) target = $region76
        $region75: #{forward.9} parent=71 // pred_region
          %506 = dma.done [#allocation5], 16
        $region76: #{forward.9} parent=71 // pred_fallthru
          _
        // Predicated region
        $region77: #{forward.9} parent=71 // pred_check
          %p507 = pneg %p114
        $region78: #{forward.9} parent=71 // pred_check_branch
          %509 = sbr.rel (%p507) target = $region80
        $region79: #{forward.9} parent=71 // pred_region
          %511 = dma.done [#allocation7], 16
        $region80: #{forward.9} parent=71 // pred_fallthru
          _
        // Predicated region
        $region81: #{forward.9} parent=71 // pred_check
          %p512 = pneg %p135
        $region82: #{forward.9} parent=71 // pred_check_branch
          %514 = sbr.rel (%p512) target = $region84
        $region83: #{forward.9} parent=71 // pred_region
          %516 = dma.done [#allocation7], 768
        $region84: #{forward.9} parent=71 // pred_fallthru
          _
        // Predicated region
        $region85: #{forward.9} parent=71 // pred_check
          %p517 = pneg %p156
        $region86: #{forward.9} parent=71 // pred_check_branch
          %519 = sbr.rel (%p517) target = $region88
        $region87: #{forward.9} parent=71 // pred_region
          %521 = dma.done [#allocation10], 16
        $region88: #{forward.9} parent=71 // pred_fallthru
          _
        // Predicated region
        $region89: #{forward.9} parent=71 // pred_check
          %p522 = pneg %p177
        $region90: #{forward.9} parent=71 // pred_check_branch
          %524 = sbr.rel (%p522) target = $region92
        $region91: #{forward.9} parent=71 // pred_region
          %526 = dma.done [#allocation10], 16
        $region92: #{forward.9} parent=71 // pred_fallthru
          _
        // Predicated region
        $region93: #{forward.9} parent=71 // pred_check
          %p527 = pneg %p198
        $region94: #{forward.9} parent=71 // pred_check_branch
          %529 = sbr.rel (%p527) target = $region96
        $region95: #{forward.9} parent=71 // pred_region
          %531 = dma.done [#allocation13], 256
        $region96: #{forward.9} parent=71 // pred_fallthru
          _
        // Predicated region
        $region97: #{forward.9} parent=71 // pred_check
          %p532 = pneg %p219
        $region98: #{forward.9} parent=71 // pred_check_branch
          %534 = sbr.rel (%p532) target = $region100
        $region99: #{forward.9} parent=71 // pred_region
          %536 = dma.done [#allocation13], 16
        $region100: #{forward.9} parent=71 // pred_fallthru
          _
        // Predicated region
        $region101: #{forward.9} parent=71 // pred_check
          %p537 = pneg %p240
        $region102: #{forward.9} parent=71 // pred_check_branch
          %539 = sbr.rel (%p537) target = $region104
        $region103: #{forward.9} parent=71 // pred_region
          %541 = dma.done [#allocation16], 16
        $region104: #{forward.9} parent=71 // pred_fallthru
          _
        // Predicated region
        $region105: #{forward.9} parent=71 // pred_check
          %p542 = pneg %p261
        $region106: #{forward.9} parent=71 // pred_check_branch
          %544 = sbr.rel (%p542) target = $region108
        $region107: #{forward.9} parent=71 // pred_region
          %546 = dma.done [#allocation16], 512
        $region108: #{forward.9} parent=71 // pred_fallthru
          _
        // Predicated region
        $region109: #{forward.9} parent=71 // pred_check
          %p547 = pneg %p282
        $region110: #{forward.9} parent=71 // pred_check_branch
          %549 = sbr.rel (%p547) target = $region112
        $region111: #{forward.9} parent=71 // pred_region
          %551 = dma.done [#allocation19], 16
        $region112: #{forward.9} parent=71 // pred_fallthru
          _
        // Predicated region
        $region113: #{forward.9} parent=71 // pred_check
          %p552 = pneg %p303
        $region114: #{forward.9} parent=71 // pred_check_branch
          %554 = sbr.rel (%p552) target = $region116
        $region115: #{forward.9} parent=71 // pred_region
          %556 = dma.done [#allocation19], 16
        $region116: #{forward.9} parent=71 // pred_fallthru
          _
        %p557 = scmp.lt.s32.totalorder %s30, 1
        %s558 = scalar_select %p557, %s30, 1
        %s559 = scalar_lea.vmem %s0, %s558
        %p560 = pneg %p51
        %p561 = pneg %p48
        %p562 = pneg %p72
        %p563 = pneg %p69
        %p564 = pneg %p93
        %p565 = pneg %p90
        %p566 = pneg %p114
        %p567 = pneg %p111
        %p568 = pneg %p135
        %p569 = pneg %p132
        %p570 = pneg %p156
        %p571 = pneg %p153
        %p572 = pneg %p177
        %p573 = pneg %p174
        %p574 = pneg %p198
        %p575 = pneg %p195
        %p576 = pneg %p219
        %p577 = pneg %p216
        %p578 = pneg %p240
        %p579 = pneg %p237
        %p580 = pneg %p261
        %p581 = pneg %p258
        %p582 = pneg %p282
        %p583 = pneg %p279
        %p584 = pneg %p303
        %p585 = pneg %p300
        %p586 = pneg %p329
        %p587 = pneg %p326
        %p588 = scmp.lt.s32.totalorder %s30, 1
        %s589 = scalar_select %p588, %s30, 1
        %s590 = scalar_lea.vmem %s13, %s589
        %p591 = scmp.lt.s32.totalorder %s30, 1
        %s592 = scalar_select %p591, %s30, 1
        %s593 = scalar_lea.vmem %s0, %s592
        %p594 = scmp.lt.s32.totalorder %s30, 1
        %s595 = scalar_select %p594, %s30, 1
        %s596 = scalar_lea.vmem %s13, %s595
        %v598 = vld [vmem:[%s593] sm:$0x1]
        %v599 = vld [vmem:[%s1] sm:$0xf]
        %v600 = vld [vmem:[%s1 + $0x4] sm:$0xf]
        %v601 = vld [vmem:[%s1 + $0x8] sm:$0xf]
        %v602 = vld [vmem:[%s1 + $0xc] sm:$0xf]
        %v603 = vld [vmem:[%s1 + $0x10] sm:$0xf]
        %v604 = vld [vmem:[%s1 + $0x14] sm:$0xf]
        %v605 = vld [vmem:[%s1 + $0x18] sm:$0xf]
        %v606 = vld [vmem:[%s1 + $0x1c] sm:$0xf]
        %v615 = vunpack.c.l.b16 %v599
        %v616 = vunpack.c.l.b16 %v600
        %v617 = vunpack.c.l.b16 %v601
        %v618 = vunpack.c.l.b16 %v602
        %v619 = vunpack.c.l.b16 %v603
        %v620 = vunpack.c.l.b16 %v604
        %v621 = vunpack.c.l.b16 %v605
        %v622 = vunpack.c.l.b16 %v606
        %v623 = vpack.c.b16 %v616, %v615
        %v624 = vpack.c.b16 %v618, %v617
        %v625 = vpack.c.b16 %v620, %v619
        %v626 = vpack.c.b16 %v622, %v621
        %vm631 = vcmask 523264
        %v633 = vsel %vm631, %v598, 0
        %635 = vmatpush.bf16.msra.mxu0 0
        %636 = vmatpush.bf16.msra.mxu0 0
        %637 = vmatpush.bf16.msra.mxu0 0
        %638 = vmatpush.bf16.msra.mxu0 0
        %639 = vmatpush.bf16.msra.mxu0 %v626
        %640 = vmatpush.bf16.msra.mxu0 %v625
        %641 = vmatpush.bf16.msra.mxu0 %v624
        %642 = vmatpush.bf16.msra.mxu0 %v623
        %643 = vmatmul.bf16.gmra.mxu0 %v633
        %v644 = vpop.f32.mrf.mxu0
        %v645 = vadd.f32 0.0, %v644
        %v646 = vpop.f32.mrf.mxu0
        %647 = vdwg.mxu0
        %v648 = vld [vmem:[#allocation4] sm:$0x1]
        %v650 = vperm.slane %v648, 0
        %v652 = vmul.f32 %v645, %v650
        %v653 = vld [vmem:[#allocation6] sm:$0x1]
        %v655 = vperm.slane %v653, 0
        %v657 = vadd.f32 %v652, %v655
        %v658 = vmax.f32 %v657, 0.0
        %v659 = vpack.c.bf16 %v658, %v658
        %vm660 = vcmask 253952
        %661 = vst.msk [vmem:[#allocation2] sm:$0x1] %vm660, %v659
        %vm662 = vcmask 254976
        %663 = vst.msk [vmem:[#allocation3] sm:$0x3] %vm662, 0.0
        %v664 = vld [vmem:[#allocation3] sm:$0x3]
        %v665 = vld [vmem:[#allocation2] sm:$0x1]
        %s666 = scalar_lea.vmem [#allocation8], 16
        %v667 = vld [vmem:[%s666] sm:$0xf]
        %v668 = vld [vmem:[%s666 + $0x4] sm:$0xf]
        %v669 = vld [vmem:[%s666 + $0x8] sm:$0xf]
        %v670 = vld [vmem:[%s666 + $0xc] sm:$0xf]
        %v675 = vunpack.c.l.b16 %v667
        %v676 = vunpack.c.l.b16 %v668
        %v677 = vunpack.c.l.b16 %v669
        %v678 = vunpack.c.l.b16 %v670
        %v679 = vpack.c.b16 %v676, %v675
        %v680 = vpack.c.b16 %v678, %v677
        %vm683 = vcmask 261120
        %v685 = vsel %vm683, %v665, 0
        %687 = vmatpush.bf16.msra.mxu0 0
        %688 = vmatpush.bf16.msra.mxu0 0
        %689 = vmatpush.bf16.msra.mxu0 0
        %690 = vmatpush.bf16.msra.mxu0 0
        %691 = vmatpush.bf16.msra.mxu0 0
        %692 = vmatpush.bf16.msra.mxu0 0
        %693 = vmatpush.bf16.msra.mxu0 %v680
        %694 = vmatpush.bf16.msra.mxu0 %v679
        %695 = vmatmul.bf16.gmra.mxu0 %v685
        %v696 = vpop.f32.mrf.mxu0
        %v697 = vadd.f32 0.0, %v696
        %v698 = vpop.f32.mrf.mxu0
        %699 = vdwg.mxu0
        %v700 = vadd.f32 %v664, %v697
        %701 = vst.msk [vmem:[#allocation3] sm:$0x3] %vm662, %v700
        %v702 = vld [vmem:[#allocation3] sm:$0x3]
        %v703 = vld [vmem:[#allocation9] sm:$0x1]
        %v705 = vperm.slane %v703, 0
        %v707 = vmul.f32 %v702, %v705
        %v708 = vld [vmem:[#allocation11] sm:$0x1]
        %v710 = vperm.slane %v708, 0
        %v712 = vadd.f32 %v707, %v710
        %v713 = vmax.f32 %v712, 0.0
        %v714 = vpack.c.bf16 %v713, %v713
        %v715 = vld [vmem:[#allocation12] sm:$0xf]
        %v716 = vld [vmem:[#allocation12 + $0x4] sm:$0xf]
        %v717 = vld [vmem:[#allocation12 + $0x8] sm:$0xf]
        %v718 = vld [vmem:[#allocation12 + $0xc] sm:$0xf]
        %v723 = vunpack.c.l.b16 %v715
        %v724 = vunpack.c.l.b16 %v716
        %v725 = vunpack.c.l.b16 %v717
        %v726 = vunpack.c.l.b16 %v718
        %v727 = vpack.c.b16 %v724, %v723
        %v728 = vpack.c.b16 %v726, %v725
        %v732 = vsel %vm683, %v714, 0
        %734 = vmatpush.bf16.msra.mxu0 0
        %735 = vmatpush.bf16.msra.mxu0 0
        %736 = vmatpush.bf16.msra.mxu0 0
        %737 = vmatpush.bf16.msra.mxu0 0
        %738 = vmatpush.bf16.msra.mxu0 0
        %739 = vmatpush.bf16.msra.mxu0 0
        %740 = vmatpush.bf16.msra.mxu0 %v728
        %741 = vmatpush.bf16.msra.mxu0 %v727
        %742 = vmatmul.bf16.gmra.mxu0 %v732
        %v743 = vpop.f32.mrf.mxu0
        %v744 = vadd.f32 0.0, %v743
        %v745 = vpop.f32.mrf.mxu0
        %746 = vdwg.mxu0
        %v747 = vld [vmem:[#allocation14] sm:$0x1]
        %v749 = vperm.slane %v747, 0
        %v751 = vmul.f32 %v744, %v749
        %v752 = vld [vmem:[#allocation15] sm:$0x1]
        %v754 = vperm.slane %v752, 0
        %v756 = vadd.f32 %v751, %v754
        %v757 = vld [vmem:[%s593] sm:$0x1]
        %v758 = vld [vmem:[#allocation17] sm:$0xf]
        %v759 = vld [vmem:[#allocation17 + $0x4] sm:$0xf]
        %v760 = vld [vmem:[#allocation17 + $0x8] sm:$0xf]
        %v761 = vld [vmem:[#allocation17 + $0xc] sm:$0xf]
        %v762 = vld [vmem:[#allocation17 + $0x10] sm:$0xf]
        %v763 = vld [vmem:[#allocation17 + $0x14] sm:$0xf]
        %v764 = vld [vmem:[#allocation17 + $0x18] sm:$0xf]
        %v765 = vld [vmem:[#allocation17 + $0x1c] sm:$0xf]
        %v774 = vunpack.c.l.b16 %v758
        %v775 = vunpack.c.l.b16 %v759
        %v776 = vunpack.c.l.b16 %v760
        %v777 = vunpack.c.l.b16 %v761
        %v778 = vunpack.c.l.b16 %v762
        %v779 = vunpack.c.l.b16 %v763
        %v780 = vunpack.c.l.b16 %v764
        %v781 = vunpack.c.l.b16 %v765
        %v782 = vpack.c.b16 %v775, %v774
        %v783 = vpack.c.b16 %v777, %v776
        %v784 = vpack.c.b16 %v779, %v778
        %v785 = vpack.c.b16 %v781, %v780
        %v791 = vsel %vm631, %v757, 0
        %793 = vmatpush.bf16.msra.mxu0 0
        %794 = vmatpush.bf16.msra.mxu0 0
        %795 = vmatpush.bf16.msra.mxu0 0
        %796 = vmatpush.bf16.msra.mxu0 0
        %797 = vmatpush.bf16.msra.mxu0 %v785
        %798 = vmatpush.bf16.msra.mxu0 %v784
        %799 = vmatpush.bf16.msra.mxu0 %v783
        %800 = vmatpush.bf16.msra.mxu0 %v782
        %801 = vmatmul.bf16.gmra.mxu0 %v791
        %v802 = vpop.f32.mrf.mxu0
        %v803 = vadd.f32 0.0, %v802
        %v804 = vpop.f32.mrf.mxu0
        %805 = vdwg.mxu0
        %v806 = vld [vmem:[#allocation18] sm:$0x1]
        %v808 = vperm.slane %v806, 0
        %v810 = vmul.f32 %v803, %v808
        %v811 = vld [vmem:[#allocation20] sm:$0x1]
        %v813 = vperm.slane %v811, 0
        %v815 = vadd.f32 %v810, %v813
        %v816 = vadd.f32 %v756, %v815
        %v817 = vmax.f32 %v816, 0.0
        %v818 = vpack.c.bf16 %v817, %v817
        %819 = vst [vmem:[%s596] sm:$0x1] %v818
        %p820 = scmp.lt.s32.totalorder %s30, 1
        %s821 = scalar_select %p820, %s30, 1
        %s822 = scalar_lea.vmem %s13, %s821
        // Predicated region
        $region117: #{forward.9} parent=71 // pred_check
          %p823 = pneg %p326
        $region118: #{forward.9} parent=71 // pred_check_branch
          %825 = sbr.rel (%p823) target = $region120
        $region119: #{forward.9} parent=71 // pred_region
          _
        $region120: #{forward.9} parent=71 // pred_fallthru
          _
      $region72: #{forward.9} parent=5 // pred_fallthru
        _
      %p826 = scmp.le.s32.totalorder 2, %s25
      // Predicated region
      $region121: #{forward.9} parent=5 // pred_check
        %p827 = pneg %p826
      $region122: #{forward.9} parent=5 // pred_check_branch
        %829 = sbr.rel (%p827) target = $region124
      $region123: #{forward.9} parent=5 // pred_region
        %s830 = ssub.s32 %s25, 2
        // Predicated region
        $region125: #{forward.9} parent=123 // pred_check
          %p831 = pneg %p332
        $region126: #{forward.9} parent=123 // pred_check_branch
          %833 = sbr.rel (%p831) target = $region128
        $region127: #{forward.9} parent=123 // pred_region
          %p834 = scmp.lt.s32.totalorder %s31, 1
          %s835 = scalar_select %p834, %s31, 1
          %s836 = scalar_lea.vmem %s13, %s835
        $region128: #{forward.9} parent=123 // pred_fallthru
          _
      $region124: #{forward.9} parent=5 // pred_fallthru
        _
    $region6: #{forward.9} parent=1 // loop_footer
      %s29 = sadd.s32 1, %s25
    $region7: #{forward.9} parent=1 // loop_footer_branch
      %24 = sbr.rel target = $region3
    $region8: #{forward.9} parent=1 // loop_exit
      _
    %837 = vsyncpa [#allocation5], 1
    %s838 = scalar_lea.sflag [#allocation5], 1
    %839 = vsyncpa %s838, 1
    %840 = vsyncpa [#allocation7], 1
    %841 = vsyncpa [#allocation10], 1
    %842 = vsyncpa [#allocation13], 1
    %843 = vsyncpa [#allocation16], 1
    %844 = vsyncpa [#allocation19], 1

// kernel: forward.10
$region0: #{forward.10}
  #allocation0 [shape = 'u32[]', space=smem, size = 0x4, offset = 0x4, fixed_abs, tag = 'smem constant byte address 0x4 - core index']
  #allocation1 [shape = 'u32[72,128]{1,0:T(1,128)}', space=vmem, size = 0x9000, scoped, tag = 'internal scratch']
  #allocation2 [shape = 'bf16[2,64]{1,0:T(2,128)(2,1)}', space=vmem, size = 0x200, scoped, tag = 'scratch operand']
  #allocation3 [shape = 'f32[2,64]{1,0:T(2,128)}', space=vmem, size = 0x400, scoped, tag = 'scratch operand']
  %s0 = inlined_call_operand.vmem [shape: bf16[2,2,128], index: 0, kind: input, shape index: {}]
  %s1 = inlined_call_operand.vmem [shape: bf16[128,64], index: 1, kind: input, shape index: {}]
  %s2 = inlined_call_operand.hbm [shape: f32[1,64], index: 2, kind: input, shape index: {}]
  %s3 = inlined_call_operand.hbm [shape: f32[1,64], index: 3, kind: input, shape index: {}]
  %s4 = inlined_call_operand.hbm [shape: bf16[3,64,64], index: 4, kind: input, shape index: {}]
  %s5 = inlined_call_operand.hbm [shape: f32[1,64], index: 5, kind: input, shape index: {}]
  %s6 = inlined_call_operand.hbm [shape: f32[1,64], index: 6, kind: input, shape index: {}]
  %s7 = inlined_call_operand.hbm [shape: bf16[64,256], index: 7, kind: input, shape index: {}]
  %s8 = inlined_call_operand.hbm [shape: f32[1,256], index: 8, kind: input, shape index: {}]
  %s9 = inlined_call_operand.hbm [shape: f32[1,256], index: 9, kind: input, shape index: {}]
  %s10 = inlined_call_operand.hbm [shape: bf16[128,256], index: 10, kind: input, shape index: {}]
  %s11 = inlined_call_operand.hbm [shape: f32[1,256], index: 11, kind: input, shape index: {}]
  %s12 = inlined_call_operand.hbm [shape: f32[1,256], index: 12, kind: input, shape index: {}]
  %s13 = inlined_call_operand.vmem [shape: bf16[2,2,256], index: 13, kind: output, shape index: {}]
  %s14 = sld [smem:[#allocation0]]
  $region129: #{forward.10} parent=0
    _
  %s16 = ssub.s32 1, %s14
  %s17 = scalar_select 0, %s16, %s14
  $region1: #{forward.10} parent=0
    #allocation4 [shape = 'u8[512]{0}', space=vmem, size = 0x400, scoped, tag = 'input window, operand 2, single buffered']
    #allocation5 [shape = 's32[2]{0}', space=sflag, size = 0x8, scoped, tag = 'scoped memory for forward.10']
    #allocation6 [shape = 'u8[512]{0}', space=vmem, size = 0x400, scoped, tag = 'input window, operand 3, single buffered']
    #allocation7 [shape = 's32[1]{0}', space=sflag, size = 0x4, scoped, tag = 'scoped memory for forward.10']
    #allocation8 [shape = 'u8[49152]{0}', space=vmem, size = 0xc000, scoped, tag = 'input window, operand 4, single buffered']
    #allocation9 [shape = 'u8[512]{0}', space=vmem, size = 0x400, scoped, tag = 'input window, operand 5, single buffered']
    #allocation10 [shape = 's32[1]{0}', space=sflag, size = 0x4, scoped, tag = 'scoped memory for forward.10']
    #allocation11 [shape = 'u8[512]{0}', space=vmem, size = 0x400, scoped, tag = 'input window, operand 6, single buffered']
    #allocation12 [shape = 'u8[32768]{0}', space=vmem, size = 0x8000, scoped, tag = 'input window, operand 7, single buffered']
    #allocation13 [shape = 's32[1]{0}', space=sflag, size = 0x4, scoped, tag = 'scoped memory for forward.10']
    #allocation14 [shape = 'u8[1024]{0}', space=vmem, size = 0x400, scoped, tag = 'input window, operand 8, single buffered']
    #allocation15 [shape = 'u8[1024]{0}', space=vmem, size = 0x400, scoped, tag = 'input window, operand 9, single buffered']
    #allocation16 [shape = 's32[1]{0}', space=sflag, size = 0x4, scoped, tag = 'scoped memory for forward.10']
    #allocation17 [shape = 'u8[65536]{0}', space=vmem, size = 0x10000, scoped, tag = 'input window, operand 10, single buffered']
    #allocation18 [shape = 'u8[1024]{0}', space=vmem, size = 0x400, scoped, tag = 'input window, operand 11, single buffered']
    #allocation19 [shape = 's32[1]{0}', space=sflag, size = 0x4, scoped, tag = 'scoped memory for forward.10']
    #allocation20 [shape = 'u8[1024]{0}', space=vmem, size = 0x400, scoped, tag = 'input window, operand 12, single buffered']
    %18 = vsyncpa [#allocation5], 0
    %19 = vsyncpa [#allocation7], 0
    %20 = vsyncpa [#allocation10], 0
    %21 = vsyncpa [#allocation13], 0
    %22 = vsyncpa [#allocation16], 0
    %23 = vsyncpa [#allocation19], 0
    loop: start=0, step=1, limit=4
    $region2: #{forward.10} parent=1 // loop_pre_header
      _
    $region3: #{forward.10} parent=1 // loop_header
      %s25 = sphi 0, %s29
      %p26 = scmp.ge.s32.totalorder %s25, 4
      %s35 = sphi 0, %s37
      %s38 = sphi 0, %s35
      %s39 = sphi 0, %s38
      %s55 = sphi 0, %s39
      %s59 = sphi 0, %s59
      %s61 = sphi 0, %s59
      %s62 = sphi 0, %s61
      %s76 = sphi 0, %s62
      %s80 = sphi 0, %s80
      %s82 = sphi 0, %s80
      %s83 = sphi 0, %s82
      %s97 = sphi 0, %s83
      %s101 = sphi 0, %s101
      %s103 = sphi 0, %s101
      %s104 = sphi 0, %s103
      %s118 = sphi 0, %s104
      %s122 = sphi 0, %s122
      %s124 = sphi 0, %s122
      %s125 = sphi 0, %s124
      %s139 = sphi 0, %s125
      %s143 = sphi 0, %s143
      %s145 = sphi 0, %s143
      %s146 = sphi 0, %s145
      %s160 = sphi 0, %s146
      %s164 = sphi 0, %s164
      %s166 = sphi 0, %s164
      %s167 = sphi 0, %s166
      %s181 = sphi 0, %s167
      %s185 = sphi 0, %s185
      %s187 = sphi 0, %s185
      %s188 = sphi 0, %s187
      %s202 = sphi 0, %s188
      %s206 = sphi 0, %s206
      %s208 = sphi 0, %s206
      %s209 = sphi 0, %s208
      %s223 = sphi 0, %s209
      %s227 = sphi 0, %s227
      %s229 = sphi 0, %s227
      %s230 = sphi 0, %s229
      %s244 = sphi 0, %s230
      %s248 = sphi 0, %s248
      %s250 = sphi 0, %s248
      %s251 = sphi 0, %s250
      %s265 = sphi 0, %s251
      %s269 = sphi 0, %s269
      %s271 = sphi 0, %s269
      %s272 = sphi 0, %s271
      %s286 = sphi 0, %s272
      %s290 = sphi 0, %s290
      %s292 = sphi 0, %s290
      %s293 = sphi 0, %s292
      %s307 = sphi 0, %s293
      %s313 = sphi 0, %s315
      %s316 = sphi 0, %s313
      %s317 = sphi 0, %s316
      %s333 = sphi 0, %s317
    $region4: #{forward.10} parent=1 // loop_header_branch
      %28 = sbr.rel (%p26) target = $region8
    $region5: #{forward.10} parent=1 // loop_body
      %s30 = ssub.s32 %s25, 1
      %s31 = ssub.s32 %s25, 2
      %s32 = sadd.s32 %s25, 1
      %s33 = ssub.s32 %s25, %s32
      %p34 = scmp.eq.s32.totalorder %s33, 0
      %s36 = sadd.s32 %s35, 1
      %s37 = scalar_select %p34, %s35, %s36
      %p40 = pneg %p34
      %p41 = scmp.eq.s32.totalorder %s25, 1
      %p42 = por %p40, %p41
      %p43 = scmp.ne.s32.totalorder %s35, %s38
      %p44 = scmp.eq.s32.totalorder %s25, 0
      %p45 = por %p43, %p44
      %p46 = scmp.ne.s32.totalorder %s35, %s38
      %p47 = scmp.eq.s32.totalorder %s30, 1
      %p48 = por %p46, %p47
      %p49 = scmp.ne.s32.totalorder %s38, %s39
      %p50 = scmp.eq.s32.totalorder %s30, 0
      %p51 = por %p49, %p50
      %p52 = scmp.ne.s32.totalorder %s38, %s39
      %p53 = scmp.eq.s32.totalorder %s31, 1
      %p54 = por %p52, %p53
      %p56 = scmp.ne.s32.totalorder %s39, %s55
      %p57 = scmp.eq.s32.totalorder %s31, 0
      %p58 = por %p56, %p57
      %s60 = sadd.s32 %s59, 1
      %p63 = scmp.eq.s32.totalorder %s25, 1
      %p64 = scmp.ne.s32.totalorder %s59, %s61
      %p65 = scmp.eq.s32.totalorder %s25, 0
      %p66 = por %p64, %p65
      %p67 = scmp.ne.s32.totalorder %s59, %s61
      %p68 = scmp.eq.s32.totalorder %s30, 1
      %p69 = por %p67, %p68
      %p70 = scmp.ne.s32.totalorder %s61, %s62
      %p71 = scmp.eq.s32.totalorder %s30, 0
      %p72 = por %p70, %p71
      %p73 = scmp.ne.s32.totalorder %s61, %s62
      %p74 = scmp.eq.s32.totalorder %s31, 1
      %p75 = por %p73, %p74
      %p77 = scmp.ne.s32.totalorder %s62, %s76
      %p78 = scmp.eq.s32.totalorder %s31, 0
      %p79 = por %p77, %p78
      %s81 = sadd.s32 %s80, 1
      %p84 = scmp.eq.s32.totalorder %s25, 1
      %p85 = scmp.ne.s32.totalorder %s80, %s82
      %p86 = scmp.eq.s32.totalorder %s25, 0
      %p87 = por %p85, %p86
      %p88 = scmp.ne.s32.totalorder %s80, %s82
      %p89 = scmp.eq.s32.totalorder %s30, 1
      %p90 = por %p88, %p89
      %p91 = scmp.ne.s32.totalorder %s82, %s83
      %p92 = scmp.eq.s32.totalorder %s30, 0
      %p93 = por %p91, %p92
      %p94 = scmp.ne.s32.totalorder %s82, %s83
      %p95 = scmp.eq.s32.totalorder %s31, 1
      %p96 = por %p94, %p95
      %p98 = scmp.ne.s32.totalorder %s83, %s97
      %p99 = scmp.eq.s32.totalorder %s31, 0
      %p100 = por %p98, %p99
      %s102 = sadd.s32 %s101, 1
      %p105 = scmp.eq.s32.totalorder %s25, 1
      %p106 = scmp.ne.s32.totalorder %s101, %s103
      %p107 = scmp.eq.s32.totalorder %s25, 0
      %p108 = por %p106, %p107
      %p109 = scmp.ne.s32.totalorder %s101, %s103
      %p110 = scmp.eq.s32.totalorder %s30, 1
      %p111 = por %p109, %p110
      %p112 = scmp.ne.s32.totalorder %s103, %s104
      %p113 = scmp.eq.s32.totalorder %s30, 0
      %p114 = por %p112, %p113
      %p115 = scmp.ne.s32.totalorder %s103, %s104
      %p116 = scmp.eq.s32.totalorder %s31, 1
      %p117 = por %p115, %p116
      %p119 = scmp.ne.s32.totalorder %s104, %s118
      %p120 = scmp.eq.s32.totalorder %s31, 0
      %p121 = por %p119, %p120
      %s123 = sadd.s32 %s122, 1
      %p126 = scmp.eq.s32.totalorder %s25, 1
      %p127 = scmp.ne.s32.totalorder %s122, %s124
      %p128 = scmp.eq.s32.totalorder %s25, 0
      %p129 = por %p127, %p128
      %p130 = scmp.ne.s32.totalorder %s122, %s124
      %p131 = scmp.eq.s32.totalorder %s30, 1
      %p132 = por %p130, %p131
      %p133 = scmp.ne.s32.totalorder %s124, %s125
      %p134 = scmp.eq.s32.totalorder %s30, 0
      %p135 = por %p133, %p134
      %p136 = scmp.ne.s32.totalorder %s124, %s125
      %p137 = scmp.eq.s32.totalorder %s31, 1
      %p138 = por %p136, %p137
      %p140 = scmp.ne.s32.totalorder %s125, %s139
      %p141 = scmp.eq.s32.totalorder %s31, 0
      %p142 = por %p140, %p141
      %s144 = sadd.s32 %s143, 1
      %p147 = scmp.eq.s32.totalorder %s25, 1
      %p148 = scmp.ne.s32.totalorder %s143, %s145
      %p149 = scmp.eq.s32.totalorder %s25, 0
      %p150 = por %p148, %p149
      %p151 = scmp.ne.s32.totalorder %s143, %s145
      %p152 = scmp.eq.s32.totalorder %s30, 1
      %p153 = por %p151, %p152
      %p154 = scmp.ne.s32.totalorder %s145, %s146
      %p155 = scmp.eq.s32.totalorder %s30, 0
      %p156 = por %p154, %p155
      %p157 = scmp.ne.s32.totalorder %s145, %s146
      %p158 = scmp.eq.s32.totalorder %s31, 1
      %p159 = por %p157, %p158
      %p161 = scmp.ne.s32.totalorder %s146, %s160
      %p162 = scmp.eq.s32.totalorder %s31, 0
      %p163 = por %p161, %p162
      %s165 = sadd.s32 %s164, 1
      %p168 = scmp.eq.s32.totalorder %s25, 1
      %p169 = scmp.ne.s32.totalorder %s164, %s166
      %p170 = scmp.eq.s32.totalorder %s25, 0
      %p171 = por %p169, %p170
      %p172 = scmp.ne.s32.totalorder %s164, %s166
      %p173 = scmp.eq.s32.totalorder %s30, 1
      %p174 = por %p172, %p173
      %p175 = scmp.ne.s32.totalorder %s166, %s167
      %p176 = scmp.eq.s32.totalorder %s30, 0
      %p177 = por %p175, %p176
      %p178 = scmp.ne.s32.totalorder %s166, %s167
      %p179 = scmp.eq.s32.totalorder %s31, 1
      %p180 = por %p178, %p179
      %p182 = scmp.ne.s32.totalorder %s167, %s181
      %p183 = scmp.eq.s32.totalorder %s31, 0
      %p184 = por %p182, %p183
      %s186 = sadd.s32 %s185, 1
      %p189 = scmp.eq.s32.totalorder %s25, 1
      %p190 = scmp.ne.s32.totalorder %s185, %s187
      %p191 = scmp.eq.s32.totalorder %s25, 0
      %p192 = por %p190, %p191
      %p193 = scmp.ne.s32.totalorder %s185, %s187
      %p194 = scmp.eq.s32.totalorder %s30, 1
      %p195 = por %p193, %p194
      %p196 = scmp.ne.s32.totalorder %s187, %s188
      %p197 = scmp.eq.s32.totalorder %s30, 0
      %p198 = por %p196, %p197
      %p199 = scmp.ne.s32.totalorder %s187, %s188
      %p200 = scmp.eq.s32.totalorder %s31, 1
      %p201 = por %p199, %p200
      %p203 = scmp.ne.s32.totalorder %s188, %s202
      %p204 = scmp.eq.s32.totalorder %s31, 0
      %p205 = por %p203, %p204
      %s207 = sadd.s32 %s206, 1
      %p210 = scmp.eq.s32.totalorder %s25, 1
      %p211 = scmp.ne.s32.totalorder %s206, %s208
      %p212 = scmp.eq.s32.totalorder %s25, 0
      %p213 = por %p211, %p212
      %p214 = scmp.ne.s32.totalorder %s206, %s208
      %p215 = scmp.eq.s32.totalorder %s30, 1
      %p216 = por %p214, %p215
      %p217 = scmp.ne.s32.totalorder %s208, %s209
      %p218 = scmp.eq.s32.totalorder %s30, 0
      %p219 = por %p217, %p218
      %p220 = scmp.ne.s32.totalorder %s208, %s209
      %p221 = scmp.eq.s32.totalorder %s31, 1
      %p222 = por %p220, %p221
      %p224 = scmp.ne.s32.totalorder %s209, %s223
      %p225 = scmp.eq.s32.totalorder %s31, 0
      %p226 = por %p224, %p225
      %s228 = sadd.s32 %s227, 1
      %p231 = scmp.eq.s32.totalorder %s25, 1
      %p232 = scmp.ne.s32.totalorder %s227, %s229
      %p233 = scmp.eq.s32.totalorder %s25, 0
      %p234 = por %p232, %p233
      %p235 = scmp.ne.s32.totalorder %s227, %s229
      %p236 = scmp.eq.s32.totalorder %s30, 1
      %p237 = por %p235, %p236
      %p238 = scmp.ne.s32.totalorder %s229, %s230
      %p239 = scmp.eq.s32.totalorder %s30, 0
      %p240 = por %p238, %p239
      %p241 = scmp.ne.s32.totalorder %s229, %s230
      %p242 = scmp.eq.s32.totalorder %s31, 1
      %p243 = por %p241, %p242
      %p245 = scmp.ne.s32.totalorder %s230, %s244
      %p246 = scmp.eq.s32.totalorder %s31, 0
      %p247 = por %p245, %p246
      %s249 = sadd.s32 %s248, 1
      %p252 = scmp.eq.s32.totalorder %s25, 1
      %p253 = scmp.ne.s32.totalorder %s248, %s250
      %p254 = scmp.eq.s32.totalorder %s25, 0
      %p255 = por %p253, %p254
      %p256 = scmp.ne.s32.totalorder %s248, %s250
      %p257 = scmp.eq.s32.totalorder %s30, 1
      %p258 = por %p256, %p257
      %p259 = scmp.ne.s32.totalorder %s250, %s251
      %p260 = scmp.eq.s32.totalorder %s30, 0
      %p261 = por %p259, %p260
      %p262 = scmp.ne.s32.totalorder %s250, %s251
      %p263 = scmp.eq.s32.totalorder %s31, 1
      %p264 = por %p262, %p263
      %p266 = scmp.ne.s32.totalorder %s251, %s265
      %p267 = scmp.eq.s32.totalorder %s31, 0
      %p268 = por %p266, %p267
      %s270 = sadd.s32 %s269, 1
      %p273 = scmp.eq.s32.totalorder %s25, 1
      %p274 = scmp.ne.s32.totalorder %s269, %s271
      %p275 = scmp.eq.s32.totalorder %s25, 0
      %p276 = por %p274, %p275
      %p277 = scmp.ne.s32.totalorder %s269, %s271
      %p278 = scmp.eq.s32.totalorder %s30, 1
      %p279 = por %p277, %p278
      %p280 = scmp.ne.s32.totalorder %s271, %s272
      %p281 = scmp.eq.s32.totalorder %s30, 0
      %p282 = por %p280, %p281
      %p283 = scmp.ne.s32.totalorder %s271, %s272
      %p284 = scmp.eq.s32.totalorder %s31, 1
      %p285 = por %p283, %p284
      %p287 = scmp.ne.s32.totalorder %s272, %s286
      %p288 = scmp.eq.s32.totalorder %s31, 0
      %p289 = por %p287, %p288
      %s291 = sadd.s32 %s290, 1
      %p294 = scmp.eq.s32.totalorder %s25, 1
      %p295 = scmp.ne.s32.totalorder %s290, %s292
      %p296 = scmp.eq.s32.totalorder %s25, 0
      %p297 = por %p295, %p296
      %p298 = scmp.ne.s32.totalorder %s290, %s292
      %p299 = scmp.eq.s32.totalorder %s30, 1
      %p300 = por %p298, %p299
      %p301 = scmp.ne.s32.totalorder %s292, %s293
      %p302 = scmp.eq.s32.totalorder %s30, 0
      %p303 = por %p301, %p302
      %p304 = scmp.ne.s32.totalorder %s292, %s293
      %p305 = scmp.eq.s32.totalorder %s31, 1
      %p306 = por %p304, %p305
      %p308 = scmp.ne.s32.totalorder %s293, %s307
      %p309 = scmp.eq.s32.totalorder %s31, 0
      %p310 = por %p308, %p309
      %s311 = ssub.s32 %s25, %s32
      %p312 = scmp.eq.s32.totalorder %s311, 0
      %s314 = sadd.s32 %s313, 1
      %s315 = scalar_select %p312, %s313, %s314
      %p318 = pneg %p312
      %p319 = scmp.eq.s32.totalorder %s25, 1
      %p320 = por %p318, %p319
      %p321 = scmp.ne.s32.totalorder %s313, %s316
      %p322 = scmp.eq.s32.totalorder %s25, 0
      %p323 = por %p321, %p322
      %p324 = scmp.ne.s32.totalorder %s313, %s316
      %p325 = scmp.eq.s32.totalorder %s30, 1
      %p326 = por %p324, %p325
      %p327 = scmp.ne.s32.totalorder %s316, %s317
      %p328 = scmp.eq.s32.totalorder %s30, 0
      %p329 = por %p327, %p328
      %p330 = scmp.ne.s32.totalorder %s316, %s317
      %p331 = scmp.eq.s32.totalorder %s31, 1
      %p332 = por %p330, %p331
      %p334 = scmp.ne.s32.totalorder %s317, %s333
      %p335 = scmp.eq.s32.totalorder %s31, 0
      %p336 = por %p334, %p335
      %p337 = scmp.le.s32.totalorder 1, %s25
      %p338 = scmp.lt.s32.totalorder %s25, 3
      %p339 = pnand %p337, %p338
      %p340 = pneg %p339
      // Predicated region
      $region9: #{forward.10} parent=5 // pred_check
        _
      $region10: #{forward.10} parent=5 // pred_check_branch
        %342 = sbr.rel (%p339) target = $region12
      $region11: #{forward.10} parent=5 // pred_region
        %s343 = ssub.s32 %s25, 1
        // Predicated region
        $region13: #{forward.10} parent=11 // pred_check
          %p344 = pneg %p72
        $region14: #{forward.10} parent=11 // pred_check_branch
          %346 = sbr.rel (%p344) target = $region16
        $region15: #{forward.10} parent=11 // pred_region
          _
        $region16: #{forward.10} parent=11 // pred_fallthru
          _
        // Predicated region
        $region17: #{forward.10} parent=11 // pred_check
          %p347 = pneg %p93
        $region18: #{forward.10} parent=11 // pred_check_branch
          %349 = sbr.rel (%p347) target = $region20
        $region19: #{forward.10} parent=11 // pred_region
          %351 = vsyncadd [#allocation5], 0
          %s353 = sshll.u32 %s2, 4
          %s354 = int_to_ptr.hbm [resolvable:$true] %s353
          %s355 = sshll.u32 [#allocation4], 4
          %s356 = int_to_ptr.vmem [resolvable:$true] %s355
          %358 = dma.hbm_to_vmem [thread:$0]  %s354, 16, %s356, [#allocation5]
        $region20: #{forward.10} parent=11 // pred_fallthru
          _
        // Predicated region
        $region21: #{forward.10} parent=11 // pred_check
          %p359 = pneg %p114
        $region22: #{forward.10} parent=11 // pred_check_branch
          %361 = sbr.rel (%p359) target = $region24
        $region23: #{forward.10} parent=11 // pred_region
          %363 = vsyncadd [#allocation7], 0
          %s365 = sshll.u32 %s3, 4
          %s366 = int_to_ptr.hbm [resolvable:$true] %s365
          %s367 = sshll.u32 [#allocation6], 4
          %s368 = int_to_ptr.vmem [resolvable:$true] %s367
          %370 = dma.hbm_to_vmem [thread:$0]  %s366, 16, %s368, [#allocation7]
        $region24: #{forward.10} parent=11 // pred_fallthru
          _
        // Predicated region
        $region25: #{forward.10} parent=11 // pred_check
          %p371 = pneg %p135
        $region26: #{forward.10} parent=11 // pred_check_branch
          %373 = sbr.rel (%p371) target = $region28
        $region27: #{forward.10} parent=11 // pred_region
          %375 = vsyncadd [#allocation7], 0
          %s376 = sshll.u32 %s4, 4
          %s377 = int_to_ptr.hbm [resolvable:$true] %s376
          %s378 = sshll.u32 [#allocation8], 4
          %s379 = int_to_ptr.vmem [resolvable:$true] %s378
          %384 = dma.hbm_to_vmem [thread:$0]  %s377, 1536, %s379, [#allocation7], 64, 64, 4
        $region28: #{forward.10} parent=11 // pred_fallthru
          _
        // Predicated region
        $region29: #{forward.10} parent=11 // pred_check
          %p385 = pneg %p156
        $region30: #{forward.10} parent=11 // pred_check_branch
          %387 = sbr.rel (%p385) target = $region32
        $region31: #{forward.10} parent=11 // pred_region
          %389 = vsyncadd [#allocation10], 0
          %s391 = sshll.u32 %s5, 4
          %s392 = int_to_ptr.hbm [resolvable:$true] %s391
          %s393 = sshll.u32 [#allocation9], 4
          %s394 = int_to_ptr.vmem [resolvable:$true] %s393
          %396 = dma.hbm_to_vmem [thread:$0]  %s392, 16, %s394, [#allocation10]
        $region32: #{forward.10} parent=11 // pred_fallthru
          _
        // Predicated region
        $region33: #{forward.10} parent=11 // pred_check
          %p397 = pneg %p177
        $region34: #{forward.10} parent=11 // pred_check_branch
          %399 = sbr.rel (%p397) target = $region36
        $region35: #{forward.10} parent=11 // pred_region
          %401 = vsyncadd [#allocation10], 0
          %s403 = sshll.u32 %s6, 4
          %s404 = int_to_ptr.hbm [resolvable:$true] %s403
          %s405 = sshll.u32 [#allocation11], 4
          %s406 = int_to_ptr.vmem [resolvable:$true] %s405
          %408 = dma.hbm_to_vmem [thread:$0]  %s404, 16, %s406, [#allocation10]
        $region36: #{forward.10} parent=11 // pred_fallthru
          _
        // Predicated region
        $region37: #{forward.10} parent=11 // pred_check
          %p409 = pneg %p198
        $region38: #{forward.10} parent=11 // pred_check_branch
          %411 = sbr.rel (%p409) target = $region40
        $region39: #{forward.10} parent=11 // pred_region
          %413 = vsyncadd [#allocation13], 0
          %s414 = sshll.u32 %s7, 4
          %s415 = int_to_ptr.hbm [resolvable:$true] %s414
          %s416 = sshll.u32 [#allocation12], 4
          %s417 = int_to_ptr.vmem [resolvable:$true] %s416
          %422 = dma.hbm_to_vmem [thread:$0]  %s415, 1024, %s417, [#allocation13], 128, 128, 8
        $region40: #{forward.10} parent=11 // pred_fallthru
          _
        // Predicated region
        $region41: #{forward.10} parent=11 // pred_check
          %p423 = pneg %p219
        $region42: #{forward.10} parent=11 // pred_check_branch
          %425 = sbr.rel (%p423) target = $region44
        $region43: #{forward.10} parent=11 // pred_region
          %427 = vsyncadd [#allocation13], 0
          %s429 = sshll.u32 %s8, 4
          %s430 = int_to_ptr.hbm [resolvable:$true] %s429
          %s431 = sshll.u32 [#allocation14], 4
          %s432 = int_to_ptr.vmem [resolvable:$true] %s431
          %434 = dma.hbm_to_vmem [thread:$0]  %s430, 32, %s432, [#allocation13]
        $region44: #{forward.10} parent=11 // pred_fallthru
          _
        // Predicated region
        $region45: #{forward.10} parent=11 // pred_check
          %p435 = pneg %p240
        $region46: #{forward.10} parent=11 // pred_check_branch
          %437 = sbr.rel (%p435) target = $region48
        $region47: #{forward.10} parent=11 // pred_region
          %439 = vsyncadd [#allocation16], 0
          %s441 = sshll.u32 %s9, 4
          %s442 = int_to_ptr.hbm [resolvable:$true] %s441
          %s443 = sshll.u32 [#allocation15], 4
          %s444 = int_to_ptr.vmem [resolvable:$true] %s443
          %446 = dma.hbm_to_vmem [thread:$0]  %s442, 32, %s444, [#allocation16]
        $region48: #{forward.10} parent=11 // pred_fallthru
          _
        // Predicated region
        $region49: #{forward.10} parent=11 // pred_check
          %p447 = pneg %p261
        $region50: #{forward.10} parent=11 // pred_check_branch
          %449 = sbr.rel (%p447) target = $region52
        $region51: #{forward.10} parent=11 // pred_region
          %451 = vsyncadd [#allocation16], 0
          %s452 = sshll.u32 %s10, 4
          %s453 = int_to_ptr.hbm [resolvable:$true] %s452
          %s454 = sshll.u32 [#allocation17], 4
          %s455 = int_to_ptr.vmem [resolvable:$true] %s454
          %460 = dma.hbm_to_vmem [thread:$0]  %s453, 2048, %s455, [#allocation16], 128, 128, 8
        $region52: #{forward.10} parent=11 // pred_fallthru
          _
        // Predicated region
        $region53: #{forward.10} parent=11 // pred_check
          %p461 = pneg %p282
        $region54: #{forward.10} parent=11 // pred_check_branch
          %463 = sbr.rel (%p461) target = $region56
        $region55: #{forward.10} parent=11 // pred_region
          %465 = vsyncadd [#allocation19], 0
          %s467 = sshll.u32 %s11, 4
          %s468 = int_to_ptr.hbm [resolvable:$true] %s467
          %s469 = sshll.u32 [#allocation18], 4
          %s470 = int_to_ptr.vmem [resolvable:$true] %s469
          %472 = dma.hbm_to_vmem [thread:$0]  %s468, 32, %s470, [#allocation19]
        $region56: #{forward.10} parent=11 // pred_fallthru
          _
        // Predicated region
        $region57: #{forward.10} parent=11 // pred_check
          %p473 = pneg %p303
        $region58: #{forward.10} parent=11 // pred_check_branch
          %475 = sbr.rel (%p473) target = $region60
        $region59: #{forward.10} parent=11 // pred_region
          %477 = vsyncadd [#allocation19], 0
          %s479 = sshll.u32 %s12, 4
          %s480 = int_to_ptr.hbm [resolvable:$true] %s479
          %s481 = sshll.u32 [#allocation20], 4
          %s482 = int_to_ptr.vmem [resolvable:$true] %s481
          %484 = dma.hbm_to_vmem [thread:$0]  %s480, 32, %s482, [#allocation19]
        $region60: #{forward.10} parent=11 // pred_fallthru
          _
      $region12: #{forward.10} parent=5 // pred_fallthru
        _
      %p485 = scmp.lt.s32.totalorder %s25, 2
      // Predicated region
      $region61: #{forward.10} parent=5 // pred_check
        %p486 = pneg %p485
      $region62: #{forward.10} parent=5 // pred_check_branch
        %488 = sbr.rel (%p486) target = $region64
      $region63: #{forward.10} parent=5 // pred_region
        // Predicated region
        $region65: #{forward.10} parent=63 // pred_check
          %p489 = pneg %p45
        $region66: #{forward.10} parent=63 // pred_check_branch
          %491 = sbr.rel (%p489) target = $region68
        $region67: #{forward.10} parent=63 // pred_region
          %p492 = scmp.lt.s32.totalorder %s25, 1
          %s493 = scalar_select %p492, %s25, 1
          %s494 = scalar_lea.vmem %s0, %s493
        $region68: #{forward.10} parent=63 // pred_fallthru
          _
      $region64: #{forward.10} parent=5 // pred_fallthru
        _
      %p495 = scmp.le.s32.totalorder 1, %s25
      %p496 = scmp.lt.s32.totalorder %s25, 3
      %p497 = pnand %p495, %p496
      %p498 = pneg %p497
      // Predicated region
      $region69: #{forward.10} parent=5 // pred_check
        _
      $region70: #{forward.10} parent=5 // pred_check_branch
        %500 = sbr.rel (%p497) target = $region72
      $region71: #{forward.10} parent=5 // pred_region
        %s501 = ssub.s32 %s25, 1
        // Predicated region
        $region73: #{forward.10} parent=71 // pred_check
          %p502 = pneg %p93
        $region74: #{forward.10} parent=71 // pred_check_branch
          %504 = sbr.rel (%p502) target = $region76
        $region75: #{forward.10} parent=71 // pred_region
          %506 = dma.done [#allocation5], 16
        $region76: #{forward.10} parent=71 // pred_fallthru
          _
        // Predicated region
        $region77: #{forward.10} parent=71 // pred_check
          %p507 = pneg %p114
        $region78: #{forward.10} parent=71 // pred_check_branch
          %509 = sbr.rel (%p507) target = $region80
        $region79: #{forward.10} parent=71 // pred_region
          %511 = dma.done [#allocation7], 16
        $region80: #{forward.10} parent=71 // pred_fallthru
          _
        // Predicated region
        $region81: #{forward.10} parent=71 // pred_check
          %p512 = pneg %p135
        $region82: #{forward.10} parent=71 // pred_check_branch
          %514 = sbr.rel (%p512) target = $region84
        $region83: #{forward.10} parent=71 // pred_region
          %516 = dma.done [#allocation7], 1536
        $region84: #{forward.10} parent=71 // pred_fallthru
          _
        // Predicated region
        $region85: #{forward.10} parent=71 // pred_check
          %p517 = pneg %p156
        $region86: #{forward.10} parent=71 // pred_check_branch
          %519 = sbr.rel (%p517) target = $region88
        $region87: #{forward.10} parent=71 // pred_region
          %521 = dma.done [#allocation10], 16
        $region88: #{forward.10} parent=71 // pred_fallthru
          _
        // Predicated region
        $region89: #{forward.10} parent=71 // pred_check
          %p522 = pneg %p177
        $region90: #{forward.10} parent=71 // pred_check_branch
          %524 = sbr.rel (%p522) target = $region92
        $region91: #{forward.10} parent=71 // pred_region
          %526 = dma.done [#allocation10], 16
        $region92: #{forward.10} parent=71 // pred_fallthru
          _
        // Predicated region
        $region93: #{forward.10} parent=71 // pred_check
          %p527 = pneg %p198
        $region94: #{forward.10} parent=71 // pred_check_branch
          %529 = sbr.rel (%p527) target = $region96
        $region95: #{forward.10} parent=71 // pred_region
          %531 = dma.done [#allocation13], 1024
        $region96: #{forward.10} parent=71 // pred_fallthru
          _
        // Predicated region
        $region97: #{forward.10} parent=71 // pred_check
          %p532 = pneg %p219
        $region98: #{forward.10} parent=71 // pred_check_branch
          %534 = sbr.rel (%p532) target = $region100
        $region99: #{forward.10} parent=71 // pred_region
          %536 = dma.done [#allocation13], 32
        $region100: #{forward.10} parent=71 // pred_fallthru
          _
        // Predicated region
        $region101: #{forward.10} parent=71 // pred_check
          %p537 = pneg %p240
        $region102: #{forward.10} parent=71 // pred_check_branch
          %539 = sbr.rel (%p537) target = $region104
        $region103: #{forward.10} parent=71 // pred_region
          %541 = dma.done [#allocation16], 32
        $region104: #{forward.10} parent=71 // pred_fallthru
          _
        // Predicated region
        $region105: #{forward.10} parent=71 // pred_check
          %p542 = pneg %p261
        $region106: #{forward.10} parent=71 // pred_check_branch
          %544 = sbr.rel (%p542) target = $region108
        $region107: #{forward.10} parent=71 // pred_region
          %546 = dma.done [#allocation16], 2048
        $region108: #{forward.10} parent=71 // pred_fallthru
          _
        // Predicated region
        $region109: #{forward.10} parent=71 // pred_check
          %p547 = pneg %p282
        $region110: #{forward.10} parent=71 // pred_check_branch
          %549 = sbr.rel (%p547) target = $region112
        $region111: #{forward.10} parent=71 // pred_region
          %551 = dma.done [#allocation19], 32
        $region112: #{forward.10} parent=71 // pred_fallthru
          _
        // Predicated region
        $region113: #{forward.10} parent=71 // pred_check
          %p552 = pneg %p303
        $region114: #{forward.10} parent=71 // pred_check_branch
          %554 = sbr.rel (%p552) target = $region116
        $region115: #{forward.10} parent=71 // pred_region
          %556 = dma.done [#allocation19], 32
        $region116: #{forward.10} parent=71 // pred_fallthru
          _
        %p557 = scmp.lt.s32.totalorder %s30, 1
        %s558 = scalar_select %p557, %s30, 1
        %s559 = scalar_lea.vmem %s0, %s558
        %p560 = pneg %p51
        %p561 = pneg %p48
        %p562 = pneg %p72
        %p563 = pneg %p69
        %p564 = pneg %p93
        %p565 = pneg %p90
        %p566 = pneg %p114
        %p567 = pneg %p111
        %p568 = pneg %p135
        %p569 = pneg %p132
        %p570 = pneg %p156
        %p571 = pneg %p153
        %p572 = pneg %p177
        %p573 = pneg %p174
        %p574 = pneg %p198
        %p575 = pneg %p195
        %p576 = pneg %p219
        %p577 = pneg %p216
        %p578 = pneg %p240
        %p579 = pneg %p237
        %p580 = pneg %p261
        %p581 = pneg %p258
        %p582 = pneg %p282
        %p583 = pneg %p279
        %p584 = pneg %p303
        %p585 = pneg %p300
        %p586 = pneg %p329
        %p587 = pneg %p326
        %p588 = scmp.lt.s32.totalorder %s30, 1
        %s589 = scalar_select %p588, %s30, 1
        %s590 = smul.addr %s589, 2
        %s591 = scalar_lea.vmem %s13, %s590
        %p592 = scmp.lt.s32.totalorder %s30, 1
        %s593 = scalar_select %p592, %s30, 1
        %s594 = scalar_lea.vmem %s0, %s593
        %p595 = scmp.lt.s32.totalorder %s30, 1
        %s596 = scalar_select %p595, %s30, 1
        %s597 = smul.addr %s596, 2
        %s598 = scalar_lea.vmem %s13, %s597
        %v600 = vld [vmem:[%s594] sm:$0x1]
        %v601 = vld [vmem:[%s1] sm:$0xf]
        %v602 = vld [vmem:[%s1 + $0x4] sm:$0xf]
        %v603 = vld [vmem:[%s1 + $0x8] sm:$0xf]
        %v604 = vld [vmem:[%s1 + $0xc] sm:$0xf]
        %v605 = vld [vmem:[%s1 + $0x10] sm:$0xf]
        %v606 = vld [vmem:[%s1 + $0x14] sm:$0xf]
        %v607 = vld [vmem:[%s1 + $0x18] sm:$0xf]
        %v608 = vld [vmem:[%s1 + $0x1c] sm:$0xf]
        %v609 = vld [vmem:[%s1 + $0x20] sm:$0xf]
        %v610 = vld [vmem:[%s1 + $0x24] sm:$0xf]
        %v611 = vld [vmem:[%s1 + $0x28] sm:$0xf]
        %v612 = vld [vmem:[%s1 + $0x2c] sm:$0xf]
        %v613 = vld [vmem:[%s1 + $0x30] sm:$0xf]
        %v614 = vld [vmem:[%s1 + $0x34] sm:$0xf]
        %v615 = vld [vmem:[%s1 + $0x38] sm:$0xf]
        %v616 = vld [vmem:[%s1 + $0x3c] sm:$0xf]
        %v633 = vunpack.c.l.b16 %v601
        %v634 = vunpack.c.l.b16 %v602
        %v635 = vunpack.c.l.b16 %v603
        %v636 = vunpack.c.l.b16 %v604
        %v637 = vunpack.c.l.b16 %v605
        %v638 = vunpack.c.l.b16 %v606
        %v639 = vunpack.c.l.b16 %v607
        %v640 = vunpack.c.l.b16 %v608
        %v641 = vunpack.c.l.b16 %v609
        %v642 = vunpack.c.l.b16 %v610
        %v643 = vunpack.c.l.b16 %v611
        %v644 = vunpack.c.l.b16 %v612
        %v645 = vunpack.c.l.b16 %v613
        %v646 = vunpack.c.l.b16 %v614
        %v647 = vunpack.c.l.b16 %v615
        %v648 = vunpack.c.l.b16 %v616
        %v649 = vpack.c.b16 %v634, %v633
        %v650 = vpack.c.b16 %v636, %v635
        %v651 = vpack.c.b16 %v638, %v637
        %v652 = vpack.c.b16 %v640, %v639
        %v653 = vpack.c.b16 %v642, %v641
        %v654 = vpack.c.b16 %v644, %v643
        %v655 = vpack.c.b16 %v646, %v645
        %v656 = vpack.c.b16 %v648, %v647
        %665 = vmatpush.bf16.msra.mxu0 %v656
        %666 = vmatpush.bf16.msra.mxu0 %v655
        %667 = vmatpush.bf16.msra.mxu0 %v654
        %668 = vmatpush.bf16.msra.mxu0 %v653
        %669 = vmatpush.bf16.msra.mxu0 %v652
        %670 = vmatpush.bf16.msra.mxu0 %v651
        %671 = vmatpush.bf16.msra.mxu0 %v650
        %672 = vmatpush.bf16.msra.mxu0 %v649
        %673 = vmatmul.bf16.gmra.mxu0 %v600
        %v674 = vpop.f32.mrf.mxu0
        %v675 = vadd.f32 0.0, %v674
        %v676 = vpop.f32.mrf.mxu0
        %677 = vdwg.mxu0
        %v678 = vld [vmem:[#allocation4] sm:$0x1]
        %v680 = vperm.slane %v678, 0
        %v682 = vmul.f32 %v675, %v680
        %v683 = vld [vmem:[#allocation6] sm:$0x1]
        %v685 = vperm.slane %v683, 0
        %v687 = vadd.f32 %v682, %v685
        %v688 = vmax.f32 %v687, 0.0
        %v689 = vpack.c.bf16 %v688, %v688
        %vm690 = vcmask 516096
        %691 = vst.msk [vmem:[#allocation2] sm:$0x1] %vm690, %v689
        %vm692 = vcmask 517120
        %693 = vst.msk [vmem:[#allocation3] sm:$0x3] %vm692, 0.0
        %v694 = vld [vmem:[#allocation3] sm:$0x3]
        %v695 = vld [vmem:[#allocation2] sm:$0x1]
        %s696 = scalar_lea.vmem [#allocation8], 32
        %v697 = vld [vmem:[%s696] sm:$0xf]
        %v698 = vld [vmem:[%s696 + $0x4] sm:$0xf]
        %v699 = vld [vmem:[%s696 + $0x8] sm:$0xf]
        %v700 = vld [vmem:[%s696 + $0xc] sm:$0xf]
        %v701 = vld [vmem:[%s696 + $0x10] sm:$0xf]
        %v702 = vld [vmem:[%s696 + $0x14] sm:$0xf]
        %v703 = vld [vmem:[%s696 + $0x18] sm:$0xf]
        %v704 = vld [vmem:[%s696 + $0x1c] sm:$0xf]
        %v713 = vunpack.c.l.b16 %v697
        %v714 = vunpack.c.l.b16 %v698
        %v715 = vunpack.c.l.b16 %v699
        %v716 = vunpack.c.l.b16 %v700
        %v717 = vunpack.c.l.b16 %v701
        %v718 = vunpack.c.l.b16 %v702
        %v719 = vunpack.c.l.b16 %v703
        %v720 = vunpack.c.l.b16 %v704
        %v721 = vpack.c.b16 %v714, %v713
        %v722 = vpack.c.b16 %v716, %v715
        %v723 = vpack.c.b16 %v718, %v717
        %v724 = vpack.c.b16 %v720, %v719
        %vm729 = vcmask 523264
        %v731 = vsel %vm729, %v695, 0
        %733 = vmatpush.bf16.msra.mxu0 0
        %734 = vmatpush.bf16.msra.mxu0 0
        %735 = vmatpush.bf16.msra.mxu0 0
        %736 = vmatpush.bf16.msra.mxu0 0
        %737 = vmatpush.bf16.msra.mxu0 %v724
        %738 = vmatpush.bf16.msra.mxu0 %v723
        %739 = vmatpush.bf16.msra.mxu0 %v722
        %740 = vmatpush.bf16.msra.mxu0 %v721
        %741 = vmatmul.bf16.gmra.mxu0 %v731
        %v742 = vpop.f32.mrf.mxu0
        %v743 = vadd.f32 0.0, %v742
        %v744 = vpop.f32.mrf.mxu0
        %745 = vdwg.mxu0
        %v746 = vadd.f32 %v694, %v743
        %747 = vst.msk [vmem:[#allocation3] sm:$0x3] %vm692, %v746
        %v748 = vld [vmem:[#allocation3] sm:$0x3]
        %v749 = vld [vmem:[#allocation9] sm:$0x1]
        %v751 = vperm.slane %v749, 0
        %v753 = vmul.f32 %v748, %v751
        %v754 = vld [vmem:[#allocation11] sm:$0x1]
        %v756 = vperm.slane %v754, 0
        %v758 = vadd.f32 %v753, %v756
        %v759 = vmax.f32 %v758, 0.0
        %v760 = vpack.c.bf16 %v759, %v759
        %v761 = vld [vmem:[#allocation12] sm:$0xff]
        %v762 = vld [vmem:[#allocation12 + $0x8] sm:$0xff]
        %v763 = vld [vmem:[#allocation12 + $0x10] sm:$0xff]
        %v764 = vld [vmem:[#allocation12 + $0x18] sm:$0xff]
        %v765 = vld [vmem:[#allocation12 + $0x20] sm:$0xff]
        %v766 = vld [vmem:[#allocation12 + $0x28] sm:$0xff]
        %v767 = vld [vmem:[#allocation12 + $0x30] sm:$0xff]
        %v768 = vld [vmem:[#allocation12 + $0x38] sm:$0xff]
        %v777 = vunpack.c.l.b16 %v761
        %v778 = vunpack.c.h.b16 %v761
        %v779 = vunpack.c.l.b16 %v762
        %v780 = vunpack.c.h.b16 %v762
        %v781 = vunpack.c.l.b16 %v763
        %v782 = vunpack.c.h.b16 %v763
        %v783 = vunpack.c.l.b16 %v764
        %v784 = vunpack.c.h.b16 %v764
        %v785 = vunpack.c.l.b16 %v765
        %v786 = vunpack.c.h.b16 %v765
        %v787 = vunpack.c.l.b16 %v766
        %v788 = vunpack.c.h.b16 %v766
        %v789 = vunpack.c.l.b16 %v767
        %v790 = vunpack.c.h.b16 %v767
        %v791 = vunpack.c.l.b16 %v768
        %v792 = vunpack.c.h.b16 %v768
        %v793 = vpack.c.b16 %v779, %v777
        %v794 = vpack.c.b16 %v780, %v778
        %v795 = vpack.c.b16 %v783, %v781
        %v796 = vpack.c.b16 %v784, %v782
        %v797 = vpack.c.b16 %v787, %v785
        %v798 = vpack.c.b16 %v788, %v786
        %v799 = vpack.c.b16 %v791, %v789
        %v800 = vpack.c.b16 %v792, %v790
        %v810 = vsel %vm729, %v760, 0
        %812 = vmatpush.bf16.msra.mxu0 0
        %813 = vmatpush.bf16.msra.mxu0 0
        %814 = vmatpush.bf16.msra.mxu0 0
        %815 = vmatpush.bf16.msra.mxu0 0
        %816 = vmatpush.bf16.msra.mxu0 %v799
        %817 = vmatpush.bf16.msra.mxu0 %v797
        %818 = vmatpush.bf16.msra.mxu0 %v795
        %819 = vmatpush.bf16.msra.mxu0 %v793
        %820 = vmatmul.bf16.gmra.mxu0 %v810
        %v821 = vpop.f32.mrf.mxu0
        %v822 = vadd.f32 0.0, %v821
        %v823 = vpop.f32.mrf.mxu0
        %824 = vdwg.mxu0
        %825 = vmatpush.bf16.msra.mxu0 0
        %826 = vmatpush.bf16.msra.mxu0 0
        %827 = vmatpush.bf16.msra.mxu0 0
        %828 = vmatpush.bf16.msra.mxu0 0
        %829 = vmatpush.bf16.msra.mxu0 %v800
        %830 = vmatpush.bf16.msra.mxu0 %v798
        %831 = vmatpush.bf16.msra.mxu0 %v796
        %832 = vmatpush.bf16.msra.mxu0 %v794
        %833 = vmatmul.bf16.gmra.mxu0 %v810
        %v834 = vpop.f32.mrf.mxu0
        %v835 = vadd.f32 0.0, %v834
        %v836 = vpop.f32.mrf.mxu0
        %837 = vdwg.mxu0
        %v838 = vld [vmem:[#allocation14] sm:$0x3]
        %v840 = vperm.slane %v838, 0
        %v841 = vperm.slane %v838, 1
        %v844 = vmul.f32 %v822, %v840
        %v845 = vmul.f32 %v835, %v841
        %v846 = vld [vmem:[#allocation15] sm:$0x3]
        %v848 = vperm.slane %v846, 0
        %v849 = vperm.slane %v846, 1
        %v852 = vadd.f32 %v844, %v848
        %v853 = vadd.f32 %v845, %v849
        %v854 = vld [vmem:[%s594] sm:$0x1]
        %v855 = vld [vmem:[#allocation17] sm:$0xff]
        %v856 = vld [vmem:[#allocation17 + $0x8] sm:$0xff]
        %v857 = vld [vmem:[#allocation17 + $0x10] sm:$0xff]
        %v858 = vld [vmem:[#allocation17 + $0x18] sm:$0xff]
        %v859 = vld [vmem:[#allocation17 + $0x20] sm:$0xff]
        %v860 = vld [vmem:[#allocation17 + $0x28] sm:$0xff]
        %v861 = vld [vmem:[#allocation17 + $0x30] sm:$0xff]
        %v862 = vld [vmem:[#allocation17 + $0x38] sm:$0xff]
        %v863 = vld [vmem:[#allocation17 + $0x40] sm:$0xff]
        %v864 = vld [vmem:[#allocation17 + $0x48] sm:$0xff]
        %v865 = vld [vmem:[#allocation17 + $0x50] sm:$0xff]
        %v866 = vld [vmem:[#allocation17 + $0x58] sm:$0xff]
        %v867 = vld [vmem:[#allocation17 + $0x60] sm:$0xff]
        %v868 = vld [vmem:[#allocation17 + $0x68] sm:$0xff]
        %v869 = vld [vmem:[#allocation17 + $0x70] sm:$0xff]
        %v870 = vld [vmem:[#allocation17 + $0x78] sm:$0xff]
        %v887 = vunpack.c.l.b16 %v855
        %v888 = vunpack.c.h.b16 %v855
        %v889 = vunpack.c.l.b16 %v856
        %v890 = vunpack.c.h.b16 %v856
        %v891 = vunpack.c.l.b16 %v857
        %v892 = vunpack.c.h.b16 %v857
        %v893 = vunpack.c.l.b16 %v858
        %v894 = vunpack.c.h.b16 %v858
        %v895 = vunpack.c.l.b16 %v859
        %v896 = vunpack.c.h.b16 %v859
        %v897 = vunpack.c.l.b16 %v860
        %v898 = vunpack.c.h.b16 %v860
        %v899 = vunpack.c.l.b16 %v861
        %v900 = vunpack.c.h.b16 %v861
        %v901 = vunpack.c.l.b16 %v862
        %v902 = vunpack.c.h.b16 %v862
        %v903 = vunpack.c.l.b16 %v863
        %v904 = vunpack.c.h.b16 %v863
        %v905 = vunpack.c.l.b16 %v864
        %v906 = vunpack.c.h.b16 %v864
        %v907 = vunpack.c.l.b16 %v865
        %v908 = vunpack.c.h.b16 %v865
        %v909 = vunpack.c.l.b16 %v866
        %v910 = vunpack.c.h.b16 %v866
        %v911 = vunpack.c.l.b16 %v867
        %v912 = vunpack.c.h.b16 %v867
        %v913 = vunpack.c.l.b16 %v868
        %v914 = vunpack.c.h.b16 %v868
        %v915 = vunpack.c.l.b16 %v869
        %v916 = vunpack.c.h.b16 %v869
        %v917 = vunpack.c.l.b16 %v870
        %v918 = vunpack.c.h.b16 %v870
        %v919 = vpack.c.b16 %v889, %v887
        %v920 = vpack.c.b16 %v890, %v888
        %v921 = vpack.c.b16 %v893, %v891
        %v922 = vpack.c.b16 %v894, %v892
        %v923 = vpack.c.b16 %v897, %v895
        %v924 = vpack.c.b16 %v898, %v896
        %v925 = vpack.c.b16 %v901, %v899
        %v926 = vpack.c.b16 %v902, %v900
        %v927 = vpack.c.b16 %v905, %v903
        %v928 = vpack.c.b16 %v906, %v904
        %v929 = vpack.c.b16 %v909, %v907
        %v930 = vpack.c.b16 %v910, %v908
        %v931 = vpack.c.b16 %v913, %v911
        %v932 = vpack.c.b16 %v914, %v912
        %v933 = vpack.c.b16 %v917, %v915
        %v934 = vpack.c.b16 %v918, %v916
        %951 = vmatpush.bf16.msra.mxu0 %v933
        %952 = vmatpush.bf16.msra.mxu0 %v931
        %953 = vmatpush.bf16.msra.mxu0 %v929
        %954 = vmatpush.bf16.msra.mxu0 %v927
        %955 = vmatpush.bf16.msra.mxu0 %v925
        %956 = vmatpush.bf16.msra.mxu0 %v923
        %957 = vmatpush.bf16.msra.mxu0 %v921
        %958 = vmatpush.bf16.msra.mxu0 %v919
        %959 = vmatmul.bf16.gmra.mxu0 %v854
        %v960 = vpop.f32.mrf.mxu0
        %v961 = vadd.f32 0.0, %v960
        %v962 = vpop.f32.mrf.mxu0
        %963 = vdwg.mxu0
        %964 = vmatpush.bf16.msra.mxu0 %v934
        %965 = vmatpush.bf16.msra.mxu0 %v932
        %966 = vmatpush.bf16.msra.mxu0 %v930
        %967 = vmatpush.bf16.msra.mxu0 %v928
        %968 = vmatpush.bf16.msra.mxu0 %v926
        %969 = vmatpush.bf16.msra.mxu0 %v924
        %970 = vmatpush.bf16.msra.mxu0 %v922
        %971 = vmatpush.bf16.msra.mxu0 %v920
        %972 = vmatmul.bf16.gmra.mxu0 %v854
        %v973 = vpop.f32.mrf.mxu0
        %v974 = vadd.f32 0.0, %v973
        %v975 = vpop.f32.mrf.mxu0
        %976 = vdwg.mxu0
        %v977 = vld [vmem:[#allocation18] sm:$0x3]
        %v979 = vperm.slane %v977, 0
        %v980 = vperm.slane %v977, 1
        %v983 = vmul.f32 %v961, %v979
        %v984 = vmul.f32 %v974, %v980
        %v985 = vld [vmem:[#allocation20] sm:$0x3]
        %v987 = vperm.slane %v985, 0
        %v988 = vperm.slane %v985, 1
        %v991 = vadd.f32 %v983, %v987
        %v992 = vadd.f32 %v984, %v988
        %v993 = vadd.f32 %v852, %v991
        %v994 = vadd.f32 %v853, %v992
        %v995 = vmax.f32 %v993, 0.0
        %v996 = vmax.f32 %v994, 0.0
        %v997 = vpack.c.bf16 %v996, %v995
        %v999 = vrot.slane %v997, 3
        %vm1000 = vcmask 1040384
        %v1003 = vsel %vm1000, %v997, %v999
        %1005 = vst [vmem:[%s598] sm:$0x3] %v1003
        %p1006 = scmp.lt.s32.totalorder %s30, 1
        %s1007 = scalar_select %p1006, %s30, 1
        %s1008 = smul.addr %s1007, 2
        %s1009 = scalar_lea.vmem %s13, %s1008
        // Predicated region
        $region117: #{forward.10} parent=71 // pred_check
          %p1010 = pneg %p326
        $region118: #{forward.10} parent=71 // pred_check_branch
          %1012 = sbr.rel (%p1010) target = $region120
        $region119: #{forward.10} parent=71 // pred_region
          _
        $region120: #{forward.10} parent=71 // pred_fallthru
          _
      $region72: #{forward.10} parent=5 // pred_fallthru
        _
      %p1013 = scmp.le.s32.totalorder 2, %s25
      // Predicated region
      $region121: #{forward.10} parent=5 // pred_check
        %p1014 = pneg %p1013
      $region122: #{forward.10} parent=5 // pred_check_branch
        %1016 = sbr.rel (%p1014) target = $region124
      $region123: #{forward.10} parent=5 // pred_region
        %s1017 = ssub.s32 %s25, 2
        // Predicated region
        $region125: #{forward.10} parent=123 // pred_check
          %p1018 = pneg %p332
        $region126: #{forward.10} parent=123 // pred_check_branch
          %1020 = sbr.rel (%p1018) target = $region128
        $region127: #{forward.10} parent=123 // pred_region
          %p1021 = scmp.lt.s32.totalorder %s31, 1
          %s1022 = scalar_select %p1021, %s31, 1
          %s1023 = smul.addr %s1022, 2
          %s1024 = scalar_lea.vmem %s13, %s1023
        $region128: #{forward.10} parent=123 // pred_fallthru
          _
      $region124: #{forward.10} parent=5 // pred_fallthru
        _
    $region6: #{forward.10} parent=1 // loop_footer
      %s29 = sadd.s32 1, %s25
    $region7: #{forward.10} parent=1 // loop_footer_branch
      %24 = sbr.rel target = $region3
    $region8: #{forward.10} parent=1 // loop_exit
      _
    %1025 = vsyncpa [#allocation5], 1
    %s1026 = scalar_lea.sflag [#allocation5], 1
    %1027 = vsyncpa %s1026, 1
    %1028 = vsyncpa [#allocation7], 1
    %1029 = vsyncpa [#allocation10], 1
    %1030 = vsyncpa [#allocation13], 1
    %1031 = vsyncpa [#allocation16], 1
    %1032 = vsyncpa [#allocation19], 1

// kernel: forward.7
$region0: #{forward.7}
  #allocation0 [shape = 'u32[]', space=smem, size = 0x4, offset = 0x4, fixed_abs, tag = 'smem constant byte address 0x4 - core index']
  #allocation1 [shape = 'u32[72,128]{1,0:T(1,128)}', space=vmem, size = 0x9000, scoped, tag = 'internal scratch']
  #allocation2 [shape = 'bf16[8,128]{1,0:T(8,128)(2,1)}', space=vmem, size = 0x800, scoped, tag = 'scratch operand']
  #allocation3 [shape = 'f32[4,32]{1,0:T(4,128)}', space=vmem, size = 0x800, scoped, tag = 'scratch operand']
  %s0 = inlined_call_operand.vmem [shape: bf16[2,8,512], index: 0, kind: input, shape index: {}]
  %s1 = inlined_call_operand.hbm [shape: bf16[512,128], index: 1, kind: input, shape index: {}]
  %s2 = inlined_call_operand.hbm [shape: f32[1,128], index: 2, kind: input, shape index: {}]
  %s3 = inlined_call_operand.hbm [shape: f32[1,128], index: 3, kind: input, shape index: {}]
  %s4 = inlined_call_operand.vmem [shape: bf16[3,128,32], index: 4, kind: input, shape index: {}]
  %s5 = inlined_call_operand.hbm [shape: f32[1,32], index: 5, kind: input, shape index: {}]
  %s6 = inlined_call_operand.hbm [shape: f32[1,32], index: 6, kind: input, shape index: {}]
  %s7 = inlined_call_operand.hbm [shape: bf16[32,128], index: 7, kind: input, shape index: {}]
  %s8 = inlined_call_operand.hbm [shape: f32[1,128], index: 8, kind: input, shape index: {}]
  %s9 = inlined_call_operand.hbm [shape: f32[1,128], index: 9, kind: input, shape index: {}]
  %s10 = inlined_call_operand.hbm [shape: bf16[512,128], index: 10, kind: input, shape index: {}]
  %s11 = inlined_call_operand.hbm [shape: f32[1,128], index: 11, kind: input, shape index: {}]
  %s12 = inlined_call_operand.hbm [shape: f32[1,128], index: 12, kind: input, shape index: {}]
  %s13 = inlined_call_operand.vmem [shape: bf16[2,4,128], index: 13, kind: output, shape index: {}]
  %s14 = sld [smem:[#allocation0]]
  $region129: #{forward.7} parent=0
    _
  %s16 = ssub.s32 1, %s14
  %s17 = scalar_select 0, %s16, %s14
  $region1: #{forward.7} parent=0
    #allocation4 [shape = 'u8[131072]{0}', space=vmem, size = 0x20000, scoped, tag = 'input window, operand 1, single buffered']
    #allocation5 [shape = 's32[2]{0}', space=sflag, size = 0x8, scoped, tag = 'scoped memory for forward.7']
    #allocation6 [shape = 'u8[512]{0}', space=vmem, size = 0x400, scoped, tag = 'input window, operand 2, single buffered']
    #allocation7 [shape = 's32[1]{0}', space=sflag, size = 0x4, scoped, tag = 'scoped memory for forward.7']
    #allocation8 [shape = 'u8[512]{0}', space=vmem, size = 0x400, scoped, tag = 'input window, operand 3, single buffered']
    #allocation9 [shape = 'u8[512]{0}', space=vmem, size = 0x400, scoped, tag = 'input window, operand 5, single buffered']
    #allocation10 [shape = 's32[1]{0}', space=sflag, size = 0x4, scoped, tag = 'scoped memory for forward.7']
    #allocation11 [shape = 'u8[512]{0}', space=vmem, size = 0x400, scoped, tag = 'input window, operand 6, single buffered']
    #allocation12 [shape = 'u8[8192]{0}', space=vmem, size = 0x2000, scoped, tag = 'input window, operand 7, single buffered']
    #allocation13 [shape = 's32[1]{0}', space=sflag, size = 0x4, scoped, tag = 'scoped memory for forward.7']
    #allocation14 [shape = 'u8[512]{0}', space=vmem, size = 0x400, scoped, tag = 'input window, operand 8, single buffered']
    #allocation15 [shape = 'u8[512]{0}', space=vmem, size = 0x400, scoped, tag = 'input window, operand 9, single buffered']
    #allocation16 [shape = 's32[1]{0}', space=sflag, size = 0x4, scoped, tag = 'scoped memory for forward.7']
    #allocation17 [shape = 'u8[131072]{0}', space=vmem, size = 0x20000, scoped, tag = 'input window, operand 10, single buffered']
    #allocation18 [shape = 'u8[512]{0}', space=vmem, size = 0x400, scoped, tag = 'input window, operand 11, single buffered']
    #allocation19 [shape = 's32[1]{0}', space=sflag, size = 0x4, scoped, tag = 'scoped memory for forward.7']
    #allocation20 [shape = 'u8[512]{0}', space=vmem, size = 0x400, scoped, tag = 'input window, operand 12, single buffered']
    %18 = vsyncpa [#allocation5], 0
    %19 = vsyncpa [#allocation7], 0
    %20 = vsyncpa [#allocation10], 0
    %21 = vsyncpa [#allocation13], 0
    %22 = vsyncpa [#allocation16], 0
    %23 = vsyncpa [#allocation19], 0
    loop: start=0, step=1, limit=4
    $region2: #{forward.7} parent=1 // loop_pre_header
      _
    $region3: #{forward.7} parent=1 // loop_header
      %s25 = sphi 0, %s29
      %p26 = scmp.ge.s32.totalorder %s25, 4
      %s35 = sphi 0, %s37
      %s38 = sphi 0, %s35
      %s39 = sphi 0, %s38
      %s55 = sphi 0, %s39
      %s59 = sphi 0, %s59
      %s61 = sphi 0, %s59
      %s62 = sphi 0, %s61
      %s76 = sphi 0, %s62
      %s80 = sphi 0, %s80
      %s82 = sphi 0, %s80
      %s83 = sphi 0, %s82
      %s97 = sphi 0, %s83
      %s101 = sphi 0, %s101
      %s103 = sphi 0, %s101
      %s104 = sphi 0, %s103
      %s118 = sphi 0, %s104
      %s122 = sphi 0, %s122
      %s124 = sphi 0, %s122
      %s125 = sphi 0, %s124
      %s139 = sphi 0, %s125
      %s143 = sphi 0, %s143
      %s145 = sphi 0, %s143
      %s146 = sphi 0, %s145
      %s160 = sphi 0, %s146
      %s164 = sphi 0, %s164
      %s166 = sphi 0, %s164
      %s167 = sphi 0, %s166
      %s181 = sphi 0, %s167
      %s185 = sphi 0, %s185
      %s187 = sphi 0, %s185
      %s188 = sphi 0, %s187
      %s202 = sphi 0, %s188
      %s206 = sphi 0, %s206
      %s208 = sphi 0, %s206
      %s209 = sphi 0, %s208
      %s223 = sphi 0, %s209
      %s227 = sphi 0, %s227
      %s229 = sphi 0, %s227
      %s230 = sphi 0, %s229
      %s244 = sphi 0, %s230
      %s248 = sphi 0, %s248
      %s250 = sphi 0, %s248
      %s251 = sphi 0, %s250
      %s265 = sphi 0, %s251
      %s269 = sphi 0, %s269
      %s271 = sphi 0, %s269
      %s272 = sphi 0, %s271
      %s286 = sphi 0, %s272
      %s290 = sphi 0, %s290
      %s292 = sphi 0, %s290
      %s293 = sphi 0, %s292
      %s307 = sphi 0, %s293
      %s313 = sphi 0, %s315
      %s316 = sphi 0, %s313
      %s317 = sphi 0, %s316
      %s333 = sphi 0, %s317
    $region4: #{forward.7} parent=1 // loop_header_branch
      %28 = sbr.rel (%p26) target = $region8
    $region5: #{forward.7} parent=1 // loop_body
      %s30 = ssub.s32 %s25, 1
      %s31 = ssub.s32 %s25, 2
      %s32 = sadd.s32 %s25, 1
      %s33 = ssub.s32 %s25, %s32
      %p34 = scmp.eq.s32.totalorder %s33, 0
      %s36 = sadd.s32 %s35, 1
      %s37 = scalar_select %p34, %s35, %s36
      %p40 = pneg %p34
      %p41 = scmp.eq.s32.totalorder %s25, 1
      %p42 = por %p40, %p41
      %p43 = scmp.ne.s32.totalorder %s35, %s38
      %p44 = scmp.eq.s32.totalorder %s25, 0
      %p45 = por %p43, %p44
      %p46 = scmp.ne.s32.totalorder %s35, %s38
      %p47 = scmp.eq.s32.totalorder %s30, 1
      %p48 = por %p46, %p47
      %p49 = scmp.ne.s32.totalorder %s38, %s39
      %p50 = scmp.eq.s32.totalorder %s30, 0
      %p51 = por %p49, %p50
      %p52 = scmp.ne.s32.totalorder %s38, %s39
      %p53 = scmp.eq.s32.totalorder %s31, 1
      %p54 = por %p52, %p53
      %p56 = scmp.ne.s32.totalorder %s39, %s55
      %p57 = scmp.eq.s32.totalorder %s31, 0
      %p58 = por %p56, %p57
      %s60 = sadd.s32 %s59, 1
      %p63 = scmp.eq.s32.totalorder %s25, 1
      %p64 = scmp.ne.s32.totalorder %s59, %s61
      %p65 = scmp.eq.s32.totalorder %s25, 0
      %p66 = por %p64, %p65
      %p67 = scmp.ne.s32.totalorder %s59, %s61
      %p68 = scmp.eq.s32.totalorder %s30, 1
      %p69 = por %p67, %p68
      %p70 = scmp.ne.s32.totalorder %s61, %s62
      %p71 = scmp.eq.s32.totalorder %s30, 0
      %p72 = por %p70, %p71
      %p73 = scmp.ne.s32.totalorder %s61, %s62
      %p74 = scmp.eq.s32.totalorder %s31, 1
      %p75 = por %p73, %p74
      %p77 = scmp.ne.s32.totalorder %s62, %s76
      %p78 = scmp.eq.s32.totalorder %s31, 0
      %p79 = por %p77, %p78
      %s81 = sadd.s32 %s80, 1
      %p84 = scmp.eq.s32.totalorder %s25, 1
      %p85 = scmp.ne.s32.totalorder %s80, %s82
      %p86 = scmp.eq.s32.totalorder %s25, 0
      %p87 = por %p85, %p86
      %p88 = scmp.ne.s32.totalorder %s80, %s82
      %p89 = scmp.eq.s32.totalorder %s30, 1
      %p90 = por %p88, %p89
      %p91 = scmp.ne.s32.totalorder %s82, %s83
      %p92 = scmp.eq.s32.totalorder %s30, 0
      %p93 = por %p91, %p92
      %p94 = scmp.ne.s32.totalorder %s82, %s83
      %p95 = scmp.eq.s32.totalorder %s31, 1
      %p96 = por %p94, %p95
      %p98 = scmp.ne.s32.totalorder %s83, %s97
      %p99 = scmp.eq.s32.totalorder %s31, 0
      %p100 = por %p98, %p99
      %s102 = sadd.s32 %s101, 1
      %p105 = scmp.eq.s32.totalorder %s25, 1
      %p106 = scmp.ne.s32.totalorder %s101, %s103
      %p107 = scmp.eq.s32.totalorder %s25, 0
      %p108 = por %p106, %p107
      %p109 = scmp.ne.s32.totalorder %s101, %s103
      %p110 = scmp.eq.s32.totalorder %s30, 1
      %p111 = por %p109, %p110
      %p112 = scmp.ne.s32.totalorder %s103, %s104
      %p113 = scmp.eq.s32.totalorder %s30, 0
      %p114 = por %p112, %p113
      %p115 = scmp.ne.s32.totalorder %s103, %s104
      %p116 = scmp.eq.s32.totalorder %s31, 1
      %p117 = por %p115, %p116
      %p119 = scmp.ne.s32.totalorder %s104, %s118
      %p120 = scmp.eq.s32.totalorder %s31, 0
      %p121 = por %p119, %p120
      %s123 = sadd.s32 %s122, 1
      %p126 = scmp.eq.s32.totalorder %s25, 1
      %p127 = scmp.ne.s32.totalorder %s122, %s124
      %p128 = scmp.eq.s32.totalorder %s25, 0
      %p129 = por %p127, %p128
      %p130 = scmp.ne.s32.totalorder %s122, %s124
      %p131 = scmp.eq.s32.totalorder %s30, 1
      %p132 = por %p130, %p131
      %p133 = scmp.ne.s32.totalorder %s124, %s125
      %p134 = scmp.eq.s32.totalorder %s30, 0
      %p135 = por %p133, %p134
      %p136 = scmp.ne.s32.totalorder %s124, %s125
      %p137 = scmp.eq.s32.totalorder %s31, 1
      %p138 = por %p136, %p137
      %p140 = scmp.ne.s32.totalorder %s125, %s139
      %p141 = scmp.eq.s32.totalorder %s31, 0
      %p142 = por %p140, %p141
      %s144 = sadd.s32 %s143, 1
      %p147 = scmp.eq.s32.totalorder %s25, 1
      %p148 = scmp.ne.s32.totalorder %s143, %s145
      %p149 = scmp.eq.s32.totalorder %s25, 0
      %p150 = por %p148, %p149
      %p151 = scmp.ne.s32.totalorder %s143, %s145
      %p152 = scmp.eq.s32.totalorder %s30, 1
      %p153 = por %p151, %p152
      %p154 = scmp.ne.s32.totalorder %s145, %s146
      %p155 = scmp.eq.s32.totalorder %s30, 0
      %p156 = por %p154, %p155
      %p157 = scmp.ne.s32.totalorder %s145, %s146
      %p158 = scmp.eq.s32.totalorder %s31, 1
      %p159 = por %p157, %p158
      %p161 = scmp.ne.s32.totalorder %s146, %s160
      %p162 = scmp.eq.s32.totalorder %s31, 0
      %p163 = por %p161, %p162
      %s165 = sadd.s32 %s164, 1
      %p168 = scmp.eq.s32.totalorder %s25, 1
      %p169 = scmp.ne.s32.totalorder %s164, %s166
      %p170 = scmp.eq.s32.totalorder %s25, 0
      %p171 = por %p169, %p170
      %p172 = scmp.ne.s32.totalorder %s164, %s166
      %p173 = scmp.eq.s32.totalorder %s30, 1
      %p174 = por %p172, %p173
      %p175 = scmp.ne.s32.totalorder %s166, %s167
      %p176 = scmp.eq.s32.totalorder %s30, 0
      %p177 = por %p175, %p176
      %p178 = scmp.ne.s32.totalorder %s166, %s167
      %p179 = scmp.eq.s32.totalorder %s31, 1
      %p180 = por %p178, %p179
      %p182 = scmp.ne.s32.totalorder %s167, %s181
      %p183 = scmp.eq.s32.totalorder %s31, 0
      %p184 = por %p182, %p183
      %s186 = sadd.s32 %s185, 1
      %p189 = scmp.eq.s32.totalorder %s25, 1
      %p190 = scmp.ne.s32.totalorder %s185, %s187
      %p191 = scmp.eq.s32.totalorder %s25, 0
      %p192 = por %p190, %p191
      %p193 = scmp.ne.s32.totalorder %s185, %s187
      %p194 = scmp.eq.s32.totalorder %s30, 1
      %p195 = por %p193, %p194
      %p196 = scmp.ne.s32.totalorder %s187, %s188
      %p197 = scmp.eq.s32.totalorder %s30, 0
      %p198 = por %p196, %p197
      %p199 = scmp.ne.s32.totalorder %s187, %s188
      %p200 = scmp.eq.s32.totalorder %s31, 1
      %p201 = por %p199, %p200
      %p203 = scmp.ne.s32.totalorder %s188, %s202
      %p204 = scmp.eq.s32.totalorder %s31, 0
      %p205 = por %p203, %p204
      %s207 = sadd.s32 %s206, 1
      %p210 = scmp.eq.s32.totalorder %s25, 1
      %p211 = scmp.ne.s32.totalorder %s206, %s208
      %p212 = scmp.eq.s32.totalorder %s25, 0
      %p213 = por %p211, %p212
      %p214 = scmp.ne.s32.totalorder %s206, %s208
      %p215 = scmp.eq.s32.totalorder %s30, 1
      %p216 = por %p214, %p215
      %p217 = scmp.ne.s32.totalorder %s208, %s209
      %p218 = scmp.eq.s32.totalorder %s30, 0
      %p219 = por %p217, %p218
      %p220 = scmp.ne.s32.totalorder %s208, %s209
      %p221 = scmp.eq.s32.totalorder %s31, 1
      %p222 = por %p220, %p221
      %p224 = scmp.ne.s32.totalorder %s209, %s223
      %p225 = scmp.eq.s32.totalorder %s31, 0
      %p226 = por %p224, %p225
      %s228 = sadd.s32 %s227, 1
      %p231 = scmp.eq.s32.totalorder %s25, 1
      %p232 = scmp.ne.s32.totalorder %s227, %s229
      %p233 = scmp.eq.s32.totalorder %s25, 0
      %p234 = por %p232, %p233
      %p235 = scmp.ne.s32.totalorder %s227, %s229
      %p236 = scmp.eq.s32.totalorder %s30, 1
      %p237 = por %p235, %p236
      %p238 = scmp.ne.s32.totalorder %s229, %s230
      %p239 = scmp.eq.s32.totalorder %s30, 0
      %p240 = por %p238, %p239
      %p241 = scmp.ne.s32.totalorder %s229, %s230
      %p242 = scmp.eq.s32.totalorder %s31, 1
      %p243 = por %p241, %p242
      %p245 = scmp.ne.s32.totalorder %s230, %s244
      %p246 = scmp.eq.s32.totalorder %s31, 0
      %p247 = por %p245, %p246
      %s249 = sadd.s32 %s248, 1
      %p252 = scmp.eq.s32.totalorder %s25, 1
      %p253 = scmp.ne.s32.totalorder %s248, %s250
      %p254 = scmp.eq.s32.totalorder %s25, 0
      %p255 = por %p253, %p254
      %p256 = scmp.ne.s32.totalorder %s248, %s250
      %p257 = scmp.eq.s32.totalorder %s30, 1
      %p258 = por %p256, %p257
      %p259 = scmp.ne.s32.totalorder %s250, %s251
      %p260 = scmp.eq.s32.totalorder %s30, 0
      %p261 = por %p259, %p260
      %p262 = scmp.ne.s32.totalorder %s250, %s251
      %p263 = scmp.eq.s32.totalorder %s31, 1
      %p264 = por %p262, %p263
      %p266 = scmp.ne.s32.totalorder %s251, %s265
      %p267 = scmp.eq.s32.totalorder %s31, 0
      %p268 = por %p266, %p267
      %s270 = sadd.s32 %s269, 1
      %p273 = scmp.eq.s32.totalorder %s25, 1
      %p274 = scmp.ne.s32.totalorder %s269, %s271
      %p275 = scmp.eq.s32.totalorder %s25, 0
      %p276 = por %p274, %p275
      %p277 = scmp.ne.s32.totalorder %s269, %s271
      %p278 = scmp.eq.s32.totalorder %s30, 1
      %p279 = por %p277, %p278
      %p280 = scmp.ne.s32.totalorder %s271, %s272
      %p281 = scmp.eq.s32.totalorder %s30, 0
      %p282 = por %p280, %p281
      %p283 = scmp.ne.s32.totalorder %s271, %s272
      %p284 = scmp.eq.s32.totalorder %s31, 1
      %p285 = por %p283, %p284
      %p287 = scmp.ne.s32.totalorder %s272, %s286
      %p288 = scmp.eq.s32.totalorder %s31, 0
      %p289 = por %p287, %p288
      %s291 = sadd.s32 %s290, 1
      %p294 = scmp.eq.s32.totalorder %s25, 1
      %p295 = scmp.ne.s32.totalorder %s290, %s292
      %p296 = scmp.eq.s32.totalorder %s25, 0
      %p297 = por %p295, %p296
      %p298 = scmp.ne.s32.totalorder %s290, %s292
      %p299 = scmp.eq.s32.totalorder %s30, 1
      %p300 = por %p298, %p299
      %p301 = scmp.ne.s32.totalorder %s292, %s293
      %p302 = scmp.eq.s32.totalorder %s30, 0
      %p303 = por %p301, %p302
      %p304 = scmp.ne.s32.totalorder %s292, %s293
      %p305 = scmp.eq.s32.totalorder %s31, 1
      %p306 = por %p304, %p305
      %p308 = scmp.ne.s32.totalorder %s293, %s307
      %p309 = scmp.eq.s32.totalorder %s31, 0
      %p310 = por %p308, %p309
      %s311 = ssub.s32 %s25, %s32
      %p312 = scmp.eq.s32.totalorder %s311, 0
      %s314 = sadd.s32 %s313, 1
      %s315 = scalar_select %p312, %s313, %s314
      %p318 = pneg %p312
      %p319 = scmp.eq.s32.totalorder %s25, 1
      %p320 = por %p318, %p319
      %p321 = scmp.ne.s32.totalorder %s313, %s316
      %p322 = scmp.eq.s32.totalorder %s25, 0
      %p323 = por %p321, %p322
      %p324 = scmp.ne.s32.totalorder %s313, %s316
      %p325 = scmp.eq.s32.totalorder %s30, 1
      %p326 = por %p324, %p325
      %p327 = scmp.ne.s32.totalorder %s316, %s317
      %p328 = scmp.eq.s32.totalorder %s30, 0
      %p329 = por %p327, %p328
      %p330 = scmp.ne.s32.totalorder %s316, %s317
      %p331 = scmp.eq.s32.totalorder %s31, 1
      %p332 = por %p330, %p331
      %p334 = scmp.ne.s32.totalorder %s317, %s333
      %p335 = scmp.eq.s32.totalorder %s31, 0
      %p336 = por %p334, %p335
      %p337 = scmp.le.s32.totalorder 1, %s25
      %p338 = scmp.lt.s32.totalorder %s25, 3
      %p339 = pnand %p337, %p338
      %p340 = pneg %p339
      // Predicated region
      $region9: #{forward.7} parent=5 // pred_check
        _
      $region10: #{forward.7} parent=5 // pred_check_branch
        %342 = sbr.rel (%p339) target = $region12
      $region11: #{forward.7} parent=5 // pred_region
        %s343 = ssub.s32 %s25, 1
        // Predicated region
        $region13: #{forward.7} parent=11 // pred_check
          %p344 = pneg %p72
        $region14: #{forward.7} parent=11 // pred_check_branch
          %346 = sbr.rel (%p344) target = $region16
        $region15: #{forward.7} parent=11 // pred_region
          %348 = vsyncadd [#allocation5], 0
          %s349 = sshll.u32 %s1, 4
          %s350 = int_to_ptr.hbm [resolvable:$true] %s349
          %s351 = sshll.u32 [#allocation4], 4
          %s352 = int_to_ptr.vmem [resolvable:$true] %s351
          %357 = dma.hbm_to_vmem [thread:$0]  %s350, 4096, %s352, [#allocation5], 64, 64, 4
        $region16: #{forward.7} parent=11 // pred_fallthru
          _
        // Predicated region
        $region17: #{forward.7} parent=11 // pred_check
          %p358 = pneg %p93
        $region18: #{forward.7} parent=11 // pred_check_branch
          %360 = sbr.rel (%p358) target = $region20
        $region19: #{forward.7} parent=11 // pred_region
          %362 = vsyncadd [#allocation7], 0
          %s364 = sshll.u32 %s2, 4
          %s365 = int_to_ptr.hbm [resolvable:$true] %s364
          %s366 = sshll.u32 [#allocation6], 4
          %s367 = int_to_ptr.vmem [resolvable:$true] %s366
          %369 = dma.hbm_to_vmem [thread:$0]  %s365, 16, %s367, [#allocation7]
        $region20: #{forward.7} parent=11 // pred_fallthru
          _
        // Predicated region
        $region21: #{forward.7} parent=11 // pred_check
          %p370 = pneg %p114
        $region22: #{forward.7} parent=11 // pred_check_branch
          %372 = sbr.rel (%p370) target = $region24
        $region23: #{forward.7} parent=11 // pred_region
          %374 = vsyncadd [#allocation7], 0
          %s376 = sshll.u32 %s3, 4
          %s377 = int_to_ptr.hbm [resolvable:$true] %s376
          %s378 = sshll.u32 [#allocation8], 4
          %s379 = int_to_ptr.vmem [resolvable:$true] %s378
          %381 = dma.hbm_to_vmem [thread:$0]  %s377, 16, %s379, [#allocation7]
        $region24: #{forward.7} parent=11 // pred_fallthru
          _
        // Predicated region
        $region25: #{forward.7} parent=11 // pred_check
          %p382 = pneg %p135
        $region26: #{forward.7} parent=11 // pred_check_branch
          %384 = sbr.rel (%p382) target = $region28
        $region27: #{forward.7} parent=11 // pred_region
          _
        $region28: #{forward.7} parent=11 // pred_fallthru
          _
        // Predicated region
        $region29: #{forward.7} parent=11 // pred_check
          %p385 = pneg %p156
        $region30: #{forward.7} parent=11 // pred_check_branch
          %387 = sbr.rel (%p385) target = $region32
        $region31: #{forward.7} parent=11 // pred_region
          %389 = vsyncadd [#allocation10], 0
          %s391 = sshll.u32 %s5, 4
          %s392 = int_to_ptr.hbm [resolvable:$true] %s391
          %s393 = sshll.u32 [#allocation9], 4
          %s394 = int_to_ptr.vmem [resolvable:$true] %s393
          %396 = dma.hbm_to_vmem [thread:$0]  %s392, 16, %s394, [#allocation10]
        $region32: #{forward.7} parent=11 // pred_fallthru
          _
        // Predicated region
        $region33: #{forward.7} parent=11 // pred_check
          %p397 = pneg %p177
        $region34: #{forward.7} parent=11 // pred_check_branch
          %399 = sbr.rel (%p397) target = $region36
        $region35: #{forward.7} parent=11 // pred_region
          %401 = vsyncadd [#allocation10], 0
          %s403 = sshll.u32 %s6, 4
          %s404 = int_to_ptr.hbm [resolvable:$true] %s403
          %s405 = sshll.u32 [#allocation11], 4
          %s406 = int_to_ptr.vmem [resolvable:$true] %s405
          %408 = dma.hbm_to_vmem [thread:$0]  %s404, 16, %s406, [#allocation10]
        $region36: #{forward.7} parent=11 // pred_fallthru
          _
        // Predicated region
        $region37: #{forward.7} parent=11 // pred_check
          %p409 = pneg %p198
        $region38: #{forward.7} parent=11 // pred_check_branch
          %411 = sbr.rel (%p409) target = $region40
        $region39: #{forward.7} parent=11 // pred_region
          %413 = vsyncadd [#allocation13], 0
          %s414 = sshll.u32 %s7, 4
          %s415 = int_to_ptr.hbm [resolvable:$true] %s414
          %s416 = sshll.u32 [#allocation12], 4
          %s417 = int_to_ptr.vmem [resolvable:$true] %s416
          %422 = dma.hbm_to_vmem [thread:$0]  %s415, 256, %s417, [#allocation13], 64, 64, 4
        $region40: #{forward.7} parent=11 // pred_fallthru
          _
        // Predicated region
        $region41: #{forward.7} parent=11 // pred_check
          %p423 = pneg %p219
        $region42: #{forward.7} parent=11 // pred_check_branch
          %425 = sbr.rel (%p423) target = $region44
        $region43: #{forward.7} parent=11 // pred_region
          %427 = vsyncadd [#allocation13], 0
          %s429 = sshll.u32 %s8, 4
          %s430 = int_to_ptr.hbm [resolvable:$true] %s429
          %s431 = sshll.u32 [#allocation14], 4
          %s432 = int_to_ptr.vmem [resolvable:$true] %s431
          %434 = dma.hbm_to_vmem [thread:$0]  %s430, 16, %s432, [#allocation13]
        $region44: #{forward.7} parent=11 // pred_fallthru
          _
        // Predicated region
        $region45: #{forward.7} parent=11 // pred_check
          %p435 = pneg %p240
        $region46: #{forward.7} parent=11 // pred_check_branch
          %437 = sbr.rel (%p435) target = $region48
        $region47: #{forward.7} parent=11 // pred_region
          %439 = vsyncadd [#allocation16], 0
          %s441 = sshll.u32 %s9, 4
          %s442 = int_to_ptr.hbm [resolvable:$true] %s441
          %s443 = sshll.u32 [#allocation15], 4
          %s444 = int_to_ptr.vmem [resolvable:$true] %s443
          %446 = dma.hbm_to_vmem [thread:$0]  %s442, 16, %s444, [#allocation16]
        $region48: #{forward.7} parent=11 // pred_fallthru
          _
        // Predicated region
        $region49: #{forward.7} parent=11 // pred_check
          %p447 = pneg %p261
        $region50: #{forward.7} parent=11 // pred_check_branch
          %449 = sbr.rel (%p447) target = $region52
        $region51: #{forward.7} parent=11 // pred_region
          %451 = vsyncadd [#allocation16], 0
          %s452 = sshll.u32 %s10, 4
          %s453 = int_to_ptr.hbm [resolvable:$true] %s452
          %s454 = sshll.u32 [#allocation17], 4
          %s455 = int_to_ptr.vmem [resolvable:$true] %s454
          %460 = dma.hbm_to_vmem [thread:$0]  %s453, 4096, %s455, [#allocation16], 64, 64, 4
        $region52: #{forward.7} parent=11 // pred_fallthru
          _
        // Predicated region
        $region53: #{forward.7} parent=11 // pred_check
          %p461 = pneg %p282
        $region54: #{forward.7} parent=11 // pred_check_branch
          %463 = sbr.rel (%p461) target = $region56
        $region55: #{forward.7} parent=11 // pred_region
          %465 = vsyncadd [#allocation19], 0
          %s467 = sshll.u32 %s11, 4
          %s468 = int_to_ptr.hbm [resolvable:$true] %s467
          %s469 = sshll.u32 [#allocation18], 4
          %s470 = int_to_ptr.vmem [resolvable:$true] %s469
          %472 = dma.hbm_to_vmem [thread:$0]  %s468, 16, %s470, [#allocation19]
        $region56: #{forward.7} parent=11 // pred_fallthru
          _
        // Predicated region
        $region57: #{forward.7} parent=11 // pred_check
          %p473 = pneg %p303
        $region58: #{forward.7} parent=11 // pred_check_branch
          %475 = sbr.rel (%p473) target = $region60
        $region59: #{forward.7} parent=11 // pred_region
          %477 = vsyncadd [#allocation19], 0
          %s479 = sshll.u32 %s12, 4
          %s480 = int_to_ptr.hbm [resolvable:$true] %s479
          %s481 = sshll.u32 [#allocation20], 4
          %s482 = int_to_ptr.vmem [resolvable:$true] %s481
          %484 = dma.hbm_to_vmem [thread:$0]  %s480, 16, %s482, [#allocation19]
        $region60: #{forward.7} parent=11 // pred_fallthru
          _
      $region12: #{forward.7} parent=5 // pred_fallthru
        _
      %p485 = scmp.lt.s32.totalorder %s25, 2
      // Predicated region
      $region61: #{forward.7} parent=5 // pred_check
        %p486 = pneg %p485
      $region62: #{forward.7} parent=5 // pred_check_branch
        %488 = sbr.rel (%p486) target = $region64
      $region63: #{forward.7} parent=5 // pred_region
        // Predicated region
        $region65: #{forward.7} parent=63 // pred_check
          %p489 = pneg %p45
        $region66: #{forward.7} parent=63 // pred_check_branch
          %491 = sbr.rel (%p489) target = $region68
        $region67: #{forward.7} parent=63 // pred_region
          %p492 = scmp.lt.s32.totalorder %s25, 1
          %s493 = scalar_select %p492, %s25, 1
          %s494 = smul.addr %s493, 4
          %s495 = smul.addr %s494, 4
          %s496 = scalar_lea.vmem %s0, %s495
        $region68: #{forward.7} parent=63 // pred_fallthru
          _
      $region64: #{forward.7} parent=5 // pred_fallthru
        _
      %p497 = scmp.le.s32.totalorder 1, %s25
      %p498 = scmp.lt.s32.totalorder %s25, 3
      %p499 = pnand %p497, %p498
      %p500 = pneg %p499
      // Predicated region
      $region69: #{forward.7} parent=5 // pred_check
        _
      $region70: #{forward.7} parent=5 // pred_check_branch
        %502 = sbr.rel (%p499) target = $region72
      $region71: #{forward.7} parent=5 // pred_region
        %s503 = ssub.s32 %s25, 1
        // Predicated region
        $region73: #{forward.7} parent=71 // pred_check
          %p504 = pneg %p72
        $region74: #{forward.7} parent=71 // pred_check_branch
          %506 = sbr.rel (%p504) target = $region76
        $region75: #{forward.7} parent=71 // pred_region
          %508 = dma.done [#allocation5], 4096
        $region76: #{forward.7} parent=71 // pred_fallthru
          _
        // Predicated region
        $region77: #{forward.7} parent=71 // pred_check
          %p509 = pneg %p93
        $region78: #{forward.7} parent=71 // pred_check_branch
          %511 = sbr.rel (%p509) target = $region80
        $region79: #{forward.7} parent=71 // pred_region
          %513 = dma.done [#allocation7], 16
        $region80: #{forward.7} parent=71 // pred_fallthru
          _
        // Predicated region
        $region81: #{forward.7} parent=71 // pred_check
          %p514 = pneg %p114
        $region82: #{forward.7} parent=71 // pred_check_branch
          %516 = sbr.rel (%p514) target = $region84
        $region83: #{forward.7} parent=71 // pred_region
          %518 = dma.done [#allocation7], 16
        $region84: #{forward.7} parent=71 // pred_fallthru
          _
        // Predicated region
        $region85: #{forward.7} parent=71 // pred_check
          %p519 = pneg %p156
        $region86: #{forward.7} parent=71 // pred_check_branch
          %521 = sbr.rel (%p519) target = $region88
        $region87: #{forward.7} parent=71 // pred_region
          %523 = dma.done [#allocation10], 16
        $region88: #{forward.7} parent=71 // pred_fallthru
          _
        // Predicated region
        $region89: #{forward.7} parent=71 // pred_check
          %p524 = pneg %p177
        $region90: #{forward.7} parent=71 // pred_check_branch
          %526 = sbr.rel (%p524) target = $region92
        $region91: #{forward.7} parent=71 // pred_region
          %528 = dma.done [#allocation10], 16
        $region92: #{forward.7} parent=71 // pred_fallthru
          _
        // Predicated region
        $region93: #{forward.7} parent=71 // pred_check
          %p529 = pneg %p198
        $region94: #{forward.7} parent=71 // pred_check_branch
          %531 = sbr.rel (%p529) target = $region96
        $region95: #{forward.7} parent=71 // pred_region
          %533 = dma.done [#allocation13], 256
        $region96: #{forward.7} parent=71 // pred_fallthru
          _
        // Predicated region
        $region97: #{forward.7} parent=71 // pred_check
          %p534 = pneg %p219
        $region98: #{forward.7} parent=71 // pred_check_branch
          %536 = sbr.rel (%p534) target = $region100
        $region99: #{forward.7} parent=71 // pred_region
          %538 = dma.done [#allocation13], 16
        $region100: #{forward.7} parent=71 // pred_fallthru
          _
        // Predicated region
        $region101: #{forward.7} parent=71 // pred_check
          %p539 = pneg %p240
        $region102: #{forward.7} parent=71 // pred_check_branch
          %541 = sbr.rel (%p539) target = $region104
        $region103: #{forward.7} parent=71 // pred_region
          %543 = dma.done [#allocation16], 16
        $region104: #{forward.7} parent=71 // pred_fallthru
          _
        // Predicated region
        $region105: #{forward.7} parent=71 // pred_check
          %p544 = pneg %p261
        $region106: #{forward.7} parent=71 // pred_check_branch
          %546 = sbr.rel (%p544) target = $region108
        $region107: #{forward.7} parent=71 // pred_region
          %548 = dma.done [#allocation16], 4096
        $region108: #{forward.7} parent=71 // pred_fallthru
          _
        // Predicated region
        $region109: #{forward.7} parent=71 // pred_check
          %p549 = pneg %p282
        $region110: #{forward.7} parent=71 // pred_check_branch
          %551 = sbr.rel (%p549) target = $region112
        $region111: #{forward.7} parent=71 // pred_region
          %553 = dma.done [#allocation19], 16
        $region112: #{forward.7} parent=71 // pred_fallthru
          _
        // Predicated region
        $region113: #{forward.7} parent=71 // pred_check
          %p554 = pneg %p303
        $region114: #{forward.7} parent=71 // pred_check_branch
          %556 = sbr.rel (%p554) target = $region116
        $region115: #{forward.7} parent=71 // pred_region
          %558 = dma.done [#allocation19], 16
        $region116: #{forward.7} parent=71 // pred_fallthru
          _
        %p559 = scmp.lt.s32.totalorder %s30, 1
        %s560 = scalar_select %p559, %s30, 1
        %s561 = smul.addr %s560, 4
        %s562 = smul.addr %s561, 4
        %s563 = scalar_lea.vmem %s0, %s562
        %p564 = pneg %p51
        %p565 = pneg %p48
        %p566 = pneg %p72
        %p567 = pneg %p69
        %p568 = pneg %p93
        %p569 = pneg %p90
        %p570 = pneg %p114
        %p571 = pneg %p111
        %p572 = pneg %p135
        %p573 = pneg %p132
        %p574 = pneg %p156
        %p575 = pneg %p153
        %p576 = pneg %p177
        %p577 = pneg %p174
        %p578 = pneg %p198
        %p579 = pneg %p195
        %p580 = pneg %p219
        %p581 = pneg %p216
        %p582 = pneg %p240
        %p583 = pneg %p237
        %p584 = pneg %p261
        %p585 = pneg %p258
        %p586 = pneg %p282
        %p587 = pneg %p279
        %p588 = pneg %p303
        %p589 = pneg %p300
        %p590 = pneg %p329
        %p591 = pneg %p326
        %p592 = scmp.lt.s32.totalorder %s30, 1
        %s593 = scalar_select %p592, %s30, 1
        %s594 = smul.addr %s593, 2
        %s595 = scalar_lea.vmem %s13, %s594
        %p596 = scmp.lt.s32.totalorder %s30, 1
        %s597 = scalar_select %p596, %s30, 1
        %s598 = smul.addr %s597, 4
        %s599 = smul.addr %s598, 4
        %s600 = scalar_lea.vmem %s0, %s599
        %p601 = scmp.lt.s32.totalorder %s30, 1
        %s602 = scalar_select %p601, %s30, 1
        %s603 = smul.addr %s602, 2
        %s604 = scalar_lea.vmem %s13, %s603
        %v606 = vld [vmem:[%s600] sm:$0xff]
        %v607 = vld [vmem:[%s600 + $0x8] sm:$0xff]
        %v608 = vld [vmem:[#allocation4] sm:$0xf]
        %v609 = vld [vmem:[#allocation4 + $0x4] sm:$0xf]
        %v610 = vld [vmem:[#allocation4 + $0x8] sm:$0xf]
        %v611 = vld [vmem:[#allocation4 + $0xc] sm:$0xf]
        %v612 = vld [vmem:[#allocation4 + $0x10] sm:$0xf]
        %v613 = vld [vmem:[#allocation4 + $0x14] sm:$0xf]
        %v614 = vld [vmem:[#allocation4 + $0x18] sm:$0xf]
        %v615 = vld [vmem:[#allocation4 + $0x1c] sm:$0xf]
        %v616 = vld [vmem:[#allocation4 + $0x20] sm:$0xf]
        %v617 = vld [vmem:[#allocation4 + $0x24] sm:$0xf]
        %v618 = vld [vmem:[#allocation4 + $0x28] sm:$0xf]
        %v619 = vld [vmem:[#allocation4 + $0x2c] sm:$0xf]
        %v620 = vld [vmem:[#allocation4 + $0x30] sm:$0xf]
        %v621 = vld [vmem:[#allocation4 + $0x34] sm:$0xf]
        %v622 = vld [vmem:[#allocation4 + $0x38] sm:$0xf]
        %v623 = vld [vmem:[#allocation4 + $0x3c] sm:$0xf]
        %v624 = vld [vmem:[#allocation4 + $0x40] sm:$0xf]
        %v625 = vld [vmem:[#allocation4 + $0x44] sm:$0xf]
        %v626 = vld [vmem:[#allocation4 + $0x48] sm:$0xf]
        %v627 = vld [vmem:[#allocation4 + $0x4c] sm:$0xf]
        %v628 = vld [vmem:[#allocation4 + $0x50] sm:$0xf]
        %v629 = vld [vmem:[#allocation4 + $0x54] sm:$0xf]
        %v630 = vld [vmem:[#allocation4 + $0x58] sm:$0xf]
        %v631 = vld [vmem:[#allocation4 + $0x5c] sm:$0xf]
        %v632 = vld [vmem:[#allocation4 + $0x60] sm:$0xf]
        %v633 = vld [vmem:[#allocation4 + $0x64] sm:$0xf]
        %v634 = vld [vmem:[#allocation4 + $0x68] sm:$0xf]
        %v635 = vld [vmem:[#allocation4 + $0x6c] sm:$0xf]
        %v636 = vld [vmem:[#allocation4 + $0x70] sm:$0xf]
        %v637 = vld [vmem:[#allocation4 + $0x74] sm:$0xf]
        %v638 = vld [vmem:[#allocation4 + $0x78] sm:$0xf]
        %v639 = vld [vmem:[#allocation4 + $0x7c] sm:$0xf]
        %v640 = vld [vmem:[#allocation4 + $0x80] sm:$0xf]
        %v641 = vld [vmem:[#allocation4 + $0x84] sm:$0xf]
        %v642 = vld [vmem:[#allocation4 + $0x88] sm:$0xf]
        %v643 = vld [vmem:[#allocation4 + $0x8c] sm:$0xf]
        %v644 = vld [vmem:[#allocation4 + $0x90] sm:$0xf]
        %v645 = vld [vmem:[#allocation4 + $0x94] sm:$0xf]
        %v646 = vld [vmem:[#allocation4 + $0x98] sm:$0xf]
        %v647 = vld [vmem:[#allocation4 + $0x9c] sm:$0xf]
        %v648 = vld [vmem:[#allocation4 + $0xa0] sm:$0xf]
        %v649 = vld [vmem:[#allocation4 + $0xa4] sm:$0xf]
        %v650 = vld [vmem:[#allocation4 + $0xa8] sm:$0xf]
        %v651 = vld [vmem:[#allocation4 + $0xac] sm:$0xf]
        %v652 = vld [vmem:[#allocation4 + $0xb0] sm:$0xf]
        %v653 = vld [vmem:[#allocation4 + $0xb4] sm:$0xf]
        %v654 = vld [vmem:[#allocation4 + $0xb8] sm:$0xf]
        %v655 = vld [vmem:[#allocation4 + $0xbc] sm:$0xf]
        %v656 = vld [vmem:[#allocation4 + $0xc0] sm:$0xf]
        %v657 = vld [vmem:[#allocation4 + $0xc4] sm:$0xf]
        %v658 = vld [vmem:[#allocation4 + $0xc8] sm:$0xf]
        %v659 = vld [vmem:[#allocation4 + $0xcc] sm:$0xf]
        %v660 = vld [vmem:[#allocation4 + $0xd0] sm:$0xf]
        %v661 = vld [vmem:[#allocation4 + $0xd4] sm:$0xf]
        %v662 = vld [vmem:[#allocation4 + $0xd8] sm:$0xf]
        %v663 = vld [vmem:[#allocation4 + $0xdc] sm:$0xf]
        %v664 = vld [vmem:[#allocation4 + $0xe0] sm:$0xf]
        %v665 = vld [vmem:[#allocation4 + $0xe4] sm:$0xf]
        %v666 = vld [vmem:[#allocation4 + $0xe8] sm:$0xf]
        %v667 = vld [vmem:[#allocation4 + $0xec] sm:$0xf]
        %v668 = vld [vmem:[#allocation4 + $0xf0] sm:$0xf]
        %v669 = vld [vmem:[#allocation4 + $0xf4] sm:$0xf]
        %v670 = vld [vmem:[#allocation4 + $0xf8] sm:$0xf]
        %v671 = vld [vmem:[#allocation4 + $0xfc] sm:$0xf]
        %v674 = vunpack.c.l.b16 %v606
        %v675 = vunpack.c.h.b16 %v606
        %v676 = vunpack.c.l.b16 %v607
        %v677 = vunpack.c.h.b16 %v607
        %v678 = vpack.c.b16 %v674, %v674
        %v679 = vpack.c.b16 %v675, %v675
        %v680 = vpack.c.b16 %v676, %v676
        %v681 = vpack.c.b16 %v677, %v677
        %v750 = vunpack.c.l.b16 %v608
        %v751 = vunpack.c.l.b16 %v609
        %v752 = vunpack.c.l.b16 %v610
        %v753 = vunpack.c.l.b16 %v611
        %v754 = vunpack.c.l.b16 %v612
        %v755 = vunpack.c.l.b16 %v613
        %v756 = vunpack.c.l.b16 %v614
        %v757 = vunpack.c.l.b16 %v615
        %v758 = vunpack.c.l.b16 %v616
        %v759 = vunpack.c.l.b16 %v617
        %v760 = vunpack.c.l.b16 %v618
        %v761 = vunpack.c.l.b16 %v619
        %v762 = vunpack.c.l.b16 %v620
        %v763 = vunpack.c.l.b16 %v621
        %v764 = vunpack.c.l.b16 %v622
        %v765 = vunpack.c.l.b16 %v623
        %v766 = vunpack.c.l.b16 %v624
        %v767 = vunpack.c.l.b16 %v625
        %v768 = vunpack.c.l.b16 %v626
        %v769 = vunpack.c.l.b16 %v627
        %v770 = vunpack.c.l.b16 %v628
        %v771 = vunpack.c.l.b16 %v629
        %v772 = vunpack.c.l.b16 %v630
        %v773 = vunpack.c.l.b16 %v631
        %v774 = vunpack.c.l.b16 %v632
        %v775 = vunpack.c.l.b16 %v633
        %v776 = vunpack.c.l.b16 %v634
        %v777 = vunpack.c.l.b16 %v635
        %v778 = vunpack.c.l.b16 %v636
        %v779 = vunpack.c.l.b16 %v637
        %v780 = vunpack.c.l.b16 %v638
        %v781 = vunpack.c.l.b16 %v639
        %v782 = vunpack.c.l.b16 %v640
        %v783 = vunpack.c.l.b16 %v641
        %v784 = vunpack.c.l.b16 %v642
        %v785 = vunpack.c.l.b16 %v643
        %v786 = vunpack.c.l.b16 %v644
        %v787 = vunpack.c.l.b16 %v645
        %v788 = vunpack.c.l.b16 %v646
        %v789 = vunpack.c.l.b16 %v647
        %v790 = vunpack.c.l.b16 %v648
        %v791 = vunpack.c.l.b16 %v649
        %v792 = vunpack.c.l.b16 %v650
        %v793 = vunpack.c.l.b16 %v651
        %v794 = vunpack.c.l.b16 %v652
        %v795 = vunpack.c.l.b16 %v653
        %v796 = vunpack.c.l.b16 %v654
        %v797 = vunpack.c.l.b16 %v655
        %v798 = vunpack.c.l.b16 %v656
        %v799 = vunpack.c.l.b16 %v657
        %v800 = vunpack.c.l.b16 %v658
        %v801 = vunpack.c.l.b16 %v659
        %v802 = vunpack.c.l.b16 %v660
        %v803 = vunpack.c.l.b16 %v661
        %v804 = vunpack.c.l.b16 %v662
        %v805 = vunpack.c.l.b16 %v663
        %v806 = vunpack.c.l.b16 %v664
        %v807 = vunpack.c.l.b16 %v665
        %v808 = vunpack.c.l.b16 %v666
        %v809 = vunpack.c.l.b16 %v667
        %v810 = vunpack.c.l.b16 %v668
        %v811 = vunpack.c.l.b16 %v669
        %v812 = vunpack.c.l.b16 %v670
        %v813 = vunpack.c.l.b16 %v671
        %v814 = vpack.c.b16 %v751, %v750
        %v815 = vpack.c.b16 %v753, %v752
        %v816 = vpack.c.b16 %v755, %v754
        %v817 = vpack.c.b16 %v757, %v756
        %v818 = vpack.c.b16 %v759, %v758
        %v819 = vpack.c.b16 %v761, %v760
        %v820 = vpack.c.b16 %v763, %v762
        %v821 = vpack.c.b16 %v765, %v764
        %v822 = vpack.c.b16 %v767, %v766
        %v823 = vpack.c.b16 %v769, %v768
        %v824 = vpack.c.b16 %v771, %v770
        %v825 = vpack.c.b16 %v773, %v772
        %v826 = vpack.c.b16 %v775, %v774
        %v827 = vpack.c.b16 %v777, %v776
        %v828 = vpack.c.b16 %v779, %v778
        %v829 = vpack.c.b16 %v781, %v780
        %v830 = vpack.c.b16 %v783, %v782
        %v831 = vpack.c.b16 %v785, %v784
        %v832 = vpack.c.b16 %v787, %v786
        %v833 = vpack.c.b16 %v789, %v788
        %v834 = vpack.c.b16 %v791, %v790
        %v835 = vpack.c.b16 %v793, %v792
        %v836 = vpack.c.b16 %v795, %v794
        %v837 = vpack.c.b16 %v797, %v796
        %v838 = vpack.c.b16 %v799, %v798
        %v839 = vpack.c.b16 %v801, %v800
        %v840 = vpack.c.b16 %v803, %v802
        %v841 = vpack.c.b16 %v805, %v804
        %v842 = vpack.c.b16 %v807, %v806
        %v843 = vpack.c.b16 %v809, %v808
        %v844 = vpack.c.b16 %v811, %v810
        %v845 = vpack.c.b16 %v813, %v812
        %878 = vmatpush.bf16.msra.mxu0 %v821
        %879 = vmatpush.bf16.msra.mxu0 %v820
        %880 = vmatpush.bf16.msra.mxu0 %v819
        %881 = vmatpush.bf16.msra.mxu0 %v818
        %882 = vmatpush.bf16.msra.mxu0 %v817
        %883 = vmatpush.bf16.msra.mxu0 %v816
        %884 = vmatpush.bf16.msra.mxu0 %v815
        %885 = vmatpush.bf16.msra.mxu0 %v814
        %886 = vmatmul.bf16.gmra.mxu0 %v678
        %v887 = vpop.f32.mrf.mxu0
        %v888 = vadd.f32 0.0, %v887
        %v889 = vpop.f32.mrf.mxu0
        %890 = vdwg.mxu0
        %891 = vmatpush.bf16.msra.mxu0 %v829
        %892 = vmatpush.bf16.msra.mxu0 %v828
        %893 = vmatpush.bf16.msra.mxu0 %v827
        %894 = vmatpush.bf16.msra.mxu0 %v826
        %895 = vmatpush.bf16.msra.mxu0 %v825
        %896 = vmatpush.bf16.msra.mxu0 %v824
        %897 = vmatpush.bf16.msra.mxu0 %v823
        %898 = vmatpush.bf16.msra.mxu0 %v822
        %899 = vmatmul.bf16.gmra.mxu0 %v679
        %v900 = vpop.f32.mrf.mxu0
        %v901 = vadd.f32 %v888, %v900
        %v902 = vpop.f32.mrf.mxu0
        %903 = vdwg.mxu0
        %904 = vmatpush.bf16.msra.mxu0 %v837
        %905 = vmatpush.bf16.msra.mxu0 %v836
        %906 = vmatpush.bf16.msra.mxu0 %v835
        %907 = vmatpush.bf16.msra.mxu0 %v834
        %908 = vmatpush.bf16.msra.mxu0 %v833
        %909 = vmatpush.bf16.msra.mxu0 %v832
        %910 = vmatpush.bf16.msra.mxu0 %v831
        %911 = vmatpush.bf16.msra.mxu0 %v830
        %912 = vmatmul.bf16.gmra.mxu0 %v680
        %v913 = vpop.f32.mrf.mxu0
        %v914 = vadd.f32 %v901, %v913
        %v915 = vpop.f32.mrf.mxu0
        %916 = vdwg.mxu0
        %917 = vmatpush.bf16.msra.mxu0 %v845
        %918 = vmatpush.bf16.msra.mxu0 %v844
        %919 = vmatpush.bf16.msra.mxu0 %v843
        %920 = vmatpush.bf16.msra.mxu0 %v842
        %921 = vmatpush.bf16.msra.mxu0 %v841
        %922 = vmatpush.bf16.msra.mxu0 %v840
        %923 = vmatpush.bf16.msra.mxu0 %v839
        %924 = vmatpush.bf16.msra.mxu0 %v838
        %925 = vmatmul.bf16.gmra.mxu0 %v681
        %v926 = vpop.f32.mrf.mxu0
        %v927 = vadd.f32 %v914, %v926
        %v928 = vpop.f32.mrf.mxu0
        %929 = vdwg.mxu0
        %v930 = vld [vmem:[#allocation6] sm:$0x1]
        %v932 = vperm.slane %v930, 0
        %v934 = vmul.f32 %v927, %v932
        %v935 = vld [vmem:[#allocation8] sm:$0x1]
        %v937 = vperm.slane %v935, 0
        %v939 = vadd.f32 %v934, %v937
        %v940 = vmax.f32 %v939, 0.0
        %v941 = vpack.c.bf16 %v940, %v940
        %942 = vst [vmem:[#allocation2] sm:$0xf] %v941
        %vm943 = vcmask 257024
        %944 = vst.msk [vmem:[#allocation3] sm:$0xf] %vm943, 0.0
        %v945 = vld [vmem:[#allocation3 + $0x1] sm:$0x7]
        %v946 = vld [vmem:[#allocation2] sm:$0x1]
        %v947 = vld [vmem:[#allocation2] sm:$0x2]
        %v948 = vld [vmem:[#allocation2] sm:$0x4]
        %v950 = vunpack.c.l.b16 %v946
        %v951 = vpack.c.b16 %v950, %v950
        %v953 = vshrl.u32 %v951, 16
        %v957 = vunpack.c.l.b16 %v947
        %v958 = vpack.c.b16 %v957, %v957
        %v959 = vrot.slane %v958, 1
        %v962 = vunpack.c.l.b16 %v948
        %v963 = vpack.c.b16 %v962, %v962
        %v965 = vshrl.u32 %v963, 16
        %v967 = vrot.slane %v965, 1
        %vm968 = vcmask 1040384
        %vm969 = vsmask.f32 256
        %vm970 = vmand %vm968, %vm969
        %v971 = vsel %vm970, %v953, %v959
        %vm972 = vcmask 1040384
        %v975 = vsel %vm972, %v971, %v967
        %v977 = vld [vmem:[%s4] sm:$0xf]
        %v978 = vld [vmem:[%s4 + $0x4] sm:$0xf]
        %v979 = vld [vmem:[%s4 + $0x8] sm:$0xf]
        %v980 = vld [vmem:[%s4 + $0xc] sm:$0xf]
        %v981 = vld [vmem:[%s4 + $0x10] sm:$0xf]
        %v982 = vld [vmem:[%s4 + $0x14] sm:$0xf]
        %v983 = vld [vmem:[%s4 + $0x18] sm:$0xf]
        %v984 = vld [vmem:[%s4 + $0x1c] sm:$0xf]
        %v985 = vld [vmem:[%s4 + $0x20] sm:$0xf]
        %v986 = vld [vmem:[%s4 + $0x24] sm:$0xf]
        %v987 = vld [vmem:[%s4 + $0x28] sm:$0xf]
        %v988 = vld [vmem:[%s4 + $0x2c] sm:$0xf]
        %v989 = vld [vmem:[%s4 + $0x30] sm:$0xf]
        %v990 = vld [vmem:[%s4 + $0x34] sm:$0xf]
        %v991 = vld [vmem:[%s4 + $0x38] sm:$0xf]
        %v992 = vld [vmem:[%s4 + $0x3c] sm:$0xf]
        %v1009 = vunpack.c.l.b16 %v977
        %v1010 = vunpack.c.l.b16 %v978
        %v1011 = vunpack.c.l.b16 %v979
        %v1012 = vunpack.c.l.b16 %v980
        %v1013 = vunpack.c.l.b16 %v981
        %v1014 = vunpack.c.l.b16 %v982
        %v1015 = vunpack.c.l.b16 %v983
        %v1016 = vunpack.c.l.b16 %v984
        %v1017 = vunpack.c.l.b16 %v985
        %v1018 = vunpack.c.l.b16 %v986
        %v1019 = vunpack.c.l.b16 %v987
        %v1020 = vunpack.c.l.b16 %v988
        %v1021 = vunpack.c.l.b16 %v989
        %v1022 = vunpack.c.l.b16 %v990
        %v1023 = vunpack.c.l.b16 %v991
        %v1024 = vunpack.c.l.b16 %v992
        %v1025 = vpack.c.b16 %v1010, %v1009
        %v1026 = vpack.c.b16 %v1012, %v1011
        %v1027 = vpack.c.b16 %v1014, %v1013
        %v1028 = vpack.c.b16 %v1016, %v1015
        %v1029 = vpack.c.b16 %v1018, %v1017
        %v1030 = vpack.c.b16 %v1020, %v1019
        %v1031 = vpack.c.b16 %v1022, %v1021
        %v1032 = vpack.c.b16 %v1024, %v1023
        %1041 = vmatpush.bf16.msra.mxu0 %v1032
        %1042 = vmatpush.bf16.msra.mxu0 %v1031
        %1043 = vmatpush.bf16.msra.mxu0 %v1030
        %1044 = vmatpush.bf16.msra.mxu0 %v1029
        %1045 = vmatpush.bf16.msra.mxu0 %v1028
        %1046 = vmatpush.bf16.msra.mxu0 %v1027
        %1047 = vmatpush.bf16.msra.mxu0 %v1026
        %1048 = vmatpush.bf16.msra.mxu0 %v1025
        %1049 = vmatmul.bf16.gmra.mxu0 %v975
        %v1050 = vpop.f32.mrf.mxu0
        %v1051 = vadd.f32 0.0, %v1050
        %v1052 = vpop.f32.mrf.mxu0
        %1053 = vdwg.mxu0
        %v1054 = vadd.f32 %v945, %v1051
        %vm1055 = vcmask 256000
        %1056 = vst.msk [vmem:[#allocation3 + $0x1] sm:$0x7] %vm1055, %v1054
        %v1057 = vld [vmem:[#allocation3] sm:$0xf]
        %v1058 = vld [vmem:[#allocation2] sm:$0x1]
        %v1059 = vld [vmem:[#allocation2] sm:$0x2]
        %v1060 = vld [vmem:[#allocation2] sm:$0x4]
        %v1061 = vld [vmem:[#allocation2] sm:$0x8]
        %v1063 = vunpack.c.l.b16 %v1059
        %v1064 = vpack.c.b16 %v1063, %v1063
        %v1066 = vshll.u32 %v1064, 16
        %v1068 = vrot.slane %v1066, 1
        %v1071 = vunpack.c.l.b16 %v1060
        %v1072 = vpack.c.b16 %v1071, %v1071
        %v1073 = vrot.slane %v1072, 1
        %v1075 = vunpack.c.l.b16 %v1061
        %v1076 = vpack.c.b16 %v1075, %v1075
        %v1078 = vshll.u32 %v1076, 16
        %v1080 = vrot.slane %v1078, 2
        %v1082 = vsel %vm970, %v1058, %v1068
        %v1085 = vsel %vm972, %v1082, %v1073
        %vm1087 = vcmask 1041408
        %vm1088 = vsmask.f32 1280
        %vm1089 = vmand %vm1087, %vm1088
        %v1090 = vsel %vm1089, %v1085, %v1080
        %s1091 = scalar_lea.vmem %s4, 64
        %v1092 = vld [vmem:[%s1091] sm:$0xf]
        %v1093 = vld [vmem:[%s1091 + $0x4] sm:$0xf]
        %v1094 = vld [vmem:[%s1091 + $0x8] sm:$0xf]
        %v1095 = vld [vmem:[%s1091 + $0xc] sm:$0xf]
        %v1096 = vld [vmem:[%s1091 + $0x10] sm:$0xf]
        %v1097 = vld [vmem:[%s1091 + $0x14] sm:$0xf]
        %v1098 = vld [vmem:[%s1091 + $0x18] sm:$0xf]
        %v1099 = vld [vmem:[%s1091 + $0x1c] sm:$0xf]
        %v1100 = vld [vmem:[%s1091 + $0x20] sm:$0xf]
        %v1101 = vld [vmem:[%s1091 + $0x24] sm:$0xf]
        %v1102 = vld [vmem:[%s1091 + $0x28] sm:$0xf]
        %v1103 = vld [vmem:[%s1091 + $0x2c] sm:$0xf]
        %v1104 = vld [vmem:[%s1091 + $0x30] sm:$0xf]
        %v1105 = vld [vmem:[%s1091 + $0x34] sm:$0xf]
        %v1106 = vld [vmem:[%s1091 + $0x38] sm:$0xf]
        %v1107 = vld [vmem:[%s1091 + $0x3c] sm:$0xf]
        %v1124 = vunpack.c.l.b16 %v1092
        %v1125 = vunpack.c.l.b16 %v1093
        %v1126 = vunpack.c.l.b16 %v1094
        %v1127 = vunpack.c.l.b16 %v1095
        %v1128 = vunpack.c.l.b16 %v1096
        %v1129 = vunpack.c.l.b16 %v1097
        %v1130 = vunpack.c.l.b16 %v1098
        %v1131 = vunpack.c.l.b16 %v1099
        %v1132 = vunpack.c.l.b16 %v1100
        %v1133 = vunpack.c.l.b16 %v1101
        %v1134 = vunpack.c.l.b16 %v1102
        %v1135 = vunpack.c.l.b16 %v1103
        %v1136 = vunpack.c.l.b16 %v1104
        %v1137 = vunpack.c.l.b16 %v1105
        %v1138 = vunpack.c.l.b16 %v1106
        %v1139 = vunpack.c.l.b16 %v1107
        %v1140 = vpack.c.b16 %v1125, %v1124
        %v1141 = vpack.c.b16 %v1127, %v1126
        %v1142 = vpack.c.b16 %v1129, %v1128
        %v1143 = vpack.c.b16 %v1131, %v1130
        %v1144 = vpack.c.b16 %v1133, %v1132
        %v1145 = vpack.c.b16 %v1135, %v1134
        %v1146 = vpack.c.b16 %v1137, %v1136
        %v1147 = vpack.c.b16 %v1139, %v1138
        %1156 = vmatpush.bf16.msra.mxu0 %v1147
        %1157 = vmatpush.bf16.msra.mxu0 %v1146
        %1158 = vmatpush.bf16.msra.mxu0 %v1145
        %1159 = vmatpush.bf16.msra.mxu0 %v1144
        %1160 = vmatpush.bf16.msra.mxu0 %v1143
        %1161 = vmatpush.bf16.msra.mxu0 %v1142
        %1162 = vmatpush.bf16.msra.mxu0 %v1141
        %1163 = vmatpush.bf16.msra.mxu0 %v1140
        %1164 = vmatmul.bf16.gmra.mxu0 %v1090
        %v1165 = vpop.f32.mrf.mxu0
        %v1166 = vadd.f32 0.0, %v1165
        %v1167 = vpop.f32.mrf.mxu0
        %1168 = vdwg.mxu0
        %v1169 = vadd.f32 %v1057, %v1166
        %1170 = vst.msk [vmem:[#allocation3] sm:$0xf] %vm943, %v1169
        %v1171 = vld [vmem:[#allocation3] sm:$0xf]
        %v1172 = vld [vmem:[#allocation2] sm:$0x1]
        %v1173 = vld [vmem:[#allocation2] sm:$0x2]
        %v1174 = vld [vmem:[#allocation2] sm:$0x4]
        %v1175 = vld [vmem:[#allocation2] sm:$0x8]
        %v1177 = vunpack.c.l.b16 %v1172
        %v1178 = vpack.c.b16 %v1177, %v1177
        %v1180 = vshrl.u32 %v1178, 16
        %v1184 = vunpack.c.l.b16 %v1173
        %v1185 = vpack.c.b16 %v1184, %v1184
        %v1186 = vrot.slane %v1185, 1
        %v1189 = vunpack.c.l.b16 %v1174
        %v1190 = vpack.c.b16 %v1189, %v1189
        %v1192 = vshrl.u32 %v1190, 16
        %v1194 = vrot.slane %v1192, 1
        %v1196 = vunpack.c.l.b16 %v1175
        %v1197 = vpack.c.b16 %v1196, %v1196
        %v1198 = vrot.slane %v1197, 2
        %v1200 = vsel %vm970, %v1180, %v1186
        %v1203 = vsel %vm972, %v1200, %v1194
        %v1205 = vsel %vm1089, %v1203, %v1198
        %s1206 = scalar_lea.vmem %s4, 128
        %v1207 = vld [vmem:[%s1206] sm:$0xf]
        %v1208 = vld [vmem:[%s1206 + $0x4] sm:$0xf]
        %v1209 = vld [vmem:[%s1206 + $0x8] sm:$0xf]
        %v1210 = vld [vmem:[%s1206 + $0xc] sm:$0xf]
        %v1211 = vld [vmem:[%s1206 + $0x10] sm:$0xf]
        %v1212 = vld [vmem:[%s1206 + $0x14] sm:$0xf]
        %v1213 = vld [vmem:[%s1206 + $0x18] sm:$0xf]
        %v1214 = vld [vmem:[%s1206 + $0x1c] sm:$0xf]
        %v1215 = vld [vmem:[%s1206 + $0x20] sm:$0xf]
        %v1216 = vld [vmem:[%s1206 + $0x24] sm:$0xf]
        %v1217 = vld [vmem:[%s1206 + $0x28] sm:$0xf]
        %v1218 = vld [vmem:[%s1206 + $0x2c] sm:$0xf]
        %v1219 = vld [vmem:[%s1206 + $0x30] sm:$0xf]
        %v1220 = vld [vmem:[%s1206 + $0x34] sm:$0xf]
        %v1221 = vld [vmem:[%s1206 + $0x38] sm:$0xf]
        %v1222 = vld [vmem:[%s1206 + $0x3c] sm:$0xf]
        %v1239 = vunpack.c.l.b16 %v1207
        %v1240 = vunpack.c.l.b16 %v1208
        %v1241 = vunpack.c.l.b16 %v1209
        %v1242 = vunpack.c.l.b16 %v1210
        %v1243 = vunpack.c.l.b16 %v1211
        %v1244 = vunpack.c.l.b16 %v1212
        %v1245 = vunpack.c.l.b16 %v1213
        %v1246 = vunpack.c.l.b16 %v1214
        %v1247 = vunpack.c.l.b16 %v1215
        %v1248 = vunpack.c.l.b16 %v1216
        %v1249 = vunpack.c.l.b16 %v1217
        %v1250 = vunpack.c.l.b16 %v1218
        %v1251 = vunpack.c.l.b16 %v1219
        %v1252 = vunpack.c.l.b16 %v1220
        %v1253 = vunpack.c.l.b16 %v1221
        %v1254 = vunpack.c.l.b16 %v1222
        %v1255 = vpack.c.b16 %v1240, %v1239
        %v1256 = vpack.c.b16 %v1242, %v1241
        %v1257 = vpack.c.b16 %v1244, %v1243
        %v1258 = vpack.c.b16 %v1246, %v1245
        %v1259 = vpack.c.b16 %v1248, %v1247
        %v1260 = vpack.c.b16 %v1250, %v1249
        %v1261 = vpack.c.b16 %v1252, %v1251
        %v1262 = vpack.c.b16 %v1254, %v1253
        %1271 = vmatpush.bf16.msra.mxu0 %v1262
        %1272 = vmatpush.bf16.msra.mxu0 %v1261
        %1273 = vmatpush.bf16.msra.mxu0 %v1260
        %1274 = vmatpush.bf16.msra.mxu0 %v1259
        %1275 = vmatpush.bf16.msra.mxu0 %v1258
        %1276 = vmatpush.bf16.msra.mxu0 %v1257
        %1277 = vmatpush.bf16.msra.mxu0 %v1256
        %1278 = vmatpush.bf16.msra.mxu0 %v1255
        %1279 = vmatmul.bf16.gmra.mxu0 %v1205
        %v1280 = vpop.f32.mrf.mxu0
        %v1281 = vadd.f32 0.0, %v1280
        %v1282 = vpop.f32.mrf.mxu0
        %1283 = vdwg.mxu0
        %v1284 = vadd.f32 %v1171, %v1281
        %1285 = vst.msk [vmem:[#allocation3] sm:$0xf] %vm943, %v1284
        %v1286 = vld [vmem:[#allocation3] sm:$0xf]
        %v1287 = vld [vmem:[#allocation9] sm:$0x1]
        %v1289 = vperm.slane %v1287, 0
        %v1291 = vmul.f32 %v1286, %v1289
        %v1292 = vld [vmem:[#allocation11] sm:$0x1]
        %v1294 = vperm.slane %v1292, 0
        %v1296 = vadd.f32 %v1291, %v1294
        %v1297 = vmax.f32 %v1296, 0.0
        %v1298 = vpack.c.bf16 %v1297, %v1297
        %v1299 = vld [vmem:[#allocation12] sm:$0xf]
        %v1300 = vld [vmem:[#allocation12 + $0x4] sm:$0xf]
        %v1301 = vld [vmem:[#allocation12 + $0x8] sm:$0xf]
        %v1302 = vld [vmem:[#allocation12 + $0xc] sm:$0xf]
        %v1307 = vunpack.c.l.b16 %v1299
        %v1308 = vunpack.c.l.b16 %v1300
        %v1309 = vunpack.c.l.b16 %v1301
        %v1310 = vunpack.c.l.b16 %v1302
        %v1311 = vpack.c.b16 %v1308, %v1307
        %v1312 = vpack.c.b16 %v1310, %v1309
        %vm1315 = vcmask 261120
        %v1317 = vsel %vm1315, %v1298, 0
        %1319 = vmatpush.bf16.msra.mxu0 0
        %1320 = vmatpush.bf16.msra.mxu0 0
        %1321 = vmatpush.bf16.msra.mxu0 0
        %1322 = vmatpush.bf16.msra.mxu0 0
        %1323 = vmatpush.bf16.msra.mxu0 0
        %1324 = vmatpush.bf16.msra.mxu0 0
        %1325 = vmatpush.bf16.msra.mxu0 %v1312
        %1326 = vmatpush.bf16.msra.mxu0 %v1311
        %1327 = vmatmul.bf16.gmra.mxu0 %v1317
        %v1328 = vpop.f32.mrf.mxu0
        %v1329 = vadd.f32 0.0, %v1328
        %v1330 = vpop.f32.mrf.mxu0
        %1331 = vdwg.mxu0
        %v1332 = vld [vmem:[#allocation14] sm:$0x1]
        %v1334 = vperm.slane %v1332, 0
        %v1336 = vmul.f32 %v1329, %v1334
        %v1337 = vld [vmem:[#allocation15] sm:$0x1]
        %v1339 = vperm.slane %v1337, 0
        %v1341 = vadd.f32 %v1336, %v1339
        %v1342 = vld [vmem:[%s600] sm:$0x11]
        %v1343 = vld [vmem:[%s600 + $0x8] sm:$0x11]
        %v1344 = vld [vmem:[%s600] sm:$0x22]
        %v1345 = vld [vmem:[%s600 + $0x8] sm:$0x22]
        %v1346 = vld [vmem:[%s600] sm:$0x44]
        %v1347 = vld [vmem:[%s600 + $0x8] sm:$0x44]
        %v1348 = vld [vmem:[%s600] sm:$0x88]
        %v1349 = vld [vmem:[%s600 + $0x8] sm:$0x88]
        %v1352 = vunpack.c.l.b16 %v1342
        %v1353 = vunpack.c.h.b16 %v1342
        %v1354 = vunpack.c.l.b16 %v1343
        %v1355 = vunpack.c.h.b16 %v1343
        %v1356 = vpack.c.b16 %v1352, %v1352
        %v1357 = vpack.c.b16 %v1353, %v1353
        %v1358 = vpack.c.b16 %v1354, %v1354
        %v1359 = vpack.c.b16 %v1355, %v1355
        %v1366 = vunpack.c.l.b16 %v1344
        %v1367 = vunpack.c.h.b16 %v1344
        %v1368 = vunpack.c.l.b16 %v1345
        %v1369 = vunpack.c.h.b16 %v1345
        %v1370 = vpack.c.b16 %v1366, %v1366
        %v1371 = vpack.c.b16 %v1367, %v1367
        %v1372 = vpack.c.b16 %v1368, %v1368
        %v1373 = vpack.c.b16 %v1369, %v1369
        %v1375 = vshll.u32 %v1370, 16
        %v1377 = vrot.slane %v1375, 1
        %v1379 = vshll.u32 %v1371, 16
        %v1381 = vrot.slane %v1379, 1
        %v1383 = vshll.u32 %v1372, 16
        %v1385 = vrot.slane %v1383, 1
        %v1387 = vshll.u32 %v1373, 16
        %v1389 = vrot.slane %v1387, 1
        %v1396 = vunpack.c.l.b16 %v1346
        %v1397 = vunpack.c.h.b16 %v1346
        %v1398 = vunpack.c.l.b16 %v1347
        %v1399 = vunpack.c.h.b16 %v1347
        %v1400 = vpack.c.b16 %v1396, %v1396
        %v1401 = vpack.c.b16 %v1397, %v1397
        %v1402 = vpack.c.b16 %v1398, %v1398
        %v1403 = vpack.c.b16 %v1399, %v1399
        %v1404 = vrot.slane %v1400, 1
        %v1405 = vrot.slane %v1401, 1
        %v1406 = vrot.slane %v1402, 1
        %v1407 = vrot.slane %v1403, 1
        %v1410 = vunpack.c.l.b16 %v1348
        %v1411 = vunpack.c.h.b16 %v1348
        %v1412 = vunpack.c.l.b16 %v1349
        %v1413 = vunpack.c.h.b16 %v1349
        %v1414 = vpack.c.b16 %v1410, %v1410
        %v1415 = vpack.c.b16 %v1411, %v1411
        %v1416 = vpack.c.b16 %v1412, %v1412
        %v1417 = vpack.c.b16 %v1413, %v1413
        %v1419 = vshll.u32 %v1414, 16
        %v1421 = vrot.slane %v1419, 2
        %v1423 = vshll.u32 %v1415, 16
        %v1425 = vrot.slane %v1423, 2
        %v1427 = vshll.u32 %v1416, 16
        %v1429 = vrot.slane %v1427, 2
        %v1431 = vshll.u32 %v1417, 16
        %v1433 = vrot.slane %v1431, 2
        %v1438 = vsel %vm970, %v1356, %v1377
        %v1439 = vsel %vm970, %v1357, %v1381
        %v1440 = vsel %vm970, %v1358, %v1385
        %v1441 = vsel %vm970, %v1359, %v1389
        %v1444 = vsel %vm972, %v1438, %v1404
        %v1448 = vsel %vm972, %v1439, %v1405
        %v1452 = vsel %vm972, %v1440, %v1406
        %v1456 = vsel %vm972, %v1441, %v1407
        %v1458 = vsel %vm1089, %v1444, %v1421
        %v1459 = vsel %vm1089, %v1448, %v1425
        %v1460 = vsel %vm1089, %v1452, %v1429
        %v1461 = vsel %vm1089, %v1456, %v1433
        %v1462 = vld [vmem:[#allocation17] sm:$0xf]
        %v1463 = vld [vmem:[#allocation17 + $0x4] sm:$0xf]
        %v1464 = vld [vmem:[#allocation17 + $0x8] sm:$0xf]
        %v1465 = vld [vmem:[#allocation17 + $0xc] sm:$0xf]
        %v1466 = vld [vmem:[#allocation17 + $0x10] sm:$0xf]
        %v1467 = vld [vmem:[#allocation17 + $0x14] sm:$0xf]
        %v1468 = vld [vmem:[#allocation17 + $0x18] sm:$0xf]
        %v1469 = vld [vmem:[#allocation17 + $0x1c] sm:$0xf]
        %v1470 = vld [vmem:[#allocation17 + $0x20] sm:$0xf]
        %v1471 = vld [vmem:[#allocation17 + $0x24] sm:$0xf]
        %v1472 = vld [vmem:[#allocation17 + $0x28] sm:$0xf]
        %v1473 = vld [vmem:[#allocation17 + $0x2c] sm:$0xf]
        %v1474 = vld [vmem:[#allocation17 + $0x30] sm:$0xf]
        %v1475 = vld [vmem:[#allocation17 + $0x34] sm:$0xf]
        %v1476 = vld [vmem:[#allocation17 + $0x38] sm:$0xf]
        %v1477 = vld [vmem:[#allocation17 + $0x3c] sm:$0xf]
        %v1478 = vld [vmem:[#allocation17 + $0x40] sm:$0xf]
        %v1479 = vld [vmem:[#allocation17 + $0x44] sm:$0xf]
        %v1480 = vld [vmem:[#allocation17 + $0x48] sm:$0xf]
        %v1481 = vld [vmem:[#allocation17 + $0x4c] sm:$0xf]
        %v1482 = vld [vmem:[#allocation17 + $0x50] sm:$0xf]
        %v1483 = vld [vmem:[#allocation17 + $0x54] sm:$0xf]
        %v1484 = vld [vmem:[#allocation17 + $0x58] sm:$0xf]
        %v1485 = vld [vmem:[#allocation17 + $0x5c] sm:$0xf]
        %v1486 = vld [vmem:[#allocation17 + $0x60] sm:$0xf]
        %v1487 = vld [vmem:[#allocation17 + $0x64] sm:$0xf]
        %v1488 = vld [vmem:[#allocation17 + $0x68] sm:$0xf]
        %v1489 = vld [vmem:[#allocation17 + $0x6c] sm:$0xf]
        %v1490 = vld [vmem:[#allocation17 + $0x70] sm:$0xf]
        %v1491 = vld [vmem:[#allocation17 + $0x74] sm:$0xf]
        %v1492 = vld [vmem:[#allocation17 + $0x78] sm:$0xf]
        %v1493 = vld [vmem:[#allocation17 + $0x7c] sm:$0xf]
        %v1494 = vld [vmem:[#allocation17 + $0x80] sm:$0xf]
        %v1495 = vld [vmem:[#allocation17 + $0x84] sm:$0xf]
        %v1496 = vld [vmem:[#allocation17 + $0x88] sm:$0xf]
        %v1497 = vld [vmem:[#allocation17 + $0x8c] sm:$0xf]
        %v1498 = vld [vmem:[#allocation17 + $0x90] sm:$0xf]
        %v1499 = vld [vmem:[#allocation17 + $0x94] sm:$0xf]
        %v1500 = vld [vmem:[#allocation17 + $0x98] sm:$0xf]
        %v1501 = vld [vmem:[#allocation17 + $0x9c] sm:$0xf]
        %v1502 = vld [vmem:[#allocation17 + $0xa0] sm:$0xf]
        %v1503 = vld [vmem:[#allocation17 + $0xa4] sm:$0xf]
        %v1504 = vld [vmem:[#allocation17 + $0xa8] sm:$0xf]
        %v1505 = vld [vmem:[#allocation17 + $0xac] sm:$0xf]
        %v1506 = vld [vmem:[#allocation17 + $0xb0] sm:$0xf]
        %v1507 = vld [vmem:[#allocation17 + $0xb4] sm:$0xf]
        %v1508 = vld [vmem:[#allocation17 + $0xb8] sm:$0xf]
        %v1509 = vld [vmem:[#allocation17 + $0xbc] sm:$0xf]
        %v1510 = vld [vmem:[#allocation17 + $0xc0] sm:$0xf]
        %v1511 = vld [vmem:[#allocation17 + $0xc4] sm:$0xf]
        %v1512 = vld [vmem:[#allocation17 + $0xc8] sm:$0xf]
        %v1513 = vld [vmem:[#allocation17 + $0xcc] sm:$0xf]
        %v1514 = vld [vmem:[#allocation17 + $0xd0] sm:$0xf]
        %v1515 = vld [vmem:[#allocation17 + $0xd4] sm:$0xf]
        %v1516 = vld [vmem:[#allocation17 + $0xd8] sm:$0xf]
        %v1517 = vld [vmem:[#allocation17 + $0xdc] sm:$0xf]
        %v1518 = vld [vmem:[#allocation17 + $0xe0] sm:$0xf]
        %v1519 = vld [vmem:[#allocation17 + $0xe4] sm:$0xf]
        %v1520 = vld [vmem:[#allocation17 + $0xe8] sm:$0xf]
        %v1521 = vld [vmem:[#allocation17 + $0xec] sm:$0xf]
        %v1522 = vld [vmem:[#allocation17 + $0xf0] sm:$0xf]
        %v1523 = vld [vmem:[#allocation17 + $0xf4] sm:$0xf]
        %v1524 = vld [vmem:[#allocation17 + $0xf8] sm:$0xf]
        %v1525 = vld [vmem:[#allocation17 + $0xfc] sm:$0xf]
        %v1590 = vunpack.c.l.b16 %v1462
        %v1591 = vunpack.c.l.b16 %v1463
        %v1592 = vunpack.c.l.b16 %v1464
        %v1593 = vunpack.c.l.b16 %v1465
        %v1594 = vunpack.c.l.b16 %v1466
        %v1595 = vunpack.c.l.b16 %v1467
        %v1596 = vunpack.c.l.b16 %v1468
        %v1597 = vunpack.c.l.b16 %v1469
        %v1598 = vunpack.c.l.b16 %v1470
        %v1599 = vunpack.c.l.b16 %v1471
        %v1600 = vunpack.c.l.b16 %v1472
        %v1601 = vunpack.c.l.b16 %v1473
        %v1602 = vunpack.c.l.b16 %v1474
        %v1603 = vunpack.c.l.b16 %v1475
        %v1604 = vunpack.c.l.b16 %v1476
        %v1605 = vunpack.c.l.b16 %v1477
        %v1606 = vunpack.c.l.b16 %v1478
        %v1607 = vunpack.c.l.b16 %v1479
        %v1608 = vunpack.c.l.b16 %v1480
        %v1609 = vunpack.c.l.b16 %v1481
        %v1610 = vunpack.c.l.b16 %v1482
        %v1611 = vunpack.c.l.b16 %v1483
        %v1612 = vunpack.c.l.b16 %v1484
        %v1613 = vunpack.c.l.b16 %v1485
        %v1614 = vunpack.c.l.b16 %v1486
        %v1615 = vunpack.c.l.b16 %v1487
        %v1616 = vunpack.c.l.b16 %v1488
        %v1617 = vunpack.c.l.b16 %v1489
        %v1618 = vunpack.c.l.b16 %v1490
        %v1619 = vunpack.c.l.b16 %v1491
        %v1620 = vunpack.c.l.b16 %v1492
        %v1621 = vunpack.c.l.b16 %v1493
        %v1622 = vunpack.c.l.b16 %v1494
        %v1623 = vunpack.c.l.b16 %v1495
        %v1624 = vunpack.c.l.b16 %v1496
        %v1625 = vunpack.c.l.b16 %v1497
        %v1626 = vunpack.c.l.b16 %v1498
        %v1627 = vunpack.c.l.b16 %v1499
        %v1628 = vunpack.c.l.b16 %v1500
        %v1629 = vunpack.c.l.b16 %v1501
        %v1630 = vunpack.c.l.b16 %v1502
        %v1631 = vunpack.c.l.b16 %v1503
        %v1632 = vunpack.c.l.b16 %v1504
        %v1633 = vunpack.c.l.b16 %v1505
        %v1634 = vunpack.c.l.b16 %v1506
        %v1635 = vunpack.c.l.b16 %v1507
        %v1636 = vunpack.c.l.b16 %v1508
        %v1637 = vunpack.c.l.b16 %v1509
        %v1638 = vunpack.c.l.b16 %v1510
        %v1639 = vunpack.c.l.b16 %v1511
        %v1640 = vunpack.c.l.b16 %v1512
        %v1641 = vunpack.c.l.b16 %v1513
        %v1642 = vunpack.c.l.b16 %v1514
        %v1643 = vunpack.c.l.b16 %v1515
        %v1644 = vunpack.c.l.b16 %v1516
        %v1645 = vunpack.c.l.b16 %v1517
        %v1646 = vunpack.c.l.b16 %v1518
        %v1647 = vunpack.c.l.b16 %v1519
        %v1648 = vunpack.c.l.b16 %v1520
        %v1649 = vunpack.c.l.b16 %v1521
        %v1650 = vunpack.c.l.b16 %v1522
        %v1651 = vunpack.c.l.b16 %v1523
        %v1652 = vunpack.c.l.b16 %v1524
        %v1653 = vunpack.c.l.b16 %v1525
        %v1654 = vpack.c.b16 %v1591, %v1590
        %v1655 = vpack.c.b16 %v1593, %v1592
        %v1656 = vpack.c.b16 %v1595, %v1594
        %v1657 = vpack.c.b16 %v1597, %v1596
        %v1658 = vpack.c.b16 %v1599, %v1598
        %v1659 = vpack.c.b16 %v1601, %v1600
        %v1660 = vpack.c.b16 %v1603, %v1602
        %v1661 = vpack.c.b16 %v1605, %v1604
        %v1662 = vpack.c.b16 %v1607, %v1606
        %v1663 = vpack.c.b16 %v1609, %v1608
        %v1664 = vpack.c.b16 %v1611, %v1610
        %v1665 = vpack.c.b16 %v1613, %v1612
        %v1666 = vpack.c.b16 %v1615, %v1614
        %v1667 = vpack.c.b16 %v1617, %v1616
        %v1668 = vpack.c.b16 %v1619, %v1618
        %v1669 = vpack.c.b16 %v1621, %v1620
        %v1670 = vpack.c.b16 %v1623, %v1622
        %v1671 = vpack.c.b16 %v1625, %v1624
        %v1672 = vpack.c.b16 %v1627, %v1626
        %v1673 = vpack.c.b16 %v1629, %v1628
        %v1674 = vpack.c.b16 %v1631, %v1630
        %v1675 = vpack.c.b16 %v1633, %v1632
        %v1676 = vpack.c.b16 %v1635, %v1634
        %v1677 = vpack.c.b16 %v1637, %v1636
        %v1678 = vpack.c.b16 %v1639, %v1638
        %v1679 = vpack.c.b16 %v1641, %v1640
        %v1680 = vpack.c.b16 %v1643, %v1642
        %v1681 = vpack.c.b16 %v1645, %v1644
        %v1682 = vpack.c.b16 %v1647, %v1646
        %v1683 = vpack.c.b16 %v1649, %v1648
        %v1684 = vpack.c.b16 %v1651, %v1650
        %v1685 = vpack.c.b16 %v1653, %v1652
        %1718 = vmatpush.bf16.msra.mxu0 %v1661
        %1719 = vmatpush.bf16.msra.mxu0 %v1660
        %1720 = vmatpush.bf16.msra.mxu0 %v1659
        %1721 = vmatpush.bf16.msra.mxu0 %v1658
        %1722 = vmatpush.bf16.msra.mxu0 %v1657
        %1723 = vmatpush.bf16.msra.mxu0 %v1656
        %1724 = vmatpush.bf16.msra.mxu0 %v1655
        %1725 = vmatpush.bf16.msra.mxu0 %v1654
        %1726 = vmatmul.bf16.gmra.mxu0 %v1458
        %v1727 = vpop.f32.mrf.mxu0
        %v1728 = vadd.f32 0.0, %v1727
        %v1729 = vpop.f32.mrf.mxu0
        %1730 = vdwg.mxu0
        %1731 = vmatpush.bf16.msra.mxu0 %v1669
        %1732 = vmatpush.bf16.msra.mxu0 %v1668
        %1733 = vmatpush.bf16.msra.mxu0 %v1667
        %1734 = vmatpush.bf16.msra.mxu0 %v1666
        %1735 = vmatpush.bf16.msra.mxu0 %v1665
        %1736 = vmatpush.bf16.msra.mxu0 %v1664
        %1737 = vmatpush.bf16.msra.mxu0 %v1663
        %1738 = vmatpush.bf16.msra.mxu0 %v1662
        %1739 = vmatmul.bf16.gmra.mxu0 %v1459
        %v1740 = vpop.f32.mrf.mxu0
        %v1741 = vadd.f32 %v1728, %v1740
        %v1742 = vpop.f32.mrf.mxu0
        %1743 = vdwg.mxu0
        %1744 = vmatpush.bf16.msra.mxu0 %v1677
        %1745 = vmatpush.bf16.msra.mxu0 %v1676
        %1746 = vmatpush.bf16.msra.mxu0 %v1675
        %1747 = vmatpush.bf16.msra.mxu0 %v1674
        %1748 = vmatpush.bf16.msra.mxu0 %v1673
        %1749 = vmatpush.bf16.msra.mxu0 %v1672
        %1750 = vmatpush.bf16.msra.mxu0 %v1671
        %1751 = vmatpush.bf16.msra.mxu0 %v1670
        %1752 = vmatmul.bf16.gmra.mxu0 %v1460
        %v1753 = vpop.f32.mrf.mxu0
        %v1754 = vadd.f32 %v1741, %v1753
        %v1755 = vpop.f32.mrf.mxu0
        %1756 = vdwg.mxu0
        %1757 = vmatpush.bf16.msra.mxu0 %v1685
        %1758 = vmatpush.bf16.msra.mxu0 %v1684
        %1759 = vmatpush.bf16.msra.mxu0 %v1683
        %1760 = vmatpush.bf16.msra.mxu0 %v1682
        %1761 = vmatpush.bf16.msra.mxu0 %v1681
        %1762 = vmatpush.bf16.msra.mxu0 %v1680
        %1763 = vmatpush.bf16.msra.mxu0 %v1679
        %1764 = vmatpush.bf16.msra.mxu0 %v1678
        %1765 = vmatmul.bf16.gmra.mxu0 %v1461
        %v1766 = vpop.f32.mrf.mxu0
        %v1767 = vadd.f32 %v1754, %v1766
        %v1768 = vpop.f32.mrf.mxu0
        %1769 = vdwg.mxu0
        %v1770 = vld [vmem:[#allocation18] sm:$0x1]
        %v1772 = vperm.slane %v1770, 0
        %v1774 = vmul.f32 %v1767, %v1772
        %v1775 = vld [vmem:[#allocation20] sm:$0x1]
        %v1777 = vperm.slane %v1775, 0
        %v1779 = vadd.f32 %v1774, %v1777
        %v1780 = vadd.f32 %v1341, %v1779
        %v1781 = vmax.f32 %v1780, 0.0
        %v1782 = vpack.c.bf16 %v1781, %v1781
        %1783 = vst [vmem:[%s604] sm:$0x3] %v1782
        %p1784 = scmp.lt.s32.totalorder %s30, 1
        %s1785 = scalar_select %p1784, %s30, 1
        %s1786 = smul.addr %s1785, 2
        %s1787 = scalar_lea.vmem %s13, %s1786
        // Predicated region
        $region117: #{forward.7} parent=71 // pred_check
          %p1788 = pneg %p326
        $region118: #{forward.7} parent=71 // pred_check_branch
          %1790 = sbr.rel (%p1788) target = $region120
        $region119: #{forward.7} parent=71 // pred_region
          _
        $region120: #{forward.7} parent=71 // pred_fallthru
          _
      $region72: #{forward.7} parent=5 // pred_fallthru
        _
      %p1791 = scmp.le.s32.totalorder 2, %s25
      // Predicated region
      $region121: #{forward.7} parent=5 // pred_check
        %p1792 = pneg %p1791
      $region122: #{forward.7} parent=5 // pred_check_branch
        %1794 = sbr.rel (%p1792) target = $region124
      $region123: #{forward.7} parent=5 // pred_region
        %s1795 = ssub.s32 %s25, 2
        // Predicated region
        $region125: #{forward.7} parent=123 // pred_check
          %p1796 = pneg %p332
        $region126: #{forward.7} parent=123 // pred_check_branch
          %1798 = sbr.rel (%p1796) target = $region128
        $region127: #{forward.7} parent=123 // pred_region
          %p1799 = scmp.lt.s32.totalorder %s31, 1
          %s1800 = scalar_select %p1799, %s31, 1
          %s1801 = smul.addr %s1800, 2
          %s1802 = scalar_lea.vmem %s13, %s1801
        $region128: #{forward.7} parent=123 // pred_fallthru
          _
      $region124: #{forward.7} parent=5 // pred_fallthru
        _
    $region6: #{forward.7} parent=1 // loop_footer
      %s29 = sadd.s32 1, %s25
    $region7: #{forward.7} parent=1 // loop_footer_branch
      %24 = sbr.rel target = $region3
    $region8: #{forward.7} parent=1 // loop_exit
      _
    %1803 = vsyncpa [#allocation5], 1
    %s1804 = scalar_lea.sflag [#allocation5], 1
    %1805 = vsyncpa %s1804, 1
    %1806 = vsyncpa [#allocation7], 1
    %1807 = vsyncpa [#allocation10], 1
    %1808 = vsyncpa [#allocation13], 1
    %1809 = vsyncpa [#allocation16], 1
    %1810 = vsyncpa [#allocation19], 1

// kernel: forward.11
$region0: #{forward.11}
  #allocation0 [shape = 'u32[]', space=smem, size = 0x4, offset = 0x4, fixed_abs, tag = 'smem constant byte address 0x4 - core index']
  #allocation1 [shape = 'u32[72,128]{1,0:T(1,128)}', space=vmem, size = 0x9000, scoped, tag = 'internal scratch']
  #allocation2 [shape = 'f32[1,1]{1,0:T(1,128)S(1)}', space=vmem, size = 0x200, scoped, tag = 'scoped memory for forward.11']
  %s0 = inlined_call_operand.vmem [shape: bf16[2,2,256], index: 0, kind: input, shape index: {}]
  %s1 = inlined_call_operand.vmem [shape: f32[256,64], index: 1, kind: input, shape index: {}]
  %s2 = inlined_call_operand.hbm [shape: f32[64,256], index: 2, kind: input, shape index: {}]
  %s3 = inlined_call_operand.hbm [shape: f32[1,256], index: 3, kind: input, shape index: {}]
  %s4 = inlined_call_operand.hbm [shape: f32[256,128], index: 4, kind: input, shape index: {}]
  %s5 = inlined_call_operand.hbm [shape: f32[1,128], index: 5, kind: input, shape index: {}]
  %s6 = inlined_call_operand.vmem [shape: f32[128,1], index: 6, kind: input, shape index: {}]
  %s7 = inlined_call_operand.<no memory space> [shape: f32[1,1], index: 7, kind: input, shape index: {}]
  %s8 = inlined_call_operand.vmem [shape: f32[2,1,1], index: 8, kind: output, shape index: {}]
  %s9 = sld [smem:[#allocation0]]
  $region81: #{forward.11} parent=0
    _
  %s11 = ssub.s32 1, %s9
  %s12 = scalar_select 0, %s11, %s9
  %v13 = vstv %s7
  %14 = vst [vmem:[#allocation2] sm:$0x1] %v13
  $region1: #{forward.11} parent=0
    #allocation3 [shape = 'u8[65536]{0}', space=vmem, size = 0x10000, scoped, tag = 'input window, operand 2, single buffered']
    #allocation4 [shape = 's32[2]{0}', space=sflag, size = 0x8, scoped, tag = 'scoped memory for forward.11']
    #allocation5 [shape = 'u8[1024]{0}', space=vmem, size = 0x400, scoped, tag = 'input window, operand 3, single buffered']
    #allocation6 [shape = 's32[1]{0}', space=sflag, size = 0x4, scoped, tag = 'scoped memory for forward.11']
    #allocation7 [shape = 'u8[131072]{0}', space=vmem, size = 0x20000, scoped, tag = 'input window, operand 4, single buffered']
    #allocation8 [shape = 'u8[512]{0}', space=vmem, size = 0x400, scoped, tag = 'input window, operand 5, single buffered']
    #allocation9 [shape = 's32[1]{0}', space=sflag, size = 0x4, scoped, tag = 'scoped memory for forward.11']
    %15 = vsyncpa [#allocation4], 0
    %16 = vsyncpa [#allocation6], 0
    %17 = vsyncpa [#allocation9], 0
    loop: start=0, step=1, limit=4
    $region2: #{forward.11} parent=1 // loop_pre_header
      _
    $region3: #{forward.11} parent=1 // loop_header
      %s19 = sphi 0, %s23
      %p20 = scmp.ge.s32.totalorder %s19, 4
      %s29 = sphi 0, %s31
      %s32 = sphi 0, %s29
      %s33 = sphi 0, %s32
      %s49 = sphi 0, %s33
      %s53 = sphi 0, %s53
      %s55 = sphi 0, %s53
      %s56 = sphi 0, %s55
      %s70 = sphi 0, %s56
      %s74 = sphi 0, %s74
      %s76 = sphi 0, %s74
      %s77 = sphi 0, %s76
      %s91 = sphi 0, %s77
      %s95 = sphi 0, %s95
      %s97 = sphi 0, %s95
      %s98 = sphi 0, %s97
      %s112 = sphi 0, %s98
      %s116 = sphi 0, %s116
      %s118 = sphi 0, %s116
      %s119 = sphi 0, %s118
      %s133 = sphi 0, %s119
      %s137 = sphi 0, %s137
      %s139 = sphi 0, %s137
      %s140 = sphi 0, %s139
      %s154 = sphi 0, %s140
      %s158 = sphi 0, %s158
      %s160 = sphi 0, %s158
      %s161 = sphi 0, %s160
      %s175 = sphi 0, %s161
      %s179 = sphi 0, %s179
      %s181 = sphi 0, %s179
      %s182 = sphi 0, %s181
      %s196 = sphi 0, %s182
      %s202 = sphi 0, %s204
      %s205 = sphi 0, %s202
      %s206 = sphi 0, %s205
      %s222 = sphi 0, %s206
    $region4: #{forward.11} parent=1 // loop_header_branch
      %22 = sbr.rel (%p20) target = $region8
    $region5: #{forward.11} parent=1 // loop_body
      %s24 = ssub.s32 %s19, 1
      %s25 = ssub.s32 %s19, 2
      %s26 = sadd.s32 %s19, 1
      %s27 = ssub.s32 %s19, %s26
      %p28 = scmp.eq.s32.totalorder %s27, 0
      %s30 = sadd.s32 %s29, 1
      %s31 = scalar_select %p28, %s29, %s30
      %p34 = pneg %p28
      %p35 = scmp.eq.s32.totalorder %s19, 1
      %p36 = por %p34, %p35
      %p37 = scmp.ne.s32.totalorder %s29, %s32
      %p38 = scmp.eq.s32.totalorder %s19, 0
      %p39 = por %p37, %p38
      %p40 = scmp.ne.s32.totalorder %s29, %s32
      %p41 = scmp.eq.s32.totalorder %s24, 1
      %p42 = por %p40, %p41
      %p43 = scmp.ne.s32.totalorder %s32, %s33
      %p44 = scmp.eq.s32.totalorder %s24, 0
      %p45 = por %p43, %p44
      %p46 = scmp.ne.s32.totalorder %s32, %s33
      %p47 = scmp.eq.s32.totalorder %s25, 1
      %p48 = por %p46, %p47
      %p50 = scmp.ne.s32.totalorder %s33, %s49
      %p51 = scmp.eq.s32.totalorder %s25, 0
      %p52 = por %p50, %p51
      %s54 = sadd.s32 %s53, 1
      %p57 = scmp.eq.s32.totalorder %s19, 1
      %p58 = scmp.ne.s32.totalorder %s53, %s55
      %p59 = scmp.eq.s32.totalorder %s19, 0
      %p60 = por %p58, %p59
      %p61 = scmp.ne.s32.totalorder %s53, %s55
      %p62 = scmp.eq.s32.totalorder %s24, 1
      %p63 = por %p61, %p62
      %p64 = scmp.ne.s32.totalorder %s55, %s56
      %p65 = scmp.eq.s32.totalorder %s24, 0
      %p66 = por %p64, %p65
      %p67 = scmp.ne.s32.totalorder %s55, %s56
      %p68 = scmp.eq.s32.totalorder %s25, 1
      %p69 = por %p67, %p68
      %p71 = scmp.ne.s32.totalorder %s56, %s70
      %p72 = scmp.eq.s32.totalorder %s25, 0
      %p73 = por %p71, %p72
      %s75 = sadd.s32 %s74, 1
      %p78 = scmp.eq.s32.totalorder %s19, 1
      %p79 = scmp.ne.s32.totalorder %s74, %s76
      %p80 = scmp.eq.s32.totalorder %s19, 0
      %p81 = por %p79, %p80
      %p82 = scmp.ne.s32.totalorder %s74, %s76
      %p83 = scmp.eq.s32.totalorder %s24, 1
      %p84 = por %p82, %p83
      %p85 = scmp.ne.s32.totalorder %s76, %s77
      %p86 = scmp.eq.s32.totalorder %s24, 0
      %p87 = por %p85, %p86
      %p88 = scmp.ne.s32.totalorder %s76, %s77
      %p89 = scmp.eq.s32.totalorder %s25, 1
      %p90 = por %p88, %p89
      %p92 = scmp.ne.s32.totalorder %s77, %s91
      %p93 = scmp.eq.s32.totalorder %s25, 0
      %p94 = por %p92, %p93
      %s96 = sadd.s32 %s95, 1
      %p99 = scmp.eq.s32.totalorder %s19, 1
      %p100 = scmp.ne.s32.totalorder %s95, %s97
      %p101 = scmp.eq.s32.totalorder %s19, 0
      %p102 = por %p100, %p101
      %p103 = scmp.ne.s32.totalorder %s95, %s97
      %p104 = scmp.eq.s32.totalorder %s24, 1
      %p105 = por %p103, %p104
      %p106 = scmp.ne.s32.totalorder %s97, %s98
      %p107 = scmp.eq.s32.totalorder %s24, 0
      %p108 = por %p106, %p107
      %p109 = scmp.ne.s32.totalorder %s97, %s98
      %p110 = scmp.eq.s32.totalorder %s25, 1
      %p111 = por %p109, %p110
      %p113 = scmp.ne.s32.totalorder %s98, %s112
      %p114 = scmp.eq.s32.totalorder %s25, 0
      %p115 = por %p113, %p114
      %s117 = sadd.s32 %s116, 1
      %p120 = scmp.eq.s32.totalorder %s19, 1
      %p121 = scmp.ne.s32.totalorder %s116, %s118
      %p122 = scmp.eq.s32.totalorder %s19, 0
      %p123 = por %p121, %p122
      %p124 = scmp.ne.s32.totalorder %s116, %s118
      %p125 = scmp.eq.s32.totalorder %s24, 1
      %p126 = por %p124, %p125
      %p127 = scmp.ne.s32.totalorder %s118, %s119
      %p128 = scmp.eq.s32.totalorder %s24, 0
      %p129 = por %p127, %p128
      %p130 = scmp.ne.s32.totalorder %s118, %s119
      %p131 = scmp.eq.s32.totalorder %s25, 1
      %p132 = por %p130, %p131
      %p134 = scmp.ne.s32.totalorder %s119, %s133
      %p135 = scmp.eq.s32.totalorder %s25, 0
      %p136 = por %p134, %p135
      %s138 = sadd.s32 %s137, 1
      %p141 = scmp.eq.s32.totalorder %s19, 1
      %p142 = scmp.ne.s32.totalorder %s137, %s139
      %p143 = scmp.eq.s32.totalorder %s19, 0
      %p144 = por %p142, %p143
      %p145 = scmp.ne.s32.totalorder %s137, %s139
      %p146 = scmp.eq.s32.totalorder %s24, 1
      %p147 = por %p145, %p146
      %p148 = scmp.ne.s32.totalorder %s139, %s140
      %p149 = scmp.eq.s32.totalorder %s24, 0
      %p150 = por %p148, %p149
      %p151 = scmp.ne.s32.totalorder %s139, %s140
      %p152 = scmp.eq.s32.totalorder %s25, 1
      %p153 = por %p151, %p152
      %p155 = scmp.ne.s32.totalorder %s140, %s154
      %p156 = scmp.eq.s32.totalorder %s25, 0
      %p157 = por %p155, %p156
      %s159 = sadd.s32 %s158, 1
      %p162 = scmp.eq.s32.totalorder %s19, 1
      %p163 = scmp.ne.s32.totalorder %s158, %s160
      %p164 = scmp.eq.s32.totalorder %s19, 0
      %p165 = por %p163, %p164
      %p166 = scmp.ne.s32.totalorder %s158, %s160
      %p167 = scmp.eq.s32.totalorder %s24, 1
      %p168 = por %p166, %p167
      %p169 = scmp.ne.s32.totalorder %s160, %s161
      %p170 = scmp.eq.s32.totalorder %s24, 0
      %p171 = por %p169, %p170
      %p172 = scmp.ne.s32.totalorder %s160, %s161
      %p173 = scmp.eq.s32.totalorder %s25, 1
      %p174 = por %p172, %p173
      %p176 = scmp.ne.s32.totalorder %s161, %s175
      %p177 = scmp.eq.s32.totalorder %s25, 0
      %p178 = por %p176, %p177
      %s180 = sadd.s32 %s179, 1
      %p183 = scmp.eq.s32.totalorder %s19, 1
      %p184 = scmp.ne.s32.totalorder %s179, %s181
      %p185 = scmp.eq.s32.totalorder %s19, 0
      %p186 = por %p184, %p185
      %p187 = scmp.ne.s32.totalorder %s179, %s181
      %p188 = scmp.eq.s32.totalorder %s24, 1
      %p189 = por %p187, %p188
      %p190 = scmp.ne.s32.totalorder %s181, %s182
      %p191 = scmp.eq.s32.totalorder %s24, 0
      %p192 = por %p190, %p191
      %p193 = scmp.ne.s32.totalorder %s181, %s182
      %p194 = scmp.eq.s32.totalorder %s25, 1
      %p195 = por %p193, %p194
      %p197 = scmp.ne.s32.totalorder %s182, %s196
      %p198 = scmp.eq.s32.totalorder %s25, 0
      %p199 = por %p197, %p198
      %s200 = ssub.s32 %s19, %s26
      %p201 = scmp.eq.s32.totalorder %s200, 0
      %s203 = sadd.s32 %s202, 1
      %s204 = scalar_select %p201, %s202, %s203
      %p207 = pneg %p201
      %p208 = scmp.eq.s32.totalorder %s19, 1
      %p209 = por %p207, %p208
      %p210 = scmp.ne.s32.totalorder %s202, %s205
      %p211 = scmp.eq.s32.totalorder %s19, 0
      %p212 = por %p210, %p211
      %p213 = scmp.ne.s32.totalorder %s202, %s205
      %p214 = scmp.eq.s32.totalorder %s24, 1
      %p215 = por %p213, %p214
      %p216 = scmp.ne.s32.totalorder %s205, %s206
      %p217 = scmp.eq.s32.totalorder %s24, 0
      %p218 = por %p216, %p217
      %p219 = scmp.ne.s32.totalorder %s205, %s206
      %p220 = scmp.eq.s32.totalorder %s25, 1
      %p221 = por %p219, %p220
      %p223 = scmp.ne.s32.totalorder %s206, %s222
      %p224 = scmp.eq.s32.totalorder %s25, 0
      %p225 = por %p223, %p224
      %p226 = scmp.le.s32.totalorder 1, %s19
      %p227 = scmp.lt.s32.totalorder %s19, 3
      %p228 = pnand %p226, %p227
      %p229 = pneg %p228
      // Predicated region
      $region9: #{forward.11} parent=5 // pred_check
        _
      $region10: #{forward.11} parent=5 // pred_check_branch
        %231 = sbr.rel (%p228) target = $region12
      $region11: #{forward.11} parent=5 // pred_region
        %s232 = ssub.s32 %s19, 1
        // Predicated region
        $region13: #{forward.11} parent=11 // pred_check
          %p233 = pneg %p66
        $region14: #{forward.11} parent=11 // pred_check_branch
          %235 = sbr.rel (%p233) target = $region16
        $region15: #{forward.11} parent=11 // pred_region
          _
        $region16: #{forward.11} parent=11 // pred_fallthru
          _
        // Predicated region
        $region17: #{forward.11} parent=11 // pred_check
          %p236 = pneg %p87
        $region18: #{forward.11} parent=11 // pred_check_branch
          %238 = sbr.rel (%p236) target = $region20
        $region19: #{forward.11} parent=11 // pred_region
          %240 = vsyncadd [#allocation4], 0
          %s241 = sshll.u32 %s2, 4
          %s242 = int_to_ptr.hbm [resolvable:$true] %s241
          %s243 = sshll.u32 [#allocation3], 4
          %s244 = int_to_ptr.vmem [resolvable:$true] %s243
          %249 = dma.hbm_to_vmem [thread:$0]  %s242, 2048, %s244, [#allocation4], 256, 256, 16
        $region20: #{forward.11} parent=11 // pred_fallthru
          _
        // Predicated region
        $region21: #{forward.11} parent=11 // pred_check
          %p250 = pneg %p108
        $region22: #{forward.11} parent=11 // pred_check_branch
          %252 = sbr.rel (%p250) target = $region24
        $region23: #{forward.11} parent=11 // pred_region
          %254 = vsyncadd [#allocation6], 0
          %s256 = sshll.u32 %s3, 4
          %s257 = int_to_ptr.hbm [resolvable:$true] %s256
          %s258 = sshll.u32 [#allocation5], 4
          %s259 = int_to_ptr.vmem [resolvable:$true] %s258
          %261 = dma.hbm_to_vmem [thread:$0]  %s257, 32, %s259, [#allocation6]
        $region24: #{forward.11} parent=11 // pred_fallthru
          _
        // Predicated region
        $region25: #{forward.11} parent=11 // pred_check
          %p262 = pneg %p129
        $region26: #{forward.11} parent=11 // pred_check_branch
          %264 = sbr.rel (%p262) target = $region28
        $region27: #{forward.11} parent=11 // pred_region
          %266 = vsyncadd [#allocation6], 0
          %s267 = sshll.u32 %s4, 4
          %s268 = int_to_ptr.hbm [resolvable:$true] %s267
          %s269 = sshll.u32 [#allocation7], 4
          %s270 = int_to_ptr.vmem [resolvable:$true] %s269
          %275 = dma.hbm_to_vmem [thread:$0]  %s268, 4096, %s270, [#allocation6], 128, 128, 8
        $region28: #{forward.11} parent=11 // pred_fallthru
          _
        // Predicated region
        $region29: #{forward.11} parent=11 // pred_check
          %p276 = pneg %p150
        $region30: #{forward.11} parent=11 // pred_check_branch
          %278 = sbr.rel (%p276) target = $region32
        $region31: #{forward.11} parent=11 // pred_region
          %280 = vsyncadd [#allocation9], 0
          %s282 = sshll.u32 %s5, 4
          %s283 = int_to_ptr.hbm [resolvable:$true] %s282
          %s284 = sshll.u32 [#allocation8], 4
          %s285 = int_to_ptr.vmem [resolvable:$true] %s284
          %287 = dma.hbm_to_vmem [thread:$0]  %s283, 16, %s285, [#allocation9]
        $region32: #{forward.11} parent=11 // pred_fallthru
          _
        // Predicated region
        $region33: #{forward.11} parent=11 // pred_check
          %p288 = pneg %p171
        $region34: #{forward.11} parent=11 // pred_check_branch
          %290 = sbr.rel (%p288) target = $region36
        $region35: #{forward.11} parent=11 // pred_region
          _
        $region36: #{forward.11} parent=11 // pred_fallthru
          _
        // Predicated region
        $region37: #{forward.11} parent=11 // pred_check
          %p291 = pneg %p192
        $region38: #{forward.11} parent=11 // pred_check_branch
          %293 = sbr.rel (%p291) target = $region40
        $region39: #{forward.11} parent=11 // pred_region
          _
        $region40: #{forward.11} parent=11 // pred_fallthru
          _
      $region12: #{forward.11} parent=5 // pred_fallthru
        _
      %p294 = scmp.lt.s32.totalorder %s19, 2
      // Predicated region
      $region41: #{forward.11} parent=5 // pred_check
        %p295 = pneg %p294
      $region42: #{forward.11} parent=5 // pred_check_branch
        %297 = sbr.rel (%p295) target = $region44
      $region43: #{forward.11} parent=5 // pred_region
        // Predicated region
        $region45: #{forward.11} parent=43 // pred_check
          %p298 = pneg %p39
        $region46: #{forward.11} parent=43 // pred_check_branch
          %300 = sbr.rel (%p298) target = $region48
        $region47: #{forward.11} parent=43 // pred_region
          %p301 = scmp.lt.s32.totalorder %s19, 1
          %s302 = scalar_select %p301, %s19, 1
          %s303 = smul.addr %s302, 2
          %s304 = scalar_lea.vmem %s0, %s303
        $region48: #{forward.11} parent=43 // pred_fallthru
          _
      $region44: #{forward.11} parent=5 // pred_fallthru
        _
      %p305 = scmp.le.s32.totalorder 1, %s19
      %p306 = scmp.lt.s32.totalorder %s19, 3
      %p307 = pnand %p305, %p306
      %p308 = pneg %p307
      // Predicated region
      $region49: #{forward.11} parent=5 // pred_check
        _
      $region50: #{forward.11} parent=5 // pred_check_branch
        %310 = sbr.rel (%p307) target = $region52
      $region51: #{forward.11} parent=5 // pred_region
        %s311 = ssub.s32 %s19, 1
        // Predicated region
        $region53: #{forward.11} parent=51 // pred_check
          %p312 = pneg %p87
        $region54: #{forward.11} parent=51 // pred_check_branch
          %314 = sbr.rel (%p312) target = $region56
        $region55: #{forward.11} parent=51 // pred_region
          %316 = dma.done [#allocation4], 2048
        $region56: #{forward.11} parent=51 // pred_fallthru
          _
        // Predicated region
        $region57: #{forward.11} parent=51 // pred_check
          %p317 = pneg %p108
        $region58: #{forward.11} parent=51 // pred_check_branch
          %319 = sbr.rel (%p317) target = $region60
        $region59: #{forward.11} parent=51 // pred_region
          %321 = dma.done [#allocation6], 32
        $region60: #{forward.11} parent=51 // pred_fallthru
          _
        // Predicated region
        $region61: #{forward.11} parent=51 // pred_check
          %p322 = pneg %p129
        $region62: #{forward.11} parent=51 // pred_check_branch
          %324 = sbr.rel (%p322) target = $region64
        $region63: #{forward.11} parent=51 // pred_region
          %326 = dma.done [#allocation6], 4096
        $region64: #{forward.11} parent=51 // pred_fallthru
          _
        // Predicated region
        $region65: #{forward.11} parent=51 // pred_check
          %p327 = pneg %p150
        $region66: #{forward.11} parent=51 // pred_check_branch
          %329 = sbr.rel (%p327) target = $region68
        $region67: #{forward.11} parent=51 // pred_region
          %331 = dma.done [#allocation9], 16
        $region68: #{forward.11} parent=51 // pred_fallthru
          _
        %p332 = scmp.lt.s32.totalorder %s24, 1
        %s333 = scalar_select %p332, %s24, 1
        %s334 = smul.addr %s333, 2
        %s335 = scalar_lea.vmem %s0, %s334
        %p336 = pneg %p45
        %p337 = pneg %p42
        %p338 = pneg %p66
        %p339 = pneg %p63
        %p340 = pneg %p87
        %p341 = pneg %p84
        %p342 = pneg %p108
        %p343 = pneg %p105
        %p344 = pneg %p129
        %p345 = pneg %p126
        %p346 = pneg %p150
        %p347 = pneg %p147
        %p348 = pneg %p171
        %p349 = pneg %p168
        %p350 = pneg %p192
        %p351 = pneg %p189
        %p352 = pneg %p218
        %p353 = pneg %p215
        %p354 = scmp.lt.s32.totalorder %s24, 1
        %s355 = scalar_select %p354, %s24, 1
        %s356 = scalar_lea.vmem %s8, %s355
        %p357 = scmp.lt.s32.totalorder %s24, 1
        %s358 = scalar_select %p357, %s24, 1
        %s359 = smul.addr %s358, 2
        %s360 = scalar_lea.vmem %s0, %s359
        %p361 = scmp.lt.s32.totalorder %s24, 1
        %s362 = scalar_select %p361, %s24, 1
        %s363 = scalar_lea.vmem %s8, %s362
        %v364 = vld [vmem:[%s360] sm:$0x3]
        %v365 = vunpack.c.l.bf16 %v364
        %367 = vst [vmem:[#allocation1] ss:$4 sm:$0xff] %v365
        %v368 = vld.sshfl [vmem:[#allocation1] sm:$0xff pattern:$0x73625140]
        %v369 = vld.sshfl [vmem:[#allocation1 + $0x8] sm:$0xff pattern:$0x73625140]
        %vm372 = vcmask 1041408
        %v373 = vsel %vm372, %v368, 0.0
        %v374 = vrot.slane %v373, 4
        %v375 = vadd.f32 %v373, %v374
        %v376 = vrot.slane %v375, 2
        %v377 = vadd.f32 %v375, %v376
        %v378 = vrot.slane %v377, 1
        %v379 = vadd.f32 %v377, %v378
        %v380 = vsel %vm372, %v369, 0.0
        %v381 = vrot.slane %v380, 4
        %v382 = vadd.f32 %v380, %v381
        %v383 = vrot.slane %v382, 2
        %v384 = vadd.f32 %v382, %v383
        %v385 = vrot.slane %v384, 1
        %v386 = vadd.f32 %v384, %v385
        %v387 = vld [vmem:[%s1] sm:$0xff]
        %v388 = vld [vmem:[%s1 + $0x8] sm:$0xff]
        %v389 = vld [vmem:[%s1 + $0x10] sm:$0xff]
        %v390 = vld [vmem:[%s1 + $0x18] sm:$0xff]
        %v391 = vld [vmem:[%s1 + $0x20] sm:$0xff]
        %v392 = vld [vmem:[%s1 + $0x28] sm:$0xff]
        %v393 = vld [vmem:[%s1 + $0x30] sm:$0xff]
        %v394 = vld [vmem:[%s1 + $0x38] sm:$0xff]
        %v395 = vld [vmem:[%s1 + $0x40] sm:$0xff]
        %v396 = vld [vmem:[%s1 + $0x48] sm:$0xff]
        %v397 = vld [vmem:[%s1 + $0x50] sm:$0xff]
        %v398 = vld [vmem:[%s1 + $0x58] sm:$0xff]
        %v399 = vld [vmem:[%s1 + $0x60] sm:$0xff]
        %v400 = vld [vmem:[%s1 + $0x68] sm:$0xff]
        %v401 = vld [vmem:[%s1 + $0x70] sm:$0xff]
        %v402 = vld [vmem:[%s1 + $0x78] sm:$0xff]
        %v403 = vld [vmem:[%s1 + $0x80] sm:$0xff]
        %v404 = vld [vmem:[%s1 + $0x88] sm:$0xff]
        %v405 = vld [vmem:[%s1 + $0x90] sm:$0xff]
        %v406 = vld [vmem:[%s1 + $0x98] sm:$0xff]
        %v407 = vld [vmem:[%s1 + $0xa0] sm:$0xff]
        %v408 = vld [vmem:[%s1 + $0xa8] sm:$0xff]
        %v409 = vld [vmem:[%s1 + $0xb0] sm:$0xff]
        %v410 = vld [vmem:[%s1 + $0xb8] sm:$0xff]
        %v411 = vld [vmem:[%s1 + $0xc0] sm:$0xff]
        %v412 = vld [vmem:[%s1 + $0xc8] sm:$0xff]
        %v413 = vld [vmem:[%s1 + $0xd0] sm:$0xff]
        %v414 = vld [vmem:[%s1 + $0xd8] sm:$0xff]
        %v415 = vld [vmem:[%s1 + $0xe0] sm:$0xff]
        %v416 = vld [vmem:[%s1 + $0xe8] sm:$0xff]
        %v417 = vld [vmem:[%s1 + $0xf0] sm:$0xff]
        %v418 = vld [vmem:[%s1 + $0xf8] sm:$0xff]
        %419 = vmatpush.msra.mxu0 %v402
        %420 = vmatpush.msra.mxu0 %v401
        %421 = vmatpush.msra.mxu0 %v400
        %422 = vmatpush.msra.mxu0 %v399
        %423 = vmatpush.msra.mxu0 %v398
        %424 = vmatpush.msra.mxu0 %v397
        %425 = vmatpush.msra.mxu0 %v396
        %426 = vmatpush.msra.mxu0 %v395
        %427 = vmatpush.msra.mxu0 %v394
        %428 = vmatpush.msra.mxu0 %v393
        %429 = vmatpush.msra.mxu0 %v392
        %430 = vmatpush.msra.mxu0 %v391
        %431 = vmatpush.msra.mxu0 %v390
        %432 = vmatpush.msra.mxu0 %v389
        %433 = vmatpush.msra.mxu0 %v388
        %434 = vmatpush.msra.mxu0 %v387
        %435 = vmatmul.f32.gmra.mxu0 %v379
        %v436 = vpop.f32.mrf.mxu0
        %v437 = vadd.f32 0.0, %v436
        %438 = vdwg.mxu0
        %439 = vmatpush.msra.mxu0 %v418
        %440 = vmatpush.msra.mxu0 %v417
        %441 = vmatpush.msra.mxu0 %v416
        %442 = vmatpush.msra.mxu0 %v415
        %443 = vmatpush.msra.mxu0 %v414
        %444 = vmatpush.msra.mxu0 %v413
        %445 = vmatpush.msra.mxu0 %v412
        %446 = vmatpush.msra.mxu0 %v411
        %447 = vmatpush.msra.mxu0 %v410
        %448 = vmatpush.msra.mxu0 %v409
        %449 = vmatpush.msra.mxu0 %v408
        %450 = vmatpush.msra.mxu0 %v407
        %451 = vmatpush.msra.mxu0 %v406
        %452 = vmatpush.msra.mxu0 %v405
        %453 = vmatpush.msra.mxu0 %v404
        %454 = vmatpush.msra.mxu0 %v403
        %455 = vmatmul.f32.gmra.mxu0 %v386
        %v456 = vpop.f32.mrf.mxu0
        %v457 = vadd.f32 %v437, %v456
        %458 = vdwg.mxu0
        %v459 = vld [vmem:[#allocation3] sm:$0xff]
        %v460 = vld [vmem:[#allocation3 + $0x8] sm:$0xff]
        %v461 = vld [vmem:[#allocation3 + $0x10] sm:$0xff]
        %v462 = vld [vmem:[#allocation3 + $0x18] sm:$0xff]
        %v463 = vld [vmem:[#allocation3 + $0x20] sm:$0xff]
        %v464 = vld [vmem:[#allocation3 + $0x28] sm:$0xff]
        %v465 = vld [vmem:[#allocation3 + $0x30] sm:$0xff]
        %v466 = vld [vmem:[#allocation3 + $0x38] sm:$0xff]
        %v467 = vld [vmem:[#allocation3 + $0x40] sm:$0xff]
        %v468 = vld [vmem:[#allocation3 + $0x48] sm:$0xff]
        %v469 = vld [vmem:[#allocation3 + $0x50] sm:$0xff]
        %v470 = vld [vmem:[#allocation3 + $0x58] sm:$0xff]
        %v471 = vld [vmem:[#allocation3 + $0x60] sm:$0xff]
        %v472 = vld [vmem:[#allocation3 + $0x68] sm:$0xff]
        %v473 = vld [vmem:[#allocation3 + $0x70] sm:$0xff]
        %v474 = vld [vmem:[#allocation3 + $0x78] sm:$0xff]
        %v475 = vld [vmem:[#allocation5] sm:$0x3]
        %v477 = vperm.slane %v475, 0
        %v478 = vperm.slane %v475, 1
        %vm481 = vcmask 523264
        %v483 = vsel %vm481, %v457, 0
        %485 = vmatpush.msra.mxu0 0.0
        %486 = vmatpush.msra.mxu0 0.0
        %487 = vmatpush.msra.mxu0 0.0
        %488 = vmatpush.msra.mxu0 0.0
        %489 = vmatpush.msra.mxu0 0.0
        %490 = vmatpush.msra.mxu0 0.0
        %491 = vmatpush.msra.mxu0 0.0
        %492 = vmatpush.msra.mxu0 0.0
        %493 = vmatpush.msra.mxu0 %v473
        %494 = vmatpush.msra.mxu0 %v471
        %495 = vmatpush.msra.mxu0 %v469
        %496 = vmatpush.msra.mxu0 %v467
        %497 = vmatpush.msra.mxu0 %v465
        %498 = vmatpush.msra.mxu0 %v463
        %499 = vmatpush.msra.mxu0 %v461
        %500 = vmatpush.msra.mxu0 %v459
        %501 = vmatmul.f32.gmra.mxu0 %v483
        %v502 = vpop.f32.mrf.mxu0
        %v503 = vadd.f32 %v477, %v502
        %504 = vdwg.mxu0
        %505 = vmatpush.msra.mxu0 0.0
        %506 = vmatpush.msra.mxu0 0.0
        %507 = vmatpush.msra.mxu0 0.0
        %508 = vmatpush.msra.mxu0 0.0
        %509 = vmatpush.msra.mxu0 0.0
        %510 = vmatpush.msra.mxu0 0.0
        %511 = vmatpush.msra.mxu0 0.0
        %512 = vmatpush.msra.mxu0 0.0
        %513 = vmatpush.msra.mxu0 %v474
        %514 = vmatpush.msra.mxu0 %v472
        %515 = vmatpush.msra.mxu0 %v470
        %516 = vmatpush.msra.mxu0 %v468
        %517 = vmatpush.msra.mxu0 %v466
        %518 = vmatpush.msra.mxu0 %v464
        %519 = vmatpush.msra.mxu0 %v462
        %520 = vmatpush.msra.mxu0 %v460
        %521 = vmatmul.f32.gmra.mxu0 %v483
        %v522 = vpop.f32.mrf.mxu0
        %v523 = vadd.f32 %v478, %v522
        %524 = vdwg.mxu0
        %v525 = vmax.f32 %v503, 0.0
        %v526 = vmax.f32 %v523, 0.0
        %v527 = vld [vmem:[#allocation7] sm:$0xff]
        %v528 = vld [vmem:[#allocation7 + $0x8] sm:$0xff]
        %v529 = vld [vmem:[#allocation7 + $0x10] sm:$0xff]
        %v530 = vld [vmem:[#allocation7 + $0x18] sm:$0xff]
        %v531 = vld [vmem:[#allocation7 + $0x20] sm:$0xff]
        %v532 = vld [vmem:[#allocation7 + $0x28] sm:$0xff]
        %v533 = vld [vmem:[#allocation7 + $0x30] sm:$0xff]
        %v534 = vld [vmem:[#allocation7 + $0x38] sm:$0xff]
        %v535 = vld [vmem:[#allocation7 + $0x40] sm:$0xff]
        %v536 = vld [vmem:[#allocation7 + $0x48] sm:$0xff]
        %v537 = vld [vmem:[#allocation7 + $0x50] sm:$0xff]
        %v538 = vld [vmem:[#allocation7 + $0x58] sm:$0xff]
        %v539 = vld [vmem:[#allocation7 + $0x60] sm:$0xff]
        %v540 = vld [vmem:[#allocation7 + $0x68] sm:$0xff]
        %v541 = vld [vmem:[#allocation7 + $0x70] sm:$0xff]
        %v542 = vld [vmem:[#allocation7 + $0x78] sm:$0xff]
        %v543 = vld [vmem:[#allocation7 + $0x80] sm:$0xff]
        %v544 = vld [vmem:[#allocation7 + $0x88] sm:$0xff]
        %v545 = vld [vmem:[#allocation7 + $0x90] sm:$0xff]
        %v546 = vld [vmem:[#allocation7 + $0x98] sm:$0xff]
        %v547 = vld [vmem:[#allocation7 + $0xa0] sm:$0xff]
        %v548 = vld [vmem:[#allocation7 + $0xa8] sm:$0xff]
        %v549 = vld [vmem:[#allocation7 + $0xb0] sm:$0xff]
        %v550 = vld [vmem:[#allocation7 + $0xb8] sm:$0xff]
        %v551 = vld [vmem:[#allocation7 + $0xc0] sm:$0xff]
        %v552 = vld [vmem:[#allocation7 + $0xc8] sm:$0xff]
        %v553 = vld [vmem:[#allocation7 + $0xd0] sm:$0xff]
        %v554 = vld [vmem:[#allocation7 + $0xd8] sm:$0xff]
        %v555 = vld [vmem:[#allocation7 + $0xe0] sm:$0xff]
        %v556 = vld [vmem:[#allocation7 + $0xe8] sm:$0xff]
        %v557 = vld [vmem:[#allocation7 + $0xf0] sm:$0xff]
        %v558 = vld [vmem:[#allocation7 + $0xf8] sm:$0xff]
        %v559 = vld [vmem:[#allocation8] sm:$0x1]
        %560 = vmatpush.msra.mxu0 %v542
        %561 = vmatpush.msra.mxu0 %v541
        %562 = vmatpush.msra.mxu0 %v540
        %563 = vmatpush.msra.mxu0 %v539
        %564 = vmatpush.msra.mxu0 %v538
        %565 = vmatpush.msra.mxu0 %v537
        %566 = vmatpush.msra.mxu0 %v536
        %567 = vmatpush.msra.mxu0 %v535
        %568 = vmatpush.msra.mxu0 %v534
        %569 = vmatpush.msra.mxu0 %v533
        %570 = vmatpush.msra.mxu0 %v532
        %571 = vmatpush.msra.mxu0 %v531
        %572 = vmatpush.msra.mxu0 %v530
        %573 = vmatpush.msra.mxu0 %v529
        %574 = vmatpush.msra.mxu0 %v528
        %575 = vmatpush.msra.mxu0 %v527
        %576 = vmatmul.f32.gmra.mxu0 %v525
        %v577 = vpop.f32.mrf.mxu0
        %v578 = vadd.f32 %v559, %v577
        %579 = vdwg.mxu0
        %580 = vmatpush.msra.mxu0 %v558
        %581 = vmatpush.msra.mxu0 %v557
        %582 = vmatpush.msra.mxu0 %v556
        %583 = vmatpush.msra.mxu0 %v555
        %584 = vmatpush.msra.mxu0 %v554
        %585 = vmatpush.msra.mxu0 %v553
        %586 = vmatpush.msra.mxu0 %v552
        %587 = vmatpush.msra.mxu0 %v551
        %588 = vmatpush.msra.mxu0 %v550
        %589 = vmatpush.msra.mxu0 %v549
        %590 = vmatpush.msra.mxu0 %v548
        %591 = vmatpush.msra.mxu0 %v547
        %592 = vmatpush.msra.mxu0 %v546
        %593 = vmatpush.msra.mxu0 %v545
        %594 = vmatpush.msra.mxu0 %v544
        %595 = vmatpush.msra.mxu0 %v543
        %596 = vmatmul.f32.gmra.mxu0 %v526
        %v597 = vpop.f32.mrf.mxu0
        %v598 = vadd.f32 %v578, %v597
        %599 = vdwg.mxu0
        %v600 = vmax.f32 %v598, 0.0
        %v601 = vld [vmem:[%s6] sm:$0xff]
        %v602 = vld [vmem:[%s6 + $0x8] sm:$0xff]
        %v603 = vld [vmem:[%s6 + $0x10] sm:$0xff]
        %v604 = vld [vmem:[%s6 + $0x18] sm:$0xff]
        %v605 = vld [vmem:[%s6 + $0x20] sm:$0xff]
        %v606 = vld [vmem:[%s6 + $0x28] sm:$0xff]
        %v607 = vld [vmem:[%s6 + $0x30] sm:$0xff]
        %v608 = vld [vmem:[%s6 + $0x38] sm:$0xff]
        %v609 = vld [vmem:[%s6 + $0x40] sm:$0xff]
        %v610 = vld [vmem:[%s6 + $0x48] sm:$0xff]
        %v611 = vld [vmem:[%s6 + $0x50] sm:$0xff]
        %v612 = vld [vmem:[%s6 + $0x58] sm:$0xff]
        %v613 = vld [vmem:[%s6 + $0x60] sm:$0xff]
        %v614 = vld [vmem:[%s6 + $0x68] sm:$0xff]
        %v615 = vld [vmem:[%s6 + $0x70] sm:$0xff]
        %v616 = vld [vmem:[%s6 + $0x78] sm:$0xff]
        %v617 = vld [vmem:[#allocation2] sm:$0x1]
        %618 = vmatpush.msra.mxu0 %v616
        %619 = vmatpush.msra.mxu0 %v615
        %620 = vmatpush.msra.mxu0 %v614
        %621 = vmatpush.msra.mxu0 %v613
        %622 = vmatpush.msra.mxu0 %v612
        %623 = vmatpush.msra.mxu0 %v611
        %624 = vmatpush.msra.mxu0 %v610
        %625 = vmatpush.msra.mxu0 %v609
        %626 = vmatpush.msra.mxu0 %v608
        %627 = vmatpush.msra.mxu0 %v607
        %628 = vmatpush.msra.mxu0 %v606
        %629 = vmatpush.msra.mxu0 %v605
        %630 = vmatpush.msra.mxu0 %v604
        %631 = vmatpush.msra.mxu0 %v603
        %632 = vmatpush.msra.mxu0 %v602
        %633 = vmatpush.msra.mxu0 %v601
        %634 = vmatmul.f32.gmra.mxu0 %v600
        %v635 = vpop.f32.mrf.mxu0
        %v636 = vadd.f32 %v617, %v635
        %637 = vdwg.mxu0
        %vm638 = vcmask 0
        %639 = vst.msk [vmem:[%s363] sm:$0x1] %vm638, %v636
        %p640 = scmp.lt.s32.totalorder %s24, 1
        %s641 = scalar_select %p640, %s24, 1
        %s642 = scalar_lea.vmem %s8, %s641
        // Predicated region
        $region69: #{forward.11} parent=51 // pred_check
          %p643 = pneg %p215
        $region70: #{forward.11} parent=51 // pred_check_branch
          %645 = sbr.rel (%p643) target = $region72
        $region71: #{forward.11} parent=51 // pred_region
          _
        $region72: #{forward.11} parent=51 // pred_fallthru
          _
      $region52: #{forward.11} parent=5 // pred_fallthru
        _
      %p646 = scmp.le.s32.totalorder 2, %s19
      // Predicated region
      $region73: #{forward.11} parent=5 // pred_check
        %p647 = pneg %p646
      $region74: #{forward.11} parent=5 // pred_check_branch
        %649 = sbr.rel (%p647) target = $region76
      $region75: #{forward.11} parent=5 // pred_region
        %s650 = ssub.s32 %s19, 2
        // Predicated region
        $region77: #{forward.11} parent=75 // pred_check
          %p651 = pneg %p221
        $region78: #{forward.11} parent=75 // pred_check_branch
          %653 = sbr.rel (%p651) target = $region80
        $region79: #{forward.11} parent=75 // pred_region
          %p654 = scmp.lt.s32.totalorder %s25, 1
          %s655 = scalar_select %p654, %s25, 1
          %s656 = scalar_lea.vmem %s8, %s655
        $region80: #{forward.11} parent=75 // pred_fallthru
          _
      $region76: #{forward.11} parent=5 // pred_fallthru
        _
    $region6: #{forward.11} parent=1 // loop_footer
      %s23 = sadd.s32 1, %s19
    $region7: #{forward.11} parent=1 // loop_footer_branch
      %18 = sbr.rel target = $region3
    $region8: #{forward.11} parent=1 // loop_exit
      _
    %657 = vsyncpa [#allocation4], 1
    %s658 = scalar_lea.sflag [#allocation4], 1
    %659 = vsyncpa %s658, 1
    %660 = vsyncpa [#allocation6], 1
    %661 = vsyncpa [#allocation9], 1

// kernel: forward.6
$region0: #{forward.6}
  #allocation0 [shape = 'u32[]', space=smem, size = 0x4, offset = 0x4, fixed_abs, tag = 'smem constant byte address 0x4 - core index']
  #allocation1 [shape = 'u32[72,128]{1,0:T(1,128)}', space=vmem, size = 0x9000, scoped, tag = 'internal scratch']
  #allocation2 [shape = 'f32[8,512]{1,0:T(8,128)}', space=vmem, size = 0x4000, scoped, tag = 'scratch operand']
  %s0 = inlined_call_operand.vmem [shape: bf16[2,8,256], index: 0, kind: input, shape index: {}]
  %s1 = inlined_call_operand.hbm [shape: bf16[7,256,512], index: 1, kind: input, shape index: {}]
  %s2 = inlined_call_operand.hbm [shape: f32[1,512], index: 2, kind: input, shape index: {}]
  %s3 = inlined_call_operand.hbm [shape: f32[1,512], index: 3, kind: input, shape index: {}]
  %s4 = inlined_call_operand.vmem [shape: bf16[2,8,512], index: 4, kind: output, shape index: {}]
  %s5 = sld [smem:[#allocation0]]
  $region61: #{forward.6} parent=0
    _
  %s7 = ssub.s32 1, %s5
  %s8 = scalar_select 0, %s7, %s5
  $region1: #{forward.6} parent=0
    #allocation3 [shape = 'u8[1835008]{0}', space=vmem, size = 0x1c0000, scoped, tag = 'input window, operand 1, single buffered']
    #allocation4 [shape = 's32[2]{0}', space=sflag, size = 0x8, scoped, tag = 'scoped memory for forward.6']
    #allocation5 [shape = 'u8[2048]{0}', space=vmem, size = 0x800, scoped, tag = 'input window, operand 2, single buffered']
    #allocation6 [shape = 's32[1]{0}', space=sflag, size = 0x4, scoped, tag = 'scoped memory for forward.6']
    #allocation7 [shape = 'u8[2048]{0}', space=vmem, size = 0x800, scoped, tag = 'input window, operand 3, single buffered']
    %9 = vsyncpa [#allocation4], 0
    %10 = vsyncpa [#allocation6], 0
    loop: start=0, step=1, limit=4
    $region2: #{forward.6} parent=1 // loop_pre_header
      _
    $region3: #{forward.6} parent=1 // loop_header
      %s12 = sphi 0, %s16
      %p13 = scmp.ge.s32.totalorder %s12, 4
      %s22 = sphi 0, %s24
      %s25 = sphi 0, %s22
      %s26 = sphi 0, %s25
      %s42 = sphi 0, %s26
      %s46 = sphi 0, %s46
      %s48 = sphi 0, %s46
      %s49 = sphi 0, %s48
      %s63 = sphi 0, %s49
      %s67 = sphi 0, %s67
      %s69 = sphi 0, %s67
      %s70 = sphi 0, %s69
      %s84 = sphi 0, %s70
      %s88 = sphi 0, %s88
      %s90 = sphi 0, %s88
      %s91 = sphi 0, %s90
      %s105 = sphi 0, %s91
      %s111 = sphi 0, %s113
      %s114 = sphi 0, %s111
      %s115 = sphi 0, %s114
      %s131 = sphi 0, %s115
    $region4: #{forward.6} parent=1 // loop_header_branch
      %15 = sbr.rel (%p13) target = $region8
    $region5: #{forward.6} parent=1 // loop_body
      %s17 = ssub.s32 %s12, 1
      %s18 = ssub.s32 %s12, 2
      %s19 = sadd.s32 %s12, 1
      %s20 = ssub.s32 %s12, %s19
      %p21 = scmp.eq.s32.totalorder %s20, 0
      %s23 = sadd.s32 %s22, 1
      %s24 = scalar_select %p21, %s22, %s23
      %p27 = pneg %p21
      %p28 = scmp.eq.s32.totalorder %s12, 1
      %p29 = por %p27, %p28
      %p30 = scmp.ne.s32.totalorder %s22, %s25
      %p31 = scmp.eq.s32.totalorder %s12, 0
      %p32 = por %p30, %p31
      %p33 = scmp.ne.s32.totalorder %s22, %s25
      %p34 = scmp.eq.s32.totalorder %s17, 1
      %p35 = por %p33, %p34
      %p36 = scmp.ne.s32.totalorder %s25, %s26
      %p37 = scmp.eq.s32.totalorder %s17, 0
      %p38 = por %p36, %p37
      %p39 = scmp.ne.s32.totalorder %s25, %s26
      %p40 = scmp.eq.s32.totalorder %s18, 1
      %p41 = por %p39, %p40
      %p43 = scmp.ne.s32.totalorder %s26, %s42
      %p44 = scmp.eq.s32.totalorder %s18, 0
      %p45 = por %p43, %p44
      %s47 = sadd.s32 %s46, 1
      %p50 = scmp.eq.s32.totalorder %s12, 1
      %p51 = scmp.ne.s32.totalorder %s46, %s48
      %p52 = scmp.eq.s32.totalorder %s12, 0
      %p53 = por %p51, %p52
      %p54 = scmp.ne.s32.totalorder %s46, %s48
      %p55 = scmp.eq.s32.totalorder %s17, 1
      %p56 = por %p54, %p55
      %p57 = scmp.ne.s32.totalorder %s48, %s49
      %p58 = scmp.eq.s32.totalorder %s17, 0
      %p59 = por %p57, %p58
      %p60 = scmp.ne.s32.totalorder %s48, %s49
      %p61 = scmp.eq.s32.totalorder %s18, 1
      %p62 = por %p60, %p61
      %p64 = scmp.ne.s32.totalorder %s49, %s63
      %p65 = scmp.eq.s32.totalorder %s18, 0
      %p66 = por %p64, %p65
      %s68 = sadd.s32 %s67, 1
      %p71 = scmp.eq.s32.totalorder %s12, 1
      %p72 = scmp.ne.s32.totalorder %s67, %s69
      %p73 = scmp.eq.s32.totalorder %s12, 0
      %p74 = por %p72, %p73
      %p75 = scmp.ne.s32.totalorder %s67, %s69
      %p76 = scmp.eq.s32.totalorder %s17, 1
      %p77 = por %p75, %p76
      %p78 = scmp.ne.s32.totalorder %s69, %s70
      %p79 = scmp.eq.s32.totalorder %s17, 0
      %p80 = por %p78, %p79
      %p81 = scmp.ne.s32.totalorder %s69, %s70
      %p82 = scmp.eq.s32.totalorder %s18, 1
      %p83 = por %p81, %p82
      %p85 = scmp.ne.s32.totalorder %s70, %s84
      %p86 = scmp.eq.s32.totalorder %s18, 0
      %p87 = por %p85, %p86
      %s89 = sadd.s32 %s88, 1
      %p92 = scmp.eq.s32.totalorder %s12, 1
      %p93 = scmp.ne.s32.totalorder %s88, %s90
      %p94 = scmp.eq.s32.totalorder %s12, 0
      %p95 = por %p93, %p94
      %p96 = scmp.ne.s32.totalorder %s88, %s90
      %p97 = scmp.eq.s32.totalorder %s17, 1
      %p98 = por %p96, %p97
      %p99 = scmp.ne.s32.totalorder %s90, %s91
      %p100 = scmp.eq.s32.totalorder %s17, 0
      %p101 = por %p99, %p100
      %p102 = scmp.ne.s32.totalorder %s90, %s91
      %p103 = scmp.eq.s32.totalorder %s18, 1
      %p104 = por %p102, %p103
      %p106 = scmp.ne.s32.totalorder %s91, %s105
      %p107 = scmp.eq.s32.totalorder %s18, 0
      %p108 = por %p106, %p107
      %s109 = ssub.s32 %s12, %s19
      %p110 = scmp.eq.s32.totalorder %s109, 0
      %s112 = sadd.s32 %s111, 1
      %s113 = scalar_select %p110, %s111, %s112
      %p116 = pneg %p110
      %p117 = scmp.eq.s32.totalorder %s12, 1
      %p118 = por %p116, %p117
      %p119 = scmp.ne.s32.totalorder %s111, %s114
      %p120 = scmp.eq.s32.totalorder %s12, 0
      %p121 = por %p119, %p120
      %p122 = scmp.ne.s32.totalorder %s111, %s114
      %p123 = scmp.eq.s32.totalorder %s17, 1
      %p124 = por %p122, %p123
      %p125 = scmp.ne.s32.totalorder %s114, %s115
      %p126 = scmp.eq.s32.totalorder %s17, 0
      %p127 = por %p125, %p126
      %p128 = scmp.ne.s32.totalorder %s114, %s115
      %p129 = scmp.eq.s32.totalorder %s18, 1
      %p130 = por %p128, %p129
      %p132 = scmp.ne.s32.totalorder %s115, %s131
      %p133 = scmp.eq.s32.totalorder %s18, 0
      %p134 = por %p132, %p133
      %p135 = scmp.le.s32.totalorder 1, %s12
      %p136 = scmp.lt.s32.totalorder %s12, 3
      %p137 = pnand %p135, %p136
      %p138 = pneg %p137
      // Predicated region
      $region9: #{forward.6} parent=5 // pred_check
        _
      $region10: #{forward.6} parent=5 // pred_check_branch
        %140 = sbr.rel (%p137) target = $region12
      $region11: #{forward.6} parent=5 // pred_region
        %s141 = ssub.s32 %s12, 1
        // Predicated region
        $region13: #{forward.6} parent=11 // pred_check
          %p142 = pneg %p59
        $region14: #{forward.6} parent=11 // pred_check_branch
          %144 = sbr.rel (%p142) target = $region16
        $region15: #{forward.6} parent=11 // pred_region
          %146 = vsyncadd [#allocation4], 0
          %s147 = sshll.u32 %s1, 4
          %s148 = int_to_ptr.hbm [resolvable:$true] %s147
          %s149 = sshll.u32 [#allocation3], 4
          %s150 = int_to_ptr.vmem [resolvable:$true] %s149
          %155 = dma.hbm_to_vmem [thread:$0]  %s148, 57344, %s150, [#allocation4], 256, 256, 16
        $region16: #{forward.6} parent=11 // pred_fallthru
          _
        // Predicated region
        $region17: #{forward.6} parent=11 // pred_check
          %p156 = pneg %p80
        $region18: #{forward.6} parent=11 // pred_check_branch
          %158 = sbr.rel (%p156) target = $region20
        $region19: #{forward.6} parent=11 // pred_region
          %160 = vsyncadd [#allocation6], 0
          %s162 = sshll.u32 %s2, 4
          %s163 = int_to_ptr.hbm [resolvable:$true] %s162
          %s164 = sshll.u32 [#allocation5], 4
          %s165 = int_to_ptr.vmem [resolvable:$true] %s164
          %167 = dma.hbm_to_vmem [thread:$0]  %s163, 64, %s165, [#allocation6]
        $region20: #{forward.6} parent=11 // pred_fallthru
          _
        // Predicated region
        $region21: #{forward.6} parent=11 // pred_check
          %p168 = pneg %p101
        $region22: #{forward.6} parent=11 // pred_check_branch
          %170 = sbr.rel (%p168) target = $region24
        $region23: #{forward.6} parent=11 // pred_region
          %172 = vsyncadd [#allocation6], 0
          %s174 = sshll.u32 %s3, 4
          %s175 = int_to_ptr.hbm [resolvable:$true] %s174
          %s176 = sshll.u32 [#allocation7], 4
          %s177 = int_to_ptr.vmem [resolvable:$true] %s176
          %179 = dma.hbm_to_vmem [thread:$0]  %s175, 64, %s177, [#allocation6]
        $region24: #{forward.6} parent=11 // pred_fallthru
          _
      $region12: #{forward.6} parent=5 // pred_fallthru
        _
      %p180 = scmp.lt.s32.totalorder %s12, 2
      // Predicated region
      $region25: #{forward.6} parent=5 // pred_check
        %p181 = pneg %p180
      $region26: #{forward.6} parent=5 // pred_check_branch
        %183 = sbr.rel (%p181) target = $region28
      $region27: #{forward.6} parent=5 // pred_region
        // Predicated region
        $region29: #{forward.6} parent=27 // pred_check
          %p184 = pneg %p32
        $region30: #{forward.6} parent=27 // pred_check_branch
          %186 = sbr.rel (%p184) target = $region32
        $region31: #{forward.6} parent=27 // pred_region
          %p187 = scmp.lt.s32.totalorder %s12, 1
          %s188 = scalar_select %p187, %s12, 1
          %s189 = smul.addr %s188, 2
          %s190 = smul.addr %s189, 4
          %s191 = scalar_lea.vmem %s0, %s190
        $region32: #{forward.6} parent=27 // pred_fallthru
          _
      $region28: #{forward.6} parent=5 // pred_fallthru
        _
      %p192 = scmp.le.s32.totalorder 1, %s12
      %p193 = scmp.lt.s32.totalorder %s12, 3
      %p194 = pnand %p192, %p193
      %p195 = pneg %p194
      // Predicated region
      $region33: #{forward.6} parent=5 // pred_check
        _
      $region34: #{forward.6} parent=5 // pred_check_branch
        %197 = sbr.rel (%p194) target = $region36
      $region35: #{forward.6} parent=5 // pred_region
        %s198 = ssub.s32 %s12, 1
        // Predicated region
        $region37: #{forward.6} parent=35 // pred_check
          %p199 = pneg %p59
        $region38: #{forward.6} parent=35 // pred_check_branch
          %201 = sbr.rel (%p199) target = $region40
        $region39: #{forward.6} parent=35 // pred_region
          %203 = dma.done [#allocation4], 57344
        $region40: #{forward.6} parent=35 // pred_fallthru
          _
        // Predicated region
        $region41: #{forward.6} parent=35 // pred_check
          %p204 = pneg %p80
        $region42: #{forward.6} parent=35 // pred_check_branch
          %206 = sbr.rel (%p204) target = $region44
        $region43: #{forward.6} parent=35 // pred_region
          %208 = dma.done [#allocation6], 64
        $region44: #{forward.6} parent=35 // pred_fallthru
          _
        // Predicated region
        $region45: #{forward.6} parent=35 // pred_check
          %p209 = pneg %p101
        $region46: #{forward.6} parent=35 // pred_check_branch
          %211 = sbr.rel (%p209) target = $region48
        $region47: #{forward.6} parent=35 // pred_region
          %213 = dma.done [#allocation6], 64
        $region48: #{forward.6} parent=35 // pred_fallthru
          _
        %p214 = scmp.lt.s32.totalorder %s17, 1
        %s215 = scalar_select %p214, %s17, 1
        %s216 = smul.addr %s215, 2
        %s217 = smul.addr %s216, 4
        %s218 = scalar_lea.vmem %s0, %s217
        %p219 = pneg %p38
        %p220 = pneg %p35
        %p221 = pneg %p59
        %p222 = pneg %p56
        %p223 = pneg %p80
        %p224 = pneg %p77
        %p225 = pneg %p101
        %p226 = pneg %p98
        %p227 = pneg %p127
        %p228 = pneg %p124
        %p229 = scmp.lt.s32.totalorder %s17, 1
        %s230 = scalar_select %p229, %s17, 1
        %s231 = smul.addr %s230, 4
        %s232 = smul.addr %s231, 4
        %s233 = scalar_lea.vmem %s4, %s232
        %p234 = scmp.lt.s32.totalorder %s17, 1
        %s235 = scalar_select %p234, %s17, 1
        %s236 = smul.addr %s235, 2
        %s237 = smul.addr %s236, 4
        %s238 = scalar_lea.vmem %s0, %s237
        %p239 = scmp.lt.s32.totalorder %s17, 1
        %s240 = scalar_select %p239, %s17, 1
        %s241 = smul.addr %s240, 4
        %s242 = smul.addr %s241, 4
        %s243 = scalar_lea.vmem %s4, %s242
        %244 = vst [vmem:[#allocation2] sm:$0xff] 0.0
        %245 = vst [vmem:[#allocation2 + $0x8] sm:$0xff] 0.0
        %246 = vst [vmem:[#allocation2 + $0x10] sm:$0xff] 0.0
        %247 = vst [vmem:[#allocation2 + $0x18] sm:$0xff] 0.0
        %v248 = vld [vmem:[%s238] sm:$0x77]
        %v249 = vld [vmem:[#allocation2] sm:$0xf8]
        %v250 = vld [vmem:[#allocation2 + $0x8] sm:$0xf8]
        %v251 = vld [vmem:[#allocation2 + $0x10] sm:$0xf8]
        %v252 = vld [vmem:[#allocation2 + $0x18] sm:$0xf8]
        %v253 = vld [vmem:[#allocation3] sm:$0xff]
        %v254 = vld [vmem:[#allocation3 + $0x8] sm:$0xff]
        %v255 = vld [vmem:[#allocation3 + $0x10] sm:$0xff]
        %v256 = vld [vmem:[#allocation3 + $0x18] sm:$0xff]
        %v257 = vld [vmem:[#allocation3 + $0x20] sm:$0xff]
        %v258 = vld [vmem:[#allocation3 + $0x28] sm:$0xff]
        %v259 = vld [vmem:[#allocation3 + $0x30] sm:$0xff]
        %v260 = vld [vmem:[#allocation3 + $0x38] sm:$0xff]
        %v261 = vld [vmem:[#allocation3 + $0x40] sm:$0xff]
        %v262 = vld [vmem:[#allocation3 + $0x48] sm:$0xff]
        %v263 = vld [vmem:[#allocation3 + $0x50] sm:$0xff]
        %v264 = vld [vmem:[#allocation3 + $0x58] sm:$0xff]
        %v265 = vld [vmem:[#allocation3 + $0x60] sm:$0xff]
        %v266 = vld [vmem:[#allocation3 + $0x68] sm:$0xff]
        %v267 = vld [vmem:[#allocation3 + $0x70] sm:$0xff]
        %v268 = vld [vmem:[#allocation3 + $0x78] sm:$0xff]
        %v269 = vld [vmem:[#allocation3 + $0x80] sm:$0xff]
        %v270 = vld [vmem:[#allocation3 + $0x88] sm:$0xff]
        %v271 = vld [vmem:[#allocation3 + $0x90] sm:$0xff]
        %v272 = vld [vmem:[#allocation3 + $0x98] sm:$0xff]
        %v273 = vld [vmem:[#allocation3 + $0xa0] sm:$0xff]
        %v274 = vld [vmem:[#allocation3 + $0xa8] sm:$0xff]
        %v275 = vld [vmem:[#allocation3 + $0xb0] sm:$0xff]
        %v276 = vld [vmem:[#allocation3 + $0xb8] sm:$0xff]
        %v277 = vld [vmem:[#allocation3 + $0xc0] sm:$0xff]
        %v278 = vld [vmem:[#allocation3 + $0xc8] sm:$0xff]
        %v279 = vld [vmem:[#allocation3 + $0xd0] sm:$0xff]
        %v280 = vld [vmem:[#allocation3 + $0xd8] sm:$0xff]
        %v281 = vld [vmem:[#allocation3 + $0xe0] sm:$0xff]
        %v282 = vld [vmem:[#allocation3 + $0xe8] sm:$0xff]
        %v283 = vld [vmem:[#allocation3 + $0xf0] sm:$0xff]
        %v284 = vld [vmem:[#allocation3 + $0xf8] sm:$0xff]
        %v285 = vld [vmem:[#allocation3 + $0x100] sm:$0xff]
        %v286 = vld [vmem:[#allocation3 + $0x108] sm:$0xff]
        %v287 = vld [vmem:[#allocation3 + $0x110] sm:$0xff]
        %v288 = vld [vmem:[#allocation3 + $0x118] sm:$0xff]
        %v289 = vld [vmem:[#allocation3 + $0x120] sm:$0xff]
        %v290 = vld [vmem:[#allocation3 + $0x128] sm:$0xff]
        %v291 = vld [vmem:[#allocation3 + $0x130] sm:$0xff]
        %v292 = vld [vmem:[#allocation3 + $0x138] sm:$0xff]
        %v293 = vld [vmem:[#allocation3 + $0x140] sm:$0xff]
        %v294 = vld [vmem:[#allocation3 + $0x148] sm:$0xff]
        %v295 = vld [vmem:[#allocation3 + $0x150] sm:$0xff]
        %v296 = vld [vmem:[#allocation3 + $0x158] sm:$0xff]
        %v297 = vld [vmem:[#allocation3 + $0x160] sm:$0xff]
        %v298 = vld [vmem:[#allocation3 + $0x168] sm:$0xff]
        %v299 = vld [vmem:[#allocation3 + $0x170] sm:$0xff]
        %v300 = vld [vmem:[#allocation3 + $0x178] sm:$0xff]
        %v301 = vld [vmem:[#allocation3 + $0x180] sm:$0xff]
        %v302 = vld [vmem:[#allocation3 + $0x188] sm:$0xff]
        %v303 = vld [vmem:[#allocation3 + $0x190] sm:$0xff]
        %v304 = vld [vmem:[#allocation3 + $0x198] sm:$0xff]
        %v305 = vld [vmem:[#allocation3 + $0x1a0] sm:$0xff]
        %v306 = vld [vmem:[#allocation3 + $0x1a8] sm:$0xff]
        %v307 = vld [vmem:[#allocation3 + $0x1b0] sm:$0xff]
        %v308 = vld [vmem:[#allocation3 + $0x1b8] sm:$0xff]
        %v309 = vld [vmem:[#allocation3 + $0x1c0] sm:$0xff]
        %v310 = vld [vmem:[#allocation3 + $0x1c8] sm:$0xff]
        %v311 = vld [vmem:[#allocation3 + $0x1d0] sm:$0xff]
        %v312 = vld [vmem:[#allocation3 + $0x1d8] sm:$0xff]
        %v313 = vld [vmem:[#allocation3 + $0x1e0] sm:$0xff]
        %v314 = vld [vmem:[#allocation3 + $0x1e8] sm:$0xff]
        %v315 = vld [vmem:[#allocation3 + $0x1f0] sm:$0xff]
        %v316 = vld [vmem:[#allocation3 + $0x1f8] sm:$0xff]
        %v318 = vunpack.c.l.b16 %v248
        %v319 = vunpack.c.h.b16 %v248
        %v320 = vpack.c.b16 %v318, %v318
        %v321 = vpack.c.b16 %v319, %v319
        %v388 = vunpack.c.l.b16 %v253
        %v389 = vunpack.c.h.b16 %v253
        %v390 = vunpack.c.l.b16 %v254
        %v391 = vunpack.c.h.b16 %v254
        %v392 = vunpack.c.l.b16 %v255
        %v393 = vunpack.c.h.b16 %v255
        %v394 = vunpack.c.l.b16 %v256
        %v395 = vunpack.c.h.b16 %v256
        %v396 = vunpack.c.l.b16 %v257
        %v397 = vunpack.c.h.b16 %v257
        %v398 = vunpack.c.l.b16 %v258
        %v399 = vunpack.c.h.b16 %v258
        %v400 = vunpack.c.l.b16 %v259
        %v401 = vunpack.c.h.b16 %v259
        %v402 = vunpack.c.l.b16 %v260
        %v403 = vunpack.c.h.b16 %v260
        %v404 = vunpack.c.l.b16 %v261
        %v405 = vunpack.c.h.b16 %v261
        %v406 = vunpack.c.l.b16 %v262
        %v407 = vunpack.c.h.b16 %v262
        %v408 = vunpack.c.l.b16 %v263
        %v409 = vunpack.c.h.b16 %v263
        %v410 = vunpack.c.l.b16 %v264
        %v411 = vunpack.c.h.b16 %v264
        %v412 = vunpack.c.l.b16 %v265
        %v413 = vunpack.c.h.b16 %v265
        %v414 = vunpack.c.l.b16 %v266
        %v415 = vunpack.c.h.b16 %v266
        %v416 = vunpack.c.l.b16 %v267
        %v417 = vunpack.c.h.b16 %v267
        %v418 = vunpack.c.l.b16 %v268
        %v419 = vunpack.c.h.b16 %v268
        %v420 = vunpack.c.l.b16 %v269
        %v421 = vunpack.c.h.b16 %v269
        %v422 = vunpack.c.l.b16 %v270
        %v423 = vunpack.c.h.b16 %v270
        %v424 = vunpack.c.l.b16 %v271
        %v425 = vunpack.c.h.b16 %v271
        %v426 = vunpack.c.l.b16 %v272
        %v427 = vunpack.c.h.b16 %v272
        %v428 = vunpack.c.l.b16 %v273
        %v429 = vunpack.c.h.b16 %v273
        %v430 = vunpack.c.l.b16 %v274
        %v431 = vunpack.c.h.b16 %v274
        %v432 = vunpack.c.l.b16 %v275
        %v433 = vunpack.c.h.b16 %v275
        %v434 = vunpack.c.l.b16 %v276
        %v435 = vunpack.c.h.b16 %v276
        %v436 = vunpack.c.l.b16 %v277
        %v437 = vunpack.c.h.b16 %v277
        %v438 = vunpack.c.l.b16 %v278
        %v439 = vunpack.c.h.b16 %v278
        %v440 = vunpack.c.l.b16 %v279
        %v441 = vunpack.c.h.b16 %v279
        %v442 = vunpack.c.l.b16 %v280
        %v443 = vunpack.c.h.b16 %v280
        %v444 = vunpack.c.l.b16 %v281
        %v445 = vunpack.c.h.b16 %v281
        %v446 = vunpack.c.l.b16 %v282
        %v447 = vunpack.c.h.b16 %v282
        %v448 = vunpack.c.l.b16 %v283
        %v449 = vunpack.c.h.b16 %v283
        %v450 = vunpack.c.l.b16 %v284
        %v451 = vunpack.c.h.b16 %v284
        %v452 = vunpack.c.l.b16 %v285
        %v453 = vunpack.c.h.b16 %v285
        %v454 = vunpack.c.l.b16 %v286
        %v455 = vunpack.c.h.b16 %v286
        %v456 = vunpack.c.l.b16 %v287
        %v457 = vunpack.c.h.b16 %v287
        %v458 = vunpack.c.l.b16 %v288
        %v459 = vunpack.c.h.b16 %v288
        %v460 = vunpack.c.l.b16 %v289
        %v461 = vunpack.c.h.b16 %v289
        %v462 = vunpack.c.l.b16 %v290
        %v463 = vunpack.c.h.b16 %v290
        %v464 = vunpack.c.l.b16 %v291
        %v465 = vunpack.c.h.b16 %v291
        %v466 = vunpack.c.l.b16 %v292
        %v467 = vunpack.c.h.b16 %v292
        %v468 = vunpack.c.l.b16 %v293
        %v469 = vunpack.c.h.b16 %v293
        %v470 = vunpack.c.l.b16 %v294
        %v471 = vunpack.c.h.b16 %v294
        %v472 = vunpack.c.l.b16 %v295
        %v473 = vunpack.c.h.b16 %v295
        %v474 = vunpack.c.l.b16 %v296
        %v475 = vunpack.c.h.b16 %v296
        %v476 = vunpack.c.l.b16 %v297
        %v477 = vunpack.c.h.b16 %v297
        %v478 = vunpack.c.l.b16 %v298
        %v479 = vunpack.c.h.b16 %v298
        %v480 = vunpack.c.l.b16 %v299
        %v481 = vunpack.c.h.b16 %v299
        %v482 = vunpack.c.l.b16 %v300
        %v483 = vunpack.c.h.b16 %v300
        %v484 = vunpack.c.l.b16 %v301
        %v485 = vunpack.c.h.b16 %v301
        %v486 = vunpack.c.l.b16 %v302
        %v487 = vunpack.c.h.b16 %v302
        %v488 = vunpack.c.l.b16 %v303
        %v489 = vunpack.c.h.b16 %v303
        %v490 = vunpack.c.l.b16 %v304
        %v491 = vunpack.c.h.b16 %v304
        %v492 = vunpack.c.l.b16 %v305
        %v493 = vunpack.c.h.b16 %v305
        %v494 = vunpack.c.l.b16 %v306
        %v495 = vunpack.c.h.b16 %v306
        %v496 = vunpack.c.l.b16 %v307
        %v497 = vunpack.c.h.b16 %v307
        %v498 = vunpack.c.l.b16 %v308
        %v499 = vunpack.c.h.b16 %v308
        %v500 = vunpack.c.l.b16 %v309
        %v501 = vunpack.c.h.b16 %v309
        %v502 = vunpack.c.l.b16 %v310
        %v503 = vunpack.c.h.b16 %v310
        %v504 = vunpack.c.l.b16 %v311
        %v505 = vunpack.c.h.b16 %v311
        %v506 = vunpack.c.l.b16 %v312
        %v507 = vunpack.c.h.b16 %v312
        %v508 = vunpack.c.l.b16 %v313
        %v509 = vunpack.c.h.b16 %v313
        %v510 = vunpack.c.l.b16 %v314
        %v511 = vunpack.c.h.b16 %v314
        %v512 = vunpack.c.l.b16 %v315
        %v513 = vunpack.c.h.b16 %v315
        %v514 = vunpack.c.l.b16 %v316
        %v515 = vunpack.c.h.b16 %v316
        %v516 = vpack.c.b16 %v392, %v388
        %v517 = vpack.c.b16 %v393, %v389
        %v518 = vpack.c.b16 %v394, %v390
        %v519 = vpack.c.b16 %v395, %v391
        %v520 = vpack.c.b16 %v400, %v396
        %v521 = vpack.c.b16 %v401, %v397
        %v522 = vpack.c.b16 %v402, %v398
        %v523 = vpack.c.b16 %v403, %v399
        %v524 = vpack.c.b16 %v408, %v404
        %v525 = vpack.c.b16 %v409, %v405
        %v526 = vpack.c.b16 %v410, %v406
        %v527 = vpack.c.b16 %v411, %v407
        %v528 = vpack.c.b16 %v416, %v412
        %v529 = vpack.c.b16 %v417, %v413
        %v530 = vpack.c.b16 %v418, %v414
        %v531 = vpack.c.b16 %v419, %v415
        %v532 = vpack.c.b16 %v424, %v420
        %v533 = vpack.c.b16 %v425, %v421
        %v534 = vpack.c.b16 %v426, %v422
        %v535 = vpack.c.b16 %v427, %v423
        %v536 = vpack.c.b16 %v432, %v428
        %v537 = vpack.c.b16 %v433, %v429
        %v538 = vpack.c.b16 %v434, %v430
        %v539 = vpack.c.b16 %v435, %v431
        %v540 = vpack.c.b16 %v440, %v436
        %v541 = vpack.c.b16 %v441, %v437
        %v542 = vpack.c.b16 %v442, %v438
        %v543 = vpack.c.b16 %v443, %v439
        %v544 = vpack.c.b16 %v448, %v444
        %v545 = vpack.c.b16 %v449, %v445
        %v546 = vpack.c.b16 %v450, %v446
        %v547 = vpack.c.b16 %v451, %v447
        %v548 = vpack.c.b16 %v456, %v452
        %v549 = vpack.c.b16 %v457, %v453
        %v550 = vpack.c.b16 %v458, %v454
        %v551 = vpack.c.b16 %v459, %v455
        %v552 = vpack.c.b16 %v464, %v460
        %v553 = vpack.c.b16 %v465, %v461
        %v554 = vpack.c.b16 %v466, %v462
        %v555 = vpack.c.b16 %v467, %v463
        %v556 = vpack.c.b16 %v472, %v468
        %v557 = vpack.c.b16 %v473, %v469
        %v558 = vpack.c.b16 %v474, %v470
        %v559 = vpack.c.b16 %v475, %v471
        %v560 = vpack.c.b16 %v480, %v476
        %v561 = vpack.c.b16 %v481, %v477
        %v562 = vpack.c.b16 %v482, %v478
        %v563 = vpack.c.b16 %v483, %v479
        %v564 = vpack.c.b16 %v488, %v484
        %v565 = vpack.c.b16 %v489, %v485
        %v566 = vpack.c.b16 %v490, %v486
        %v567 = vpack.c.b16 %v491, %v487
        %v568 = vpack.c.b16 %v496, %v492
        %v569 = vpack.c.b16 %v497, %v493
        %v570 = vpack.c.b16 %v498, %v494
        %v571 = vpack.c.b16 %v499, %v495
        %v572 = vpack.c.b16 %v504, %v500
        %v573 = vpack.c.b16 %v505, %v501
        %v574 = vpack.c.b16 %v506, %v502
        %v575 = vpack.c.b16 %v507, %v503
        %v576 = vpack.c.b16 %v512, %v508
        %v577 = vpack.c.b16 %v513, %v509
        %v578 = vpack.c.b16 %v514, %v510
        %v579 = vpack.c.b16 %v515, %v511
        %644 = vmatpush.bf16.msra.mxu0 %v544
        %645 = vmatpush.bf16.msra.mxu0 %v540
        %646 = vmatpush.bf16.msra.mxu0 %v536
        %647 = vmatpush.bf16.msra.mxu0 %v532
        %648 = vmatpush.bf16.msra.mxu0 %v528
        %649 = vmatpush.bf16.msra.mxu0 %v524
        %650 = vmatpush.bf16.msra.mxu0 %v520
        %651 = vmatpush.bf16.msra.mxu0 %v516
        %652 = vmatmul.bf16.gmra.mxu0 %v320
        %v653 = vpop.f32.mrf.mxu0
        %v654 = vadd.f32 0.0, %v653
        %v655 = vpop.f32.mrf.mxu0
        %656 = vdwg.mxu0
        %657 = vmatpush.bf16.msra.mxu0 %v576
        %658 = vmatpush.bf16.msra.mxu0 %v572
        %659 = vmatpush.bf16.msra.mxu0 %v568
        %660 = vmatpush.bf16.msra.mxu0 %v564
        %661 = vmatpush.bf16.msra.mxu0 %v560
        %662 = vmatpush.bf16.msra.mxu0 %v556
        %663 = vmatpush.bf16.msra.mxu0 %v552
        %664 = vmatpush.bf16.msra.mxu0 %v548
        %665 = vmatmul.bf16.gmra.mxu0 %v321
        %v666 = vpop.f32.mrf.mxu0
        %v667 = vadd.f32 %v654, %v666
        %v668 = vpop.f32.mrf.mxu0
        %669 = vdwg.mxu0
        %670 = vmatpush.bf16.msra.mxu0 %v545
        %671 = vmatpush.bf16.msra.mxu0 %v541
        %672 = vmatpush.bf16.msra.mxu0 %v537
        %673 = vmatpush.bf16.msra.mxu0 %v533
        %674 = vmatpush.bf16.msra.mxu0 %v529
        %675 = vmatpush.bf16.msra.mxu0 %v525
        %676 = vmatpush.bf16.msra.mxu0 %v521
        %677 = vmatpush.bf16.msra.mxu0 %v517
        %678 = vmatmul.bf16.gmra.mxu0 %v320
        %v679 = vpop.f32.mrf.mxu0
        %v680 = vadd.f32 0.0, %v679
        %v681 = vpop.f32.mrf.mxu0
        %682 = vdwg.mxu0
        %683 = vmatpush.bf16.msra.mxu0 %v577
        %684 = vmatpush.bf16.msra.mxu0 %v573
        %685 = vmatpush.bf16.msra.mxu0 %v569
        %686 = vmatpush.bf16.msra.mxu0 %v565
        %687 = vmatpush.bf16.msra.mxu0 %v561
        %688 = vmatpush.bf16.msra.mxu0 %v557
        %689 = vmatpush.bf16.msra.mxu0 %v553
        %690 = vmatpush.bf16.msra.mxu0 %v549
        %691 = vmatmul.bf16.gmra.mxu0 %v321
        %v692 = vpop.f32.mrf.mxu0
        %v693 = vadd.f32 %v680, %v692
        %v694 = vpop.f32.mrf.mxu0
        %695 = vdwg.mxu0
        %696 = vmatpush.bf16.msra.mxu0 %v546
        %697 = vmatpush.bf16.msra.mxu0 %v542
        %698 = vmatpush.bf16.msra.mxu0 %v538
        %699 = vmatpush.bf16.msra.mxu0 %v534
        %700 = vmatpush.bf16.msra.mxu0 %v530
        %701 = vmatpush.bf16.msra.mxu0 %v526
        %702 = vmatpush.bf16.msra.mxu0 %v522
        %703 = vmatpush.bf16.msra.mxu0 %v518
        %704 = vmatmul.bf16.gmra.mxu0 %v320
        %v705 = vpop.f32.mrf.mxu0
        %v706 = vadd.f32 0.0, %v705
        %v707 = vpop.f32.mrf.mxu0
        %708 = vdwg.mxu0
        %709 = vmatpush.bf16.msra.mxu0 %v578
        %710 = vmatpush.bf16.msra.mxu0 %v574
        %711 = vmatpush.bf16.msra.mxu0 %v570
        %712 = vmatpush.bf16.msra.mxu0 %v566
        %713 = vmatpush.bf16.msra.mxu0 %v562
        %714 = vmatpush.bf16.msra.mxu0 %v558
        %715 = vmatpush.bf16.msra.mxu0 %v554
        %716 = vmatpush.bf16.msra.mxu0 %v550
        %717 = vmatmul.bf16.gmra.mxu0 %v321
        %v718 = vpop.f32.mrf.mxu0
        %v719 = vadd.f32 %v706, %v718
        %v720 = vpop.f32.mrf.mxu0
        %721 = vdwg.mxu0
        %722 = vmatpush.bf16.msra.mxu0 %v547
        %723 = vmatpush.bf16.msra.mxu0 %v543
        %724 = vmatpush.bf16.msra.mxu0 %v539
        %725 = vmatpush.bf16.msra.mxu0 %v535
        %726 = vmatpush.bf16.msra.mxu0 %v531
        %727 = vmatpush.bf16.msra.mxu0 %v527
        %728 = vmatpush.bf16.msra.mxu0 %v523
        %729 = vmatpush.bf16.msra.mxu0 %v519
        %730 = vmatmul.bf16.gmra.mxu0 %v320
        %v731 = vpop.f32.mrf.mxu0
        %v732 = vadd.f32 0.0, %v731
        %v733 = vpop.f32.mrf.mxu0
        %734 = vdwg.mxu0
        %735 = vmatpush.bf16.msra.mxu0 %v579
        %736 = vmatpush.bf16.msra.mxu0 %v575
        %737 = vmatpush.bf16.msra.mxu0 %v571
        %738 = vmatpush.bf16.msra.mxu0 %v567
        %739 = vmatpush.bf16.msra.mxu0 %v563
        %740 = vmatpush.bf16.msra.mxu0 %v559
        %741 = vmatpush.bf16.msra.mxu0 %v555
        %742 = vmatpush.bf16.msra.mxu0 %v551
        %743 = vmatmul.bf16.gmra.mxu0 %v321
        %v744 = vpop.f32.mrf.mxu0
        %v745 = vadd.f32 %v732, %v744
        %v746 = vpop.f32.mrf.mxu0
        %747 = vdwg.mxu0
        %v752 = vrot.slane %v667, 5
        %v753 = vrot.slane %v693, 5
        %v754 = vrot.slane %v719, 5
        %v755 = vrot.slane %v745, 5
        %v760 = vadd.f32 %v249, %v752
        %v761 = vadd.f32 %v250, %v753
        %v762 = vadd.f32 %v251, %v754
        %v763 = vadd.f32 %v252, %v755
        %764 = vst [vmem:[#allocation2] sm:$0xf8] %v760
        %765 = vst [vmem:[#allocation2 + $0x8] sm:$0xf8] %v761
        %766 = vst [vmem:[#allocation2 + $0x10] sm:$0xf8] %v762
        %767 = vst [vmem:[#allocation2 + $0x18] sm:$0xf8] %v763
        %v768 = vld [vmem:[%s238] sm:$0x77]
        %v769 = vld [vmem:[#allocation2] sm:$0xfc]
        %v770 = vld [vmem:[#allocation2 + $0x8] sm:$0xfc]
        %v771 = vld [vmem:[#allocation2 + $0x10] sm:$0xfc]
        %v772 = vld [vmem:[#allocation2 + $0x18] sm:$0xfc]
        %s773 = scalar_lea.vmem [#allocation3], 512
        %v774 = vld [vmem:[%s773] sm:$0xff]
        %v775 = vld [vmem:[%s773 + $0x8] sm:$0xff]
        %v776 = vld [vmem:[%s773 + $0x10] sm:$0xff]
        %v777 = vld [vmem:[%s773 + $0x18] sm:$0xff]
        %v778 = vld [vmem:[%s773 + $0x20] sm:$0xff]
        %v779 = vld [vmem:[%s773 + $0x28] sm:$0xff]
        %v780 = vld [vmem:[%s773 + $0x30] sm:$0xff]
        %v781 = vld [vmem:[%s773 + $0x38] sm:$0xff]
        %v782 = vld [vmem:[%s773 + $0x40] sm:$0xff]
        %v783 = vld [vmem:[%s773 + $0x48] sm:$0xff]
        %v784 = vld [vmem:[%s773 + $0x50] sm:$0xff]
        %v785 = vld [vmem:[%s773 + $0x58] sm:$0xff]
        %v786 = vld [vmem:[%s773 + $0x60] sm:$0xff]
        %v787 = vld [vmem:[%s773 + $0x68] sm:$0xff]
        %v788 = vld [vmem:[%s773 + $0x70] sm:$0xff]
        %v789 = vld [vmem:[%s773 + $0x78] sm:$0xff]
        %v790 = vld [vmem:[%s773 + $0x80] sm:$0xff]
        %v791 = vld [vmem:[%s773 + $0x88] sm:$0xff]
        %v792 = vld [vmem:[%s773 + $0x90] sm:$0xff]
        %v793 = vld [vmem:[%s773 + $0x98] sm:$0xff]
        %v794 = vld [vmem:[%s773 + $0xa0] sm:$0xff]
        %v795 = vld [vmem:[%s773 + $0xa8] sm:$0xff]
        %v796 = vld [vmem:[%s773 + $0xb0] sm:$0xff]
        %v797 = vld [vmem:[%s773 + $0xb8] sm:$0xff]
        %v798 = vld [vmem:[%s773 + $0xc0] sm:$0xff]
        %v799 = vld [vmem:[%s773 + $0xc8] sm:$0xff]
        %v800 = vld [vmem:[%s773 + $0xd0] sm:$0xff]
        %v801 = vld [vmem:[%s773 + $0xd8] sm:$0xff]
        %v802 = vld [vmem:[%s773 + $0xe0] sm:$0xff]
        %v803 = vld [vmem:[%s773 + $0xe8] sm:$0xff]
        %v804 = vld [vmem:[%s773 + $0xf0] sm:$0xff]
        %v805 = vld [vmem:[%s773 + $0xf8] sm:$0xff]
        %v806 = vld [vmem:[%s773 + $0x100] sm:$0xff]
        %v807 = vld [vmem:[%s773 + $0x108] sm:$0xff]
        %v808 = vld [vmem:[%s773 + $0x110] sm:$0xff]
        %v809 = vld [vmem:[%s773 + $0x118] sm:$0xff]
        %v810 = vld [vmem:[%s773 + $0x120] sm:$0xff]
        %v811 = vld [vmem:[%s773 + $0x128] sm:$0xff]
        %v812 = vld [vmem:[%s773 + $0x130] sm:$0xff]
        %v813 = vld [vmem:[%s773 + $0x138] sm:$0xff]
        %v814 = vld [vmem:[%s773 + $0x140] sm:$0xff]
        %v815 = vld [vmem:[%s773 + $0x148] sm:$0xff]
        %v816 = vld [vmem:[%s773 + $0x150] sm:$0xff]
        %v817 = vld [vmem:[%s773 + $0x158] sm:$0xff]
        %v818 = vld [vmem:[%s773 + $0x160] sm:$0xff]
        %v819 = vld [vmem:[%s773 + $0x168] sm:$0xff]
        %v820 = vld [vmem:[%s773 + $0x170] sm:$0xff]
        %v821 = vld [vmem:[%s773 + $0x178] sm:$0xff]
        %v822 = vld [vmem:[%s773 + $0x180] sm:$0xff]
        %v823 = vld [vmem:[%s773 + $0x188] sm:$0xff]
        %v824 = vld [vmem:[%s773 + $0x190] sm:$0xff]
        %v825 = vld [vmem:[%s773 + $0x198] sm:$0xff]
        %v826 = vld [vmem:[%s773 + $0x1a0] sm:$0xff]
        %v827 = vld [vmem:[%s773 + $0x1a8] sm:$0xff]
        %v828 = vld [vmem:[%s773 + $0x1b0] sm:$0xff]
        %v829 = vld [vmem:[%s773 + $0x1b8] sm:$0xff]
        %v830 = vld [vmem:[%s773 + $0x1c0] sm:$0xff]
        %v831 = vld [vmem:[%s773 + $0x1c8] sm:$0xff]
        %v832 = vld [vmem:[%s773 + $0x1d0] sm:$0xff]
        %v833 = vld [vmem:[%s773 + $0x1d8] sm:$0xff]
        %v834 = vld [vmem:[%s773 + $0x1e0] sm:$0xff]
        %v835 = vld [vmem:[%s773 + $0x1e8] sm:$0xff]
        %v836 = vld [vmem:[%s773 + $0x1f0] sm:$0xff]
        %v837 = vld [vmem:[%s773 + $0x1f8] sm:$0xff]
        %v839 = vunpack.c.l.b16 %v768
        %v840 = vunpack.c.h.b16 %v768
        %v841 = vpack.c.b16 %v839, %v839
        %v842 = vpack.c.b16 %v840, %v840
        %v909 = vunpack.c.l.b16 %v774
        %v910 = vunpack.c.h.b16 %v774
        %v911 = vunpack.c.l.b16 %v775
        %v912 = vunpack.c.h.b16 %v775
        %v913 = vunpack.c.l.b16 %v776
        %v914 = vunpack.c.h.b16 %v776
        %v915 = vunpack.c.l.b16 %v777
        %v916 = vunpack.c.h.b16 %v777
        %v917 = vunpack.c.l.b16 %v778
        %v918 = vunpack.c.h.b16 %v778
        %v919 = vunpack.c.l.b16 %v779
        %v920 = vunpack.c.h.b16 %v779
        %v921 = vunpack.c.l.b16 %v780
        %v922 = vunpack.c.h.b16 %v780
        %v923 = vunpack.c.l.b16 %v781
        %v924 = vunpack.c.h.b16 %v781
        %v925 = vunpack.c.l.b16 %v782
        %v926 = vunpack.c.h.b16 %v782
        %v927 = vunpack.c.l.b16 %v783
        %v928 = vunpack.c.h.b16 %v783
        %v929 = vunpack.c.l.b16 %v784
        %v930 = vunpack.c.h.b16 %v784
        %v931 = vunpack.c.l.b16 %v785
        %v932 = vunpack.c.h.b16 %v785
        %v933 = vunpack.c.l.b16 %v786
        %v934 = vunpack.c.h.b16 %v786
        %v935 = vunpack.c.l.b16 %v787
        %v936 = vunpack.c.h.b16 %v787
        %v937 = vunpack.c.l.b16 %v788
        %v938 = vunpack.c.h.b16 %v788
        %v939 = vunpack.c.l.b16 %v789
        %v940 = vunpack.c.h.b16 %v789
        %v941 = vunpack.c.l.b16 %v790
        %v942 = vunpack.c.h.b16 %v790
        %v943 = vunpack.c.l.b16 %v791
        %v944 = vunpack.c.h.b16 %v791
        %v945 = vunpack.c.l.b16 %v792
        %v946 = vunpack.c.h.b16 %v792
        %v947 = vunpack.c.l.b16 %v793
        %v948 = vunpack.c.h.b16 %v793
        %v949 = vunpack.c.l.b16 %v794
        %v950 = vunpack.c.h.b16 %v794
        %v951 = vunpack.c.l.b16 %v795
        %v952 = vunpack.c.h.b16 %v795
        %v953 = vunpack.c.l.b16 %v796
        %v954 = vunpack.c.h.b16 %v796
        %v955 = vunpack.c.l.b16 %v797
        %v956 = vunpack.c.h.b16 %v797
        %v957 = vunpack.c.l.b16 %v798
        %v958 = vunpack.c.h.b16 %v798
        %v959 = vunpack.c.l.b16 %v799
        %v960 = vunpack.c.h.b16 %v799
        %v961 = vunpack.c.l.b16 %v800
        %v962 = vunpack.c.h.b16 %v800
        %v963 = vunpack.c.l.b16 %v801
        %v964 = vunpack.c.h.b16 %v801
        %v965 = vunpack.c.l.b16 %v802
        %v966 = vunpack.c.h.b16 %v802
        %v967 = vunpack.c.l.b16 %v803
        %v968 = vunpack.c.h.b16 %v803
        %v969 = vunpack.c.l.b16 %v804
        %v970 = vunpack.c.h.b16 %v804
        %v971 = vunpack.c.l.b16 %v805
        %v972 = vunpack.c.h.b16 %v805
        %v973 = vunpack.c.l.b16 %v806
        %v974 = vunpack.c.h.b16 %v806
        %v975 = vunpack.c.l.b16 %v807
        %v976 = vunpack.c.h.b16 %v807
        %v977 = vunpack.c.l.b16 %v808
        %v978 = vunpack.c.h.b16 %v808
        %v979 = vunpack.c.l.b16 %v809
        %v980 = vunpack.c.h.b16 %v809
        %v981 = vunpack.c.l.b16 %v810
        %v982 = vunpack.c.h.b16 %v810
        %v983 = vunpack.c.l.b16 %v811
        %v984 = vunpack.c.h.b16 %v811
        %v985 = vunpack.c.l.b16 %v812
        %v986 = vunpack.c.h.b16 %v812
        %v987 = vunpack.c.l.b16 %v813
        %v988 = vunpack.c.h.b16 %v813
        %v989 = vunpack.c.l.b16 %v814
        %v990 = vunpack.c.h.b16 %v814
        %v991 = vunpack.c.l.b16 %v815
        %v992 = vunpack.c.h.b16 %v815
        %v993 = vunpack.c.l.b16 %v816
        %v994 = vunpack.c.h.b16 %v816
        %v995 = vunpack.c.l.b16 %v817
        %v996 = vunpack.c.h.b16 %v817
        %v997 = vunpack.c.l.b16 %v818
        %v998 = vunpack.c.h.b16 %v818
        %v999 = vunpack.c.l.b16 %v819
        %v1000 = vunpack.c.h.b16 %v819
        %v1001 = vunpack.c.l.b16 %v820
        %v1002 = vunpack.c.h.b16 %v820
        %v1003 = vunpack.c.l.b16 %v821
        %v1004 = vunpack.c.h.b16 %v821
        %v1005 = vunpack.c.l.b16 %v822
        %v1006 = vunpack.c.h.b16 %v822
        %v1007 = vunpack.c.l.b16 %v823
        %v1008 = vunpack.c.h.b16 %v823
        %v1009 = vunpack.c.l.b16 %v824
        %v1010 = vunpack.c.h.b16 %v824
        %v1011 = vunpack.c.l.b16 %v825
        %v1012 = vunpack.c.h.b16 %v825
        %v1013 = vunpack.c.l.b16 %v826
        %v1014 = vunpack.c.h.b16 %v826
        %v1015 = vunpack.c.l.b16 %v827
        %v1016 = vunpack.c.h.b16 %v827
        %v1017 = vunpack.c.l.b16 %v828
        %v1018 = vunpack.c.h.b16 %v828
        %v1019 = vunpack.c.l.b16 %v829
        %v1020 = vunpack.c.h.b16 %v829
        %v1021 = vunpack.c.l.b16 %v830
        %v1022 = vunpack.c.h.b16 %v830
        %v1023 = vunpack.c.l.b16 %v831
        %v1024 = vunpack.c.h.b16 %v831
        %v1025 = vunpack.c.l.b16 %v832
        %v1026 = vunpack.c.h.b16 %v832
        %v1027 = vunpack.c.l.b16 %v833
        %v1028 = vunpack.c.h.b16 %v833
        %v1029 = vunpack.c.l.b16 %v834
        %v1030 = vunpack.c.h.b16 %v834
        %v1031 = vunpack.c.l.b16 %v835
        %v1032 = vunpack.c.h.b16 %v835
        %v1033 = vunpack.c.l.b16 %v836
        %v1034 = vunpack.c.h.b16 %v836
        %v1035 = vunpack.c.l.b16 %v837
        %v1036 = vunpack.c.h.b16 %v837
        %v1037 = vpack.c.b16 %v913, %v909
        %v1038 = vpack.c.b16 %v914, %v910
        %v1039 = vpack.c.b16 %v915, %v911
        %v1040 = vpack.c.b16 %v916, %v912
        %v1041 = vpack.c.b16 %v921, %v917
        %v1042 = vpack.c.b16 %v922, %v918
        %v1043 = vpack.c.b16 %v923, %v919
        %v1044 = vpack.c.b16 %v924, %v920
        %v1045 = vpack.c.b16 %v929, %v925
        %v1046 = vpack.c.b16 %v930, %v926
        %v1047 = vpack.c.b16 %v931, %v927
        %v1048 = vpack.c.b16 %v932, %v928
        %v1049 = vpack.c.b16 %v937, %v933
        %v1050 = vpack.c.b16 %v938, %v934
        %v1051 = vpack.c.b16 %v939, %v935
        %v1052 = vpack.c.b16 %v940, %v936
        %v1053 = vpack.c.b16 %v945, %v941
        %v1054 = vpack.c.b16 %v946, %v942
        %v1055 = vpack.c.b16 %v947, %v943
        %v1056 = vpack.c.b16 %v948, %v944
        %v1057 = vpack.c.b16 %v953, %v949
        %v1058 = vpack.c.b16 %v954, %v950
        %v1059 = vpack.c.b16 %v955, %v951
        %v1060 = vpack.c.b16 %v956, %v952
        %v1061 = vpack.c.b16 %v961, %v957
        %v1062 = vpack.c.b16 %v962, %v958
        %v1063 = vpack.c.b16 %v963, %v959
        %v1064 = vpack.c.b16 %v964, %v960
        %v1065 = vpack.c.b16 %v969, %v965
        %v1066 = vpack.c.b16 %v970, %v966
        %v1067 = vpack.c.b16 %v971, %v967
        %v1068 = vpack.c.b16 %v972, %v968
        %v1069 = vpack.c.b16 %v977, %v973
        %v1070 = vpack.c.b16 %v978, %v974
        %v1071 = vpack.c.b16 %v979, %v975
        %v1072 = vpack.c.b16 %v980, %v976
        %v1073 = vpack.c.b16 %v985, %v981
        %v1074 = vpack.c.b16 %v986, %v982
        %v1075 = vpack.c.b16 %v987, %v983
        %v1076 = vpack.c.b16 %v988, %v984
        %v1077 = vpack.c.b16 %v993, %v989
        %v1078 = vpack.c.b16 %v994, %v990
        %v1079 = vpack.c.b16 %v995, %v991
        %v1080 = vpack.c.b16 %v996, %v992
        %v1081 = vpack.c.b16 %v1001, %v997
        %v1082 = vpack.c.b16 %v1002, %v998
        %v1083 = vpack.c.b16 %v1003, %v999
        %v1084 = vpack.c.b16 %v1004, %v1000
        %v1085 = vpack.c.b16 %v1009, %v1005
        %v1086 = vpack.c.b16 %v1010, %v1006
        %v1087 = vpack.c.b16 %v1011, %v1007
        %v1088 = vpack.c.b16 %v1012, %v1008
        %v1089 = vpack.c.b16 %v1017, %v1013
        %v1090 = vpack.c.b16 %v1018, %v1014
        %v1091 = vpack.c.b16 %v1019, %v1015
        %v1092 = vpack.c.b16 %v1020, %v1016
        %v1093 = vpack.c.b16 %v1025, %v1021
        %v1094 = vpack.c.b16 %v1026, %v1022
        %v1095 = vpack.c.b16 %v1027, %v1023
        %v1096 = vpack.c.b16 %v1028, %v1024
        %v1097 = vpack.c.b16 %v1033, %v1029
        %v1098 = vpack.c.b16 %v1034, %v1030
        %v1099 = vpack.c.b16 %v1035, %v1031
        %v1100 = vpack.c.b16 %v1036, %v1032
        %1165 = vmatpush.bf16.msra.mxu0 %v1065
        %1166 = vmatpush.bf16.msra.mxu0 %v1061
        %1167 = vmatpush.bf16.msra.mxu0 %v1057
        %1168 = vmatpush.bf16.msra.mxu0 %v1053
        %1169 = vmatpush.bf16.msra.mxu0 %v1049
        %1170 = vmatpush.bf16.msra.mxu0 %v1045
        %1171 = vmatpush.bf16.msra.mxu0 %v1041
        %1172 = vmatpush.bf16.msra.mxu0 %v1037
        %1173 = vmatmul.bf16.gmra.mxu0 %v841
        %v1174 = vpop.f32.mrf.mxu0
        %v1175 = vadd.f32 0.0, %v1174
        %v1176 = vpop.f32.mrf.mxu0
        %1177 = vdwg.mxu0
        %1178 = vmatpush.bf16.msra.mxu0 %v1097
        %1179 = vmatpush.bf16.msra.mxu0 %v1093
        %1180 = vmatpush.bf16.msra.mxu0 %v1089
        %1181 = vmatpush.bf16.msra.mxu0 %v1085
        %1182 = vmatpush.bf16.msra.mxu0 %v1081
        %1183 = vmatpush.bf16.msra.mxu0 %v1077
        %1184 = vmatpush.bf16.msra.mxu0 %v1073
        %1185 = vmatpush.bf16.msra.mxu0 %v1069
        %1186 = vmatmul.bf16.gmra.mxu0 %v842
        %v1187 = vpop.f32.mrf.mxu0
        %v1188 = vadd.f32 %v1175, %v1187
        %v1189 = vpop.f32.mrf.mxu0
        %1190 = vdwg.mxu0
        %1191 = vmatpush.bf16.msra.mxu0 %v1066
        %1192 = vmatpush.bf16.msra.mxu0 %v1062
        %1193 = vmatpush.bf16.msra.mxu0 %v1058
        %1194 = vmatpush.bf16.msra.mxu0 %v1054
        %1195 = vmatpush.bf16.msra.mxu0 %v1050
        %1196 = vmatpush.bf16.msra.mxu0 %v1046
        %1197 = vmatpush.bf16.msra.mxu0 %v1042
        %1198 = vmatpush.bf16.msra.mxu0 %v1038
        %1199 = vmatmul.bf16.gmra.mxu0 %v841
        %v1200 = vpop.f32.mrf.mxu0
        %v1201 = vadd.f32 0.0, %v1200
        %v1202 = vpop.f32.mrf.mxu0
        %1203 = vdwg.mxu0
        %1204 = vmatpush.bf16.msra.mxu0 %v1098
        %1205 = vmatpush.bf16.msra.mxu0 %v1094
        %1206 = vmatpush.bf16.msra.mxu0 %v1090
        %1207 = vmatpush.bf16.msra.mxu0 %v1086
        %1208 = vmatpush.bf16.msra.mxu0 %v1082
        %1209 = vmatpush.bf16.msra.mxu0 %v1078
        %1210 = vmatpush.bf16.msra.mxu0 %v1074
        %1211 = vmatpush.bf16.msra.mxu0 %v1070
        %1212 = vmatmul.bf16.gmra.mxu0 %v842
        %v1213 = vpop.f32.mrf.mxu0
        %v1214 = vadd.f32 %v1201, %v1213
        %v1215 = vpop.f32.mrf.mxu0
        %1216 = vdwg.mxu0
        %1217 = vmatpush.bf16.msra.mxu0 %v1067
        %1218 = vmatpush.bf16.msra.mxu0 %v1063
        %1219 = vmatpush.bf16.msra.mxu0 %v1059
        %1220 = vmatpush.bf16.msra.mxu0 %v1055
        %1221 = vmatpush.bf16.msra.mxu0 %v1051
        %1222 = vmatpush.bf16.msra.mxu0 %v1047
        %1223 = vmatpush.bf16.msra.mxu0 %v1043
        %1224 = vmatpush.bf16.msra.mxu0 %v1039
        %1225 = vmatmul.bf16.gmra.mxu0 %v841
        %v1226 = vpop.f32.mrf.mxu0
        %v1227 = vadd.f32 0.0, %v1226
        %v1228 = vpop.f32.mrf.mxu0
        %1229 = vdwg.mxu0
        %1230 = vmatpush.bf16.msra.mxu0 %v1099
        %1231 = vmatpush.bf16.msra.mxu0 %v1095
        %1232 = vmatpush.bf16.msra.mxu0 %v1091
        %1233 = vmatpush.bf16.msra.mxu0 %v1087
        %1234 = vmatpush.bf16.msra.mxu0 %v1083
        %1235 = vmatpush.bf16.msra.mxu0 %v1079
        %1236 = vmatpush.bf16.msra.mxu0 %v1075
        %1237 = vmatpush.bf16.msra.mxu0 %v1071
        %1238 = vmatmul.bf16.gmra.mxu0 %v842
        %v1239 = vpop.f32.mrf.mxu0
        %v1240 = vadd.f32 %v1227, %v1239
        %v1241 = vpop.f32.mrf.mxu0
        %1242 = vdwg.mxu0
        %1243 = vmatpush.bf16.msra.mxu0 %v1068
        %1244 = vmatpush.bf16.msra.mxu0 %v1064
        %1245 = vmatpush.bf16.msra.mxu0 %v1060
        %1246 = vmatpush.bf16.msra.mxu0 %v1056
        %1247 = vmatpush.bf16.msra.mxu0 %v1052
        %1248 = vmatpush.bf16.msra.mxu0 %v1048
        %1249 = vmatpush.bf16.msra.mxu0 %v1044
        %1250 = vmatpush.bf16.msra.mxu0 %v1040
        %1251 = vmatmul.bf16.gmra.mxu0 %v841
        %v1252 = vpop.f32.mrf.mxu0
        %v1253 = vadd.f32 0.0, %v1252
        %v1254 = vpop.f32.mrf.mxu0
        %1255 = vdwg.mxu0
        %1256 = vmatpush.bf16.msra.mxu0 %v1100
        %1257 = vmatpush.bf16.msra.mxu0 %v1096
        %1258 = vmatpush.bf16.msra.mxu0 %v1092
        %1259 = vmatpush.bf16.msra.mxu0 %v1088
        %1260 = vmatpush.bf16.msra.mxu0 %v1084
        %1261 = vmatpush.bf16.msra.mxu0 %v1080
        %1262 = vmatpush.bf16.msra.mxu0 %v1076
        %1263 = vmatpush.bf16.msra.mxu0 %v1072
        %1264 = vmatmul.bf16.gmra.mxu0 %v842
        %v1265 = vpop.f32.mrf.mxu0
        %v1266 = vadd.f32 %v1253, %v1265
        %v1267 = vpop.f32.mrf.mxu0
        %1268 = vdwg.mxu0
        %v1273 = vrot.slane %v1188, 6
        %v1274 = vrot.slane %v1214, 6
        %v1275 = vrot.slane %v1240, 6
        %v1276 = vrot.slane %v1266, 6
        %v1281 = vadd.f32 %v769, %v1273
        %v1282 = vadd.f32 %v770, %v1274
        %v1283 = vadd.f32 %v771, %v1275
        %v1284 = vadd.f32 %v772, %v1276
        %1285 = vst [vmem:[#allocation2] sm:$0xfc] %v1281
        %1286 = vst [vmem:[#allocation2 + $0x8] sm:$0xfc] %v1282
        %1287 = vst [vmem:[#allocation2 + $0x10] sm:$0xfc] %v1283
        %1288 = vst [vmem:[#allocation2 + $0x18] sm:$0xfc] %v1284
        %v1289 = vld [vmem:[%s238] sm:$0xff]
        %v1290 = vld [vmem:[#allocation2] sm:$0xfe]
        %v1291 = vld [vmem:[#allocation2 + $0x8] sm:$0xfe]
        %v1292 = vld [vmem:[#allocation2 + $0x10] sm:$0xfe]
        %v1293 = vld [vmem:[#allocation2 + $0x18] sm:$0xfe]
        %s1294 = scalar_lea.vmem [#allocation3], 1024
        %v1295 = vld [vmem:[%s1294] sm:$0xff]
        %v1296 = vld [vmem:[%s1294 + $0x8] sm:$0xff]
        %v1297 = vld [vmem:[%s1294 + $0x10] sm:$0xff]
        %v1298 = vld [vmem:[%s1294 + $0x18] sm:$0xff]
        %v1299 = vld [vmem:[%s1294 + $0x20] sm:$0xff]
        %v1300 = vld [vmem:[%s1294 + $0x28] sm:$0xff]
        %v1301 = vld [vmem:[%s1294 + $0x30] sm:$0xff]
        %v1302 = vld [vmem:[%s1294 + $0x38] sm:$0xff]
        %v1303 = vld [vmem:[%s1294 + $0x40] sm:$0xff]
        %v1304 = vld [vmem:[%s1294 + $0x48] sm:$0xff]
        %v1305 = vld [vmem:[%s1294 + $0x50] sm:$0xff]
        %v1306 = vld [vmem:[%s1294 + $0x58] sm:$0xff]
        %v1307 = vld [vmem:[%s1294 + $0x60] sm:$0xff]
        %v1308 = vld [vmem:[%s1294 + $0x68] sm:$0xff]
        %v1309 = vld [vmem:[%s1294 + $0x70] sm:$0xff]
        %v1310 = vld [vmem:[%s1294 + $0x78] sm:$0xff]
        %v1311 = vld [vmem:[%s1294 + $0x80] sm:$0xff]
        %v1312 = vld [vmem:[%s1294 + $0x88] sm:$0xff]
        %v1313 = vld [vmem:[%s1294 + $0x90] sm:$0xff]
        %v1314 = vld [vmem:[%s1294 + $0x98] sm:$0xff]
        %v1315 = vld [vmem:[%s1294 + $0xa0] sm:$0xff]
        %v1316 = vld [vmem:[%s1294 + $0xa8] sm:$0xff]
        %v1317 = vld [vmem:[%s1294 + $0xb0] sm:$0xff]
        %v1318 = vld [vmem:[%s1294 + $0xb8] sm:$0xff]
        %v1319 = vld [vmem:[%s1294 + $0xc0] sm:$0xff]
        %v1320 = vld [vmem:[%s1294 + $0xc8] sm:$0xff]
        %v1321 = vld [vmem:[%s1294 + $0xd0] sm:$0xff]
        %v1322 = vld [vmem:[%s1294 + $0xd8] sm:$0xff]
        %v1323 = vld [vmem:[%s1294 + $0xe0] sm:$0xff]
        %v1324 = vld [vmem:[%s1294 + $0xe8] sm:$0xff]
        %v1325 = vld [vmem:[%s1294 + $0xf0] sm:$0xff]
        %v1326 = vld [vmem:[%s1294 + $0xf8] sm:$0xff]
        %v1327 = vld [vmem:[%s1294 + $0x100] sm:$0xff]
        %v1328 = vld [vmem:[%s1294 + $0x108] sm:$0xff]
        %v1329 = vld [vmem:[%s1294 + $0x110] sm:$0xff]
        %v1330 = vld [vmem:[%s1294 + $0x118] sm:$0xff]
        %v1331 = vld [vmem:[%s1294 + $0x120] sm:$0xff]
        %v1332 = vld [vmem:[%s1294 + $0x128] sm:$0xff]
        %v1333 = vld [vmem:[%s1294 + $0x130] sm:$0xff]
        %v1334 = vld [vmem:[%s1294 + $0x138] sm:$0xff]
        %v1335 = vld [vmem:[%s1294 + $0x140] sm:$0xff]
        %v1336 = vld [vmem:[%s1294 + $0x148] sm:$0xff]
        %v1337 = vld [vmem:[%s1294 + $0x150] sm:$0xff]
        %v1338 = vld [vmem:[%s1294 + $0x158] sm:$0xff]
        %v1339 = vld [vmem:[%s1294 + $0x160] sm:$0xff]
        %v1340 = vld [vmem:[%s1294 + $0x168] sm:$0xff]
        %v1341 = vld [vmem:[%s1294 + $0x170] sm:$0xff]
        %v1342 = vld [vmem:[%s1294 + $0x178] sm:$0xff]
        %v1343 = vld [vmem:[%s1294 + $0x180] sm:$0xff]
        %v1344 = vld [vmem:[%s1294 + $0x188] sm:$0xff]
        %v1345 = vld [vmem:[%s1294 + $0x190] sm:$0xff]
        %v1346 = vld [vmem:[%s1294 + $0x198] sm:$0xff]
        %v1347 = vld [vmem:[%s1294 + $0x1a0] sm:$0xff]
        %v1348 = vld [vmem:[%s1294 + $0x1a8] sm:$0xff]
        %v1349 = vld [vmem:[%s1294 + $0x1b0] sm:$0xff]
        %v1350 = vld [vmem:[%s1294 + $0x1b8] sm:$0xff]
        %v1351 = vld [vmem:[%s1294 + $0x1c0] sm:$0xff]
        %v1352 = vld [vmem:[%s1294 + $0x1c8] sm:$0xff]
        %v1353 = vld [vmem:[%s1294 + $0x1d0] sm:$0xff]
        %v1354 = vld [vmem:[%s1294 + $0x1d8] sm:$0xff]
        %v1355 = vld [vmem:[%s1294 + $0x1e0] sm:$0xff]
        %v1356 = vld [vmem:[%s1294 + $0x1e8] sm:$0xff]
        %v1357 = vld [vmem:[%s1294 + $0x1f0] sm:$0xff]
        %v1358 = vld [vmem:[%s1294 + $0x1f8] sm:$0xff]
        %v1360 = vunpack.c.l.b16 %v1289
        %v1361 = vunpack.c.h.b16 %v1289
        %v1362 = vpack.c.b16 %v1360, %v1360
        %v1363 = vpack.c.b16 %v1361, %v1361
        %v1430 = vunpack.c.l.b16 %v1295
        %v1431 = vunpack.c.h.b16 %v1295
        %v1432 = vunpack.c.l.b16 %v1296
        %v1433 = vunpack.c.h.b16 %v1296
        %v1434 = vunpack.c.l.b16 %v1297
        %v1435 = vunpack.c.h.b16 %v1297
        %v1436 = vunpack.c.l.b16 %v1298
        %v1437 = vunpack.c.h.b16 %v1298
        %v1438 = vunpack.c.l.b16 %v1299
        %v1439 = vunpack.c.h.b16 %v1299
        %v1440 = vunpack.c.l.b16 %v1300
        %v1441 = vunpack.c.h.b16 %v1300
        %v1442 = vunpack.c.l.b16 %v1301
        %v1443 = vunpack.c.h.b16 %v1301
        %v1444 = vunpack.c.l.b16 %v1302
        %v1445 = vunpack.c.h.b16 %v1302
        %v1446 = vunpack.c.l.b16 %v1303
        %v1447 = vunpack.c.h.b16 %v1303
        %v1448 = vunpack.c.l.b16 %v1304
        %v1449 = vunpack.c.h.b16 %v1304
        %v1450 = vunpack.c.l.b16 %v1305
        %v1451 = vunpack.c.h.b16 %v1305
        %v1452 = vunpack.c.l.b16 %v1306
        %v1453 = vunpack.c.h.b16 %v1306
        %v1454 = vunpack.c.l.b16 %v1307
        %v1455 = vunpack.c.h.b16 %v1307
        %v1456 = vunpack.c.l.b16 %v1308
        %v1457 = vunpack.c.h.b16 %v1308
        %v1458 = vunpack.c.l.b16 %v1309
        %v1459 = vunpack.c.h.b16 %v1309
        %v1460 = vunpack.c.l.b16 %v1310
        %v1461 = vunpack.c.h.b16 %v1310
        %v1462 = vunpack.c.l.b16 %v1311
        %v1463 = vunpack.c.h.b16 %v1311
        %v1464 = vunpack.c.l.b16 %v1312
        %v1465 = vunpack.c.h.b16 %v1312
        %v1466 = vunpack.c.l.b16 %v1313
        %v1467 = vunpack.c.h.b16 %v1313
        %v1468 = vunpack.c.l.b16 %v1314
        %v1469 = vunpack.c.h.b16 %v1314
        %v1470 = vunpack.c.l.b16 %v1315
        %v1471 = vunpack.c.h.b16 %v1315
        %v1472 = vunpack.c.l.b16 %v1316
        %v1473 = vunpack.c.h.b16 %v1316
        %v1474 = vunpack.c.l.b16 %v1317
        %v1475 = vunpack.c.h.b16 %v1317
        %v1476 = vunpack.c.l.b16 %v1318
        %v1477 = vunpack.c.h.b16 %v1318
        %v1478 = vunpack.c.l.b16 %v1319
        %v1479 = vunpack.c.h.b16 %v1319
        %v1480 = vunpack.c.l.b16 %v1320
        %v1481 = vunpack.c.h.b16 %v1320
        %v1482 = vunpack.c.l.b16 %v1321
        %v1483 = vunpack.c.h.b16 %v1321
        %v1484 = vunpack.c.l.b16 %v1322
        %v1485 = vunpack.c.h.b16 %v1322
        %v1486 = vunpack.c.l.b16 %v1323
        %v1487 = vunpack.c.h.b16 %v1323
        %v1488 = vunpack.c.l.b16 %v1324
        %v1489 = vunpack.c.h.b16 %v1324
        %v1490 = vunpack.c.l.b16 %v1325
        %v1491 = vunpack.c.h.b16 %v1325
        %v1492 = vunpack.c.l.b16 %v1326
        %v1493 = vunpack.c.h.b16 %v1326
        %v1494 = vunpack.c.l.b16 %v1327
        %v1495 = vunpack.c.h.b16 %v1327
        %v1496 = vunpack.c.l.b16 %v1328
        %v1497 = vunpack.c.h.b16 %v1328
        %v1498 = vunpack.c.l.b16 %v1329
        %v1499 = vunpack.c.h.b16 %v1329
        %v1500 = vunpack.c.l.b16 %v1330
        %v1501 = vunpack.c.h.b16 %v1330
        %v1502 = vunpack.c.l.b16 %v1331
        %v1503 = vunpack.c.h.b16 %v1331
        %v1504 = vunpack.c.l.b16 %v1332
        %v1505 = vunpack.c.h.b16 %v1332
        %v1506 = vunpack.c.l.b16 %v1333
        %v1507 = vunpack.c.h.b16 %v1333
        %v1508 = vunpack.c.l.b16 %v1334
        %v1509 = vunpack.c.h.b16 %v1334
        %v1510 = vunpack.c.l.b16 %v1335
        %v1511 = vunpack.c.h.b16 %v1335
        %v1512 = vunpack.c.l.b16 %v1336
        %v1513 = vunpack.c.h.b16 %v1336
        %v1514 = vunpack.c.l.b16 %v1337
        %v1515 = vunpack.c.h.b16 %v1337
        %v1516 = vunpack.c.l.b16 %v1338
        %v1517 = vunpack.c.h.b16 %v1338
        %v1518 = vunpack.c.l.b16 %v1339
        %v1519 = vunpack.c.h.b16 %v1339
        %v1520 = vunpack.c.l.b16 %v1340
        %v1521 = vunpack.c.h.b16 %v1340
        %v1522 = vunpack.c.l.b16 %v1341
        %v1523 = vunpack.c.h.b16 %v1341
        %v1524 = vunpack.c.l.b16 %v1342
        %v1525 = vunpack.c.h.b16 %v1342
        %v1526 = vunpack.c.l.b16 %v1343
        %v1527 = vunpack.c.h.b16 %v1343
        %v1528 = vunpack.c.l.b16 %v1344
        %v1529 = vunpack.c.h.b16 %v1344
        %v1530 = vunpack.c.l.b16 %v1345
        %v1531 = vunpack.c.h.b16 %v1345
        %v1532 = vunpack.c.l.b16 %v1346
        %v1533 = vunpack.c.h.b16 %v1346
        %v1534 = vunpack.c.l.b16 %v1347
        %v1535 = vunpack.c.h.b16 %v1347
        %v1536 = vunpack.c.l.b16 %v1348
        %v1537 = vunpack.c.h.b16 %v1348
        %v1538 = vunpack.c.l.b16 %v1349
        %v1539 = vunpack.c.h.b16 %v1349
        %v1540 = vunpack.c.l.b16 %v1350
        %v1541 = vunpack.c.h.b16 %v1350
        %v1542 = vunpack.c.l.b16 %v1351
        %v1543 = vunpack.c.h.b16 %v1351
        %v1544 = vunpack.c.l.b16 %v1352
        %v1545 = vunpack.c.h.b16 %v1352
        %v1546 = vunpack.c.l.b16 %v1353
        %v1547 = vunpack.c.h.b16 %v1353
        %v1548 = vunpack.c.l.b16 %v1354
        %v1549 = vunpack.c.h.b16 %v1354
        %v1550 = vunpack.c.l.b16 %v1355
        %v1551 = vunpack.c.h.b16 %v1355
        %v1552 = vunpack.c.l.b16 %v1356
        %v1553 = vunpack.c.h.b16 %v1356
        %v1554 = vunpack.c.l.b16 %v1357
        %v1555 = vunpack.c.h.b16 %v1357
        %v1556 = vunpack.c.l.b16 %v1358
        %v1557 = vunpack.c.h.b16 %v1358
        %v1558 = vpack.c.b16 %v1434, %v1430
        %v1559 = vpack.c.b16 %v1435, %v1431
        %v1560 = vpack.c.b16 %v1436, %v1432
        %v1561 = vpack.c.b16 %v1437, %v1433
        %v1562 = vpack.c.b16 %v1442, %v1438
        %v1563 = vpack.c.b16 %v1443, %v1439
        %v1564 = vpack.c.b16 %v1444, %v1440
        %v1565 = vpack.c.b16 %v1445, %v1441
        %v1566 = vpack.c.b16 %v1450, %v1446
        %v1567 = vpack.c.b16 %v1451, %v1447
        %v1568 = vpack.c.b16 %v1452, %v1448
        %v1569 = vpack.c.b16 %v1453, %v1449
        %v1570 = vpack.c.b16 %v1458, %v1454
        %v1571 = vpack.c.b16 %v1459, %v1455
        %v1572 = vpack.c.b16 %v1460, %v1456
        %v1573 = vpack.c.b16 %v1461, %v1457
        %v1574 = vpack.c.b16 %v1466, %v1462
        %v1575 = vpack.c.b16 %v1467, %v1463
        %v1576 = vpack.c.b16 %v1468, %v1464
        %v1577 = vpack.c.b16 %v1469, %v1465
        %v1578 = vpack.c.b16 %v1474, %v1470
        %v1579 = vpack.c.b16 %v1475, %v1471
        %v1580 = vpack.c.b16 %v1476, %v1472
        %v1581 = vpack.c.b16 %v1477, %v1473
        %v1582 = vpack.c.b16 %v1482, %v1478
        %v1583 = vpack.c.b16 %v1483, %v1479
        %v1584 = vpack.c.b16 %v1484, %v1480
        %v1585 = vpack.c.b16 %v1485, %v1481
        %v1586 = vpack.c.b16 %v1490, %v1486
        %v1587 = vpack.c.b16 %v1491, %v1487
        %v1588 = vpack.c.b16 %v1492, %v1488
        %v1589 = vpack.c.b16 %v1493, %v1489
        %v1590 = vpack.c.b16 %v1498, %v1494
        %v1591 = vpack.c.b16 %v1499, %v1495
        %v1592 = vpack.c.b16 %v1500, %v1496
        %v1593 = vpack.c.b16 %v1501, %v1497
        %v1594 = vpack.c.b16 %v1506, %v1502
        %v1595 = vpack.c.b16 %v1507, %v1503
        %v1596 = vpack.c.b16 %v1508, %v1504
        %v1597 = vpack.c.b16 %v1509, %v1505
        %v1598 = vpack.c.b16 %v1514, %v1510
        %v1599 = vpack.c.b16 %v1515, %v1511
        %v1600 = vpack.c.b16 %v1516, %v1512
        %v1601 = vpack.c.b16 %v1517, %v1513
        %v1602 = vpack.c.b16 %v1522, %v1518
        %v1603 = vpack.c.b16 %v1523, %v1519
        %v1604 = vpack.c.b16 %v1524, %v1520
        %v1605 = vpack.c.b16 %v1525, %v1521
        %v1606 = vpack.c.b16 %v1530, %v1526
        %v1607 = vpack.c.b16 %v1531, %v1527
        %v1608 = vpack.c.b16 %v1532, %v1528
        %v1609 = vpack.c.b16 %v1533, %v1529
        %v1610 = vpack.c.b16 %v1538, %v1534
        %v1611 = vpack.c.b16 %v1539, %v1535
        %v1612 = vpack.c.b16 %v1540, %v1536
        %v1613 = vpack.c.b16 %v1541, %v1537
        %v1614 = vpack.c.b16 %v1546, %v1542
        %v1615 = vpack.c.b16 %v1547, %v1543
        %v1616 = vpack.c.b16 %v1548, %v1544
        %v1617 = vpack.c.b16 %v1549, %v1545
        %v1618 = vpack.c.b16 %v1554, %v1550
        %v1619 = vpack.c.b16 %v1555, %v1551
        %v1620 = vpack.c.b16 %v1556, %v1552
        %v1621 = vpack.c.b16 %v1557, %v1553
        %1686 = vmatpush.bf16.msra.mxu0 %v1586
        %1687 = vmatpush.bf16.msra.mxu0 %v1582
        %1688 = vmatpush.bf16.msra.mxu0 %v1578
        %1689 = vmatpush.bf16.msra.mxu0 %v1574
        %1690 = vmatpush.bf16.msra.mxu0 %v1570
        %1691 = vmatpush.bf16.msra.mxu0 %v1566
        %1692 = vmatpush.bf16.msra.mxu0 %v1562
        %1693 = vmatpush.bf16.msra.mxu0 %v1558
        %1694 = vmatmul.bf16.gmra.mxu0 %v1362
        %v1695 = vpop.f32.mrf.mxu0
        %v1696 = vadd.f32 0.0, %v1695
        %v1697 = vpop.f32.mrf.mxu0
        %1698 = vdwg.mxu0
        %1699 = vmatpush.bf16.msra.mxu0 %v1618
        %1700 = vmatpush.bf16.msra.mxu0 %v1614
        %1701 = vmatpush.bf16.msra.mxu0 %v1610
        %1702 = vmatpush.bf16.msra.mxu0 %v1606
        %1703 = vmatpush.bf16.msra.mxu0 %v1602
        %1704 = vmatpush.bf16.msra.mxu0 %v1598
        %1705 = vmatpush.bf16.msra.mxu0 %v1594
        %1706 = vmatpush.bf16.msra.mxu0 %v1590
        %1707 = vmatmul.bf16.gmra.mxu0 %v1363
        %v1708 = vpop.f32.mrf.mxu0
        %v1709 = vadd.f32 %v1696, %v1708
        %v1710 = vpop.f32.mrf.mxu0
        %1711 = vdwg.mxu0
        %1712 = vmatpush.bf16.msra.mxu0 %v1587
        %1713 = vmatpush.bf16.msra.mxu0 %v1583
        %1714 = vmatpush.bf16.msra.mxu0 %v1579
        %1715 = vmatpush.bf16.msra.mxu0 %v1575
        %1716 = vmatpush.bf16.msra.mxu0 %v1571
        %1717 = vmatpush.bf16.msra.mxu0 %v1567
        %1718 = vmatpush.bf16.msra.mxu0 %v1563
        %1719 = vmatpush.bf16.msra.mxu0 %v1559
        %1720 = vmatmul.bf16.gmra.mxu0 %v1362
        %v1721 = vpop.f32.mrf.mxu0
        %v1722 = vadd.f32 0.0, %v1721
        %v1723 = vpop.f32.mrf.mxu0
        %1724 = vdwg.mxu0
        %1725 = vmatpush.bf16.msra.mxu0 %v1619
        %1726 = vmatpush.bf16.msra.mxu0 %v1615
        %1727 = vmatpush.bf16.msra.mxu0 %v1611
        %1728 = vmatpush.bf16.msra.mxu0 %v1607
        %1729 = vmatpush.bf16.msra.mxu0 %v1603
        %1730 = vmatpush.bf16.msra.mxu0 %v1599
        %1731 = vmatpush.bf16.msra.mxu0 %v1595
        %1732 = vmatpush.bf16.msra.mxu0 %v1591
        %1733 = vmatmul.bf16.gmra.mxu0 %v1363
        %v1734 = vpop.f32.mrf.mxu0
        %v1735 = vadd.f32 %v1722, %v1734
        %v1736 = vpop.f32.mrf.mxu0
        %1737 = vdwg.mxu0
        %1738 = vmatpush.bf16.msra.mxu0 %v1588
        %1739 = vmatpush.bf16.msra.mxu0 %v1584
        %1740 = vmatpush.bf16.msra.mxu0 %v1580
        %1741 = vmatpush.bf16.msra.mxu0 %v1576
        %1742 = vmatpush.bf16.msra.mxu0 %v1572
        %1743 = vmatpush.bf16.msra.mxu0 %v1568
        %1744 = vmatpush.bf16.msra.mxu0 %v1564
        %1745 = vmatpush.bf16.msra.mxu0 %v1560
        %1746 = vmatmul.bf16.gmra.mxu0 %v1362
        %v1747 = vpop.f32.mrf.mxu0
        %v1748 = vadd.f32 0.0, %v1747
        %v1749 = vpop.f32.mrf.mxu0
        %1750 = vdwg.mxu0
        %1751 = vmatpush.bf16.msra.mxu0 %v1620
        %1752 = vmatpush.bf16.msra.mxu0 %v1616
        %1753 = vmatpush.bf16.msra.mxu0 %v1612
        %1754 = vmatpush.bf16.msra.mxu0 %v1608
        %1755 = vmatpush.bf16.msra.mxu0 %v1604
        %1756 = vmatpush.bf16.msra.mxu0 %v1600
        %1757 = vmatpush.bf16.msra.mxu0 %v1596
        %1758 = vmatpush.bf16.msra.mxu0 %v1592
        %1759 = vmatmul.bf16.gmra.mxu0 %v1363
        %v1760 = vpop.f32.mrf.mxu0
        %v1761 = vadd.f32 %v1748, %v1760
        %v1762 = vpop.f32.mrf.mxu0
        %1763 = vdwg.mxu0
        %1764 = vmatpush.bf16.msra.mxu0 %v1589
        %1765 = vmatpush.bf16.msra.mxu0 %v1585
        %1766 = vmatpush.bf16.msra.mxu0 %v1581
        %1767 = vmatpush.bf16.msra.mxu0 %v1577
        %1768 = vmatpush.bf16.msra.mxu0 %v1573
        %1769 = vmatpush.bf16.msra.mxu0 %v1569
        %1770 = vmatpush.bf16.msra.mxu0 %v1565
        %1771 = vmatpush.bf16.msra.mxu0 %v1561
        %1772 = vmatmul.bf16.gmra.mxu0 %v1362
        %v1773 = vpop.f32.mrf.mxu0
        %v1774 = vadd.f32 0.0, %v1773
        %v1775 = vpop.f32.mrf.mxu0
        %1776 = vdwg.mxu0
        %1777 = vmatpush.bf16.msra.mxu0 %v1621
        %1778 = vmatpush.bf16.msra.mxu0 %v1617
        %1779 = vmatpush.bf16.msra.mxu0 %v1613
        %1780 = vmatpush.bf16.msra.mxu0 %v1609
        %1781 = vmatpush.bf16.msra.mxu0 %v1605
        %1782 = vmatpush.bf16.msra.mxu0 %v1601
        %1783 = vmatpush.bf16.msra.mxu0 %v1597
        %1784 = vmatpush.bf16.msra.mxu0 %v1593
        %1785 = vmatmul.bf16.gmra.mxu0 %v1363
        %v1786 = vpop.f32.mrf.mxu0
        %v1787 = vadd.f32 %v1774, %v1786
        %v1788 = vpop.f32.mrf.mxu0
        %1789 = vdwg.mxu0
        %v1794 = vrot.slane %v1709, 7
        %v1795 = vrot.slane %v1735, 7
        %v1796 = vrot.slane %v1761, 7
        %v1797 = vrot.slane %v1787, 7
        %v1802 = vadd.f32 %v1290, %v1794
        %v1803 = vadd.f32 %v1291, %v1795
        %v1804 = vadd.f32 %v1292, %v1796
        %v1805 = vadd.f32 %v1293, %v1797
        %1806 = vst [vmem:[#allocation2] sm:$0xfe] %v1802
        %1807 = vst [vmem:[#allocation2 + $0x8] sm:$0xfe] %v1803
        %1808 = vst [vmem:[#allocation2 + $0x10] sm:$0xfe] %v1804
        %1809 = vst [vmem:[#allocation2 + $0x18] sm:$0xfe] %v1805
        %v1810 = vld [vmem:[%s238] sm:$0xff]
        %v1811 = vld [vmem:[#allocation2] sm:$0xff]
        %v1812 = vld [vmem:[#allocation2 + $0x8] sm:$0xff]
        %v1813 = vld [vmem:[#allocation2 + $0x10] sm:$0xff]
        %v1814 = vld [vmem:[#allocation2 + $0x18] sm:$0xff]
        %s1815 = scalar_lea.vmem [#allocation3], 1536
        %v1816 = vld [vmem:[%s1815] sm:$0xff]
        %v1817 = vld [vmem:[%s1815 + $0x8] sm:$0xff]
        %v1818 = vld [vmem:[%s1815 + $0x10] sm:$0xff]
        %v1819 = vld [vmem:[%s1815 + $0x18] sm:$0xff]
        %v1820 = vld [vmem:[%s1815 + $0x20] sm:$0xff]
        %v1821 = vld [vmem:[%s1815 + $0x28] sm:$0xff]
        %v1822 = vld [vmem:[%s1815 + $0x30] sm:$0xff]
        %v1823 = vld [vmem:[%s1815 + $0x38] sm:$0xff]
        %v1824 = vld [vmem:[%s1815 + $0x40] sm:$0xff]
        %v1825 = vld [vmem:[%s1815 + $0x48] sm:$0xff]
        %v1826 = vld [vmem:[%s1815 + $0x50] sm:$0xff]
        %v1827 = vld [vmem:[%s1815 + $0x58] sm:$0xff]
        %v1828 = vld [vmem:[%s1815 + $0x60] sm:$0xff]
        %v1829 = vld [vmem:[%s1815 + $0x68] sm:$0xff]
        %v1830 = vld [vmem:[%s1815 + $0x70] sm:$0xff]
        %v1831 = vld [vmem:[%s1815 + $0x78] sm:$0xff]
        %v1832 = vld [vmem:[%s1815 + $0x80] sm:$0xff]
        %v1833 = vld [vmem:[%s1815 + $0x88] sm:$0xff]
        %v1834 = vld [vmem:[%s1815 + $0x90] sm:$0xff]
        %v1835 = vld [vmem:[%s1815 + $0x98] sm:$0xff]
        %v1836 = vld [vmem:[%s1815 + $0xa0] sm:$0xff]
        %v1837 = vld [vmem:[%s1815 + $0xa8] sm:$0xff]
        %v1838 = vld [vmem:[%s1815 + $0xb0] sm:$0xff]
        %v1839 = vld [vmem:[%s1815 + $0xb8] sm:$0xff]
        %v1840 = vld [vmem:[%s1815 + $0xc0] sm:$0xff]
        %v1841 = vld [vmem:[%s1815 + $0xc8] sm:$0xff]
        %v1842 = vld [vmem:[%s1815 + $0xd0] sm:$0xff]
        %v1843 = vld [vmem:[%s1815 + $0xd8] sm:$0xff]
        %v1844 = vld [vmem:[%s1815 + $0xe0] sm:$0xff]
        %v1845 = vld [vmem:[%s1815 + $0xe8] sm:$0xff]
        %v1846 = vld [vmem:[%s1815 + $0xf0] sm:$0xff]
        %v1847 = vld [vmem:[%s1815 + $0xf8] sm:$0xff]
        %v1848 = vld [vmem:[%s1815 + $0x100] sm:$0xff]
        %v1849 = vld [vmem:[%s1815 + $0x108] sm:$0xff]
        %v1850 = vld [vmem:[%s1815 + $0x110] sm:$0xff]
        %v1851 = vld [vmem:[%s1815 + $0x118] sm:$0xff]
        %v1852 = vld [vmem:[%s1815 + $0x120] sm:$0xff]
        %v1853 = vld [vmem:[%s1815 + $0x128] sm:$0xff]
        %v1854 = vld [vmem:[%s1815 + $0x130] sm:$0xff]
        %v1855 = vld [vmem:[%s1815 + $0x138] sm:$0xff]
        %v1856 = vld [vmem:[%s1815 + $0x140] sm:$0xff]
        %v1857 = vld [vmem:[%s1815 + $0x148] sm:$0xff]
        %v1858 = vld [vmem:[%s1815 + $0x150] sm:$0xff]
        %v1859 = vld [vmem:[%s1815 + $0x158] sm:$0xff]
        %v1860 = vld [vmem:[%s1815 + $0x160] sm:$0xff]
        %v1861 = vld [vmem:[%s1815 + $0x168] sm:$0xff]
        %v1862 = vld [vmem:[%s1815 + $0x170] sm:$0xff]
        %v1863 = vld [vmem:[%s1815 + $0x178] sm:$0xff]
        %v1864 = vld [vmem:[%s1815 + $0x180] sm:$0xff]
        %v1865 = vld [vmem:[%s1815 + $0x188] sm:$0xff]
        %v1866 = vld [vmem:[%s1815 + $0x190] sm:$0xff]
        %v1867 = vld [vmem:[%s1815 + $0x198] sm:$0xff]
        %v1868 = vld [vmem:[%s1815 + $0x1a0] sm:$0xff]
        %v1869 = vld [vmem:[%s1815 + $0x1a8] sm:$0xff]
        %v1870 = vld [vmem:[%s1815 + $0x1b0] sm:$0xff]
        %v1871 = vld [vmem:[%s1815 + $0x1b8] sm:$0xff]
        %v1872 = vld [vmem:[%s1815 + $0x1c0] sm:$0xff]
        %v1873 = vld [vmem:[%s1815 + $0x1c8] sm:$0xff]
        %v1874 = vld [vmem:[%s1815 + $0x1d0] sm:$0xff]
        %v1875 = vld [vmem:[%s1815 + $0x1d8] sm:$0xff]
        %v1876 = vld [vmem:[%s1815 + $0x1e0] sm:$0xff]
        %v1877 = vld [vmem:[%s1815 + $0x1e8] sm:$0xff]
        %v1878 = vld [vmem:[%s1815 + $0x1f0] sm:$0xff]
        %v1879 = vld [vmem:[%s1815 + $0x1f8] sm:$0xff]
        %v1881 = vunpack.c.l.b16 %v1810
        %v1882 = vunpack.c.h.b16 %v1810
        %v1883 = vpack.c.b16 %v1881, %v1881
        %v1884 = vpack.c.b16 %v1882, %v1882
        %v1951 = vunpack.c.l.b16 %v1816
        %v1952 = vunpack.c.h.b16 %v1816
        %v1953 = vunpack.c.l.b16 %v1817
        %v1954 = vunpack.c.h.b16 %v1817
        %v1955 = vunpack.c.l.b16 %v1818
        %v1956 = vunpack.c.h.b16 %v1818
        %v1957 = vunpack.c.l.b16 %v1819
        %v1958 = vunpack.c.h.b16 %v1819
        %v1959 = vunpack.c.l.b16 %v1820
        %v1960 = vunpack.c.h.b16 %v1820
        %v1961 = vunpack.c.l.b16 %v1821
        %v1962 = vunpack.c.h.b16 %v1821
        %v1963 = vunpack.c.l.b16 %v1822
        %v1964 = vunpack.c.h.b16 %v1822
        %v1965 = vunpack.c.l.b16 %v1823
        %v1966 = vunpack.c.h.b16 %v1823
        %v1967 = vunpack.c.l.b16 %v1824
        %v1968 = vunpack.c.h.b16 %v1824
        %v1969 = vunpack.c.l.b16 %v1825
        %v1970 = vunpack.c.h.b16 %v1825
        %v1971 = vunpack.c.l.b16 %v1826
        %v1972 = vunpack.c.h.b16 %v1826
        %v1973 = vunpack.c.l.b16 %v1827
        %v1974 = vunpack.c.h.b16 %v1827
        %v1975 = vunpack.c.l.b16 %v1828
        %v1976 = vunpack.c.h.b16 %v1828
        %v1977 = vunpack.c.l.b16 %v1829
        %v1978 = vunpack.c.h.b16 %v1829
        %v1979 = vunpack.c.l.b16 %v1830
        %v1980 = vunpack.c.h.b16 %v1830
        %v1981 = vunpack.c.l.b16 %v1831
        %v1982 = vunpack.c.h.b16 %v1831
        %v1983 = vunpack.c.l.b16 %v1832
        %v1984 = vunpack.c.h.b16 %v1832
        %v1985 = vunpack.c.l.b16 %v1833
        %v1986 = vunpack.c.h.b16 %v1833
        %v1987 = vunpack.c.l.b16 %v1834
        %v1988 = vunpack.c.h.b16 %v1834
        %v1989 = vunpack.c.l.b16 %v1835
        %v1990 = vunpack.c.h.b16 %v1835
        %v1991 = vunpack.c.l.b16 %v1836
        %v1992 = vunpack.c.h.b16 %v1836
        %v1993 = vunpack.c.l.b16 %v1837
        %v1994 = vunpack.c.h.b16 %v1837
        %v1995 = vunpack.c.l.b16 %v1838
        %v1996 = vunpack.c.h.b16 %v1838
        %v1997 = vunpack.c.l.b16 %v1839
        %v1998 = vunpack.c.h.b16 %v1839
        %v1999 = vunpack.c.l.b16 %v1840
        %v2000 = vunpack.c.h.b16 %v1840
        %v2001 = vunpack.c.l.b16 %v1841
        %v2002 = vunpack.c.h.b16 %v1841
        %v2003 = vunpack.c.l.b16 %v1842
        %v2004 = vunpack.c.h.b16 %v1842
        %v2005 = vunpack.c.l.b16 %v1843
        %v2006 = vunpack.c.h.b16 %v1843
        %v2007 = vunpack.c.l.b16 %v1844
        %v2008 = vunpack.c.h.b16 %v1844
        %v2009 = vunpack.c.l.b16 %v1845
        %v2010 = vunpack.c.h.b16 %v1845
        %v2011 = vunpack.c.l.b16 %v1846
        %v2012 = vunpack.c.h.b16 %v1846
        %v2013 = vunpack.c.l.b16 %v1847
        %v2014 = vunpack.c.h.b16 %v1847
        %v2015 = vunpack.c.l.b16 %v1848
        %v2016 = vunpack.c.h.b16 %v1848
        %v2017 = vunpack.c.l.b16 %v1849
        %v2018 = vunpack.c.h.b16 %v1849
        %v2019 = vunpack.c.l.b16 %v1850
        %v2020 = vunpack.c.h.b16 %v1850
        %v2021 = vunpack.c.l.b16 %v1851
        %v2022 = vunpack.c.h.b16 %v1851
        %v2023 = vunpack.c.l.b16 %v1852
        %v2024 = vunpack.c.h.b16 %v1852
        %v2025 = vunpack.c.l.b16 %v1853
        %v2026 = vunpack.c.h.b16 %v1853
        %v2027 = vunpack.c.l.b16 %v1854
        %v2028 = vunpack.c.h.b16 %v1854
        %v2029 = vunpack.c.l.b16 %v1855
        %v2030 = vunpack.c.h.b16 %v1855
        %v2031 = vunpack.c.l.b16 %v1856
        %v2032 = vunpack.c.h.b16 %v1856
        %v2033 = vunpack.c.l.b16 %v1857
        %v2034 = vunpack.c.h.b16 %v1857
        %v2035 = vunpack.c.l.b16 %v1858
        %v2036 = vunpack.c.h.b16 %v1858
        %v2037 = vunpack.c.l.b16 %v1859
        %v2038 = vunpack.c.h.b16 %v1859
        %v2039 = vunpack.c.l.b16 %v1860
        %v2040 = vunpack.c.h.b16 %v1860
        %v2041 = vunpack.c.l.b16 %v1861
        %v2042 = vunpack.c.h.b16 %v1861
        %v2043 = vunpack.c.l.b16 %v1862
        %v2044 = vunpack.c.h.b16 %v1862
        %v2045 = vunpack.c.l.b16 %v1863
        %v2046 = vunpack.c.h.b16 %v1863
        %v2047 = vunpack.c.l.b16 %v1864
        %v2048 = vunpack.c.h.b16 %v1864
        %v2049 = vunpack.c.l.b16 %v1865
        %v2050 = vunpack.c.h.b16 %v1865
        %v2051 = vunpack.c.l.b16 %v1866
        %v2052 = vunpack.c.h.b16 %v1866
        %v2053 = vunpack.c.l.b16 %v1867
        %v2054 = vunpack.c.h.b16 %v1867
        %v2055 = vunpack.c.l.b16 %v1868
        %v2056 = vunpack.c.h.b16 %v1868
        %v2057 = vunpack.c.l.b16 %v1869
        %v2058 = vunpack.c.h.b16 %v1869
        %v2059 = vunpack.c.l.b16 %v1870
        %v2060 = vunpack.c.h.b16 %v1870
        %v2061 = vunpack.c.l.b16 %v1871
        %v2062 = vunpack.c.h.b16 %v1871
        %v2063 = vunpack.c.l.b16 %v1872
        %v2064 = vunpack.c.h.b16 %v1872
        %v2065 = vunpack.c.l.b16 %v1873
        %v2066 = vunpack.c.h.b16 %v1873
        %v2067 = vunpack.c.l.b16 %v1874
        %v2068 = vunpack.c.h.b16 %v1874
        %v2069 = vunpack.c.l.b16 %v1875
        %v2070 = vunpack.c.h.b16 %v1875
        %v2071 = vunpack.c.l.b16 %v1876
        %v2072 = vunpack.c.h.b16 %v1876
        %v2073 = vunpack.c.l.b16 %v1877
        %v2074 = vunpack.c.h.b16 %v1877
        %v2075 = vunpack.c.l.b16 %v1878
        %v2076 = vunpack.c.h.b16 %v1878
        %v2077 = vunpack.c.l.b16 %v1879
        %v2078 = vunpack.c.h.b16 %v1879
        %v2079 = vpack.c.b16 %v1955, %v1951
        %v2080 = vpack.c.b16 %v1956, %v1952
        %v2081 = vpack.c.b16 %v1957, %v1953
        %v2082 = vpack.c.b16 %v1958, %v1954
        %v2083 = vpack.c.b16 %v1963, %v1959
        %v2084 = vpack.c.b16 %v1964, %v1960
        %v2085 = vpack.c.b16 %v1965, %v1961
        %v2086 = vpack.c.b16 %v1966, %v1962
        %v2087 = vpack.c.b16 %v1971, %v1967
        %v2088 = vpack.c.b16 %v1972, %v1968
        %v2089 = vpack.c.b16 %v1973, %v1969
        %v2090 = vpack.c.b16 %v1974, %v1970
        %v2091 = vpack.c.b16 %v1979, %v1975
        %v2092 = vpack.c.b16 %v1980, %v1976
        %v2093 = vpack.c.b16 %v1981, %v1977
        %v2094 = vpack.c.b16 %v1982, %v1978
        %v2095 = vpack.c.b16 %v1987, %v1983
        %v2096 = vpack.c.b16 %v1988, %v1984
        %v2097 = vpack.c.b16 %v1989, %v1985
        %v2098 = vpack.c.b16 %v1990, %v1986
        %v2099 = vpack.c.b16 %v1995, %v1991
        %v2100 = vpack.c.b16 %v1996, %v1992
        %v2101 = vpack.c.b16 %v1997, %v1993
        %v2102 = vpack.c.b16 %v1998, %v1994
        %v2103 = vpack.c.b16 %v2003, %v1999
        %v2104 = vpack.c.b16 %v2004, %v2000
        %v2105 = vpack.c.b16 %v2005, %v2001
        %v2106 = vpack.c.b16 %v2006, %v2002
        %v2107 = vpack.c.b16 %v2011, %v2007
        %v2108 = vpack.c.b16 %v2012, %v2008
        %v2109 = vpack.c.b16 %v2013, %v2009
        %v2110 = vpack.c.b16 %v2014, %v2010
        %v2111 = vpack.c.b16 %v2019, %v2015
        %v2112 = vpack.c.b16 %v2020, %v2016
        %v2113 = vpack.c.b16 %v2021, %v2017
        %v2114 = vpack.c.b16 %v2022, %v2018
        %v2115 = vpack.c.b16 %v2027, %v2023
        %v2116 = vpack.c.b16 %v2028, %v2024
        %v2117 = vpack.c.b16 %v2029, %v2025
        %v2118 = vpack.c.b16 %v2030, %v2026
        %v2119 = vpack.c.b16 %v2035, %v2031
        %v2120 = vpack.c.b16 %v2036, %v2032
        %v2121 = vpack.c.b16 %v2037, %v2033
        %v2122 = vpack.c.b16 %v2038, %v2034
        %v2123 = vpack.c.b16 %v2043, %v2039
        %v2124 = vpack.c.b16 %v2044, %v2040
        %v2125 = vpack.c.b16 %v2045, %v2041
        %v2126 = vpack.c.b16 %v2046, %v2042
        %v2127 = vpack.c.b16 %v2051, %v2047
        %v2128 = vpack.c.b16 %v2052, %v2048
        %v2129 = vpack.c.b16 %v2053, %v2049
        %v2130 = vpack.c.b16 %v2054, %v2050
        %v2131 = vpack.c.b16 %v2059, %v2055
        %v2132 = vpack.c.b16 %v2060, %v2056
        %v2133 = vpack.c.b16 %v2061, %v2057
        %v2134 = vpack.c.b16 %v2062, %v2058
        %v2135 = vpack.c.b16 %v2067, %v2063
        %v2136 = vpack.c.b16 %v2068, %v2064
        %v2137 = vpack.c.b16 %v2069, %v2065
        %v2138 = vpack.c.b16 %v2070, %v2066
        %v2139 = vpack.c.b16 %v2075, %v2071
        %v2140 = vpack.c.b16 %v2076, %v2072
        %v2141 = vpack.c.b16 %v2077, %v2073
        %v2142 = vpack.c.b16 %v2078, %v2074
        %2207 = vmatpush.bf16.msra.mxu0 %v2107
        %2208 = vmatpush.bf16.msra.mxu0 %v2103
        %2209 = vmatpush.bf16.msra.mxu0 %v2099
        %2210 = vmatpush.bf16.msra.mxu0 %v2095
        %2211 = vmatpush.bf16.msra.mxu0 %v2091
        %2212 = vmatpush.bf16.msra.mxu0 %v2087
        %2213 = vmatpush.bf16.msra.mxu0 %v2083
        %2214 = vmatpush.bf16.msra.mxu0 %v2079
        %2215 = vmatmul.bf16.gmra.mxu0 %v1883
        %v2216 = vpop.f32.mrf.mxu0
        %v2217 = vadd.f32 0.0, %v2216
        %v2218 = vpop.f32.mrf.mxu0
        %2219 = vdwg.mxu0
        %2220 = vmatpush.bf16.msra.mxu0 %v2139
        %2221 = vmatpush.bf16.msra.mxu0 %v2135
        %2222 = vmatpush.bf16.msra.mxu0 %v2131
        %2223 = vmatpush.bf16.msra.mxu0 %v2127
        %2224 = vmatpush.bf16.msra.mxu0 %v2123
        %2225 = vmatpush.bf16.msra.mxu0 %v2119
        %2226 = vmatpush.bf16.msra.mxu0 %v2115
        %2227 = vmatpush.bf16.msra.mxu0 %v2111
        %2228 = vmatmul.bf16.gmra.mxu0 %v1884
        %v2229 = vpop.f32.mrf.mxu0
        %v2230 = vadd.f32 %v2217, %v2229
        %v2231 = vpop.f32.mrf.mxu0
        %2232 = vdwg.mxu0
        %2233 = vmatpush.bf16.msra.mxu0 %v2108
        %2234 = vmatpush.bf16.msra.mxu0 %v2104
        %2235 = vmatpush.bf16.msra.mxu0 %v2100
        %2236 = vmatpush.bf16.msra.mxu0 %v2096
        %2237 = vmatpush.bf16.msra.mxu0 %v2092
        %2238 = vmatpush.bf16.msra.mxu0 %v2088
        %2239 = vmatpush.bf16.msra.mxu0 %v2084
        %2240 = vmatpush.bf16.msra.mxu0 %v2080
        %2241 = vmatmul.bf16.gmra.mxu0 %v1883
        %v2242 = vpop.f32.mrf.mxu0
        %v2243 = vadd.f32 0.0, %v2242
        %v2244 = vpop.f32.mrf.mxu0
        %2245 = vdwg.mxu0
        %2246 = vmatpush.bf16.msra.mxu0 %v2140
        %2247 = vmatpush.bf16.msra.mxu0 %v2136
        %2248 = vmatpush.bf16.msra.mxu0 %v2132
        %2249 = vmatpush.bf16.msra.mxu0 %v2128
        %2250 = vmatpush.bf16.msra.mxu0 %v2124
        %2251 = vmatpush.bf16.msra.mxu0 %v2120
        %2252 = vmatpush.bf16.msra.mxu0 %v2116
        %2253 = vmatpush.bf16.msra.mxu0 %v2112
        %2254 = vmatmul.bf16.gmra.mxu0 %v1884
        %v2255 = vpop.f32.mrf.mxu0
        %v2256 = vadd.f32 %v2243, %v2255
        %v2257 = vpop.f32.mrf.mxu0
        %2258 = vdwg.mxu0
        %2259 = vmatpush.bf16.msra.mxu0 %v2109
        %2260 = vmatpush.bf16.msra.mxu0 %v2105
        %2261 = vmatpush.bf16.msra.mxu0 %v2101
        %2262 = vmatpush.bf16.msra.mxu0 %v2097
        %2263 = vmatpush.bf16.msra.mxu0 %v2093
        %2264 = vmatpush.bf16.msra.mxu0 %v2089
        %2265 = vmatpush.bf16.msra.mxu0 %v2085
        %2266 = vmatpush.bf16.msra.mxu0 %v2081
        %2267 = vmatmul.bf16.gmra.mxu0 %v1883
        %v2268 = vpop.f32.mrf.mxu0
        %v2269 = vadd.f32 0.0, %v2268
        %v2270 = vpop.f32.mrf.mxu0
        %2271 = vdwg.mxu0
        %2272 = vmatpush.bf16.msra.mxu0 %v2141
        %2273 = vmatpush.bf16.msra.mxu0 %v2137
        %2274 = vmatpush.bf16.msra.mxu0 %v2133
        %2275 = vmatpush.bf16.msra.mxu0 %v2129
        %2276 = vmatpush.bf16.msra.mxu0 %v2125
        %2277 = vmatpush.bf16.msra.mxu0 %v2121
        %2278 = vmatpush.bf16.msra.mxu0 %v2117
        %2279 = vmatpush.bf16.msra.mxu0 %v2113
        %2280 = vmatmul.bf16.gmra.mxu0 %v1884
        %v2281 = vpop.f32.mrf.mxu0
        %v2282 = vadd.f32 %v2269, %v2281
        %v2283 = vpop.f32.mrf.mxu0
        %2284 = vdwg.mxu0
        %2285 = vmatpush.bf16.msra.mxu0 %v2110
        %2286 = vmatpush.bf16.msra.mxu0 %v2106
        %2287 = vmatpush.bf16.msra.mxu0 %v2102
        %2288 = vmatpush.bf16.msra.mxu0 %v2098
        %2289 = vmatpush.bf16.msra.mxu0 %v2094
        %2290 = vmatpush.bf16.msra.mxu0 %v2090
        %2291 = vmatpush.bf16.msra.mxu0 %v2086
        %2292 = vmatpush.bf16.msra.mxu0 %v2082
        %2293 = vmatmul.bf16.gmra.mxu0 %v1883
        %v2294 = vpop.f32.mrf.mxu0
        %v2295 = vadd.f32 0.0, %v2294
        %v2296 = vpop.f32.mrf.mxu0
        %2297 = vdwg.mxu0
        %2298 = vmatpush.bf16.msra.mxu0 %v2142
        %2299 = vmatpush.bf16.msra.mxu0 %v2138
        %2300 = vmatpush.bf16.msra.mxu0 %v2134
        %2301 = vmatpush.bf16.msra.mxu0 %v2130
        %2302 = vmatpush.bf16.msra.mxu0 %v2126
        %2303 = vmatpush.bf16.msra.mxu0 %v2122
        %2304 = vmatpush.bf16.msra.mxu0 %v2118
        %2305 = vmatpush.bf16.msra.mxu0 %v2114
        %2306 = vmatmul.bf16.gmra.mxu0 %v1884
        %v2307 = vpop.f32.mrf.mxu0
        %v2308 = vadd.f32 %v2295, %v2307
        %v2309 = vpop.f32.mrf.mxu0
        %2310 = vdwg.mxu0
        %v2311 = vadd.f32 %v1811, %v2230
        %v2312 = vadd.f32 %v1812, %v2256
        %v2313 = vadd.f32 %v1813, %v2282
        %v2314 = vadd.f32 %v1814, %v2308
        %2315 = vst [vmem:[#allocation2] sm:$0xff] %v2311
        %2316 = vst [vmem:[#allocation2 + $0x8] sm:$0xff] %v2312
        %2317 = vst [vmem:[#allocation2 + $0x10] sm:$0xff] %v2313
        %2318 = vst [vmem:[#allocation2 + $0x18] sm:$0xff] %v2314
        %v2319 = vld [vmem:[%s238] sm:$0xff]
        %v2320 = vld [vmem:[#allocation2] sm:$0x7f]
        %v2321 = vld [vmem:[#allocation2 + $0x8] sm:$0x7f]
        %v2322 = vld [vmem:[#allocation2 + $0x10] sm:$0x7f]
        %v2323 = vld [vmem:[#allocation2 + $0x18] sm:$0x7f]
        %s2324 = scalar_lea.vmem [#allocation3], 2048
        %v2325 = vld [vmem:[%s2324] sm:$0xff]
        %v2326 = vld [vmem:[%s2324 + $0x8] sm:$0xff]
        %v2327 = vld [vmem:[%s2324 + $0x10] sm:$0xff]
        %v2328 = vld [vmem:[%s2324 + $0x18] sm:$0xff]
        %v2329 = vld [vmem:[%s2324 + $0x20] sm:$0xff]
        %v2330 = vld [vmem:[%s2324 + $0x28] sm:$0xff]
        %v2331 = vld [vmem:[%s2324 + $0x30] sm:$0xff]
        %v2332 = vld [vmem:[%s2324 + $0x38] sm:$0xff]
        %v2333 = vld [vmem:[%s2324 + $0x40] sm:$0xff]
        %v2334 = vld [vmem:[%s2324 + $0x48] sm:$0xff]
        %v2335 = vld [vmem:[%s2324 + $0x50] sm:$0xff]
        %v2336 = vld [vmem:[%s2324 + $0x58] sm:$0xff]
        %v2337 = vld [vmem:[%s2324 + $0x60] sm:$0xff]
        %v2338 = vld [vmem:[%s2324 + $0x68] sm:$0xff]
        %v2339 = vld [vmem:[%s2324 + $0x70] sm:$0xff]
        %v2340 = vld [vmem:[%s2324 + $0x78] sm:$0xff]
        %v2341 = vld [vmem:[%s2324 + $0x80] sm:$0xff]
        %v2342 = vld [vmem:[%s2324 + $0x88] sm:$0xff]
        %v2343 = vld [vmem:[%s2324 + $0x90] sm:$0xff]
        %v2344 = vld [vmem:[%s2324 + $0x98] sm:$0xff]
        %v2345 = vld [vmem:[%s2324 + $0xa0] sm:$0xff]
        %v2346 = vld [vmem:[%s2324 + $0xa8] sm:$0xff]
        %v2347 = vld [vmem:[%s2324 + $0xb0] sm:$0xff]
        %v2348 = vld [vmem:[%s2324 + $0xb8] sm:$0xff]
        %v2349 = vld [vmem:[%s2324 + $0xc0] sm:$0xff]
        %v2350 = vld [vmem:[%s2324 + $0xc8] sm:$0xff]
        %v2351 = vld [vmem:[%s2324 + $0xd0] sm:$0xff]
        %v2352 = vld [vmem:[%s2324 + $0xd8] sm:$0xff]
        %v2353 = vld [vmem:[%s2324 + $0xe0] sm:$0xff]
        %v2354 = vld [vmem:[%s2324 + $0xe8] sm:$0xff]
        %v2355 = vld [vmem:[%s2324 + $0xf0] sm:$0xff]
        %v2356 = vld [vmem:[%s2324 + $0xf8] sm:$0xff]
        %v2357 = vld [vmem:[%s2324 + $0x100] sm:$0xff]
        %v2358 = vld [vmem:[%s2324 + $0x108] sm:$0xff]
        %v2359 = vld [vmem:[%s2324 + $0x110] sm:$0xff]
        %v2360 = vld [vmem:[%s2324 + $0x118] sm:$0xff]
        %v2361 = vld [vmem:[%s2324 + $0x120] sm:$0xff]
        %v2362 = vld [vmem:[%s2324 + $0x128] sm:$0xff]
        %v2363 = vld [vmem:[%s2324 + $0x130] sm:$0xff]
        %v2364 = vld [vmem:[%s2324 + $0x138] sm:$0xff]
        %v2365 = vld [vmem:[%s2324 + $0x140] sm:$0xff]
        %v2366 = vld [vmem:[%s2324 + $0x148] sm:$0xff]
        %v2367 = vld [vmem:[%s2324 + $0x150] sm:$0xff]
        %v2368 = vld [vmem:[%s2324 + $0x158] sm:$0xff]
        %v2369 = vld [vmem:[%s2324 + $0x160] sm:$0xff]
        %v2370 = vld [vmem:[%s2324 + $0x168] sm:$0xff]
        %v2371 = vld [vmem:[%s2324 + $0x170] sm:$0xff]
        %v2372 = vld [vmem:[%s2324 + $0x178] sm:$0xff]
        %v2373 = vld [vmem:[%s2324 + $0x180] sm:$0xff]
        %v2374 = vld [vmem:[%s2324 + $0x188] sm:$0xff]
        %v2375 = vld [vmem:[%s2324 + $0x190] sm:$0xff]
        %v2376 = vld [vmem:[%s2324 + $0x198] sm:$0xff]
        %v2377 = vld [vmem:[%s2324 + $0x1a0] sm:$0xff]
        %v2378 = vld [vmem:[%s2324 + $0x1a8] sm:$0xff]
        %v2379 = vld [vmem:[%s2324 + $0x1b0] sm:$0xff]
        %v2380 = vld [vmem:[%s2324 + $0x1b8] sm:$0xff]
        %v2381 = vld [vmem:[%s2324 + $0x1c0] sm:$0xff]
        %v2382 = vld [vmem:[%s2324 + $0x1c8] sm:$0xff]
        %v2383 = vld [vmem:[%s2324 + $0x1d0] sm:$0xff]
        %v2384 = vld [vmem:[%s2324 + $0x1d8] sm:$0xff]
        %v2385 = vld [vmem:[%s2324 + $0x1e0] sm:$0xff]
        %v2386 = vld [vmem:[%s2324 + $0x1e8] sm:$0xff]
        %v2387 = vld [vmem:[%s2324 + $0x1f0] sm:$0xff]
        %v2388 = vld [vmem:[%s2324 + $0x1f8] sm:$0xff]
        %v2390 = vunpack.c.l.b16 %v2319
        %v2391 = vunpack.c.h.b16 %v2319
        %v2392 = vpack.c.b16 %v2390, %v2390
        %v2393 = vpack.c.b16 %v2391, %v2391
        %v2395 = vshrl.u32 %v2392, 16
        %v2397 = vshll.u32 %v2392, 16
        %v2399 = vrot.slane %v2397, 1
        %v2400 = vor.u32 %v2395, %v2399
        %v2402 = vshrl.u32 %v2393, 16
        %v2404 = vshll.u32 %v2393, 16
        %v2406 = vrot.slane %v2404, 1
        %v2407 = vor.u32 %v2402, %v2406
        %v2474 = vunpack.c.l.b16 %v2325
        %v2475 = vunpack.c.h.b16 %v2325
        %v2476 = vunpack.c.l.b16 %v2326
        %v2477 = vunpack.c.h.b16 %v2326
        %v2478 = vunpack.c.l.b16 %v2327
        %v2479 = vunpack.c.h.b16 %v2327
        %v2480 = vunpack.c.l.b16 %v2328
        %v2481 = vunpack.c.h.b16 %v2328
        %v2482 = vunpack.c.l.b16 %v2329
        %v2483 = vunpack.c.h.b16 %v2329
        %v2484 = vunpack.c.l.b16 %v2330
        %v2485 = vunpack.c.h.b16 %v2330
        %v2486 = vunpack.c.l.b16 %v2331
        %v2487 = vunpack.c.h.b16 %v2331
        %v2488 = vunpack.c.l.b16 %v2332
        %v2489 = vunpack.c.h.b16 %v2332
        %v2490 = vunpack.c.l.b16 %v2333
        %v2491 = vunpack.c.h.b16 %v2333
        %v2492 = vunpack.c.l.b16 %v2334
        %v2493 = vunpack.c.h.b16 %v2334
        %v2494 = vunpack.c.l.b16 %v2335
        %v2495 = vunpack.c.h.b16 %v2335
        %v2496 = vunpack.c.l.b16 %v2336
        %v2497 = vunpack.c.h.b16 %v2336
        %v2498 = vunpack.c.l.b16 %v2337
        %v2499 = vunpack.c.h.b16 %v2337
        %v2500 = vunpack.c.l.b16 %v2338
        %v2501 = vunpack.c.h.b16 %v2338
        %v2502 = vunpack.c.l.b16 %v2339
        %v2503 = vunpack.c.h.b16 %v2339
        %v2504 = vunpack.c.l.b16 %v2340
        %v2505 = vunpack.c.h.b16 %v2340
        %v2506 = vunpack.c.l.b16 %v2341
        %v2507 = vunpack.c.h.b16 %v2341
        %v2508 = vunpack.c.l.b16 %v2342
        %v2509 = vunpack.c.h.b16 %v2342
        %v2510 = vunpack.c.l.b16 %v2343
        %v2511 = vunpack.c.h.b16 %v2343
        %v2512 = vunpack.c.l.b16 %v2344
        %v2513 = vunpack.c.h.b16 %v2344
        %v2514 = vunpack.c.l.b16 %v2345
        %v2515 = vunpack.c.h.b16 %v2345
        %v2516 = vunpack.c.l.b16 %v2346
        %v2517 = vunpack.c.h.b16 %v2346
        %v2518 = vunpack.c.l.b16 %v2347
        %v2519 = vunpack.c.h.b16 %v2347
        %v2520 = vunpack.c.l.b16 %v2348
        %v2521 = vunpack.c.h.b16 %v2348
        %v2522 = vunpack.c.l.b16 %v2349
        %v2523 = vunpack.c.h.b16 %v2349
        %v2524 = vunpack.c.l.b16 %v2350
        %v2525 = vunpack.c.h.b16 %v2350
        %v2526 = vunpack.c.l.b16 %v2351
        %v2527 = vunpack.c.h.b16 %v2351
        %v2528 = vunpack.c.l.b16 %v2352
        %v2529 = vunpack.c.h.b16 %v2352
        %v2530 = vunpack.c.l.b16 %v2353
        %v2531 = vunpack.c.h.b16 %v2353
        %v2532 = vunpack.c.l.b16 %v2354
        %v2533 = vunpack.c.h.b16 %v2354
        %v2534 = vunpack.c.l.b16 %v2355
        %v2535 = vunpack.c.h.b16 %v2355
        %v2536 = vunpack.c.l.b16 %v2356
        %v2537 = vunpack.c.h.b16 %v2356
        %v2538 = vunpack.c.l.b16 %v2357
        %v2539 = vunpack.c.h.b16 %v2357
        %v2540 = vunpack.c.l.b16 %v2358
        %v2541 = vunpack.c.h.b16 %v2358
        %v2542 = vunpack.c.l.b16 %v2359
        %v2543 = vunpack.c.h.b16 %v2359
        %v2544 = vunpack.c.l.b16 %v2360
        %v2545 = vunpack.c.h.b16 %v2360
        %v2546 = vunpack.c.l.b16 %v2361
        %v2547 = vunpack.c.h.b16 %v2361
        %v2548 = vunpack.c.l.b16 %v2362
        %v2549 = vunpack.c.h.b16 %v2362
        %v2550 = vunpack.c.l.b16 %v2363
        %v2551 = vunpack.c.h.b16 %v2363
        %v2552 = vunpack.c.l.b16 %v2364
        %v2553 = vunpack.c.h.b16 %v2364
        %v2554 = vunpack.c.l.b16 %v2365
        %v2555 = vunpack.c.h.b16 %v2365
        %v2556 = vunpack.c.l.b16 %v2366
        %v2557 = vunpack.c.h.b16 %v2366
        %v2558 = vunpack.c.l.b16 %v2367
        %v2559 = vunpack.c.h.b16 %v2367
        %v2560 = vunpack.c.l.b16 %v2368
        %v2561 = vunpack.c.h.b16 %v2368
        %v2562 = vunpack.c.l.b16 %v2369
        %v2563 = vunpack.c.h.b16 %v2369
        %v2564 = vunpack.c.l.b16 %v2370
        %v2565 = vunpack.c.h.b16 %v2370
        %v2566 = vunpack.c.l.b16 %v2371
        %v2567 = vunpack.c.h.b16 %v2371
        %v2568 = vunpack.c.l.b16 %v2372
        %v2569 = vunpack.c.h.b16 %v2372
        %v2570 = vunpack.c.l.b16 %v2373
        %v2571 = vunpack.c.h.b16 %v2373
        %v2572 = vunpack.c.l.b16 %v2374
        %v2573 = vunpack.c.h.b16 %v2374
        %v2574 = vunpack.c.l.b16 %v2375
        %v2575 = vunpack.c.h.b16 %v2375
        %v2576 = vunpack.c.l.b16 %v2376
        %v2577 = vunpack.c.h.b16 %v2376
        %v2578 = vunpack.c.l.b16 %v2377
        %v2579 = vunpack.c.h.b16 %v2377
        %v2580 = vunpack.c.l.b16 %v2378
        %v2581 = vunpack.c.h.b16 %v2378
        %v2582 = vunpack.c.l.b16 %v2379
        %v2583 = vunpack.c.h.b16 %v2379
        %v2584 = vunpack.c.l.b16 %v2380
        %v2585 = vunpack.c.h.b16 %v2380
        %v2586 = vunpack.c.l.b16 %v2381
        %v2587 = vunpack.c.h.b16 %v2381
        %v2588 = vunpack.c.l.b16 %v2382
        %v2589 = vunpack.c.h.b16 %v2382
        %v2590 = vunpack.c.l.b16 %v2383
        %v2591 = vunpack.c.h.b16 %v2383
        %v2592 = vunpack.c.l.b16 %v2384
        %v2593 = vunpack.c.h.b16 %v2384
        %v2594 = vunpack.c.l.b16 %v2385
        %v2595 = vunpack.c.h.b16 %v2385
        %v2596 = vunpack.c.l.b16 %v2386
        %v2597 = vunpack.c.h.b16 %v2386
        %v2598 = vunpack.c.l.b16 %v2387
        %v2599 = vunpack.c.h.b16 %v2387
        %v2600 = vunpack.c.l.b16 %v2388
        %v2601 = vunpack.c.h.b16 %v2388
        %v2602 = vpack.c.b16 %v2478, %v2474
        %v2603 = vpack.c.b16 %v2479, %v2475
        %v2604 = vpack.c.b16 %v2480, %v2476
        %v2605 = vpack.c.b16 %v2481, %v2477
        %v2606 = vpack.c.b16 %v2486, %v2482
        %v2607 = vpack.c.b16 %v2487, %v2483
        %v2608 = vpack.c.b16 %v2488, %v2484
        %v2609 = vpack.c.b16 %v2489, %v2485
        %v2610 = vpack.c.b16 %v2494, %v2490
        %v2611 = vpack.c.b16 %v2495, %v2491
        %v2612 = vpack.c.b16 %v2496, %v2492
        %v2613 = vpack.c.b16 %v2497, %v2493
        %v2614 = vpack.c.b16 %v2502, %v2498
        %v2615 = vpack.c.b16 %v2503, %v2499
        %v2616 = vpack.c.b16 %v2504, %v2500
        %v2617 = vpack.c.b16 %v2505, %v2501
        %v2618 = vpack.c.b16 %v2510, %v2506
        %v2619 = vpack.c.b16 %v2511, %v2507
        %v2620 = vpack.c.b16 %v2512, %v2508
        %v2621 = vpack.c.b16 %v2513, %v2509
        %v2622 = vpack.c.b16 %v2518, %v2514
        %v2623 = vpack.c.b16 %v2519, %v2515
        %v2624 = vpack.c.b16 %v2520, %v2516
        %v2625 = vpack.c.b16 %v2521, %v2517
        %v2626 = vpack.c.b16 %v2526, %v2522
        %v2627 = vpack.c.b16 %v2527, %v2523
        %v2628 = vpack.c.b16 %v2528, %v2524
        %v2629 = vpack.c.b16 %v2529, %v2525
        %v2630 = vpack.c.b16 %v2534, %v2530
        %v2631 = vpack.c.b16 %v2535, %v2531
        %v2632 = vpack.c.b16 %v2536, %v2532
        %v2633 = vpack.c.b16 %v2537, %v2533
        %v2634 = vpack.c.b16 %v2542, %v2538
        %v2635 = vpack.c.b16 %v2543, %v2539
        %v2636 = vpack.c.b16 %v2544, %v2540
        %v2637 = vpack.c.b16 %v2545, %v2541
        %v2638 = vpack.c.b16 %v2550, %v2546
        %v2639 = vpack.c.b16 %v2551, %v2547
        %v2640 = vpack.c.b16 %v2552, %v2548
        %v2641 = vpack.c.b16 %v2553, %v2549
        %v2642 = vpack.c.b16 %v2558, %v2554
        %v2643 = vpack.c.b16 %v2559, %v2555
        %v2644 = vpack.c.b16 %v2560, %v2556
        %v2645 = vpack.c.b16 %v2561, %v2557
        %v2646 = vpack.c.b16 %v2566, %v2562
        %v2647 = vpack.c.b16 %v2567, %v2563
        %v2648 = vpack.c.b16 %v2568, %v2564
        %v2649 = vpack.c.b16 %v2569, %v2565
        %v2650 = vpack.c.b16 %v2574, %v2570
        %v2651 = vpack.c.b16 %v2575, %v2571
        %v2652 = vpack.c.b16 %v2576, %v2572
        %v2653 = vpack.c.b16 %v2577, %v2573
        %v2654 = vpack.c.b16 %v2582, %v2578
        %v2655 = vpack.c.b16 %v2583, %v2579
        %v2656 = vpack.c.b16 %v2584, %v2580
        %v2657 = vpack.c.b16 %v2585, %v2581
        %v2658 = vpack.c.b16 %v2590, %v2586
        %v2659 = vpack.c.b16 %v2591, %v2587
        %v2660 = vpack.c.b16 %v2592, %v2588
        %v2661 = vpack.c.b16 %v2593, %v2589
        %v2662 = vpack.c.b16 %v2598, %v2594
        %v2663 = vpack.c.b16 %v2599, %v2595
        %v2664 = vpack.c.b16 %v2600, %v2596
        %v2665 = vpack.c.b16 %v2601, %v2597
        %2730 = vmatpush.bf16.msra.mxu0 %v2630
        %2731 = vmatpush.bf16.msra.mxu0 %v2626
        %2732 = vmatpush.bf16.msra.mxu0 %v2622
        %2733 = vmatpush.bf16.msra.mxu0 %v2618
        %2734 = vmatpush.bf16.msra.mxu0 %v2614
        %2735 = vmatpush.bf16.msra.mxu0 %v2610
        %2736 = vmatpush.bf16.msra.mxu0 %v2606
        %2737 = vmatpush.bf16.msra.mxu0 %v2602
        %2738 = vmatmul.bf16.gmra.mxu0 %v2400
        %v2739 = vpop.f32.mrf.mxu0
        %v2740 = vadd.f32 0.0, %v2739
        %v2741 = vpop.f32.mrf.mxu0
        %2742 = vdwg.mxu0
        %2743 = vmatpush.bf16.msra.mxu0 %v2662
        %2744 = vmatpush.bf16.msra.mxu0 %v2658
        %2745 = vmatpush.bf16.msra.mxu0 %v2654
        %2746 = vmatpush.bf16.msra.mxu0 %v2650
        %2747 = vmatpush.bf16.msra.mxu0 %v2646
        %2748 = vmatpush.bf16.msra.mxu0 %v2642
        %2749 = vmatpush.bf16.msra.mxu0 %v2638
        %2750 = vmatpush.bf16.msra.mxu0 %v2634
        %2751 = vmatmul.bf16.gmra.mxu0 %v2407
        %v2752 = vpop.f32.mrf.mxu0
        %v2753 = vadd.f32 %v2740, %v2752
        %v2754 = vpop.f32.mrf.mxu0
        %2755 = vdwg.mxu0
        %2756 = vmatpush.bf16.msra.mxu0 %v2631
        %2757 = vmatpush.bf16.msra.mxu0 %v2627
        %2758 = vmatpush.bf16.msra.mxu0 %v2623
        %2759 = vmatpush.bf16.msra.mxu0 %v2619
        %2760 = vmatpush.bf16.msra.mxu0 %v2615
        %2761 = vmatpush.bf16.msra.mxu0 %v2611
        %2762 = vmatpush.bf16.msra.mxu0 %v2607
        %2763 = vmatpush.bf16.msra.mxu0 %v2603
        %2764 = vmatmul.bf16.gmra.mxu0 %v2400
        %v2765 = vpop.f32.mrf.mxu0
        %v2766 = vadd.f32 0.0, %v2765
        %v2767 = vpop.f32.mrf.mxu0
        %2768 = vdwg.mxu0
        %2769 = vmatpush.bf16.msra.mxu0 %v2663
        %2770 = vmatpush.bf16.msra.mxu0 %v2659
        %2771 = vmatpush.bf16.msra.mxu0 %v2655
        %2772 = vmatpush.bf16.msra.mxu0 %v2651
        %2773 = vmatpush.bf16.msra.mxu0 %v2647
        %2774 = vmatpush.bf16.msra.mxu0 %v2643
        %2775 = vmatpush.bf16.msra.mxu0 %v2639
        %2776 = vmatpush.bf16.msra.mxu0 %v2635
        %2777 = vmatmul.bf16.gmra.mxu0 %v2407
        %v2778 = vpop.f32.mrf.mxu0
        %v2779 = vadd.f32 %v2766, %v2778
        %v2780 = vpop.f32.mrf.mxu0
        %2781 = vdwg.mxu0
        %2782 = vmatpush.bf16.msra.mxu0 %v2632
        %2783 = vmatpush.bf16.msra.mxu0 %v2628
        %2784 = vmatpush.bf16.msra.mxu0 %v2624
        %2785 = vmatpush.bf16.msra.mxu0 %v2620
        %2786 = vmatpush.bf16.msra.mxu0 %v2616
        %2787 = vmatpush.bf16.msra.mxu0 %v2612
        %2788 = vmatpush.bf16.msra.mxu0 %v2608
        %2789 = vmatpush.bf16.msra.mxu0 %v2604
        %2790 = vmatmul.bf16.gmra.mxu0 %v2400
        %v2791 = vpop.f32.mrf.mxu0
        %v2792 = vadd.f32 0.0, %v2791
        %v2793 = vpop.f32.mrf.mxu0
        %2794 = vdwg.mxu0
        %2795 = vmatpush.bf16.msra.mxu0 %v2664
        %2796 = vmatpush.bf16.msra.mxu0 %v2660
        %2797 = vmatpush.bf16.msra.mxu0 %v2656
        %2798 = vmatpush.bf16.msra.mxu0 %v2652
        %2799 = vmatpush.bf16.msra.mxu0 %v2648
        %2800 = vmatpush.bf16.msra.mxu0 %v2644
        %2801 = vmatpush.bf16.msra.mxu0 %v2640
        %2802 = vmatpush.bf16.msra.mxu0 %v2636
        %2803 = vmatmul.bf16.gmra.mxu0 %v2407
        %v2804 = vpop.f32.mrf.mxu0
        %v2805 = vadd.f32 %v2792, %v2804
        %v2806 = vpop.f32.mrf.mxu0
        %2807 = vdwg.mxu0
        %2808 = vmatpush.bf16.msra.mxu0 %v2633
        %2809 = vmatpush.bf16.msra.mxu0 %v2629
        %2810 = vmatpush.bf16.msra.mxu0 %v2625
        %2811 = vmatpush.bf16.msra.mxu0 %v2621
        %2812 = vmatpush.bf16.msra.mxu0 %v2617
        %2813 = vmatpush.bf16.msra.mxu0 %v2613
        %2814 = vmatpush.bf16.msra.mxu0 %v2609
        %2815 = vmatpush.bf16.msra.mxu0 %v2605
        %2816 = vmatmul.bf16.gmra.mxu0 %v2400
        %v2817 = vpop.f32.mrf.mxu0
        %v2818 = vadd.f32 0.0, %v2817
        %v2819 = vpop.f32.mrf.mxu0
        %2820 = vdwg.mxu0
        %2821 = vmatpush.bf16.msra.mxu0 %v2665
        %2822 = vmatpush.bf16.msra.mxu0 %v2661
        %2823 = vmatpush.bf16.msra.mxu0 %v2657
        %2824 = vmatpush.bf16.msra.mxu0 %v2653
        %2825 = vmatpush.bf16.msra.mxu0 %v2649
        %2826 = vmatpush.bf16.msra.mxu0 %v2645
        %2827 = vmatpush.bf16.msra.mxu0 %v2641
        %2828 = vmatpush.bf16.msra.mxu0 %v2637
        %2829 = vmatmul.bf16.gmra.mxu0 %v2407
        %v2830 = vpop.f32.mrf.mxu0
        %v2831 = vadd.f32 %v2818, %v2830
        %v2832 = vpop.f32.mrf.mxu0
        %2833 = vdwg.mxu0
        %v2834 = vadd.f32 %v2320, %v2753
        %v2835 = vadd.f32 %v2321, %v2779
        %v2836 = vadd.f32 %v2322, %v2805
        %v2837 = vadd.f32 %v2323, %v2831
        %2838 = vst [vmem:[#allocation2] sm:$0x7f] %v2834
        %2839 = vst [vmem:[#allocation2 + $0x8] sm:$0x7f] %v2835
        %2840 = vst [vmem:[#allocation2 + $0x10] sm:$0x7f] %v2836
        %2841 = vst [vmem:[#allocation2 + $0x18] sm:$0x7f] %v2837
        %v2842 = vld [vmem:[%s238] sm:$0xee]
        %v2843 = vld [vmem:[#allocation2] sm:$0x3f]
        %v2844 = vld [vmem:[#allocation2 + $0x8] sm:$0x3f]
        %v2845 = vld [vmem:[#allocation2 + $0x10] sm:$0x3f]
        %v2846 = vld [vmem:[#allocation2 + $0x18] sm:$0x3f]
        %s2847 = scalar_lea.vmem [#allocation3], 2560
        %v2848 = vld [vmem:[%s2847] sm:$0xff]
        %v2849 = vld [vmem:[%s2847 + $0x8] sm:$0xff]
        %v2850 = vld [vmem:[%s2847 + $0x10] sm:$0xff]
        %v2851 = vld [vmem:[%s2847 + $0x18] sm:$0xff]
        %v2852 = vld [vmem:[%s2847 + $0x20] sm:$0xff]
        %v2853 = vld [vmem:[%s2847 + $0x28] sm:$0xff]
        %v2854 = vld [vmem:[%s2847 + $0x30] sm:$0xff]
        %v2855 = vld [vmem:[%s2847 + $0x38] sm:$0xff]
        %v2856 = vld [vmem:[%s2847 + $0x40] sm:$0xff]
        %v2857 = vld [vmem:[%s2847 + $0x48] sm:$0xff]
        %v2858 = vld [vmem:[%s2847 + $0x50] sm:$0xff]
        %v2859 = vld [vmem:[%s2847 + $0x58] sm:$0xff]
        %v2860 = vld [vmem:[%s2847 + $0x60] sm:$0xff]
        %v2861 = vld [vmem:[%s2847 + $0x68] sm:$0xff]
        %v2862 = vld [vmem:[%s2847 + $0x70] sm:$0xff]
        %v2863 = vld [vmem:[%s2847 + $0x78] sm:$0xff]
        %v2864 = vld [vmem:[%s2847 + $0x80] sm:$0xff]
        %v2865 = vld [vmem:[%s2847 + $0x88] sm:$0xff]
        %v2866 = vld [vmem:[%s2847 + $0x90] sm:$0xff]
        %v2867 = vld [vmem:[%s2847 + $0x98] sm:$0xff]
        %v2868 = vld [vmem:[%s2847 + $0xa0] sm:$0xff]
        %v2869 = vld [vmem:[%s2847 + $0xa8] sm:$0xff]
        %v2870 = vld [vmem:[%s2847 + $0xb0] sm:$0xff]
        %v2871 = vld [vmem:[%s2847 + $0xb8] sm:$0xff]
        %v2872 = vld [vmem:[%s2847 + $0xc0] sm:$0xff]
        %v2873 = vld [vmem:[%s2847 + $0xc8] sm:$0xff]
        %v2874 = vld [vmem:[%s2847 + $0xd0] sm:$0xff]
        %v2875 = vld [vmem:[%s2847 + $0xd8] sm:$0xff]
        %v2876 = vld [vmem:[%s2847 + $0xe0] sm:$0xff]
        %v2877 = vld [vmem:[%s2847 + $0xe8] sm:$0xff]
        %v2878 = vld [vmem:[%s2847 + $0xf0] sm:$0xff]
        %v2879 = vld [vmem:[%s2847 + $0xf8] sm:$0xff]
        %v2880 = vld [vmem:[%s2847 + $0x100] sm:$0xff]
        %v2881 = vld [vmem:[%s2847 + $0x108] sm:$0xff]
        %v2882 = vld [vmem:[%s2847 + $0x110] sm:$0xff]
        %v2883 = vld [vmem:[%s2847 + $0x118] sm:$0xff]
        %v2884 = vld [vmem:[%s2847 + $0x120] sm:$0xff]
        %v2885 = vld [vmem:[%s2847 + $0x128] sm:$0xff]
        %v2886 = vld [vmem:[%s2847 + $0x130] sm:$0xff]
        %v2887 = vld [vmem:[%s2847 + $0x138] sm:$0xff]
        %v2888 = vld [vmem:[%s2847 + $0x140] sm:$0xff]
        %v2889 = vld [vmem:[%s2847 + $0x148] sm:$0xff]
        %v2890 = vld [vmem:[%s2847 + $0x150] sm:$0xff]
        %v2891 = vld [vmem:[%s2847 + $0x158] sm:$0xff]
        %v2892 = vld [vmem:[%s2847 + $0x160] sm:$0xff]
        %v2893 = vld [vmem:[%s2847 + $0x168] sm:$0xff]
        %v2894 = vld [vmem:[%s2847 + $0x170] sm:$0xff]
        %v2895 = vld [vmem:[%s2847 + $0x178] sm:$0xff]
        %v2896 = vld [vmem:[%s2847 + $0x180] sm:$0xff]
        %v2897 = vld [vmem:[%s2847 + $0x188] sm:$0xff]
        %v2898 = vld [vmem:[%s2847 + $0x190] sm:$0xff]
        %v2899 = vld [vmem:[%s2847 + $0x198] sm:$0xff]
        %v2900 = vld [vmem:[%s2847 + $0x1a0] sm:$0xff]
        %v2901 = vld [vmem:[%s2847 + $0x1a8] sm:$0xff]
        %v2902 = vld [vmem:[%s2847 + $0x1b0] sm:$0xff]
        %v2903 = vld [vmem:[%s2847 + $0x1b8] sm:$0xff]
        %v2904 = vld [vmem:[%s2847 + $0x1c0] sm:$0xff]
        %v2905 = vld [vmem:[%s2847 + $0x1c8] sm:$0xff]
        %v2906 = vld [vmem:[%s2847 + $0x1d0] sm:$0xff]
        %v2907 = vld [vmem:[%s2847 + $0x1d8] sm:$0xff]
        %v2908 = vld [vmem:[%s2847 + $0x1e0] sm:$0xff]
        %v2909 = vld [vmem:[%s2847 + $0x1e8] sm:$0xff]
        %v2910 = vld [vmem:[%s2847 + $0x1f0] sm:$0xff]
        %v2911 = vld [vmem:[%s2847 + $0x1f8] sm:$0xff]
        %v2913 = vunpack.c.l.b16 %v2842
        %v2914 = vunpack.c.h.b16 %v2842
        %v2915 = vpack.c.b16 %v2913, %v2913
        %v2916 = vpack.c.b16 %v2914, %v2914
        %v2917 = vrot.slane %v2915, 1
        %v2918 = vrot.slane %v2916, 1
        %v2985 = vunpack.c.l.b16 %v2848
        %v2986 = vunpack.c.h.b16 %v2848
        %v2987 = vunpack.c.l.b16 %v2849
        %v2988 = vunpack.c.h.b16 %v2849
        %v2989 = vunpack.c.l.b16 %v2850
        %v2990 = vunpack.c.h.b16 %v2850
        %v2991 = vunpack.c.l.b16 %v2851
        %v2992 = vunpack.c.h.b16 %v2851
        %v2993 = vunpack.c.l.b16 %v2852
        %v2994 = vunpack.c.h.b16 %v2852
        %v2995 = vunpack.c.l.b16 %v2853
        %v2996 = vunpack.c.h.b16 %v2853
        %v2997 = vunpack.c.l.b16 %v2854
        %v2998 = vunpack.c.h.b16 %v2854
        %v2999 = vunpack.c.l.b16 %v2855
        %v3000 = vunpack.c.h.b16 %v2855
        %v3001 = vunpack.c.l.b16 %v2856
        %v3002 = vunpack.c.h.b16 %v2856
        %v3003 = vunpack.c.l.b16 %v2857
        %v3004 = vunpack.c.h.b16 %v2857
        %v3005 = vunpack.c.l.b16 %v2858
        %v3006 = vunpack.c.h.b16 %v2858
        %v3007 = vunpack.c.l.b16 %v2859
        %v3008 = vunpack.c.h.b16 %v2859
        %v3009 = vunpack.c.l.b16 %v2860
        %v3010 = vunpack.c.h.b16 %v2860
        %v3011 = vunpack.c.l.b16 %v2861
        %v3012 = vunpack.c.h.b16 %v2861
        %v3013 = vunpack.c.l.b16 %v2862
        %v3014 = vunpack.c.h.b16 %v2862
        %v3015 = vunpack.c.l.b16 %v2863
        %v3016 = vunpack.c.h.b16 %v2863
        %v3017 = vunpack.c.l.b16 %v2864
        %v3018 = vunpack.c.h.b16 %v2864
        %v3019 = vunpack.c.l.b16 %v2865
        %v3020 = vunpack.c.h.b16 %v2865
        %v3021 = vunpack.c.l.b16 %v2866
        %v3022 = vunpack.c.h.b16 %v2866
        %v3023 = vunpack.c.l.b16 %v2867
        %v3024 = vunpack.c.h.b16 %v2867
        %v3025 = vunpack.c.l.b16 %v2868
        %v3026 = vunpack.c.h.b16 %v2868
        %v3027 = vunpack.c.l.b16 %v2869
        %v3028 = vunpack.c.h.b16 %v2869
        %v3029 = vunpack.c.l.b16 %v2870
        %v3030 = vunpack.c.h.b16 %v2870
        %v3031 = vunpack.c.l.b16 %v2871
        %v3032 = vunpack.c.h.b16 %v2871
        %v3033 = vunpack.c.l.b16 %v2872
        %v3034 = vunpack.c.h.b16 %v2872
        %v3035 = vunpack.c.l.b16 %v2873
        %v3036 = vunpack.c.h.b16 %v2873
        %v3037 = vunpack.c.l.b16 %v2874
        %v3038 = vunpack.c.h.b16 %v2874
        %v3039 = vunpack.c.l.b16 %v2875
        %v3040 = vunpack.c.h.b16 %v2875
        %v3041 = vunpack.c.l.b16 %v2876
        %v3042 = vunpack.c.h.b16 %v2876
        %v3043 = vunpack.c.l.b16 %v2877
        %v3044 = vunpack.c.h.b16 %v2877
        %v3045 = vunpack.c.l.b16 %v2878
        %v3046 = vunpack.c.h.b16 %v2878
        %v3047 = vunpack.c.l.b16 %v2879
        %v3048 = vunpack.c.h.b16 %v2879
        %v3049 = vunpack.c.l.b16 %v2880
        %v3050 = vunpack.c.h.b16 %v2880
        %v3051 = vunpack.c.l.b16 %v2881
        %v3052 = vunpack.c.h.b16 %v2881
        %v3053 = vunpack.c.l.b16 %v2882
        %v3054 = vunpack.c.h.b16 %v2882
        %v3055 = vunpack.c.l.b16 %v2883
        %v3056 = vunpack.c.h.b16 %v2883
        %v3057 = vunpack.c.l.b16 %v2884
        %v3058 = vunpack.c.h.b16 %v2884
        %v3059 = vunpack.c.l.b16 %v2885
        %v3060 = vunpack.c.h.b16 %v2885
        %v3061 = vunpack.c.l.b16 %v2886
        %v3062 = vunpack.c.h.b16 %v2886
        %v3063 = vunpack.c.l.b16 %v2887
        %v3064 = vunpack.c.h.b16 %v2887
        %v3065 = vunpack.c.l.b16 %v2888
        %v3066 = vunpack.c.h.b16 %v2888
        %v3067 = vunpack.c.l.b16 %v2889
        %v3068 = vunpack.c.h.b16 %v2889
        %v3069 = vunpack.c.l.b16 %v2890
        %v3070 = vunpack.c.h.b16 %v2890
        %v3071 = vunpack.c.l.b16 %v2891
        %v3072 = vunpack.c.h.b16 %v2891
        %v3073 = vunpack.c.l.b16 %v2892
        %v3074 = vunpack.c.h.b16 %v2892
        %v3075 = vunpack.c.l.b16 %v2893
        %v3076 = vunpack.c.h.b16 %v2893
        %v3077 = vunpack.c.l.b16 %v2894
        %v3078 = vunpack.c.h.b16 %v2894
        %v3079 = vunpack.c.l.b16 %v2895
        %v3080 = vunpack.c.h.b16 %v2895
        %v3081 = vunpack.c.l.b16 %v2896
        %v3082 = vunpack.c.h.b16 %v2896
        %v3083 = vunpack.c.l.b16 %v2897
        %v3084 = vunpack.c.h.b16 %v2897
        %v3085 = vunpack.c.l.b16 %v2898
        %v3086 = vunpack.c.h.b16 %v2898
        %v3087 = vunpack.c.l.b16 %v2899
        %v3088 = vunpack.c.h.b16 %v2899
        %v3089 = vunpack.c.l.b16 %v2900
        %v3090 = vunpack.c.h.b16 %v2900
        %v3091 = vunpack.c.l.b16 %v2901
        %v3092 = vunpack.c.h.b16 %v2901
        %v3093 = vunpack.c.l.b16 %v2902
        %v3094 = vunpack.c.h.b16 %v2902
        %v3095 = vunpack.c.l.b16 %v2903
        %v3096 = vunpack.c.h.b16 %v2903
        %v3097 = vunpack.c.l.b16 %v2904
        %v3098 = vunpack.c.h.b16 %v2904
        %v3099 = vunpack.c.l.b16 %v2905
        %v3100 = vunpack.c.h.b16 %v2905
        %v3101 = vunpack.c.l.b16 %v2906
        %v3102 = vunpack.c.h.b16 %v2906
        %v3103 = vunpack.c.l.b16 %v2907
        %v3104 = vunpack.c.h.b16 %v2907
        %v3105 = vunpack.c.l.b16 %v2908
        %v3106 = vunpack.c.h.b16 %v2908
        %v3107 = vunpack.c.l.b16 %v2909
        %v3108 = vunpack.c.h.b16 %v2909
        %v3109 = vunpack.c.l.b16 %v2910
        %v3110 = vunpack.c.h.b16 %v2910
        %v3111 = vunpack.c.l.b16 %v2911
        %v3112 = vunpack.c.h.b16 %v2911
        %v3113 = vpack.c.b16 %v2989, %v2985
        %v3114 = vpack.c.b16 %v2990, %v2986
        %v3115 = vpack.c.b16 %v2991, %v2987
        %v3116 = vpack.c.b16 %v2992, %v2988
        %v3117 = vpack.c.b16 %v2997, %v2993
        %v3118 = vpack.c.b16 %v2998, %v2994
        %v3119 = vpack.c.b16 %v2999, %v2995
        %v3120 = vpack.c.b16 %v3000, %v2996
        %v3121 = vpack.c.b16 %v3005, %v3001
        %v3122 = vpack.c.b16 %v3006, %v3002
        %v3123 = vpack.c.b16 %v3007, %v3003
        %v3124 = vpack.c.b16 %v3008, %v3004
        %v3125 = vpack.c.b16 %v3013, %v3009
        %v3126 = vpack.c.b16 %v3014, %v3010
        %v3127 = vpack.c.b16 %v3015, %v3011
        %v3128 = vpack.c.b16 %v3016, %v3012
        %v3129 = vpack.c.b16 %v3021, %v3017
        %v3130 = vpack.c.b16 %v3022, %v3018
        %v3131 = vpack.c.b16 %v3023, %v3019
        %v3132 = vpack.c.b16 %v3024, %v3020
        %v3133 = vpack.c.b16 %v3029, %v3025
        %v3134 = vpack.c.b16 %v3030, %v3026
        %v3135 = vpack.c.b16 %v3031, %v3027
        %v3136 = vpack.c.b16 %v3032, %v3028
        %v3137 = vpack.c.b16 %v3037, %v3033
        %v3138 = vpack.c.b16 %v3038, %v3034
        %v3139 = vpack.c.b16 %v3039, %v3035
        %v3140 = vpack.c.b16 %v3040, %v3036
        %v3141 = vpack.c.b16 %v3045, %v3041
        %v3142 = vpack.c.b16 %v3046, %v3042
        %v3143 = vpack.c.b16 %v3047, %v3043
        %v3144 = vpack.c.b16 %v3048, %v3044
        %v3145 = vpack.c.b16 %v3053, %v3049
        %v3146 = vpack.c.b16 %v3054, %v3050
        %v3147 = vpack.c.b16 %v3055, %v3051
        %v3148 = vpack.c.b16 %v3056, %v3052
        %v3149 = vpack.c.b16 %v3061, %v3057
        %v3150 = vpack.c.b16 %v3062, %v3058
        %v3151 = vpack.c.b16 %v3063, %v3059
        %v3152 = vpack.c.b16 %v3064, %v3060
        %v3153 = vpack.c.b16 %v3069, %v3065
        %v3154 = vpack.c.b16 %v3070, %v3066
        %v3155 = vpack.c.b16 %v3071, %v3067
        %v3156 = vpack.c.b16 %v3072, %v3068
        %v3157 = vpack.c.b16 %v3077, %v3073
        %v3158 = vpack.c.b16 %v3078, %v3074
        %v3159 = vpack.c.b16 %v3079, %v3075
        %v3160 = vpack.c.b16 %v3080, %v3076
        %v3161 = vpack.c.b16 %v3085, %v3081
        %v3162 = vpack.c.b16 %v3086, %v3082
        %v3163 = vpack.c.b16 %v3087, %v3083
        %v3164 = vpack.c.b16 %v3088, %v3084
        %v3165 = vpack.c.b16 %v3093, %v3089
        %v3166 = vpack.c.b16 %v3094, %v3090
        %v3167 = vpack.c.b16 %v3095, %v3091
        %v3168 = vpack.c.b16 %v3096, %v3092
        %v3169 = vpack.c.b16 %v3101, %v3097
        %v3170 = vpack.c.b16 %v3102, %v3098
        %v3171 = vpack.c.b16 %v3103, %v3099
        %v3172 = vpack.c.b16 %v3104, %v3100
        %v3173 = vpack.c.b16 %v3109, %v3105
        %v3174 = vpack.c.b16 %v3110, %v3106
        %v3175 = vpack.c.b16 %v3111, %v3107
        %v3176 = vpack.c.b16 %v3112, %v3108
        %3241 = vmatpush.bf16.msra.mxu0 %v3141
        %3242 = vmatpush.bf16.msra.mxu0 %v3137
        %3243 = vmatpush.bf16.msra.mxu0 %v3133
        %3244 = vmatpush.bf16.msra.mxu0 %v3129
        %3245 = vmatpush.bf16.msra.mxu0 %v3125
        %3246 = vmatpush.bf16.msra.mxu0 %v3121
        %3247 = vmatpush.bf16.msra.mxu0 %v3117
        %3248 = vmatpush.bf16.msra.mxu0 %v3113
        %3249 = vmatmul.bf16.gmra.mxu0 %v2917
        %v3250 = vpop.f32.mrf.mxu0
        %v3251 = vadd.f32 0.0, %v3250
        %v3252 = vpop.f32.mrf.mxu0
        %3253 = vdwg.mxu0
        %3254 = vmatpush.bf16.msra.mxu0 %v3173
        %3255 = vmatpush.bf16.msra.mxu0 %v3169
        %3256 = vmatpush.bf16.msra.mxu0 %v3165
        %3257 = vmatpush.bf16.msra.mxu0 %v3161
        %3258 = vmatpush.bf16.msra.mxu0 %v3157
        %3259 = vmatpush.bf16.msra.mxu0 %v3153
        %3260 = vmatpush.bf16.msra.mxu0 %v3149
        %3261 = vmatpush.bf16.msra.mxu0 %v3145
        %3262 = vmatmul.bf16.gmra.mxu0 %v2918
        %v3263 = vpop.f32.mrf.mxu0
        %v3264 = vadd.f32 %v3251, %v3263
        %v3265 = vpop.f32.mrf.mxu0
        %3266 = vdwg.mxu0
        %3267 = vmatpush.bf16.msra.mxu0 %v3142
        %3268 = vmatpush.bf16.msra.mxu0 %v3138
        %3269 = vmatpush.bf16.msra.mxu0 %v3134
        %3270 = vmatpush.bf16.msra.mxu0 %v3130
        %3271 = vmatpush.bf16.msra.mxu0 %v3126
        %3272 = vmatpush.bf16.msra.mxu0 %v3122
        %3273 = vmatpush.bf16.msra.mxu0 %v3118
        %3274 = vmatpush.bf16.msra.mxu0 %v3114
        %3275 = vmatmul.bf16.gmra.mxu0 %v2917
        %v3276 = vpop.f32.mrf.mxu0
        %v3277 = vadd.f32 0.0, %v3276
        %v3278 = vpop.f32.mrf.mxu0
        %3279 = vdwg.mxu0
        %3280 = vmatpush.bf16.msra.mxu0 %v3174
        %3281 = vmatpush.bf16.msra.mxu0 %v3170
        %3282 = vmatpush.bf16.msra.mxu0 %v3166
        %3283 = vmatpush.bf16.msra.mxu0 %v3162
        %3284 = vmatpush.bf16.msra.mxu0 %v3158
        %3285 = vmatpush.bf16.msra.mxu0 %v3154
        %3286 = vmatpush.bf16.msra.mxu0 %v3150
        %3287 = vmatpush.bf16.msra.mxu0 %v3146
        %3288 = vmatmul.bf16.gmra.mxu0 %v2918
        %v3289 = vpop.f32.mrf.mxu0
        %v3290 = vadd.f32 %v3277, %v3289
        %v3291 = vpop.f32.mrf.mxu0
        %3292 = vdwg.mxu0
        %3293 = vmatpush.bf16.msra.mxu0 %v3143
        %3294 = vmatpush.bf16.msra.mxu0 %v3139
        %3295 = vmatpush.bf16.msra.mxu0 %v3135
        %3296 = vmatpush.bf16.msra.mxu0 %v3131
        %3297 = vmatpush.bf16.msra.mxu0 %v3127
        %3298 = vmatpush.bf16.msra.mxu0 %v3123
        %3299 = vmatpush.bf16.msra.mxu0 %v3119
        %3300 = vmatpush.bf16.msra.mxu0 %v3115
        %3301 = vmatmul.bf16.gmra.mxu0 %v2917
        %v3302 = vpop.f32.mrf.mxu0
        %v3303 = vadd.f32 0.0, %v3302
        %v3304 = vpop.f32.mrf.mxu0
        %3305 = vdwg.mxu0
        %3306 = vmatpush.bf16.msra.mxu0 %v3175
        %3307 = vmatpush.bf16.msra.mxu0 %v3171
        %3308 = vmatpush.bf16.msra.mxu0 %v3167
        %3309 = vmatpush.bf16.msra.mxu0 %v3163
        %3310 = vmatpush.bf16.msra.mxu0 %v3159
        %3311 = vmatpush.bf16.msra.mxu0 %v3155
        %3312 = vmatpush.bf16.msra.mxu0 %v3151
        %3313 = vmatpush.bf16.msra.mxu0 %v3147
        %3314 = vmatmul.bf16.gmra.mxu0 %v2918
        %v3315 = vpop.f32.mrf.mxu0
        %v3316 = vadd.f32 %v3303, %v3315
        %v3317 = vpop.f32.mrf.mxu0
        %3318 = vdwg.mxu0
        %3319 = vmatpush.bf16.msra.mxu0 %v3144
        %3320 = vmatpush.bf16.msra.mxu0 %v3140
        %3321 = vmatpush.bf16.msra.mxu0 %v3136
        %3322 = vmatpush.bf16.msra.mxu0 %v3132
        %3323 = vmatpush.bf16.msra.mxu0 %v3128
        %3324 = vmatpush.bf16.msra.mxu0 %v3124
        %3325 = vmatpush.bf16.msra.mxu0 %v3120
        %3326 = vmatpush.bf16.msra.mxu0 %v3116
        %3327 = vmatmul.bf16.gmra.mxu0 %v2917
        %v3328 = vpop.f32.mrf.mxu0
        %v3329 = vadd.f32 0.0, %v3328
        %v3330 = vpop.f32.mrf.mxu0
        %3331 = vdwg.mxu0
        %3332 = vmatpush.bf16.msra.mxu0 %v3176
        %3333 = vmatpush.bf16.msra.mxu0 %v3172
        %3334 = vmatpush.bf16.msra.mxu0 %v3168
        %3335 = vmatpush.bf16.msra.mxu0 %v3164
        %3336 = vmatpush.bf16.msra.mxu0 %v3160
        %3337 = vmatpush.bf16.msra.mxu0 %v3156
        %3338 = vmatpush.bf16.msra.mxu0 %v3152
        %3339 = vmatpush.bf16.msra.mxu0 %v3148
        %3340 = vmatmul.bf16.gmra.mxu0 %v2918
        %v3341 = vpop.f32.mrf.mxu0
        %v3342 = vadd.f32 %v3329, %v3341
        %v3343 = vpop.f32.mrf.mxu0
        %3344 = vdwg.mxu0
        %v3345 = vadd.f32 %v2843, %v3264
        %v3346 = vadd.f32 %v2844, %v3290
        %v3347 = vadd.f32 %v2845, %v3316
        %v3348 = vadd.f32 %v2846, %v3342
        %3349 = vst [vmem:[#allocation2] sm:$0x3f] %v3345
        %3350 = vst [vmem:[#allocation2 + $0x8] sm:$0x3f] %v3346
        %3351 = vst [vmem:[#allocation2 + $0x10] sm:$0x3f] %v3347
        %3352 = vst [vmem:[#allocation2 + $0x18] sm:$0x3f] %v3348
        %v3353 = vld [vmem:[%s238] sm:$0xee]
        %v3354 = vld [vmem:[#allocation2] sm:$0x1f]
        %v3355 = vld [vmem:[#allocation2 + $0x8] sm:$0x1f]
        %v3356 = vld [vmem:[#allocation2 + $0x10] sm:$0x1f]
        %v3357 = vld [vmem:[#allocation2 + $0x18] sm:$0x1f]
        %s3358 = scalar_lea.vmem [#allocation3], 3072
        %v3359 = vld [vmem:[%s3358] sm:$0xff]
        %v3360 = vld [vmem:[%s3358 + $0x8] sm:$0xff]
        %v3361 = vld [vmem:[%s3358 + $0x10] sm:$0xff]
        %v3362 = vld [vmem:[%s3358 + $0x18] sm:$0xff]
        %v3363 = vld [vmem:[%s3358 + $0x20] sm:$0xff]
        %v3364 = vld [vmem:[%s3358 + $0x28] sm:$0xff]
        %v3365 = vld [vmem:[%s3358 + $0x30] sm:$0xff]
        %v3366 = vld [vmem:[%s3358 + $0x38] sm:$0xff]
        %v3367 = vld [vmem:[%s3358 + $0x40] sm:$0xff]
        %v3368 = vld [vmem:[%s3358 + $0x48] sm:$0xff]
        %v3369 = vld [vmem:[%s3358 + $0x50] sm:$0xff]
        %v3370 = vld [vmem:[%s3358 + $0x58] sm:$0xff]
        %v3371 = vld [vmem:[%s3358 + $0x60] sm:$0xff]
        %v3372 = vld [vmem:[%s3358 + $0x68] sm:$0xff]
        %v3373 = vld [vmem:[%s3358 + $0x70] sm:$0xff]
        %v3374 = vld [vmem:[%s3358 + $0x78] sm:$0xff]
        %v3375 = vld [vmem:[%s3358 + $0x80] sm:$0xff]
        %v3376 = vld [vmem:[%s3358 + $0x88] sm:$0xff]
        %v3377 = vld [vmem:[%s3358 + $0x90] sm:$0xff]
        %v3378 = vld [vmem:[%s3358 + $0x98] sm:$0xff]
        %v3379 = vld [vmem:[%s3358 + $0xa0] sm:$0xff]
        %v3380 = vld [vmem:[%s3358 + $0xa8] sm:$0xff]
        %v3381 = vld [vmem:[%s3358 + $0xb0] sm:$0xff]
        %v3382 = vld [vmem:[%s3358 + $0xb8] sm:$0xff]
        %v3383 = vld [vmem:[%s3358 + $0xc0] sm:$0xff]
        %v3384 = vld [vmem:[%s3358 + $0xc8] sm:$0xff]
        %v3385 = vld [vmem:[%s3358 + $0xd0] sm:$0xff]
        %v3386 = vld [vmem:[%s3358 + $0xd8] sm:$0xff]
        %v3387 = vld [vmem:[%s3358 + $0xe0] sm:$0xff]
        %v3388 = vld [vmem:[%s3358 + $0xe8] sm:$0xff]
        %v3389 = vld [vmem:[%s3358 + $0xf0] sm:$0xff]
        %v3390 = vld [vmem:[%s3358 + $0xf8] sm:$0xff]
        %v3391 = vld [vmem:[%s3358 + $0x100] sm:$0xff]
        %v3392 = vld [vmem:[%s3358 + $0x108] sm:$0xff]
        %v3393 = vld [vmem:[%s3358 + $0x110] sm:$0xff]
        %v3394 = vld [vmem:[%s3358 + $0x118] sm:$0xff]
        %v3395 = vld [vmem:[%s3358 + $0x120] sm:$0xff]
        %v3396 = vld [vmem:[%s3358 + $0x128] sm:$0xff]
        %v3397 = vld [vmem:[%s3358 + $0x130] sm:$0xff]
        %v3398 = vld [vmem:[%s3358 + $0x138] sm:$0xff]
        %v3399 = vld [vmem:[%s3358 + $0x140] sm:$0xff]
        %v3400 = vld [vmem:[%s3358 + $0x148] sm:$0xff]
        %v3401 = vld [vmem:[%s3358 + $0x150] sm:$0xff]
        %v3402 = vld [vmem:[%s3358 + $0x158] sm:$0xff]
        %v3403 = vld [vmem:[%s3358 + $0x160] sm:$0xff]
        %v3404 = vld [vmem:[%s3358 + $0x168] sm:$0xff]
        %v3405 = vld [vmem:[%s3358 + $0x170] sm:$0xff]
        %v3406 = vld [vmem:[%s3358 + $0x178] sm:$0xff]
        %v3407 = vld [vmem:[%s3358 + $0x180] sm:$0xff]
        %v3408 = vld [vmem:[%s3358 + $0x188] sm:$0xff]
        %v3409 = vld [vmem:[%s3358 + $0x190] sm:$0xff]
        %v3410 = vld [vmem:[%s3358 + $0x198] sm:$0xff]
        %v3411 = vld [vmem:[%s3358 + $0x1a0] sm:$0xff]
        %v3412 = vld [vmem:[%s3358 + $0x1a8] sm:$0xff]
        %v3413 = vld [vmem:[%s3358 + $0x1b0] sm:$0xff]
        %v3414 = vld [vmem:[%s3358 + $0x1b8] sm:$0xff]
        %v3415 = vld [vmem:[%s3358 + $0x1c0] sm:$0xff]
        %v3416 = vld [vmem:[%s3358 + $0x1c8] sm:$0xff]
        %v3417 = vld [vmem:[%s3358 + $0x1d0] sm:$0xff]
        %v3418 = vld [vmem:[%s3358 + $0x1d8] sm:$0xff]
        %v3419 = vld [vmem:[%s3358 + $0x1e0] sm:$0xff]
        %v3420 = vld [vmem:[%s3358 + $0x1e8] sm:$0xff]
        %v3421 = vld [vmem:[%s3358 + $0x1f0] sm:$0xff]
        %v3422 = vld [vmem:[%s3358 + $0x1f8] sm:$0xff]
        %v3424 = vunpack.c.l.b16 %v3353
        %v3425 = vunpack.c.h.b16 %v3353
        %v3426 = vpack.c.b16 %v3424, %v3424
        %v3427 = vpack.c.b16 %v3425, %v3425
        %v3429 = vshrl.u32 %v3426, 16
        %v3431 = vrot.slane %v3429, 1
        %v3432 = vshll.u32 %v3426, 16
        %v3434 = vrot.slane %v3432, 2
        %v3435 = vor.u32 %v3431, %v3434
        %v3437 = vshrl.u32 %v3427, 16
        %v3439 = vrot.slane %v3437, 1
        %v3440 = vshll.u32 %v3427, 16
        %v3442 = vrot.slane %v3440, 2
        %v3443 = vor.u32 %v3439, %v3442
        %v3510 = vunpack.c.l.b16 %v3359
        %v3511 = vunpack.c.h.b16 %v3359
        %v3512 = vunpack.c.l.b16 %v3360
        %v3513 = vunpack.c.h.b16 %v3360
        %v3514 = vunpack.c.l.b16 %v3361
        %v3515 = vunpack.c.h.b16 %v3361
        %v3516 = vunpack.c.l.b16 %v3362
        %v3517 = vunpack.c.h.b16 %v3362
        %v3518 = vunpack.c.l.b16 %v3363
        %v3519 = vunpack.c.h.b16 %v3363
        %v3520 = vunpack.c.l.b16 %v3364
        %v3521 = vunpack.c.h.b16 %v3364
        %v3522 = vunpack.c.l.b16 %v3365
        %v3523 = vunpack.c.h.b16 %v3365
        %v3524 = vunpack.c.l.b16 %v3366
        %v3525 = vunpack.c.h.b16 %v3366
        %v3526 = vunpack.c.l.b16 %v3367
        %v3527 = vunpack.c.h.b16 %v3367
        %v3528 = vunpack.c.l.b16 %v3368
        %v3529 = vunpack.c.h.b16 %v3368
        %v3530 = vunpack.c.l.b16 %v3369
        %v3531 = vunpack.c.h.b16 %v3369
        %v3532 = vunpack.c.l.b16 %v3370
        %v3533 = vunpack.c.h.b16 %v3370
        %v3534 = vunpack.c.l.b16 %v3371
        %v3535 = vunpack.c.h.b16 %v3371
        %v3536 = vunpack.c.l.b16 %v3372
        %v3537 = vunpack.c.h.b16 %v3372
        %v3538 = vunpack.c.l.b16 %v3373
        %v3539 = vunpack.c.h.b16 %v3373
        %v3540 = vunpack.c.l.b16 %v3374
        %v3541 = vunpack.c.h.b16 %v3374
        %v3542 = vunpack.c.l.b16 %v3375
        %v3543 = vunpack.c.h.b16 %v3375
        %v3544 = vunpack.c.l.b16 %v3376
        %v3545 = vunpack.c.h.b16 %v3376
        %v3546 = vunpack.c.l.b16 %v3377
        %v3547 = vunpack.c.h.b16 %v3377
        %v3548 = vunpack.c.l.b16 %v3378
        %v3549 = vunpack.c.h.b16 %v3378
        %v3550 = vunpack.c.l.b16 %v3379
        %v3551 = vunpack.c.h.b16 %v3379
        %v3552 = vunpack.c.l.b16 %v3380
        %v3553 = vunpack.c.h.b16 %v3380
        %v3554 = vunpack.c.l.b16 %v3381
        %v3555 = vunpack.c.h.b16 %v3381
        %v3556 = vunpack.c.l.b16 %v3382
        %v3557 = vunpack.c.h.b16 %v3382
        %v3558 = vunpack.c.l.b16 %v3383
        %v3559 = vunpack.c.h.b16 %v3383
        %v3560 = vunpack.c.l.b16 %v3384
        %v3561 = vunpack.c.h.b16 %v3384
        %v3562 = vunpack.c.l.b16 %v3385
        %v3563 = vunpack.c.h.b16 %v3385
        %v3564 = vunpack.c.l.b16 %v3386
        %v3565 = vunpack.c.h.b16 %v3386
        %v3566 = vunpack.c.l.b16 %v3387
        %v3567 = vunpack.c.h.b16 %v3387
        %v3568 = vunpack.c.l.b16 %v3388
        %v3569 = vunpack.c.h.b16 %v3388
        %v3570 = vunpack.c.l.b16 %v3389
        %v3571 = vunpack.c.h.b16 %v3389
        %v3572 = vunpack.c.l.b16 %v3390
        %v3573 = vunpack.c.h.b16 %v3390
        %v3574 = vunpack.c.l.b16 %v3391
        %v3575 = vunpack.c.h.b16 %v3391
        %v3576 = vunpack.c.l.b16 %v3392
        %v3577 = vunpack.c.h.b16 %v3392
        %v3578 = vunpack.c.l.b16 %v3393
        %v3579 = vunpack.c.h.b16 %v3393
        %v3580 = vunpack.c.l.b16 %v3394
        %v3581 = vunpack.c.h.b16 %v3394
        %v3582 = vunpack.c.l.b16 %v3395
        %v3583 = vunpack.c.h.b16 %v3395
        %v3584 = vunpack.c.l.b16 %v3396
        %v3585 = vunpack.c.h.b16 %v3396
        %v3586 = vunpack.c.l.b16 %v3397
        %v3587 = vunpack.c.h.b16 %v3397
        %v3588 = vunpack.c.l.b16 %v3398
        %v3589 = vunpack.c.h.b16 %v3398
        %v3590 = vunpack.c.l.b16 %v3399
        %v3591 = vunpack.c.h.b16 %v3399
        %v3592 = vunpack.c.l.b16 %v3400
        %v3593 = vunpack.c.h.b16 %v3400
        %v3594 = vunpack.c.l.b16 %v3401
        %v3595 = vunpack.c.h.b16 %v3401
        %v3596 = vunpack.c.l.b16 %v3402
        %v3597 = vunpack.c.h.b16 %v3402
        %v3598 = vunpack.c.l.b16 %v3403
        %v3599 = vunpack.c.h.b16 %v3403
        %v3600 = vunpack.c.l.b16 %v3404
        %v3601 = vunpack.c.h.b16 %v3404
        %v3602 = vunpack.c.l.b16 %v3405
        %v3603 = vunpack.c.h.b16 %v3405
        %v3604 = vunpack.c.l.b16 %v3406
        %v3605 = vunpack.c.h.b16 %v3406
        %v3606 = vunpack.c.l.b16 %v3407
        %v3607 = vunpack.c.h.b16 %v3407
        %v3608 = vunpack.c.l.b16 %v3408
        %v3609 = vunpack.c.h.b16 %v3408
        %v3610 = vunpack.c.l.b16 %v3409
        %v3611 = vunpack.c.h.b16 %v3409
        %v3612 = vunpack.c.l.b16 %v3410
        %v3613 = vunpack.c.h.b16 %v3410
        %v3614 = vunpack.c.l.b16 %v3411
        %v3615 = vunpack.c.h.b16 %v3411
        %v3616 = vunpack.c.l.b16 %v3412
        %v3617 = vunpack.c.h.b16 %v3412
        %v3618 = vunpack.c.l.b16 %v3413
        %v3619 = vunpack.c.h.b16 %v3413
        %v3620 = vunpack.c.l.b16 %v3414
        %v3621 = vunpack.c.h.b16 %v3414
        %v3622 = vunpack.c.l.b16 %v3415
        %v3623 = vunpack.c.h.b16 %v3415
        %v3624 = vunpack.c.l.b16 %v3416
        %v3625 = vunpack.c.h.b16 %v3416
        %v3626 = vunpack.c.l.b16 %v3417
        %v3627 = vunpack.c.h.b16 %v3417
        %v3628 = vunpack.c.l.b16 %v3418
        %v3629 = vunpack.c.h.b16 %v3418
        %v3630 = vunpack.c.l.b16 %v3419
        %v3631 = vunpack.c.h.b16 %v3419
        %v3632 = vunpack.c.l.b16 %v3420
        %v3633 = vunpack.c.h.b16 %v3420
        %v3634 = vunpack.c.l.b16 %v3421
        %v3635 = vunpack.c.h.b16 %v3421
        %v3636 = vunpack.c.l.b16 %v3422
        %v3637 = vunpack.c.h.b16 %v3422
        %v3638 = vpack.c.b16 %v3514, %v3510
        %v3639 = vpack.c.b16 %v3515, %v3511
        %v3640 = vpack.c.b16 %v3516, %v3512
        %v3641 = vpack.c.b16 %v3517, %v3513
        %v3642 = vpack.c.b16 %v3522, %v3518
        %v3643 = vpack.c.b16 %v3523, %v3519
        %v3644 = vpack.c.b16 %v3524, %v3520
        %v3645 = vpack.c.b16 %v3525, %v3521
        %v3646 = vpack.c.b16 %v3530, %v3526
        %v3647 = vpack.c.b16 %v3531, %v3527
        %v3648 = vpack.c.b16 %v3532, %v3528
        %v3649 = vpack.c.b16 %v3533, %v3529
        %v3650 = vpack.c.b16 %v3538, %v3534
        %v3651 = vpack.c.b16 %v3539, %v3535
        %v3652 = vpack.c.b16 %v3540, %v3536
        %v3653 = vpack.c.b16 %v3541, %v3537
        %v3654 = vpack.c.b16 %v3546, %v3542
        %v3655 = vpack.c.b16 %v3547, %v3543
        %v3656 = vpack.c.b16 %v3548, %v3544
        %v3657 = vpack.c.b16 %v3549, %v3545
        %v3658 = vpack.c.b16 %v3554, %v3550
        %v3659 = vpack.c.b16 %v3555, %v3551
        %v3660 = vpack.c.b16 %v3556, %v3552
        %v3661 = vpack.c.b16 %v3557, %v3553
        %v3662 = vpack.c.b16 %v3562, %v3558
        %v3663 = vpack.c.b16 %v3563, %v3559
        %v3664 = vpack.c.b16 %v3564, %v3560
        %v3665 = vpack.c.b16 %v3565, %v3561
        %v3666 = vpack.c.b16 %v3570, %v3566
        %v3667 = vpack.c.b16 %v3571, %v3567
        %v3668 = vpack.c.b16 %v3572, %v3568
        %v3669 = vpack.c.b16 %v3573, %v3569
        %v3670 = vpack.c.b16 %v3578, %v3574
        %v3671 = vpack.c.b16 %v3579, %v3575
        %v3672 = vpack.c.b16 %v3580, %v3576
        %v3673 = vpack.c.b16 %v3581, %v3577
        %v3674 = vpack.c.b16 %v3586, %v3582
        %v3675 = vpack.c.b16 %v3587, %v3583
        %v3676 = vpack.c.b16 %v3588, %v3584
        %v3677 = vpack.c.b16 %v3589, %v3585
        %v3678 = vpack.c.b16 %v3594, %v3590
        %v3679 = vpack.c.b16 %v3595, %v3591
        %v3680 = vpack.c.b16 %v3596, %v3592
        %v3681 = vpack.c.b16 %v3597, %v3593
        %v3682 = vpack.c.b16 %v3602, %v3598
        %v3683 = vpack.c.b16 %v3603, %v3599
        %v3684 = vpack.c.b16 %v3604, %v3600
        %v3685 = vpack.c.b16 %v3605, %v3601
        %v3686 = vpack.c.b16 %v3610, %v3606
        %v3687 = vpack.c.b16 %v3611, %v3607
        %v3688 = vpack.c.b16 %v3612, %v3608
        %v3689 = vpack.c.b16 %v3613, %v3609
        %v3690 = vpack.c.b16 %v3618, %v3614
        %v3691 = vpack.c.b16 %v3619, %v3615
        %v3692 = vpack.c.b16 %v3620, %v3616
        %v3693 = vpack.c.b16 %v3621, %v3617
        %v3694 = vpack.c.b16 %v3626, %v3622
        %v3695 = vpack.c.b16 %v3627, %v3623
        %v3696 = vpack.c.b16 %v3628, %v3624
        %v3697 = vpack.c.b16 %v3629, %v3625
        %v3698 = vpack.c.b16 %v3634, %v3630
        %v3699 = vpack.c.b16 %v3635, %v3631
        %v3700 = vpack.c.b16 %v3636, %v3632
        %v3701 = vpack.c.b16 %v3637, %v3633
        %3766 = vmatpush.bf16.msra.mxu0 %v3666
        %3767 = vmatpush.bf16.msra.mxu0 %v3662
        %3768 = vmatpush.bf16.msra.mxu0 %v3658
        %3769 = vmatpush.bf16.msra.mxu0 %v3654
        %3770 = vmatpush.bf16.msra.mxu0 %v3650
        %3771 = vmatpush.bf16.msra.mxu0 %v3646
        %3772 = vmatpush.bf16.msra.mxu0 %v3642
        %3773 = vmatpush.bf16.msra.mxu0 %v3638
        %3774 = vmatmul.bf16.gmra.mxu0 %v3435
        %v3775 = vpop.f32.mrf.mxu0
        %v3776 = vadd.f32 0.0, %v3775
        %v3777 = vpop.f32.mrf.mxu0
        %3778 = vdwg.mxu0
        %3779 = vmatpush.bf16.msra.mxu0 %v3698
        %3780 = vmatpush.bf16.msra.mxu0 %v3694
        %3781 = vmatpush.bf16.msra.mxu0 %v3690
        %3782 = vmatpush.bf16.msra.mxu0 %v3686
        %3783 = vmatpush.bf16.msra.mxu0 %v3682
        %3784 = vmatpush.bf16.msra.mxu0 %v3678
        %3785 = vmatpush.bf16.msra.mxu0 %v3674
        %3786 = vmatpush.bf16.msra.mxu0 %v3670
        %3787 = vmatmul.bf16.gmra.mxu0 %v3443
        %v3788 = vpop.f32.mrf.mxu0
        %v3789 = vadd.f32 %v3776, %v3788
        %v3790 = vpop.f32.mrf.mxu0
        %3791 = vdwg.mxu0
        %3792 = vmatpush.bf16.msra.mxu0 %v3667
        %3793 = vmatpush.bf16.msra.mxu0 %v3663
        %3794 = vmatpush.bf16.msra.mxu0 %v3659
        %3795 = vmatpush.bf16.msra.mxu0 %v3655
        %3796 = vmatpush.bf16.msra.mxu0 %v3651
        %3797 = vmatpush.bf16.msra.mxu0 %v3647
        %3798 = vmatpush.bf16.msra.mxu0 %v3643
        %3799 = vmatpush.bf16.msra.mxu0 %v3639
        %3800 = vmatmul.bf16.gmra.mxu0 %v3435
        %v3801 = vpop.f32.mrf.mxu0
        %v3802 = vadd.f32 0.0, %v3801
        %v3803 = vpop.f32.mrf.mxu0
        %3804 = vdwg.mxu0
        %3805 = vmatpush.bf16.msra.mxu0 %v3699
        %3806 = vmatpush.bf16.msra.mxu0 %v3695
        %3807 = vmatpush.bf16.msra.mxu0 %v3691
        %3808 = vmatpush.bf16.msra.mxu0 %v3687
        %3809 = vmatpush.bf16.msra.mxu0 %v3683
        %3810 = vmatpush.bf16.msra.mxu0 %v3679
        %3811 = vmatpush.bf16.msra.mxu0 %v3675
        %3812 = vmatpush.bf16.msra.mxu0 %v3671
        %3813 = vmatmul.bf16.gmra.mxu0 %v3443
        %v3814 = vpop.f32.mrf.mxu0
        %v3815 = vadd.f32 %v3802, %v3814
        %v3816 = vpop.f32.mrf.mxu0
        %3817 = vdwg.mxu0
        %3818 = vmatpush.bf16.msra.mxu0 %v3668
        %3819 = vmatpush.bf16.msra.mxu0 %v3664
        %3820 = vmatpush.bf16.msra.mxu0 %v3660
        %3821 = vmatpush.bf16.msra.mxu0 %v3656
        %3822 = vmatpush.bf16.msra.mxu0 %v3652
        %3823 = vmatpush.bf16.msra.mxu0 %v3648
        %3824 = vmatpush.bf16.msra.mxu0 %v3644
        %3825 = vmatpush.bf16.msra.mxu0 %v3640
        %3826 = vmatmul.bf16.gmra.mxu0 %v3435
        %v3827 = vpop.f32.mrf.mxu0
        %v3828 = vadd.f32 0.0, %v3827
        %v3829 = vpop.f32.mrf.mxu0
        %3830 = vdwg.mxu0
        %3831 = vmatpush.bf16.msra.mxu0 %v3700
        %3832 = vmatpush.bf16.msra.mxu0 %v3696
        %3833 = vmatpush.bf16.msra.mxu0 %v3692
        %3834 = vmatpush.bf16.msra.mxu0 %v3688
        %3835 = vmatpush.bf16.msra.mxu0 %v3684
        %3836 = vmatpush.bf16.msra.mxu0 %v3680
        %3837 = vmatpush.bf16.msra.mxu0 %v3676
        %3838 = vmatpush.bf16.msra.mxu0 %v3672
        %3839 = vmatmul.bf16.gmra.mxu0 %v3443
        %v3840 = vpop.f32.mrf.mxu0
        %v3841 = vadd.f32 %v3828, %v3840
        %v3842 = vpop.f32.mrf.mxu0
        %3843 = vdwg.mxu0
        %3844 = vmatpush.bf16.msra.mxu0 %v3669
        %3845 = vmatpush.bf16.msra.mxu0 %v3665
        %3846 = vmatpush.bf16.msra.mxu0 %v3661
        %3847 = vmatpush.bf16.msra.mxu0 %v3657
        %3848 = vmatpush.bf16.msra.mxu0 %v3653
        %3849 = vmatpush.bf16.msra.mxu0 %v3649
        %3850 = vmatpush.bf16.msra.mxu0 %v3645
        %3851 = vmatpush.bf16.msra.mxu0 %v3641
        %3852 = vmatmul.bf16.gmra.mxu0 %v3435
        %v3853 = vpop.f32.mrf.mxu0
        %v3854 = vadd.f32 0.0, %v3853
        %v3855 = vpop.f32.mrf.mxu0
        %3856 = vdwg.mxu0
        %3857 = vmatpush.bf16.msra.mxu0 %v3701
        %3858 = vmatpush.bf16.msra.mxu0 %v3697
        %3859 = vmatpush.bf16.msra.mxu0 %v3693
        %3860 = vmatpush.bf16.msra.mxu0 %v3689
        %3861 = vmatpush.bf16.msra.mxu0 %v3685
        %3862 = vmatpush.bf16.msra.mxu0 %v3681
        %3863 = vmatpush.bf16.msra.mxu0 %v3677
        %3864 = vmatpush.bf16.msra.mxu0 %v3673
        %3865 = vmatmul.bf16.gmra.mxu0 %v3443
        %v3866 = vpop.f32.mrf.mxu0
        %v3867 = vadd.f32 %v3854, %v3866
        %v3868 = vpop.f32.mrf.mxu0
        %3869 = vdwg.mxu0
        %v3870 = vadd.f32 %v3354, %v3789
        %v3871 = vadd.f32 %v3355, %v3815
        %v3872 = vadd.f32 %v3356, %v3841
        %v3873 = vadd.f32 %v3357, %v3867
        %3874 = vst [vmem:[#allocation2] sm:$0x1f] %v3870
        %3875 = vst [vmem:[#allocation2 + $0x8] sm:$0x1f] %v3871
        %3876 = vst [vmem:[#allocation2 + $0x10] sm:$0x1f] %v3872
        %3877 = vst [vmem:[#allocation2 + $0x18] sm:$0x1f] %v3873
        %v3878 = vld [vmem:[#allocation2] sm:$0xff]
        %v3879 = vld [vmem:[#allocation2 + $0x8] sm:$0xff]
        %v3880 = vld [vmem:[#allocation2 + $0x10] sm:$0xff]
        %v3881 = vld [vmem:[#allocation2 + $0x18] sm:$0xff]
        %v3882 = vld [vmem:[#allocation5] sm:$0xf]
        %v3884 = vperm.slane %v3882, 0
        %v3885 = vperm.slane %v3882, 1
        %v3886 = vperm.slane %v3882, 2
        %v3887 = vperm.slane %v3882, 3
        %v3892 = vmul.f32 %v3878, %v3884
        %v3893 = vmul.f32 %v3879, %v3885
        %v3894 = vmul.f32 %v3880, %v3886
        %v3895 = vmul.f32 %v3881, %v3887
        %v3896 = vld [vmem:[#allocation7] sm:$0xf]
        %v3898 = vperm.slane %v3896, 0
        %v3899 = vperm.slane %v3896, 1
        %v3900 = vperm.slane %v3896, 2
        %v3901 = vperm.slane %v3896, 3
        %v3906 = vadd.f32 %v3892, %v3898
        %v3907 = vadd.f32 %v3893, %v3899
        %v3908 = vadd.f32 %v3894, %v3900
        %v3909 = vadd.f32 %v3895, %v3901
        %v3910 = vmax.f32 %v3906, 0.0
        %v3911 = vmax.f32 %v3907, 0.0
        %v3912 = vmax.f32 %v3908, 0.0
        %v3913 = vmax.f32 %v3909, 0.0
        %v3914 = vpack.c.bf16 %v3911, %v3910
        %v3915 = vpack.c.bf16 %v3913, %v3912
        %3916 = vst [vmem:[%s243] sm:$0xff] %v3914
        %3917 = vst [vmem:[%s243 + $0x8] sm:$0xff] %v3915
        %p3918 = scmp.lt.s32.totalorder %s17, 1
        %s3919 = scalar_select %p3918, %s17, 1
        %s3920 = smul.addr %s3919, 4
        %s3921 = smul.addr %s3920, 4
        %s3922 = scalar_lea.vmem %s4, %s3921
        // Predicated region
        $region49: #{forward.6} parent=35 // pred_check
          %p3923 = pneg %p124
        $region50: #{forward.6} parent=35 // pred_check_branch
          %3925 = sbr.rel (%p3923) target = $region52
        $region51: #{forward.6} parent=35 // pred_region
          _
        $region52: #{forward.6} parent=35 // pred_fallthru
          _
      $region36: #{forward.6} parent=5 // pred_fallthru
        _
      %p3926 = scmp.le.s32.totalorder 2, %s12
      // Predicated region
      $region53: #{forward.6} parent=5 // pred_check
        %p3927 = pneg %p3926
      $region54: #{forward.6} parent=5 // pred_check_branch
        %3929 = sbr.rel (%p3927) target = $region56
      $region55: #{forward.6} parent=5 // pred_region
        %s3930 = ssub.s32 %s12, 2
        // Predicated region
        $region57: #{forward.6} parent=55 // pred_check
          %p3931 = pneg %p130
        $region58: #{forward.6} parent=55 // pred_check_branch
          %3933 = sbr.rel (%p3931) target = $region60
        $region59: #{forward.6} parent=55 // pred_region
          %p3934 = scmp.lt.s32.totalorder %s18, 1
          %s3935 = scalar_select %p3934, %s18, 1
          %s3936 = smul.addr %s3935, 4
          %s3937 = smul.addr %s3936, 4
          %s3938 = scalar_lea.vmem %s4, %s3937
        $region60: #{forward.6} parent=55 // pred_fallthru
          _
      $region56: #{forward.6} parent=5 // pred_fallthru
        _
    $region6: #{forward.6} parent=1 // loop_footer
      %s16 = sadd.s32 1, %s12
    $region7: #{forward.6} parent=1 // loop_footer_branch
      %11 = sbr.rel target = $region3
    $region8: #{forward.6} parent=1 // loop_exit
      _
    %3939 = vsyncpa [#allocation4], 1
    %s3940 = scalar_lea.sflag [#allocation4], 1
    %3941 = vsyncpa %s3940, 1
    %3942 = vsyncpa [#allocation6], 1

</llo_original>
